<compile_context>
chip_gen: v6e
topology: v6e:2x2x1
jax: 0.10.0
libtpu: 0.0.40
codegen_flags: <defaults>
</compile_context>

<pallas_src>
import functools

import jax
import jax.numpy as jnp
from jax.experimental import pallas as pl
from jax.experimental.pallas import tpu as pltpu

NC = 1        # input channels
NDF = 64      # base width
NZ = 8        # latent dim
BN_EPS = 1e-5
LEAKY_SLOPE = 0.2

LANE = 128
SUBLANE = 8
TM_MAX = 256               # M tile: multiple of 256 -> full MXU fill (v6e/v7x)
TK_MAX = 2304              # K tile cap; divides every K appearing in this net
ACT_DTYPE = jnp.bfloat16   # inter-layer activations / matmul operands
VMEM_LIMIT = 48 * 1024 * 1024   # within physical VMEM on v5e/v6e/v7x


def _round_up(x, m):
    return (x + m - 1) // m * m


# ----------------------------- Pallas kernel --------------------------------

def _conv_kernel(*refs, multi_k, in_affine, with_stats, apply_leaky):
    """Fused im2col-matmul tile.  grid = (M tiles "parallel", K tiles "arbitrary").

    Static flags select the ref layout:
      refs = a, b, [scale_k, bias_k], out, [stats], [acc]
    * in_affine  : per-K-column scale/bias + LeakyReLU applied to the A block
                   before the dot (fuses BN4 affine + a4 into conv5).
    * with_stats : per-M-tile per-channel sum / sum-of-squares written as an
                   extra (1, 2, OC) output (BN batch statistics).
    * apply_leaky: LeakyReLU on the conv output.
    * multi_k    : K is tiled -> f32 VMEM accumulator + pl.when init/epilogue.
                   Single-K-block layers skip the accumulator scratch.
    """
    idx = 0
    a_ref = refs[idx]; idx += 1
    b_ref = refs[idx]; idx += 1
    if in_affine:
        s_ref = refs[idx]; idx += 1
        t_ref = refs[idx]; idx += 1
    o_ref = refs[idx]; idx += 1
    if with_stats:
        st_ref = refs[idx]; idx += 1
    acc_ref = refs[idx] if multi_k else None

    a = a_ref[...]
    if in_affine:
        # Note: only valid when the layer's im2col has no zero-padded spatial
        # entries (conv5: pad=0).  Padded M rows become nonzero but are sliced
        # off outside the kernel and never feed BN statistics.
        af = a.astype(jnp.float32) * s_ref[...] + t_ref[...]
        af = jnp.where(af >= 0.0, af, LEAKY_SLOPE * af)
        a = af.astype(b_ref.dtype)
    part = jnp.dot(a, b_ref[...], preferred_element_type=jnp.float32)

    def _epilogue(y):
        if with_stats:
            # Zero-padded rows contribute exactly zero to both sums; the
            # divide by the true row count happens outside the kernel.
            sums = jnp.sum(y, axis=0, keepdims=True)
            sqs = jnp.sum(y * y, axis=0, keepdims=True)
            st_ref[...] = jnp.concatenate([sums, sqs], axis=0)[None]
        if apply_leaky:
            y = jnp.where(y >= 0.0, y, LEAKY_SLOPE * y)
        o_ref[...] = y.astype(o_ref.dtype)

    if multi_k:
        k = pl.program_id(1)

        @pl.when(k == 0)
        def _():
            acc_ref[...] = jnp.zeros_like(acc_ref)

        acc_ref[...] += part

        @pl.when(k == pl.num_programs(1) - 1)
        def _():
            _epilogue(acc_ref[...])
    else:
        _epilogue(part)


def fused_conv_layer(a, w, *, in_scale=None, in_bias=None, with_stats=False,
                     apply_leaky=False, out_dtype=ACT_DTYPE):
    """One pallas_call: (M, K) @ (K, OC) with fused prologue/epilogue.

    Returns a tuple: (y,) or (y, stats) with y (Mp, OC) and stats
    (n_m_tiles, 2, OC) f32 per-tile [sum, sum_sq] over rows.
    """
    m, K = a.shape
    Kw, OC = w.shape
    assert K == Kw

    # Tile choice: M ("parallel", megacore-shardable), K ("arbitrary", inner).
    mp8 = _round_up(m, SUBLANE)
    tm = TM_MAX if mp8 >= TM_MAX else mp8
    mp = _round_up(mp8, tm)
    tk = K if K <= TK_MAX else TK_MAX
    assert K % tk == 0, (K, tk)
    n_m, n_k = mp // tm, K // tk
    multi_k = n_k > 1
    in_affine = in_scale is not None

    if mp > m:  # zero rows: zero conv output, zero BN-stat contribution
        a = jnp.pad(a, ((0, mp - m), (0, 0)))

    in_specs = [pl.BlockSpec((tm, tk), lambda i, k: (i, k)),
                pl.BlockSpec((tk, OC), lambda i, k: (k, 0))]
    args = [a, w]
    if in_affine:
        in_specs += [pl.BlockSpec((1, tk), lambda i, k: (0, k)),
                     pl.BlockSpec((1, tk), lambda i, k: (0, k))]
        args += [in_scale.reshape(1, K).astype(jnp.float32),
                 in_bias.reshape(1, K).astype(jnp.float32)]

    out_shape = [jax.ShapeDtypeStruct((mp, OC), out_dtype)]
    out_specs = [pl.BlockSpec((tm, OC), lambda i, k: (i, 0))]
    if with_stats:
        out_shape.append(jax.ShapeDtypeStruct((n_m, 2, OC), jnp.float32))
        out_specs.append(pl.BlockSpec((1, 2, OC), lambda i, k: (i, 0, 0)))

    scratch_shapes = [pltpu.VMEM((tm, OC), jnp.float32)] if multi_k else []

    kernel = functools.partial(_conv_kernel, multi_k=multi_k,
                               in_affine=in_affine, with_stats=with_stats,
                               apply_leaky=apply_leaky)

    bytes_accessed = sum(int(x.size) * x.dtype.itemsize for x in args)
    for s in out_shape:
        n = 1
        for d in s.shape:
            n *= int(d)
        bytes_accessed += n * jnp.dtype(s.dtype).itemsize
    cost = pl.CostEstimate(flops=2 * mp * K * OC, transcendentals=0,
                           bytes_accessed=bytes_accessed)

    return pl.pallas_call(
        kernel,
        out_shape=tuple(out_shape),
        grid_spec=pltpu.PrefetchScalarGridSpec(
            num_scalar_prefetch=0,
            grid=(n_m, n_k),
            in_specs=in_specs,
            out_specs=tuple(out_specs),
            scratch_shapes=scratch_shapes),
        compiler_params=pltpu.CompilerParams(
            dimension_semantics=("parallel", "arbitrary"),
            vmem_limit_bytes=VMEM_LIMIT),
        cost_estimate=cost,
    )(*args)


# ------------------------------- glue (JAX) ---------------------------------

def im2col_nhwc(x_nhwc, kh, kw, stride, pad):
    """Channels-last im2col: (N,H,W,C) -> (N*OH*OW, kh*kw*C), K ordered
    (tap outer, channel inner) to match prep_weight."""
    x = jnp.pad(x_nhwc, ((0, 0), (pad, pad), (pad, pad), (0, 0)))
    N, H, W, C = x.shape
    oh = (H - kh) // stride + 1
    ow = (W - kw) // stride + 1
    cols = [x[:, i:i + stride * oh:stride, j:j + stride * ow:stride, :]
            for i in range(kh) for j in range(kw)]
    p = jnp.stack(cols, axis=3)                    # (N, oh, ow, kh*kw, C)
    return p.reshape(N * oh * ow, kh * kw * C), oh, ow


def prep_weight(w_oihw, oc_pad=None, dtype=ACT_DTYPE):
    """PyTorch OIHW conv weight -> (KH*KW*IC, OCp) matmul operand whose K
    ordering (tap outer, channel inner) matches im2col_nhwc."""
    OC, IC, KH, KW = w_oihw.shape
    w = w_oihw
    if oc_pad is not None and oc_pad > OC:
        w = jnp.pad(w, ((0, oc_pad - OC), (0, 0), (0, 0), (0, 0)))
    ocp = w.shape[0]
    w = w.transpose(2, 3, 1, 0).reshape(KH * KW * IC, ocp)
    return w.astype(dtype)


def _bn_affine_from_stats(stats, gamma, beta, m_true):
    """Finalize BN scale/bias from per-M-tile partial sums (trivial XLA)."""
    s = jnp.sum(stats[:, 0, :], axis=0)
    ss = jnp.sum(stats[:, 1, :], axis=0)
    inv_m = 1.0 / float(m_true)
    mean = s * inv_m
    # E[x^2]-E[x]^2 in f32; fine at 5e-2 tolerance.
    # TODO(synk): switch to shifted-moment/Welford if tolerances tighten.
    var = jnp.maximum(ss * inv_m - mean * mean, 0.0)   # biased (training BN)
    scale = gamma * jax.lax.rsqrt(var + BN_EPS)
    bias = beta - mean * scale
    return scale, bias


def init_params(key):
    ks = jax.random.split(key, 9)
    return {
        "w1": 0.05 * jax.random.normal(ks[0], (NDF, NC, 3, 3), jnp.float32),
        "w2": 0.05 * jax.random.normal(ks[1], (NDF * 2, NDF, 3, 3), jnp.float32),
        "w3": 0.05 * jax.random.normal(ks[2], (NDF * 4, NDF * 2, 3, 3), jnp.float32),
        "w4": 0.05 * jax.random.normal(ks[3], (NDF * 8, NDF * 4, 3, 3), jnp.float32),
        "w5": 0.05 * jax.random.normal(ks[4], (NZ, NDF * 8, 3, 3), jnp.float32),
        "g2": 1.0 + 0.1 * jax.random.normal(ks[5], (NDF * 2,), jnp.float32),
        "b2": 0.1 * jax.random.normal(ks[5], (NDF * 2,), jnp.float32),
        "g3": 1.0 + 0.1 * jax.random.normal(ks[6], (NDF * 4,), jnp.float32),
        "b3": 0.1 * jax.random.normal(ks[6], (NDF * 4,), jnp.float32),
        "g4": 1.0 + 0.1 * jax.random.normal(ks[7], (NDF * 8,), jnp.float32),
        "b4": 0.1 * jax.random.normal(ks[7], (NDF * 8,), jnp.float32),
    }


@functools.partial(jax.jit, static_argnames=("is_training",))
def encoder_forward_pallas(x_nchw, params, noise_key, is_training=True):
    x = x_nchw.astype(jnp.float32)
    if is_training:
        # PyTorch: x.data += normal(0, 0.01) (functional equivalent)
        x = x + 0.01 * jax.random.normal(noise_key, x.shape, x.dtype)
    N = x.shape[0]
    x = jnp.transpose(x, (0, 2, 3, 1))                 # NHWC once, up front

    # Weight prep (constant-folded under jit).
    w1 = prep_weight(params["w1"], oc_pad=LANE)        # (9, 128)   K unpadded
    w2 = prep_weight(params["w2"])                     # (576, 128)
    w3 = prep_weight(params["w3"])                     # (1152, 256)
    w4 = prep_weight(params["w4"])                     # (2304, 512)
    w5 = prep_weight(params["w5"], oc_pad=LANE)        # (4608, 128)

    # conv1 -> LeakyReLU (no BN).  K = 9 (no 9->128 padding of the big im2col
    # stream); OC padded 64->128 for lane-dense stores, padded channels are
    # dropped before conv2 so conv2's K is the true 576.
    a, oh, ow = im2col_nhwc(x.astype(ACT_DTYPE), 3, 3, 2, 2)
    m = N * oh * ow
    (y,) = fused_conv_layer(a, w1, apply_leaky=True)
    x = y[:m, :NDF].reshape(N, oh, ow, NDF)

    # conv2 / conv3: kernel emits raw conv output + per-M-tile BN partial
    # stats; scale/bias finalized in XLA; the per-channel FMA + LeakyReLU
    # fuse into the next layer's im2col gather (pure elementwise XLA glue).
    for w, g, b, stride, pad in [(w2, params["g2"], params["b2"], 2, 2),
                                 (w3, params["g3"], params["b3"], 2, 2)]:
        a, oh, ow = im2col_nhwc(x, 3, 3, stride, pad)
        m = N * oh * ow
        OC = w.shape[1]
        y, stats = fused_conv_layer(a, w, with_stats=True,
                                    out_dtype=jnp.float32)
        scale, bias = _bn_affine_from_stats(stats, g, b, m)
        z = y[:m] * scale + bias
        z = jnp.where(z >= 0.0, z, LEAKY_SLOPE * z)
        x = z.reshape(N, oh, ow, OC).astype(ACT_DTYPE)

    # conv4: raw conv output + BN4 partial stats.
    a, oh, ow = im2col_nhwc(x, 3, 3, 2, 1)
    m = N * oh * ow
    OC4 = w4.shape[1]
    y4, stats4 = fused_conv_layer(a, w4, with_stats=True, out_dtype=jnp.float32)
    scale4, bias4 = _bn_affine_from_stats(stats4, params["g4"], params["b4"], m)

    # conv5: single output position, pad=0 -> its im2col is just a reshape of
    # conv4's 3x3x512 output, so BN4 affine + LeakyReLU fuse into conv5's
    # kernel prologue (per-K-column scale/bias, tap-major / channel-minor to
    # match the weight layout).  No standalone BN4 pass / extra HBM trip.
    taps = oh * ow
    a5 = y4[:m].reshape(N, taps * OC4)
    s5 = jnp.tile(scale4, taps)
    b5 = jnp.tile(bias4, taps)
    (y5,) = fused_conv_layer(a5, w5, in_scale=s5, in_bias=b5,
                             apply_leaky=False, out_dtype=jnp.float32)
    out = y5[:N, :NZ].reshape(N, 1, 1, NZ)
    return jnp.transpose(out, (0, 3, 1, 2))            # (N, nz, 1, 1)


# --------------------------- pure-JAX reference -----------------------------

def _conv_ref(x, w, stride, pad):
    return jax.lax.conv_general_dilated(
        x, w, (stride, stride), ((pad, pad), (pad, pad)),
        dimension_numbers=("NCHW", "OIHW", "NCHW"))


def encoder_forward_ref(x, params, noise_key, is_training=True):
    if is_training:
        x = x + 0.01 * jax.random.normal(noise_key, x.shape, x.dtype)
    leaky = lambda v: jnp.where(v >= 0.0, v, LEAKY_SLOPE * v)

    x = leaky(_conv_ref(x, params["w1"], 2, 2))
    for w, g, b, s, p in [(params["w2"], params["g2"], params["b2"], 2, 2),
                          (params["w3"], params["g3"], params["b3"], 2, 2),
                          (params["w4"], params["g4"], params["b4"], 2, 1)]:
        y = _conv_ref(x, w, s, p)
        mean = jnp.mean(y, axis=(0, 2, 3), keepdims=True)
        var = jnp.mean(jnp.square(y - mean), axis=(0, 2, 3), keepdims=True)
        y = (y - mean) / jnp.sqrt(var + BN_EPS)
        y = y * g.reshape(1, -1, 1, 1) + b.reshape(1, -1, 1, 1)
        x = leaky(y)
    return _conv_ref(x, params["w5"], 1, 0)


# ---------------------------------- main ------------------------------------

if __name__ == "__main__":
    key = jax.random.PRNGKey(0)
    k_param, k_x, k_noise = jax.random.split(key, 3)

    params = init_params(k_param)
    # MNIST-like input: batch=2, 1 channel, 28x28
    x = jax.random.normal(k_x, (2, NC, 28, 28), jnp.float32)

    out = encoder_forward_pallas(x, params, k_noise, is_training=True)
    out = jax.block_until_ready(out)
    assert out.shape == (2, NZ, 1, 1), out.shape

    ref = jax.block_until_ready(encoder_forward_ref(x, params, k_noise, True))
    # bf16 matmul operands / activations (f32 accumulation, f32 BN stats) vs
    # the all-f32 XLA reference: allow a few-percent tolerance.
    if not jnp.allclose(out, ref, rtol=5e-2, atol=5e-2):
        max_err = float(jnp.max(jnp.abs(out - ref)))
        raise AssertionError(
            f"Pallas encoder output mismatch vs JAX reference (max|diff|={max_err})")

    print("KERNEL_OK")
</pallas_src>

<mosaic_0001>
module attributes {stable_mosaic.version = 11 : i64} {
  func.func @_conv_kernel(%arg0: i32, %arg1: i32, %arg2: memref<256x9xbf16, #tpu.memory_space<vmem>>, %arg3: memref<9x128xbf16, #tpu.memory_space<vmem>>, %arg4: memref<256x128xbf16, #tpu.memory_space<vmem>>) attributes {dimension_semantics = [#tpu.dimension_semantics<parallel>, #tpu.dimension_semantics<arbitrary>], iteration_bounds = array<i64: 2, 1>, scalar_prefetch = 0 : i64, scratch_operands = 0 : i64, tpu.core_type = #tpu.core_type<tc>, window_params = [{transform_indices = @transform_0, window_bounds = array<i64: 256, 9>}, {transform_indices = @transform_1, window_bounds = array<i64: 9, 128>}, {transform_indices = @transform_2, window_bounds = array<i64: 256, 128>}]} {
    %c0 = arith.constant 0 : index
    %c0_0 = arith.constant 0 : index
    %0 = vector.load %arg2[%c0, %c0_0] : memref<256x9xbf16, #tpu.memory_space<vmem>>, vector<256x9xbf16>
    %c0_1 = arith.constant 0 : index
    %c0_2 = arith.constant 0 : index
    %1 = vector.load %arg3[%c0_1, %c0_2] : memref<9x128xbf16, #tpu.memory_space<vmem>>, vector<9x128xbf16>
    %cst = arith.constant dense<0.000000e+00> : vector<256x128xf32>
    %2 = tpu.matmul %0, %1, %cst {dimension_numbers = #tpu.dot_dimension_numbers<[1], [0], [0], [1], [0, 0, 1, 1], [], []>} : vector<256x9xbf16>, vector<9x128xbf16>, vector<256x128xf32> -> vector<256x128xf32>
    %cst_3 = arith.constant 0.000000e+00 : f32
    %3 = vector.broadcast %cst_3 : f32 to vector<256x128xf32>
    %4 = arith.cmpf oge, %2, %3 : vector<256x128xf32>
    %cst_4 = arith.constant 2.000000e-01 : f32
    %5 = vector.broadcast %cst_4 : f32 to vector<256x128xf32>
    %6 = arith.mulf %5, %2 : vector<256x128xf32>
    %7 = arith.select %4, %2, %6 : vector<256x128xi1>, vector<256x128xf32>
    %8 = arith.truncf %7 : vector<256x128xf32> to vector<256x128xbf16>
    %c0_5 = arith.constant 0 : index
    %c0_6 = arith.constant 0 : index
    %9 = vector.load %arg4[%c0_5, %c0_6] : memref<256x128xbf16, #tpu.memory_space<vmem>>, vector<256x128xbf16>
    tpu.vector_store %arg4[%c0_5, %c0_6], %8 {strides = array<i32>} : memref<256x128xbf16, #tpu.memory_space<vmem>>, vector<256x128xbf16>,
    return
  }
  func.func @transform_0(%arg0: i32, %arg1: i32) -> (i32, i32) {
    %c0_i32 = arith.constant 0 : i32
    return %arg0, %arg1 : i32, i32
  }
  func.func @transform_1(%arg0: i32, %arg1: i32) -> (i32, i32) {
    %c0_i32 = arith.constant 0 : i32
    %c0_i32_0 = arith.constant 0 : i32
    return %arg1, %c0_i32 : i32, i32
  }
  func.func @transform_2(%arg0: i32, %arg1: i32) -> (i32, i32) {
    %c0_i32 = arith.constant 0 : i32
    %c0_i32_0 = arith.constant 0 : i32
    return %arg0, %c0_i32 : i32, i32
  }
}

module attributes {stable_mosaic.version = 11 : i64} {
  func.func @_conv_kernel(%arg0: i32, %arg1: i32, %arg2: memref<168x576xbf16, #tpu.memory_space<vmem>>, %arg3: memref<576x128xbf16, #tpu.memory_space<vmem>>, %arg4: memref<168x128xf32, #tpu.memory_space<vmem>>, %arg5: memref<1x2x128xf32, #tpu.memory_space<vmem>>) attributes {dimension_semantics = [#tpu.dimension_semantics<parallel>, #tpu.dimension_semantics<arbitrary>], iteration_bounds = array<i64: 1, 1>, scalar_prefetch = 0 : i64, scratch_operands = 0 : i64, tpu.core_type = #tpu.core_type<tc>, window_params = [{transform_indices = @transform_0, window_bounds = array<i64: 168, 576>}, {transform_indices = @transform_1, window_bounds = array<i64: 576, 128>}, {transform_indices = @transform_2, window_bounds = array<i64: 168, 128>}, {transform_indices = @transform_3, window_bounds = array<i64: 1, 2, 128>}]} {
    %c0 = arith.constant 0 : index
    %c0_0 = arith.constant 0 : index
    %0 = vector.load %arg2[%c0, %c0_0] : memref<168x576xbf16, #tpu.memory_space<vmem>>, vector<168x576xbf16>
    %c0_1 = arith.constant 0 : index
    %c0_2 = arith.constant 0 : index
    %1 = vector.load %arg3[%c0_1, %c0_2] : memref<576x128xbf16, #tpu.memory_space<vmem>>, vector<576x128xbf16>
    %cst = arith.constant dense<0.000000e+00> : vector<168x128xf32>
    %2 = tpu.matmul %0, %1, %cst {dimension_numbers = #tpu.dot_dimension_numbers<[1], [0], [0], [1], [0, 0, 1, 1], [], []>} : vector<168x576xbf16>, vector<576x128xbf16>, vector<168x128xf32> -> vector<168x128xf32>
    %cst_3 = arith.constant dense<0.000000e+00> : vector<128xf32>
    %3 = vector.multi_reduction <add>, %2, %cst_3 [0] : vector<168x128xf32> to vector<128xf32>
    %4 = vector.shape_cast %3 : vector<128xf32> to vector<1x128xf32>
    %5 = arith.mulf %2, %2 : vector<168x128xf32>
    %cst_4 = arith.constant dense<0.000000e+00> : vector<128xf32>
    %6 = vector.multi_reduction <add>, %5, %cst_4 [0] : vector<168x128xf32> to vector<128xf32>
    %7 = vector.shape_cast %6 : vector<128xf32> to vector<1x128xf32>
    %8 = tpu.concatenate %4, %7 in 0 : vector<1x128xf32>, vector<1x128xf32> -> vector<2x128xf32>
    %9 = vector.shape_cast %8 : vector<2x128xf32> to vector<1x2x128xf32>
    %c0_5 = arith.constant 0 : index
    %c0_6 = arith.constant 0 : index
    %c0_7 = arith.constant 0 : index
    %10 = vector.load %arg5[%c0_5, %c0_6, %c0_7] : memref<1x2x128xf32, #tpu.memory_space<vmem>>, vector<1x2x128xf32>
    tpu.vector_store %arg5[%c0_5, %c0_6, %c0_7], %9 {strides = array<i32>} : memref<1x2x128xf32, #tpu.memory_space<vmem>>, vector<1x2x128xf32>,
    %c0_8 = arith.constant 0 : index
    %c0_9 = arith.constant 0 : index
    %11 = vector.load %arg4[%c0_8, %c0_9] : memref<168x128xf32, #tpu.memory_space<vmem>>, vector<168x128xf32>
    tpu.vector_store %arg4[%c0_8, %c0_9], %2 {strides = array<i32>} : memref<168x128xf32, #tpu.memory_space<vmem>>, vector<168x128xf32>,
    return
  }
  func.func @transform_0(%arg0: i32, %arg1: i32) -> (i32, i32) {
    %c0_i32 = arith.constant 0 : i32
    return %arg0, %arg1 : i32, i32
  }
  func.func @transform_1(%arg0: i32, %arg1: i32) -> (i32, i32) {
    %c0_i32 = arith.constant 0 : i32
    %c0_i32_0 = arith.constant 0 : i32
    return %arg1, %c0_i32 : i32, i32
  }
  func.func @transform_2(%arg0: i32, %arg1: i32) -> (i32, i32) {
    %c0_i32 = arith.constant 0 : i32
    %c0_i32_0 = arith.constant 0 : i32
    return %arg0, %c0_i32 : i32, i32
  }
  func.func @transform_3(%arg0: i32, %arg1: i32) -> (i32, i32, i32) {
    %c0_i32 = arith.constant 0 : i32
    %c0_i32_0 = arith.constant 0 : i32
    %c0_i32_1 = arith.constant 0 : i32
    return %arg0, %c0_i32, %c0_i32_0 : i32, i32, i32
  }
}

module attributes {stable_mosaic.version = 11 : i64} {
  func.func @_conv_kernel(%arg0: i32, %arg1: i32, %arg2: memref<72x1152xbf16, #tpu.memory_space<vmem>>, %arg3: memref<1152x256xbf16, #tpu.memory_space<vmem>>, %arg4: memref<72x256xf32, #tpu.memory_space<vmem>>, %arg5: memref<1x2x256xf32, #tpu.memory_space<vmem>>) attributes {dimension_semantics = [#tpu.dimension_semantics<parallel>, #tpu.dimension_semantics<arbitrary>], iteration_bounds = array<i64: 1, 1>, scalar_prefetch = 0 : i64, scratch_operands = 0 : i64, tpu.core_type = #tpu.core_type<tc>, window_params = [{transform_indices = @transform_0, window_bounds = array<i64: 72, 1152>}, {transform_indices = @transform_1, window_bounds = array<i64: 1152, 256>}, {transform_indices = @transform_2, window_bounds = array<i64: 72, 256>}, {transform_indices = @transform_3, window_bounds = array<i64: 1, 2, 256>}]} {
    %c0 = arith.constant 0 : index
    %c0_0 = arith.constant 0 : index
    %0 = vector.load %arg2[%c0, %c0_0] : memref<72x1152xbf16, #tpu.memory_space<vmem>>, vector<72x1152xbf16>
    %c0_1 = arith.constant 0 : index
    %c0_2 = arith.constant 0 : index
    %1 = vector.load %arg3[%c0_1, %c0_2] : memref<1152x256xbf16, #tpu.memory_space<vmem>>, vector<1152x256xbf16>
    %cst = arith.constant dense<0.000000e+00> : vector<72x256xf32>
    %2 = tpu.matmul %0, %1, %cst {dimension_numbers = #tpu.dot_dimension_numbers<[1], [0], [0], [1], [0, 0, 1, 1], [], []>} : vector<72x1152xbf16>, vector<1152x256xbf16>, vector<72x256xf32> -> vector<72x256xf32>
    %cst_3 = arith.constant dense<0.000000e+00> : vector<256xf32>
    %3 = vector.multi_reduction <add>, %2, %cst_3 [0] : vector<72x256xf32> to vector<256xf32>
    %4 = vector.shape_cast %3 : vector<256xf32> to vector<1x256xf32>
    %5 = arith.mulf %2, %2 : vector<72x256xf32>
    %cst_4 = arith.constant dense<0.000000e+00> : vector<256xf32>
    %6 = vector.multi_reduction <add>, %5, %cst_4 [0] : vector<72x256xf32> to vector<256xf32>
    %7 = vector.shape_cast %6 : vector<256xf32> to vector<1x256xf32>
    %8 = tpu.concatenate %4, %7 in 0 : vector<1x256xf32>, vector<1x256xf32> -> vector<2x256xf32>
    %9 = vector.shape_cast %8 : vector<2x256xf32> to vector<1x2x256xf32>
    %c0_5 = arith.constant 0 : index
    %c0_6 = arith.constant 0 : index
    %c0_7 = arith.constant 0 : index
    %10 = vector.load %arg5[%c0_5, %c0_6, %c0_7] : memref<1x2x256xf32, #tpu.memory_space<vmem>>, vector<1x2x256xf32>
    tpu.vector_store %arg5[%c0_5, %c0_6, %c0_7], %9 {strides = array<i32>} : memref<1x2x256xf32, #tpu.memory_space<vmem>>, vector<1x2x256xf32>,
    %c0_8 = arith.constant 0 : index
    %c0_9 = arith.constant 0 : index
    %11 = vector.load %arg4[%c0_8, %c0_9] : memref<72x256xf32, #tpu.memory_space<vmem>>, vector<72x256xf32>
    tpu.vector_store %arg4[%c0_8, %c0_9], %2 {strides = array<i32>} : memref<72x256xf32, #tpu.memory_space<vmem>>, vector<72x256xf32>,
    return
  }
  func.func @transform_0(%arg0: i32, %arg1: i32) -> (i32, i32) {
    %c0_i32 = arith.constant 0 : i32
    return %arg0, %arg1 : i32, i32
  }
  func.func @transform_1(%arg0: i32, %arg1: i32) -> (i32, i32) {
    %c0_i32 = arith.constant 0 : i32
    %c0_i32_0 = arith.constant 0 : i32
    return %arg1, %c0_i32 : i32, i32
  }
  func.func @transform_2(%arg0: i32, %arg1: i32) -> (i32, i32) {
    %c0_i32 = arith.constant 0 : i32
    %c0_i32_0 = arith.constant 0 : i32
    return %arg0, %c0_i32 : i32, i32
  }
  func.func @transform_3(%arg0: i32, %arg1: i32) -> (i32, i32, i32) {
    %c0_i32 = arith.constant 0 : i32
    %c0_i32_0 = arith.constant 0 : i32
    %c0_i32_1 = arith.constant 0 : i32
    return %arg0, %c0_i32, %c0_i32_0 : i32, i32, i32
  }
}

module attributes {stable_mosaic.version = 11 : i64} {
  func.func @_conv_kernel(%arg0: i32, %arg1: i32, %arg2: memref<24x2304xbf16, #tpu.memory_space<vmem>>, %arg3: memref<2304x512xbf16, #tpu.memory_space<vmem>>, %arg4: memref<24x512xf32, #tpu.memory_space<vmem>>, %arg5: memref<1x2x512xf32, #tpu.memory_space<vmem>>) attributes {dimension_semantics = [#tpu.dimension_semantics<parallel>, #tpu.dimension_semantics<arbitrary>], iteration_bounds = array<i64: 1, 1>, scalar_prefetch = 0 : i64, scratch_operands = 0 : i64, tpu.core_type = #tpu.core_type<tc>, window_params = [{transform_indices = @transform_0, window_bounds = array<i64: 24, 2304>}, {transform_indices = @transform_1, window_bounds = array<i64: 2304, 512>}, {transform_indices = @transform_2, window_bounds = array<i64: 24, 512>}, {transform_indices = @transform_3, window_bounds = array<i64: 1, 2, 512>}]} {
    %c0 = arith.constant 0 : index
    %c0_0 = arith.constant 0 : index
    %0 = vector.load %arg2[%c0, %c0_0] : memref<24x2304xbf16, #tpu.memory_space<vmem>>, vector<24x2304xbf16>
    %c0_1 = arith.constant 0 : index
    %c0_2 = arith.constant 0 : index
    %1 = vector.load %arg3[%c0_1, %c0_2] : memref<2304x512xbf16, #tpu.memory_space<vmem>>, vector<2304x512xbf16>
    %cst = arith.constant dense<0.000000e+00> : vector<24x512xf32>
    %2 = tpu.matmul %0, %1, %cst {dimension_numbers = #tpu.dot_dimension_numbers<[1], [0], [0], [1], [0, 0, 1, 1], [], []>} : vector<24x2304xbf16>, vector<2304x512xbf16>, vector<24x512xf32> -> vector<24x512xf32>
    %cst_3 = arith.constant dense<0.000000e+00> : vector<512xf32>
    %3 = vector.multi_reduction <add>, %2, %cst_3 [0] : vector<24x512xf32> to vector<512xf32>
    %4 = vector.shape_cast %3 : vector<512xf32> to vector<1x512xf32>
    %5 = arith.mulf %2, %2 : vector<24x512xf32>
    %cst_4 = arith.constant dense<0.000000e+00> : vector<512xf32>
    %6 = vector.multi_reduction <add>, %5, %cst_4 [0] : vector<24x512xf32> to vector<512xf32>
    %7 = vector.shape_cast %6 : vector<512xf32> to vector<1x512xf32>
    %8 = tpu.concatenate %4, %7 in 0 : vector<1x512xf32>, vector<1x512xf32> -> vector<2x512xf32>
    %9 = vector.shape_cast %8 : vector<2x512xf32> to vector<1x2x512xf32>
    %c0_5 = arith.constant 0 : index
    %c0_6 = arith.constant 0 : index
    %c0_7 = arith.constant 0 : index
    %10 = vector.load %arg5[%c0_5, %c0_6, %c0_7] : memref<1x2x512xf32, #tpu.memory_space<vmem>>, vector<1x2x512xf32>
    tpu.vector_store %arg5[%c0_5, %c0_6, %c0_7], %9 {strides = array<i32>} : memref<1x2x512xf32, #tpu.memory_space<vmem>>, vector<1x2x512xf32>,
    %c0_8 = arith.constant 0 : index
    %c0_9 = arith.constant 0 : index
    %11 = vector.load %arg4[%c0_8, %c0_9] : memref<24x512xf32, #tpu.memory_space<vmem>>, vector<24x512xf32>
    tpu.vector_store %arg4[%c0_8, %c0_9], %2 {strides = array<i32>} : memref<24x512xf32, #tpu.memory_space<vmem>>, vector<24x512xf32>,
    return
  }
  func.func @transform_0(%arg0: i32, %arg1: i32) -> (i32, i32) {
    %c0_i32 = arith.constant 0 : i32
    return %arg0, %arg1 : i32, i32
  }
  func.func @transform_1(%arg0: i32, %arg1: i32) -> (i32, i32) {
    %c0_i32 = arith.constant 0 : i32
    %c0_i32_0 = arith.constant 0 : i32
    return %arg1, %c0_i32 : i32, i32
  }
  func.func @transform_2(%arg0: i32, %arg1: i32) -> (i32, i32) {
    %c0_i32 = arith.constant 0 : i32
    %c0_i32_0 = arith.constant 0 : i32
    return %arg0, %c0_i32 : i32, i32
  }
  func.func @transform_3(%arg0: i32, %arg1: i32) -> (i32, i32, i32) {
    %c0_i32 = arith.constant 0 : i32
    %c0_i32_0 = arith.constant 0 : i32
    %c0_i32_1 = arith.constant 0 : i32
    return %arg0, %c0_i32, %c0_i32_0 : i32, i32, i32
  }
}

module attributes {stable_mosaic.version = 11 : i64} {
  func.func @_conv_kernel(%arg0: i32, %arg1: i32, %arg2: memref<8x2304xf32, #tpu.memory_space<vmem>>, %arg3: memref<2304x128xbf16, #tpu.memory_space<vmem>>, %arg4: memref<1x2304xf32, #tpu.memory_space<vmem>>, %arg5: memref<1x2304xf32, #tpu.memory_space<vmem>>, %arg6: memref<8x128xf32, #tpu.memory_space<vmem>>, %arg7: memref<8x128xf32, #tpu.memory_space<vmem>>) attributes {dimension_semantics = [#tpu.dimension_semantics<parallel>, #tpu.dimension_semantics<arbitrary>], iteration_bounds = array<i64: 1, 2>, scalar_prefetch = 0 : i64, scratch_operands = 1 : i64, tpu.core_type = #tpu.core_type<tc>, window_params = [{transform_indices = @transform_0, window_bounds = array<i64: 8, 2304>}, {transform_indices = @transform_1, window_bounds = array<i64: 2304, 128>}, {transform_indices = @transform_2, window_bounds = array<i64: 1, 2304>}, {transform_indices = @transform_3, window_bounds = array<i64: 1, 2304>}, {transform_indices = @transform_4, window_bounds = array<i64: 8, 128>}]} {
    %c0 = arith.constant 0 : index
    %c0_0 = arith.constant 0 : index
    %0 = vector.load %arg2[%c0, %c0_0] : memref<8x2304xf32, #tpu.memory_space<vmem>>, vector<8x2304xf32>
    %c0_1 = arith.constant 0 : index
    %c0_2 = arith.constant 0 : index
    %1 = vector.load %arg4[%c0_1, %c0_2] : memref<1x2304xf32, #tpu.memory_space<vmem>>, vector<1x2304xf32>
    %2 = vector.broadcast %1 : vector<1x2304xf32> to vector<8x2304xf32>
    %3 = arith.mulf %0, %2 : vector<8x2304xf32>
    %c0_3 = arith.constant 0 : index
    %c0_4 = arith.constant 0 : index
    %4 = vector.load %arg5[%c0_3, %c0_4] : memref<1x2304xf32, #tpu.memory_space<vmem>>, vector<1x2304xf32>
    %5 = vector.broadcast %4 : vector<1x2304xf32> to vector<8x2304xf32>
    %6 = arith.addf %3, %5 : vector<8x2304xf32>
    %cst = arith.constant 0.000000e+00 : f32
    %7 = vector.broadcast %cst : f32 to vector<8x2304xf32>
    %8 = arith.cmpf oge, %6, %7 : vector<8x2304xf32>
    %cst_5 = arith.constant 2.000000e-01 : f32
    %9 = vector.broadcast %cst_5 : f32 to vector<8x2304xf32>
    %10 = arith.mulf %9, %6 : vector<8x2304xf32>
    %11 = arith.select %8, %6, %10 : vector<8x2304xi1>, vector<8x2304xf32>
    %12 = arith.truncf %11 : vector<8x2304xf32> to vector<8x2304xbf16>
    %c0_6 = arith.constant 0 : index
    %c0_7 = arith.constant 0 : index
    %13 = vector.load %arg3[%c0_6, %c0_7] : memref<2304x128xbf16, #tpu.memory_space<vmem>>, vector<2304x128xbf16>
    %cst_8 = arith.constant dense<0.000000e+00> : vector<8x128xf32>
    %14 = tpu.matmul %12, %13, %cst_8 {dimension_numbers = #tpu.dot_dimension_numbers<[1], [0], [0], [1], [0, 0, 1, 1], [], []>} : vector<8x2304xbf16>, vector<2304x128xbf16>, vector<8x128xf32> -> vector<8x128xf32>
    %c0_i32 = arith.constant 0 : i32
    %15 = arith.cmpi eq, %arg1, %c0_i32 : i32
    %16 = arith.extui %15 : i1 to i32
    %c0_i32_9 = arith.constant 0 : i32
    %17 = arith.cmpi ne, %16, %c0_i32_9 : i32
    scf.if %17 {
      %cst_15 = arith.constant 0.000000e+00 : f32
      %24 = vector.broadcast %cst_15 : f32 to vector<8x128xf32>
      %c0_16 = arith.constant 0 : index
      %c0_17 = arith.constant 0 : index
      %25 = vector.load %arg7[%c0_16, %c0_17] : memref<8x128xf32, #tpu.memory_space<vmem>>, vector<8x128xf32>
      tpu.vector_store %arg7[%c0_16, %c0_17], %24 {strides = array<i32>} : memref<8x128xf32, #tpu.memory_space<vmem>>, vector<8x128xf32>,
    } else {
    }
    %c0_10 = arith.constant 0 : index
    %c0_11 = arith.constant 0 : index
    %18 = vector.load %arg7[%c0_10, %c0_11] : memref<8x128xf32, #tpu.memory_space<vmem>>, vector<8x128xf32>
    %19 = arith.addf %18, %14 : vector<8x128xf32>
    %c0_12 = arith.constant 0 : index
    %c0_13 = arith.constant 0 : index
    %20 = vector.load %arg7[%c0_12, %c0_13] : memref<8x128xf32, #tpu.memory_space<vmem>>, vector<8x128xf32>
    tpu.vector_store %arg7[%c0_12, %c0_13], %19 {strides = array<i32>} : memref<8x128xf32, #tpu.memory_space<vmem>>, vector<8x128xf32>,
    %c1_i32 = arith.constant 1 : i32
    %21 = arith.cmpi eq, %arg1, %c1_i32 : i32
    %22 = arith.extui %21 : i1 to i32
    %c0_i32_14 = arith.constant 0 : i32
    %23 = arith.cmpi ne, %22, %c0_i32_14 : i32
    scf.if %23 {
      %c0_15 = arith.constant 0 : index
      %c0_16 = arith.constant 0 : index
      %24 = vector.load %arg7[%c0_15, %c0_16] : memref<8x128xf32, #tpu.memory_space<vmem>>, vector<8x128xf32>
      %c0_17 = arith.constant 0 : index
      %c0_18 = arith.constant 0 : index
      %25 = vector.load %arg6[%c0_17, %c0_18] : memref<8x128xf32, #tpu.memory_space<vmem>>, vector<8x128xf32>
      tpu.vector_store %arg6[%c0_17, %c0_18], %24 {strides = array<i32>} : memref<8x128xf32, #tpu.memory_space<vmem>>, vector<8x128xf32>,
    } else {
    }
    return
  }
  func.func @transform_0(%arg0: i32, %arg1: i32) -> (i32, i32) {
    %c0_i32 = arith.constant 0 : i32
    return %arg0, %arg1 : i32, i32
  }
  func.func @transform_1(%arg0: i32, %arg1: i32) -> (i32, i32) {
    %c0_i32 = arith.constant 0 : i32
    %c0_i32_0 = arith.constant 0 : i32
    return %arg1, %c0_i32 : i32, i32
  }
  func.func @transform_2(%arg0: i32, %arg1: i32) -> (i32, i32) {
    %c0_i32 = arith.constant 0 : i32
    %c0_i32_0 = arith.constant 0 : i32
    return %c0_i32, %arg1 : i32, i32
  }
  func.func @transform_3(%arg0: i32, %arg1: i32) -> (i32, i32) {
    %c0_i32 = arith.constant 0 : i32
    %c0_i32_0 = arith.constant 0 : i32
    return %c0_i32, %arg1 : i32, i32
  }
  func.func @transform_4(%arg0: i32, %arg1: i32) -> (i32, i32) {
    %c0_i32 = arith.constant 0 : i32
    %c0_i32_0 = arith.constant 0 : i32
    return %arg0, %c0_i32 : i32, i32
  }
}

</mosaic_0001>

<llo_original>
// kernel: encoder_forward_pallas.5
$region0: #{encoder_forward_pallas.5}
  #allocation0 [shape = 'u32[]', space=smem, size = 0x4, offset = 0x4, fixed_abs, tag = 'smem constant byte address 0x4 - core index']
  #allocation1 [shape = 'u32[144,128]{1,0:T(1,128)}', space=vmem, size = 0x12000, scoped, tag = 'internal scratch']
  %s0 = inlined_call_operand.vmem [shape: bf16[512,9], index: 0, kind: input, shape index: {}]
  %s1 = inlined_call_operand.vmem [shape: bf16[9,128], index: 1, kind: input, shape index: {}]
  %s2 = inlined_call_operand.vmem [shape: bf16[512,128], index: 2, kind: output, shape index: {}]
  %s3 = sld [smem:[#allocation0]]
  $region41: #{encoder_forward_pallas.5} parent=0
    _
  %s5 = ssub.s32 1, %s3
  %s6 = scalar_select 0, %s5, %s3
  loop: start=0, step=1, limit=4
  $region2: #{encoder_forward_pallas.5} parent=0 // loop_pre_header
    _
  $region3: #{encoder_forward_pallas.5} parent=0 // loop_header
    %s8 = sphi 0, %s12
    %p9 = scmp.ge.s32.totalorder %s8, 4
    %s15 = sphi 0, %s27
    %s16 = sphi 0, %s23
    %s17 = sphi 0, %s15
    %s18 = sphi 0, %s16
    %s19 = sphi 0, %s17
    %s20 = sphi 0, %s18
    %s32 = sphi 0, %s34
    %s35 = sphi 0, %s32
    %s36 = sphi 0, %s35
    %s52 = sphi 0, %s36
    %s58 = sphi 0, %s60
    %s61 = sphi 0, %s58
    %s62 = sphi 0, %s61
    %s78 = sphi 0, %s62
    %s84 = sphi 0, %s86
    %s87 = sphi 0, %s84
    %s88 = sphi 0, %s87
    %s104 = sphi 0, %s88
  $region4: #{encoder_forward_pallas.5} parent=0 // loop_header_branch
    %11 = sbr.rel (%p9) target = $region8
  $region5: #{encoder_forward_pallas.5} parent=0 // loop_body
    %s13 = ssub.s32 %s8, 1
    %s14 = ssub.s32 %s8, 2
    %s21 = sadd.s32 1, %s16
    %p22 = scmp.ge.s32.totalorder %s21, 1
    %s23 = scalar_select %p22, 0, %s21
    %s24 = sadd.s32 1, %s15
    %s25 = scalar_select %p22, %s24, %s15
    %p26 = scmp.ge.s32.totalorder %s25, 2
    %s27 = scalar_select %p26, 0, %s25
    %s28 = ssub.s32 %s15, %s27
    %s29 = ssub.s32 %s16, %s23
    %s30 = sor.u32 %s28, %s29
    %p31 = scmp.eq.s32.totalorder %s30, 0
    %s33 = sadd.s32 %s32, 1
    %s34 = scalar_select %p31, %s32, %s33
    %p37 = pneg %p31
    %p38 = scmp.eq.s32.totalorder %s8, 1
    %p39 = por %p37, %p38
    %p40 = scmp.ne.s32.totalorder %s32, %s35
    %p41 = scmp.eq.s32.totalorder %s8, 0
    %p42 = por %p40, %p41
    %p43 = scmp.ne.s32.totalorder %s32, %s35
    %p44 = scmp.eq.s32.totalorder %s13, 1
    %p45 = por %p43, %p44
    %p46 = scmp.ne.s32.totalorder %s35, %s36
    %p47 = scmp.eq.s32.totalorder %s13, 0
    %p48 = por %p46, %p47
    %p49 = scmp.ne.s32.totalorder %s35, %s36
    %p50 = scmp.eq.s32.totalorder %s14, 1
    %p51 = por %p49, %p50
    %p53 = scmp.ne.s32.totalorder %s36, %s52
    %p54 = scmp.eq.s32.totalorder %s14, 0
    %p55 = por %p53, %p54
    %s56 = ssub.s32 %s16, %s23
    %p57 = scmp.eq.s32.totalorder %s56, 0
    %s59 = sadd.s32 %s58, 1
    %s60 = scalar_select %p57, %s58, %s59
    %p63 = pneg %p57
    %p64 = scmp.eq.s32.totalorder %s8, 1
    %p65 = por %p63, %p64
    %p66 = scmp.ne.s32.totalorder %s58, %s61
    %p67 = scmp.eq.s32.totalorder %s8, 0
    %p68 = por %p66, %p67
    %p69 = scmp.ne.s32.totalorder %s58, %s61
    %p70 = scmp.eq.s32.totalorder %s13, 1
    %p71 = por %p69, %p70
    %p72 = scmp.ne.s32.totalorder %s61, %s62
    %p73 = scmp.eq.s32.totalorder %s13, 0
    %p74 = por %p72, %p73
    %p75 = scmp.ne.s32.totalorder %s61, %s62
    %p76 = scmp.eq.s32.totalorder %s14, 1
    %p77 = por %p75, %p76
    %p79 = scmp.ne.s32.totalorder %s62, %s78
    %p80 = scmp.eq.s32.totalorder %s14, 0
    %p81 = por %p79, %p80
    %s82 = ssub.s32 %s15, %s27
    %p83 = scmp.eq.s32.totalorder %s82, 0
    %s85 = sadd.s32 %s84, 1
    %s86 = scalar_select %p83, %s84, %s85
    %p89 = pneg %p83
    %p90 = scmp.eq.s32.totalorder %s8, 1
    %p91 = por %p89, %p90
    %p92 = scmp.ne.s32.totalorder %s84, %s87
    %p93 = scmp.eq.s32.totalorder %s8, 0
    %p94 = por %p92, %p93
    %p95 = scmp.ne.s32.totalorder %s84, %s87
    %p96 = scmp.eq.s32.totalorder %s13, 1
    %p97 = por %p95, %p96
    %p98 = scmp.ne.s32.totalorder %s87, %s88
    %p99 = scmp.eq.s32.totalorder %s13, 0
    %p100 = por %p98, %p99
    %p101 = scmp.ne.s32.totalorder %s87, %s88
    %p102 = scmp.eq.s32.totalorder %s14, 1
    %p103 = por %p101, %p102
    %p105 = scmp.ne.s32.totalorder %s88, %s104
    %p106 = scmp.eq.s32.totalorder %s14, 0
    %p107 = por %p105, %p106
    %p108 = scmp.le.s32.totalorder 1, %s8
    %p109 = scmp.lt.s32.totalorder %s8, 3
    %p110 = pnand %p108, %p109
    %p111 = pneg %p110
    // Predicated region
    $region9: #{encoder_forward_pallas.5} parent=5 // pred_check
      _
    $region10: #{encoder_forward_pallas.5} parent=5 // pred_check_branch
      %113 = sbr.rel (%p110) target = $region12
    $region11: #{encoder_forward_pallas.5} parent=5 // pred_region
      %s114 = ssub.s32 %s8, 1
      // Predicated region
      $region13: #{encoder_forward_pallas.5} parent=11 // pred_check
        %p115 = pneg %p74
      $region14: #{encoder_forward_pallas.5} parent=11 // pred_check_branch
        %117 = sbr.rel (%p115) target = $region16
      $region15: #{encoder_forward_pallas.5} parent=11 // pred_region
        %s118 = smul.u32 2, %s18
        %p119 = scmp.lt.s32.totalorder %s118, 1
        %s120 = scalar_select %p119, %s118, 1
        %s121 = smul.addr %s120, 4
        %s122 = scalar_lea.vmem %s1, %s121
        %s123 = smul.u32 2, %s18
      $region16: #{encoder_forward_pallas.5} parent=11 // pred_fallthru
        _
    $region12: #{encoder_forward_pallas.5} parent=5 // pred_fallthru
      _
    %p124 = scmp.lt.s32.totalorder %s8, 2
    // Predicated region
    $region17: #{encoder_forward_pallas.5} parent=5 // pred_check
      %p125 = pneg %p124
    $region18: #{encoder_forward_pallas.5} parent=5 // pred_check_branch
      %127 = sbr.rel (%p125) target = $region20
    $region19: #{encoder_forward_pallas.5} parent=5 // pred_region
      // Predicated region
      $region21: #{encoder_forward_pallas.5} parent=19 // pred_check
        %p128 = pneg %p42
      $region22: #{encoder_forward_pallas.5} parent=19 // pred_check_branch
        %130 = sbr.rel (%p128) target = $region24
      $region23: #{encoder_forward_pallas.5} parent=19 // pred_region
        %s131 = smul.u32 32, %s15
        %p132 = scmp.lt.s32.totalorder %s131, 63
        %s133 = scalar_select %p132, %s131, 63
        %p134 = scmp.lt.s32.totalorder %s16, 0
        %s135 = scalar_select %p134, %s16, 0
        %s136 = sadd.s32 %s135, %s133
        %s137 = smul.addr %s136, 4
        %s138 = scalar_lea.vmem %s0, %s137
        %s139 = smul.u32 32, %s15
      $region24: #{encoder_forward_pallas.5} parent=19 // pred_fallthru
        _
    $region20: #{encoder_forward_pallas.5} parent=5 // pred_fallthru
      _
    %p140 = scmp.le.s32.totalorder 1, %s8
    %p141 = scmp.lt.s32.totalorder %s8, 3
    %p142 = pnand %p140, %p141
    %p143 = pneg %p142
    // Predicated region
    $region25: #{encoder_forward_pallas.5} parent=5 // pred_check
      _
    $region26: #{encoder_forward_pallas.5} parent=5 // pred_check_branch
      %145 = sbr.rel (%p142) target = $region28
    $region27: #{encoder_forward_pallas.5} parent=5 // pred_region
      %s146 = ssub.s32 %s8, 1
      %s147 = smul.u32 32, %s17
      %p148 = scmp.lt.s32.totalorder %s147, 63
      %s149 = scalar_select %p148, %s147, 63
      %p150 = scmp.lt.s32.totalorder %s18, 0
      %s151 = scalar_select %p150, %s18, 0
      %s152 = sadd.s32 %s151, %s149
      %s153 = smul.addr %s152, 4
      %s154 = scalar_lea.vmem %s0, %s153
      %p155 = pneg %p48
      %p156 = pneg %p45
      %s157 = smul.u32 2, %s18
      %p158 = scmp.lt.s32.totalorder %s157, 1
      %s159 = scalar_select %p158, %s157, 1
      %s160 = smul.addr %s159, 4
      %s161 = scalar_lea.vmem %s1, %s160
      %p162 = pneg %p74
      %p163 = pneg %p71
      %p164 = pneg %p100
      %p165 = pneg %p97
      %s166 = smul.u32 32, %s17
      %p167 = scmp.lt.s32.totalorder %s166, 63
      %s168 = scalar_select %p167, %s166, 63
      %s169 = smul.addr %s168, 4
      %s170 = scalar_lea.vmem %s2, %s169
      %s171 = smul.u32 32, %s17
      %p172 = scmp.lt.s32.totalorder %s171, 63
      %s173 = scalar_select %p172, %s171, 63
      %p174 = scmp.lt.s32.totalorder %s18, 0
      %s175 = scalar_select %p174, %s18, 0
      %s176 = sadd.s32 %s175, %s173
      %s177 = smul.addr %s176, 4
      %s178 = scalar_lea.vmem %s0, %s177
      %s179 = smul.u32 32, %s17
      %s180 = smul.u32 2, %s18
      %p181 = scmp.lt.s32.totalorder %s180, 1
      %s182 = scalar_select %p181, %s180, 1
      %s183 = smul.addr %s182, 4
      %s184 = scalar_lea.vmem %s1, %s183
      %s185 = smul.u32 2, %s18
      %s186 = smul.u32 32, %s17
      %p187 = scmp.lt.s32.totalorder %s186, 63
      %s188 = scalar_select %p187, %s186, 63
      %s189 = smul.addr %s188, 4
      %s190 = scalar_lea.vmem %s2, %s189
      %s191 = smul.u32 32, %s17
      %v193 = vld [vmem:[%s178] sm:$0xf]
      %v194 = vld [vmem:[%s178 + $0x4] sm:$0xf]
      %v195 = vld [vmem:[%s178 + $0x8] sm:$0xf]
      %v196 = vld [vmem:[%s178 + $0xc] sm:$0xf]
      %v197 = vld [vmem:[%s178 + $0x10] sm:$0xf]
      %v198 = vld [vmem:[%s178 + $0x14] sm:$0xf]
      %v199 = vld [vmem:[%s178 + $0x18] sm:$0xf]
      %v200 = vld [vmem:[%s178 + $0x1c] sm:$0xf]
      %v201 = vld [vmem:[%s178 + $0x20] sm:$0xf]
      %v202 = vld [vmem:[%s178 + $0x24] sm:$0xf]
      %v203 = vld [vmem:[%s178 + $0x28] sm:$0xf]
      %v204 = vld [vmem:[%s178 + $0x2c] sm:$0xf]
      %v205 = vld [vmem:[%s178 + $0x30] sm:$0xf]
      %v206 = vld [vmem:[%s178 + $0x34] sm:$0xf]
      %v207 = vld [vmem:[%s178 + $0x38] sm:$0xf]
      %v208 = vld [vmem:[%s178 + $0x3c] sm:$0xf]
      %v209 = vld [vmem:[%s178 + $0x40] sm:$0xf]
      %v210 = vld [vmem:[%s178 + $0x44] sm:$0xf]
      %v211 = vld [vmem:[%s178 + $0x48] sm:$0xf]
      %v212 = vld [vmem:[%s178 + $0x4c] sm:$0xf]
      %v213 = vld [vmem:[%s178 + $0x50] sm:$0xf]
      %v214 = vld [vmem:[%s178 + $0x54] sm:$0xf]
      %v215 = vld [vmem:[%s178 + $0x58] sm:$0xf]
      %v216 = vld [vmem:[%s178 + $0x5c] sm:$0xf]
      %v217 = vld [vmem:[%s178 + $0x60] sm:$0xf]
      %v218 = vld [vmem:[%s178 + $0x64] sm:$0xf]
      %v219 = vld [vmem:[%s178 + $0x68] sm:$0xf]
      %v220 = vld [vmem:[%s178 + $0x6c] sm:$0xf]
      %v221 = vld [vmem:[%s178 + $0x70] sm:$0xf]
      %v222 = vld [vmem:[%s178 + $0x74] sm:$0xf]
      %v223 = vld [vmem:[%s178 + $0x78] sm:$0xf]
      %v224 = vld [vmem:[%s178 + $0x7c] sm:$0xf]
      %v225 = vld [vmem:[%s184] sm:$0xf]
      %v226 = vld [vmem:[%s184 + $0x4] sm:$0x1]
      %v259 = vunpack.c.l.b16 %v193
      %v260 = vunpack.c.l.b16 %v194
      %v261 = vunpack.c.l.b16 %v195
      %v262 = vunpack.c.l.b16 %v196
      %v263 = vunpack.c.l.b16 %v197
      %v264 = vunpack.c.l.b16 %v198
      %v265 = vunpack.c.l.b16 %v199
      %v266 = vunpack.c.l.b16 %v200
      %v267 = vunpack.c.l.b16 %v201
      %v268 = vunpack.c.l.b16 %v202
      %v269 = vunpack.c.l.b16 %v203
      %v270 = vunpack.c.l.b16 %v204
      %v271 = vunpack.c.l.b16 %v205
      %v272 = vunpack.c.l.b16 %v206
      %v273 = vunpack.c.l.b16 %v207
      %v274 = vunpack.c.l.b16 %v208
      %v275 = vunpack.c.l.b16 %v209
      %v276 = vunpack.c.l.b16 %v210
      %v277 = vunpack.c.l.b16 %v211
      %v278 = vunpack.c.l.b16 %v212
      %v279 = vunpack.c.l.b16 %v213
      %v280 = vunpack.c.l.b16 %v214
      %v281 = vunpack.c.l.b16 %v215
      %v282 = vunpack.c.l.b16 %v216
      %v283 = vunpack.c.l.b16 %v217
      %v284 = vunpack.c.l.b16 %v218
      %v285 = vunpack.c.l.b16 %v219
      %v286 = vunpack.c.l.b16 %v220
      %v287 = vunpack.c.l.b16 %v221
      %v288 = vunpack.c.l.b16 %v222
      %v289 = vunpack.c.l.b16 %v223
      %v290 = vunpack.c.l.b16 %v224
      %v291 = vpack.c.b16 %v260, %v259
      %v292 = vpack.c.b16 %v262, %v261
      %v293 = vpack.c.b16 %v264, %v263
      %v294 = vpack.c.b16 %v266, %v265
      %v295 = vpack.c.b16 %v268, %v267
      %v296 = vpack.c.b16 %v270, %v269
      %v297 = vpack.c.b16 %v272, %v271
      %v298 = vpack.c.b16 %v274, %v273
      %v299 = vpack.c.b16 %v276, %v275
      %v300 = vpack.c.b16 %v278, %v277
      %v301 = vpack.c.b16 %v280, %v279
      %v302 = vpack.c.b16 %v282, %v281
      %v303 = vpack.c.b16 %v284, %v283
      %v304 = vpack.c.b16 %v286, %v285
      %v305 = vpack.c.b16 %v288, %v287
      %v306 = vpack.c.b16 %v290, %v289
      %v309 = vunpack.c.l.b16 %v225
      %v310 = vunpack.c.l.b16 %v226
      %v311 = vpack.c.b16 %v310, %v309
      %vm312 = vcmask 72704
      %v314 = vsel %vm312, %v291, 0
      %v317 = vsel %vm312, %v292, 0
      %v320 = vsel %vm312, %v293, 0
      %v323 = vsel %vm312, %v294, 0
      %v326 = vsel %vm312, %v295, 0
      %v329 = vsel %vm312, %v296, 0
      %v332 = vsel %vm312, %v297, 0
      %v335 = vsel %vm312, %v298, 0
      %v338 = vsel %vm312, %v299, 0
      %v341 = vsel %vm312, %v300, 0
      %v344 = vsel %vm312, %v301, 0
      %v347 = vsel %vm312, %v302, 0
      %v350 = vsel %vm312, %v303, 0
      %v353 = vsel %vm312, %v304, 0
      %v356 = vsel %vm312, %v305, 0
      %v359 = vsel %vm312, %v306, 0
      %vm361 = vcmask 1043456
      %vm362 = vcmask 1044480
      %v363 = vsel %vm361, 4294967295, 65535
      %v364 = vsel %vm362, %v363, 0
      %v366 = vand.u32 %v311, %v364
      %368 = vmatprep.subr.bf16.mxu0 0
      %369 = vmatpush1.bf16.msra.mxu0 0
      %370 = vmatprep.subr.bf16.mxu0 0
      %371 = vmatpush1.bf16.msra.mxu0 0
      %372 = vmatprep.subr.bf16.mxu0 0
      %373 = vmatpush1.bf16.msra.mxu0 0
      %374 = vmatprep.subr.bf16.mxu0 0
      %375 = vmatpush1.bf16.msra.mxu0 0
      %376 = vmatprep.subr.bf16.mxu0 0
      %377 = vmatpush1.bf16.msra.mxu0 0
      %378 = vmatprep.subr.bf16.mxu0 0
      %379 = vmatpush1.bf16.msra.mxu0 0
      %380 = vmatprep.subr.bf16.mxu0 0
      %381 = vmatpush1.bf16.msra.mxu0 0
      %382 = vmatprep.subr.bf16.mxu0 0
      %383 = vmatpush1.bf16.msra.mxu0 %v366
      %384 = vmatprep.subr.bf16.mxu0 0
      %385 = vmatpush2.bf16.msra.mxu0 0
      %386 = vmatprep.subr.bf16.mxu0 0
      %387 = vmatpush2.bf16.msra.mxu0 0
      %388 = vmatprep.subr.bf16.mxu0 0
      %389 = vmatpush2.bf16.msra.mxu0 0
      %390 = vmatprep.subr.bf16.mxu0 0
      %391 = vmatpush2.bf16.msra.mxu0 0
      %392 = vmatprep.subr.bf16.mxu0 0
      %393 = vmatpush2.bf16.msra.mxu0 0
      %394 = vmatprep.subr.bf16.mxu0 0
      %395 = vmatpush2.bf16.msra.mxu0 0
      %396 = vmatprep.subr.bf16.mxu0 0
      %397 = vmatpush2.bf16.msra.mxu0 0
      %398 = vmatprep.subr.bf16.mxu0 0
      %399 = vmatpush2.bf16.msra.mxu0 0
      %400 = vmatprep.mubr.bf16.mxu0 0
      %401 = vmatmul.mubr.bf16.gmra.mxu0 %v314
      %v402 = vpop.f32.mrf.mxu0
      %v403 = vadd.f32 0.0, %v402
      %v404 = vpop.f32.mrf.mxu0
      %v405 = vpop.f32.mrf.mxu0
      %v406 = vadd.f32 0.0, %v405
      %v407 = vpop.f32.mrf.mxu0
      %408 = vmatprep.mubr.bf16.mxu0 0
      %409 = vmatmul.mubr.bf16.gmra.mxu0 %v317
      %v410 = vpop.f32.mrf.mxu0
      %v411 = vadd.f32 0.0, %v410
      %v412 = vpop.f32.mrf.mxu0
      %v413 = vpop.f32.mrf.mxu0
      %v414 = vadd.f32 0.0, %v413
      %v415 = vpop.f32.mrf.mxu0
      %416 = vmatprep.mubr.bf16.mxu0 0
      %417 = vmatmul.mubr.bf16.gmra.mxu0 %v320
      %v418 = vpop.f32.mrf.mxu0
      %v419 = vadd.f32 0.0, %v418
      %v420 = vpop.f32.mrf.mxu0
      %v421 = vpop.f32.mrf.mxu0
      %v422 = vadd.f32 0.0, %v421
      %v423 = vpop.f32.mrf.mxu0
      %424 = vmatprep.mubr.bf16.mxu0 0
      %425 = vmatmul.mubr.bf16.gmra.mxu0 %v323
      %v426 = vpop.f32.mrf.mxu0
      %v427 = vadd.f32 0.0, %v426
      %v428 = vpop.f32.mrf.mxu0
      %v429 = vpop.f32.mrf.mxu0
      %v430 = vadd.f32 0.0, %v429
      %v431 = vpop.f32.mrf.mxu0
      %432 = vmatprep.mubr.bf16.mxu0 0
      %433 = vmatmul.mubr.bf16.gmra.mxu0 %v326
      %v434 = vpop.f32.mrf.mxu0
      %v435 = vadd.f32 0.0, %v434
      %v436 = vpop.f32.mrf.mxu0
      %v437 = vpop.f32.mrf.mxu0
      %v438 = vadd.f32 0.0, %v437
      %v439 = vpop.f32.mrf.mxu0
      %440 = vmatprep.mubr.bf16.mxu0 0
      %441 = vmatmul.mubr.bf16.gmra.mxu0 %v329
      %v442 = vpop.f32.mrf.mxu0
      %v443 = vadd.f32 0.0, %v442
      %v444 = vpop.f32.mrf.mxu0
      %v445 = vpop.f32.mrf.mxu0
      %v446 = vadd.f32 0.0, %v445
      %v447 = vpop.f32.mrf.mxu0
      %448 = vmatprep.mubr.bf16.mxu0 0
      %449 = vmatmul.mubr.bf16.gmra.mxu0 %v332
      %v450 = vpop.f32.mrf.mxu0
      %v451 = vadd.f32 0.0, %v450
      %v452 = vpop.f32.mrf.mxu0
      %v453 = vpop.f32.mrf.mxu0
      %v454 = vadd.f32 0.0, %v453
      %v455 = vpop.f32.mrf.mxu0
      %456 = vmatprep.mubr.bf16.mxu0 0
      %457 = vmatmul.mubr.bf16.gmra.mxu0 %v335
      %v458 = vpop.f32.mrf.mxu0
      %v459 = vadd.f32 0.0, %v458
      %v460 = vpop.f32.mrf.mxu0
      %v461 = vpop.f32.mrf.mxu0
      %v462 = vadd.f32 0.0, %v461
      %v463 = vpop.f32.mrf.mxu0
      %464 = vmatprep.mubr.bf16.mxu0 0
      %465 = vmatmul.mubr.bf16.gmra.mxu0 %v338
      %v466 = vpop.f32.mrf.mxu0
      %v467 = vadd.f32 0.0, %v466
      %v468 = vpop.f32.mrf.mxu0
      %v469 = vpop.f32.mrf.mxu0
      %v470 = vadd.f32 0.0, %v469
      %v471 = vpop.f32.mrf.mxu0
      %472 = vmatprep.mubr.bf16.mxu0 0
      %473 = vmatmul.mubr.bf16.gmra.mxu0 %v341
      %v474 = vpop.f32.mrf.mxu0
      %v475 = vadd.f32 0.0, %v474
      %v476 = vpop.f32.mrf.mxu0
      %v477 = vpop.f32.mrf.mxu0
      %v478 = vadd.f32 0.0, %v477
      %v479 = vpop.f32.mrf.mxu0
      %480 = vmatprep.mubr.bf16.mxu0 0
      %481 = vmatmul.mubr.bf16.gmra.mxu0 %v344
      %v482 = vpop.f32.mrf.mxu0
      %v483 = vadd.f32 0.0, %v482
      %v484 = vpop.f32.mrf.mxu0
      %v485 = vpop.f32.mrf.mxu0
      %v486 = vadd.f32 0.0, %v485
      %v487 = vpop.f32.mrf.mxu0
      %488 = vmatprep.mubr.bf16.mxu0 0
      %489 = vmatmul.mubr.bf16.gmra.mxu0 %v347
      %v490 = vpop.f32.mrf.mxu0
      %v491 = vadd.f32 0.0, %v490
      %v492 = vpop.f32.mrf.mxu0
      %v493 = vpop.f32.mrf.mxu0
      %v494 = vadd.f32 0.0, %v493
      %v495 = vpop.f32.mrf.mxu0
      %496 = vmatprep.mubr.bf16.mxu0 0
      %497 = vmatmul.mubr.bf16.gmra.mxu0 %v350
      %v498 = vpop.f32.mrf.mxu0
      %v499 = vadd.f32 0.0, %v498
      %v500 = vpop.f32.mrf.mxu0
      %v501 = vpop.f32.mrf.mxu0
      %v502 = vadd.f32 0.0, %v501
      %v503 = vpop.f32.mrf.mxu0
      %504 = vmatprep.mubr.bf16.mxu0 0
      %505 = vmatmul.mubr.bf16.gmra.mxu0 %v353
      %v506 = vpop.f32.mrf.mxu0
      %v507 = vadd.f32 0.0, %v506
      %v508 = vpop.f32.mrf.mxu0
      %v509 = vpop.f32.mrf.mxu0
      %v510 = vadd.f32 0.0, %v509
      %v511 = vpop.f32.mrf.mxu0
      %512 = vmatprep.mubr.bf16.mxu0 0
      %513 = vmatmul.mubr.bf16.gmra.mxu0 %v356
      %v514 = vpop.f32.mrf.mxu0
      %v515 = vadd.f32 0.0, %v514
      %v516 = vpop.f32.mrf.mxu0
      %v517 = vpop.f32.mrf.mxu0
      %v518 = vadd.f32 0.0, %v517
      %v519 = vpop.f32.mrf.mxu0
      %520 = vmatprep.mubr.bf16.mxu0 0
      %521 = vmatmul.mubr.bf16.gmra.mxu0 %v359
      %v522 = vpop.f32.mrf.mxu0
      %v523 = vadd.f32 0.0, %v522
      %v524 = vpop.f32.mrf.mxu0
      %v525 = vpop.f32.mrf.mxu0
      %v526 = vadd.f32 0.0, %v525
      %v527 = vpop.f32.mrf.mxu0
      %528 = vdwg.mxu0
      %vm529 = vcmp.ge.f32.partialorder %v403, 0.0
      %vm530 = vcmp.ge.f32.partialorder %v406, 0.0
      %vm531 = vcmp.ge.f32.partialorder %v411, 0.0
      %vm532 = vcmp.ge.f32.partialorder %v414, 0.0
      %vm533 = vcmp.ge.f32.partialorder %v419, 0.0
      %vm534 = vcmp.ge.f32.partialorder %v422, 0.0
      %vm535 = vcmp.ge.f32.partialorder %v427, 0.0
      %vm536 = vcmp.ge.f32.partialorder %v430, 0.0
      %vm537 = vcmp.ge.f32.partialorder %v435, 0.0
      %vm538 = vcmp.ge.f32.partialorder %v438, 0.0
      %vm539 = vcmp.ge.f32.partialorder %v443, 0.0
      %vm540 = vcmp.ge.f32.partialorder %v446, 0.0
      %vm541 = vcmp.ge.f32.partialorder %v451, 0.0
      %vm542 = vcmp.ge.f32.partialorder %v454, 0.0
      %vm543 = vcmp.ge.f32.partialorder %v459, 0.0
      %vm544 = vcmp.ge.f32.partialorder %v462, 0.0
      %vm545 = vcmp.ge.f32.partialorder %v467, 0.0
      %vm546 = vcmp.ge.f32.partialorder %v470, 0.0
      %vm547 = vcmp.ge.f32.partialorder %v475, 0.0
      %vm548 = vcmp.ge.f32.partialorder %v478, 0.0
      %vm549 = vcmp.ge.f32.partialorder %v483, 0.0
      %vm550 = vcmp.ge.f32.partialorder %v486, 0.0
      %vm551 = vcmp.ge.f32.partialorder %v491, 0.0
      %vm552 = vcmp.ge.f32.partialorder %v494, 0.0
      %vm553 = vcmp.ge.f32.partialorder %v499, 0.0
      %vm554 = vcmp.ge.f32.partialorder %v502, 0.0
      %vm555 = vcmp.ge.f32.partialorder %v507, 0.0
      %vm556 = vcmp.ge.f32.partialorder %v510, 0.0
      %vm557 = vcmp.ge.f32.partialorder %v515, 0.0
      %vm558 = vcmp.ge.f32.partialorder %v518, 0.0
      %vm559 = vcmp.ge.f32.partialorder %v523, 0.0
      %vm560 = vcmp.ge.f32.partialorder %v526, 0.0
      %v561 = vmul.f32 %v403, 0.2
      %v562 = vmul.f32 %v406, 0.2
      %v563 = vmul.f32 %v411, 0.2
      %v564 = vmul.f32 %v414, 0.2
      %v565 = vmul.f32 %v419, 0.2
      %v566 = vmul.f32 %v422, 0.2
      %v567 = vmul.f32 %v427, 0.2
      %v568 = vmul.f32 %v430, 0.2
      %v569 = vmul.f32 %v435, 0.2
      %v570 = vmul.f32 %v438, 0.2
      %v571 = vmul.f32 %v443, 0.2
      %v572 = vmul.f32 %v446, 0.2
      %v573 = vmul.f32 %v451, 0.2
      %v574 = vmul.f32 %v454, 0.2
      %v575 = vmul.f32 %v459, 0.2
      %v576 = vmul.f32 %v462, 0.2
      %v577 = vmul.f32 %v467, 0.2
      %v578 = vmul.f32 %v470, 0.2
      %v579 = vmul.f32 %v475, 0.2
      %v580 = vmul.f32 %v478, 0.2
      %v581 = vmul.f32 %v483, 0.2
      %v582 = vmul.f32 %v486, 0.2
      %v583 = vmul.f32 %v491, 0.2
      %v584 = vmul.f32 %v494, 0.2
      %v585 = vmul.f32 %v499, 0.2
      %v586 = vmul.f32 %v502, 0.2
      %v587 = vmul.f32 %v507, 0.2
      %v588 = vmul.f32 %v510, 0.2
      %v589 = vmul.f32 %v515, 0.2
      %v590 = vmul.f32 %v518, 0.2
      %v591 = vmul.f32 %v523, 0.2
      %v592 = vmul.f32 %v526, 0.2
      %v593 = vsel %vm529, %v403, %v561
      %v594 = vsel %vm530, %v406, %v562
      %v595 = vsel %vm531, %v411, %v563
      %v596 = vsel %vm532, %v414, %v564
      %v597 = vsel %vm533, %v419, %v565
      %v598 = vsel %vm534, %v422, %v566
      %v599 = vsel %vm535, %v427, %v567
      %v600 = vsel %vm536, %v430, %v568
      %v601 = vsel %vm537, %v435, %v569
      %v602 = vsel %vm538, %v438, %v570
      %v603 = vsel %vm539, %v443, %v571
      %v604 = vsel %vm540, %v446, %v572
      %v605 = vsel %vm541, %v451, %v573
      %v606 = vsel %vm542, %v454, %v574
      %v607 = vsel %vm543, %v459, %v575
      %v608 = vsel %vm544, %v462, %v576
      %v609 = vsel %vm545, %v467, %v577
      %v610 = vsel %vm546, %v470, %v578
      %v611 = vsel %vm547, %v475, %v579
      %v612 = vsel %vm548, %v478, %v580
      %v613 = vsel %vm549, %v483, %v581
      %v614 = vsel %vm550, %v486, %v582
      %v615 = vsel %vm551, %v491, %v583
      %v616 = vsel %vm552, %v494, %v584
      %v617 = vsel %vm553, %v499, %v585
      %v618 = vsel %vm554, %v502, %v586
      %v619 = vsel %vm555, %v507, %v587
      %v620 = vsel %vm556, %v510, %v588
      %v621 = vsel %vm557, %v515, %v589
      %v622 = vsel %vm558, %v518, %v590
      %v623 = vsel %vm559, %v523, %v591
      %v624 = vsel %vm560, %v526, %v592
      %v625 = vpack.c.bf16 %v594, %v593
      %v626 = vpack.c.bf16 %v596, %v595
      %v627 = vpack.c.bf16 %v598, %v597
      %v628 = vpack.c.bf16 %v600, %v599
      %v629 = vpack.c.bf16 %v602, %v601
      %v630 = vpack.c.bf16 %v604, %v603
      %v631 = vpack.c.bf16 %v606, %v605
      %v632 = vpack.c.bf16 %v608, %v607
      %v633 = vpack.c.bf16 %v610, %v609
      %v634 = vpack.c.bf16 %v612, %v611
      %v635 = vpack.c.bf16 %v614, %v613
      %v636 = vpack.c.bf16 %v616, %v615
      %v637 = vpack.c.bf16 %v618, %v617
      %v638 = vpack.c.bf16 %v620, %v619
      %v639 = vpack.c.bf16 %v622, %v621
      %v640 = vpack.c.bf16 %v624, %v623
      %v657 = vunpack.c.l.b16 %v625
      %v658 = vunpack.c.h.b16 %v625
      %v659 = vunpack.c.l.b16 %v626
      %v660 = vunpack.c.h.b16 %v626
      %v661 = vunpack.c.l.b16 %v627
      %v662 = vunpack.c.h.b16 %v627
      %v663 = vunpack.c.l.b16 %v628
      %v664 = vunpack.c.h.b16 %v628
      %v665 = vunpack.c.l.b16 %v629
      %v666 = vunpack.c.h.b16 %v629
      %v667 = vunpack.c.l.b16 %v630
      %v668 = vunpack.c.h.b16 %v630
      %v669 = vunpack.c.l.b16 %v631
      %v670 = vunpack.c.h.b16 %v631
      %v671 = vunpack.c.l.b16 %v632
      %v672 = vunpack.c.h.b16 %v632
      %v673 = vunpack.c.l.b16 %v633
      %v674 = vunpack.c.h.b16 %v633
      %v675 = vunpack.c.l.b16 %v634
      %v676 = vunpack.c.h.b16 %v634
      %v677 = vunpack.c.l.b16 %v635
      %v678 = vunpack.c.h.b16 %v635
      %v679 = vunpack.c.l.b16 %v636
      %v680 = vunpack.c.h.b16 %v636
      %v681 = vunpack.c.l.b16 %v637
      %v682 = vunpack.c.h.b16 %v637
      %v683 = vunpack.c.l.b16 %v638
      %v684 = vunpack.c.h.b16 %v638
      %v685 = vunpack.c.l.b16 %v639
      %v686 = vunpack.c.h.b16 %v639
      %v687 = vunpack.c.l.b16 %v640
      %v688 = vunpack.c.h.b16 %v640
      %v689 = vpack.c.b16 %v657, %v657
      %v690 = vpack.c.b16 %v658, %v658
      %v691 = vpack.c.b16 %v659, %v659
      %v692 = vpack.c.b16 %v660, %v660
      %v693 = vpack.c.b16 %v661, %v661
      %v694 = vpack.c.b16 %v662, %v662
      %v695 = vpack.c.b16 %v663, %v663
      %v696 = vpack.c.b16 %v664, %v664
      %v697 = vpack.c.b16 %v665, %v665
      %v698 = vpack.c.b16 %v666, %v666
      %v699 = vpack.c.b16 %v667, %v667
      %v700 = vpack.c.b16 %v668, %v668
      %v701 = vpack.c.b16 %v669, %v669
      %v702 = vpack.c.b16 %v670, %v670
      %v703 = vpack.c.b16 %v671, %v671
      %v704 = vpack.c.b16 %v672, %v672
      %v705 = vpack.c.b16 %v673, %v673
      %v706 = vpack.c.b16 %v674, %v674
      %v707 = vpack.c.b16 %v675, %v675
      %v708 = vpack.c.b16 %v676, %v676
      %v709 = vpack.c.b16 %v677, %v677
      %v710 = vpack.c.b16 %v678, %v678
      %v711 = vpack.c.b16 %v679, %v679
      %v712 = vpack.c.b16 %v680, %v680
      %v713 = vpack.c.b16 %v681, %v681
      %v714 = vpack.c.b16 %v682, %v682
      %v715 = vpack.c.b16 %v683, %v683
      %v716 = vpack.c.b16 %v684, %v684
      %v717 = vpack.c.b16 %v685, %v685
      %v718 = vpack.c.b16 %v686, %v686
      %v719 = vpack.c.b16 %v687, %v687
      %v720 = vpack.c.b16 %v688, %v688
      %753 = vst [vmem:[%s190] sm:$0xf] %v689
      %754 = vst [vmem:[%s190 + $0x4] sm:$0xf] %v690
      %755 = vst [vmem:[%s190 + $0x8] sm:$0xf] %v691
      %756 = vst [vmem:[%s190 + $0xc] sm:$0xf] %v692
      %757 = vst [vmem:[%s190 + $0x10] sm:$0xf] %v693
      %758 = vst [vmem:[%s190 + $0x14] sm:$0xf] %v694
      %759 = vst [vmem:[%s190 + $0x18] sm:$0xf] %v695
      %760 = vst [vmem:[%s190 + $0x1c] sm:$0xf] %v696
      %761 = vst [vmem:[%s190 + $0x20] sm:$0xf] %v697
      %762 = vst [vmem:[%s190 + $0x24] sm:$0xf] %v698
      %763 = vst [vmem:[%s190 + $0x28] sm:$0xf] %v699
      %764 = vst [vmem:[%s190 + $0x2c] sm:$0xf] %v700
      %765 = vst [vmem:[%s190 + $0x30] sm:$0xf] %v701
      %766 = vst [vmem:[%s190 + $0x34] sm:$0xf] %v702
      %767 = vst [vmem:[%s190 + $0x38] sm:$0xf] %v703
      %768 = vst [vmem:[%s190 + $0x3c] sm:$0xf] %v704
      %769 = vst [vmem:[%s190 + $0x40] sm:$0xf] %v705
      %770 = vst [vmem:[%s190 + $0x44] sm:$0xf] %v706
      %771 = vst [vmem:[%s190 + $0x48] sm:$0xf] %v707
      %772 = vst [vmem:[%s190 + $0x4c] sm:$0xf] %v708
      %773 = vst [vmem:[%s190 + $0x50] sm:$0xf] %v709
      %774 = vst [vmem:[%s190 + $0x54] sm:$0xf] %v710
      %775 = vst [vmem:[%s190 + $0x58] sm:$0xf] %v711
      %776 = vst [vmem:[%s190 + $0x5c] sm:$0xf] %v712
      %777 = vst [vmem:[%s190 + $0x60] sm:$0xf] %v713
      %778 = vst [vmem:[%s190 + $0x64] sm:$0xf] %v714
      %779 = vst [vmem:[%s190 + $0x68] sm:$0xf] %v715
      %780 = vst [vmem:[%s190 + $0x6c] sm:$0xf] %v716
      %781 = vst [vmem:[%s190 + $0x70] sm:$0xf] %v717
      %782 = vst [vmem:[%s190 + $0x74] sm:$0xf] %v718
      %783 = vst [vmem:[%s190 + $0x78] sm:$0xf] %v719
      %784 = vst [vmem:[%s190 + $0x7c] sm:$0xf] %v720
      %s785 = smul.u32 32, %s17
      %p786 = scmp.lt.s32.totalorder %s785, 63
      %s787 = scalar_select %p786, %s785, 63
      %s788 = smul.addr %s787, 4
      %s789 = scalar_lea.vmem %s2, %s788
      // Predicated region
      $region29: #{encoder_forward_pallas.5} parent=27 // pred_check
        %p790 = pneg %p97
      $region30: #{encoder_forward_pallas.5} parent=27 // pred_check_branch
        %792 = sbr.rel (%p790) target = $region32
      $region31: #{encoder_forward_pallas.5} parent=27 // pred_region
        %s793 = smul.u32 32, %s17
      $region32: #{encoder_forward_pallas.5} parent=27 // pred_fallthru
        _
    $region28: #{encoder_forward_pallas.5} parent=5 // pred_fallthru
      _
    %p794 = scmp.le.s32.totalorder 2, %s8
    // Predicated region
    $region33: #{encoder_forward_pallas.5} parent=5 // pred_check
      %p795 = pneg %p794
    $region34: #{encoder_forward_pallas.5} parent=5 // pred_check_branch
      %797 = sbr.rel (%p795) target = $region36
    $region35: #{encoder_forward_pallas.5} parent=5 // pred_region
      %s798 = ssub.s32 %s8, 2
      // Predicated region
      $region37: #{encoder_forward_pallas.5} parent=35 // pred_check
        %p799 = pneg %p103
      $region38: #{encoder_forward_pallas.5} parent=35 // pred_check_branch
        %801 = sbr.rel (%p799) target = $region40
      $region39: #{encoder_forward_pallas.5} parent=35 // pred_region
        %s802 = smul.u32 32, %s19
        %p803 = scmp.lt.s32.totalorder %s802, 63
        %s804 = scalar_select %p803, %s802, 63
        %s805 = smul.addr %s804, 4
        %s806 = scalar_lea.vmem %s2, %s805
      $region40: #{encoder_forward_pallas.5} parent=35 // pred_fallthru
        _
    $region36: #{encoder_forward_pallas.5} parent=5 // pred_fallthru
      _
  $region6: #{encoder_forward_pallas.5} parent=0 // loop_footer
    %s12 = sadd.s32 1, %s8
  $region7: #{encoder_forward_pallas.5} parent=0 // loop_footer_branch
    %7 = sbr.rel target = $region3
  $region8: #{encoder_forward_pallas.5} parent=0 // loop_exit
    _

// kernel: encoder_forward_pallas.6
$region0: #{encoder_forward_pallas.6}
  #allocation0 [shape = 'u32[]', space=smem, size = 0x4, offset = 0x4, fixed_abs, tag = 'smem constant byte address 0x4 - core index']
  #allocation1 [shape = 'u32[144,128]{1,0:T(1,128)}', space=vmem, size = 0x12000, scoped, tag = 'internal scratch']
  %s0 = inlined_call_operand.vmem [shape: bf16[168,576], index: 0, kind: input, shape index: {}]
  %s1 = inlined_call_operand.vmem [shape: bf16[576,128], index: 1, kind: input, shape index: {}]
  %s2 = inlined_call_operand.vmem [shape: f32[168,128], index: 2, kind: output, shape index: {0}]
  %s3 = inlined_call_operand.vmem [shape: f32[1,2,128], index: 3, kind: output, shape index: {1}]
  %4 = xla_tuple %s2, %s3
  %s5 = sld [smem:[#allocation0]]
  $region26: #{encoder_forward_pallas.6} parent=0
    _
  %s7 = ssub.s32 1, %s5
  %s8 = scalar_select 0, %s7, %s5
  // Predicated region
  $region2: #{encoder_forward_pallas.6} parent=0 // pred_check
    _
  $region3: #{encoder_forward_pallas.6} parent=0 // pred_check_branch
    %10 = sbr.rel (0) target = $region5
  $region4: #{encoder_forward_pallas.6} parent=0 // pred_region
    _
  $region5: #{encoder_forward_pallas.6} parent=0 // pred_fallthru
    _
  // Predicated region
  $region6: #{encoder_forward_pallas.6} parent=0 // pred_check
    _
  $region7: #{encoder_forward_pallas.6} parent=0 // pred_check_branch
    %12 = sbr.rel (0) target = $region9
  $region8: #{encoder_forward_pallas.6} parent=0 // pred_region
    _
  $region9: #{encoder_forward_pallas.6} parent=0 // pred_fallthru
    _
  %v14 = vld [vmem:[%s0] sm:$0xff]
  %v15 = vld [vmem:[%s0 + $0x8] sm:$0xff]
  %v16 = vld [vmem:[%s0 + $0x10] sm:$0xf]
  %v17 = vld [vmem:[%s0 + $0x14] sm:$0xff]
  %v18 = vld [vmem:[%s0 + $0x1c] sm:$0xff]
  %v19 = vld [vmem:[%s0 + $0x24] sm:$0xf]
  %v20 = vld [vmem:[%s0 + $0x28] sm:$0xff]
  %v21 = vld [vmem:[%s0 + $0x30] sm:$0xff]
  %v22 = vld [vmem:[%s0 + $0x38] sm:$0xf]
  %v23 = vld [vmem:[%s0 + $0x3c] sm:$0xff]
  %v24 = vld [vmem:[%s0 + $0x44] sm:$0xff]
  %v25 = vld [vmem:[%s0 + $0x4c] sm:$0xf]
  %v26 = vld [vmem:[%s0 + $0x50] sm:$0xff]
  %v27 = vld [vmem:[%s0 + $0x58] sm:$0xff]
  %v28 = vld [vmem:[%s0 + $0x60] sm:$0xf]
  %v29 = vld [vmem:[%s0 + $0x64] sm:$0xff]
  %v30 = vld [vmem:[%s0 + $0x6c] sm:$0xff]
  %v31 = vld [vmem:[%s0 + $0x74] sm:$0xf]
  %v32 = vld [vmem:[%s0 + $0x78] sm:$0xff]
  %v33 = vld [vmem:[%s0 + $0x80] sm:$0xff]
  %v34 = vld [vmem:[%s0 + $0x88] sm:$0xf]
  %v35 = vld [vmem:[%s0 + $0x8c] sm:$0xff]
  %v36 = vld [vmem:[%s0 + $0x94] sm:$0xff]
  %v37 = vld [vmem:[%s0 + $0x9c] sm:$0xf]
  %v38 = vld [vmem:[%s0 + $0xa0] sm:$0xff]
  %v39 = vld [vmem:[%s0 + $0xa8] sm:$0xff]
  %v40 = vld [vmem:[%s0 + $0xb0] sm:$0xf]
  %v41 = vld [vmem:[%s0 + $0xb4] sm:$0xff]
  %v42 = vld [vmem:[%s0 + $0xbc] sm:$0xff]
  %v43 = vld [vmem:[%s0 + $0xc4] sm:$0xf]
  %v44 = vld [vmem:[%s0 + $0xc8] sm:$0xff]
  %v45 = vld [vmem:[%s0 + $0xd0] sm:$0xff]
  %v46 = vld [vmem:[%s0 + $0xd8] sm:$0xf]
  %v47 = vld [vmem:[%s0 + $0xdc] sm:$0xff]
  %v48 = vld [vmem:[%s0 + $0xe4] sm:$0xff]
  %v49 = vld [vmem:[%s0 + $0xec] sm:$0xf]
  %v50 = vld [vmem:[%s0 + $0xf0] sm:$0xff]
  %v51 = vld [vmem:[%s0 + $0xf8] sm:$0xff]
  %v52 = vld [vmem:[%s0 + $0x100] sm:$0xf]
  %v53 = vld [vmem:[%s0 + $0x104] sm:$0xff]
  %v54 = vld [vmem:[%s0 + $0x10c] sm:$0xff]
  %v55 = vld [vmem:[%s0 + $0x114] sm:$0xf]
  %v56 = vld [vmem:[%s0 + $0x118] sm:$0xff]
  %v57 = vld [vmem:[%s0 + $0x120] sm:$0xff]
  %v58 = vld [vmem:[%s0 + $0x128] sm:$0xf]
  %v59 = vld [vmem:[%s0 + $0x12c] sm:$0xff]
  %v60 = vld [vmem:[%s0 + $0x134] sm:$0xff]
  %v61 = vld [vmem:[%s0 + $0x13c] sm:$0xf]
  %v62 = vld [vmem:[%s0 + $0x140] sm:$0xff]
  %v63 = vld [vmem:[%s0 + $0x148] sm:$0xff]
  %v64 = vld [vmem:[%s0 + $0x150] sm:$0xf]
  %v65 = vld [vmem:[%s0 + $0x154] sm:$0xff]
  %v66 = vld [vmem:[%s0 + $0x15c] sm:$0xff]
  %v67 = vld [vmem:[%s0 + $0x164] sm:$0xf]
  %v68 = vld [vmem:[%s0 + $0x168] sm:$0xff]
  %v69 = vld [vmem:[%s0 + $0x170] sm:$0xff]
  %v70 = vld [vmem:[%s0 + $0x178] sm:$0xf]
  %v71 = vld [vmem:[%s0 + $0x17c] sm:$0xff]
  %v72 = vld [vmem:[%s0 + $0x184] sm:$0xff]
  %v73 = vld [vmem:[%s0 + $0x18c] sm:$0xf]
  %v74 = vld [vmem:[%s0 + $0x190] sm:$0xff]
  %v75 = vld [vmem:[%s0 + $0x198] sm:$0xff]
  %v76 = vld [vmem:[%s0 + $0x1a0] sm:$0xf]
  %v77 = vld [vmem:[%s1] sm:$0xf]
  %v78 = vld [vmem:[%s1 + $0x4] sm:$0xf]
  %v79 = vld [vmem:[%s1 + $0x8] sm:$0xf]
  %v80 = vld [vmem:[%s1 + $0xc] sm:$0xf]
  %v81 = vld [vmem:[%s1 + $0x10] sm:$0xf]
  %v82 = vld [vmem:[%s1 + $0x14] sm:$0xf]
  %v83 = vld [vmem:[%s1 + $0x18] sm:$0xf]
  %v84 = vld [vmem:[%s1 + $0x1c] sm:$0xf]
  %v85 = vld [vmem:[%s1 + $0x20] sm:$0xf]
  %v86 = vld [vmem:[%s1 + $0x24] sm:$0xf]
  %v87 = vld [vmem:[%s1 + $0x28] sm:$0xf]
  %v88 = vld [vmem:[%s1 + $0x2c] sm:$0xf]
  %v89 = vld [vmem:[%s1 + $0x30] sm:$0xf]
  %v90 = vld [vmem:[%s1 + $0x34] sm:$0xf]
  %v91 = vld [vmem:[%s1 + $0x38] sm:$0xf]
  %v92 = vld [vmem:[%s1 + $0x3c] sm:$0xf]
  %v93 = vld [vmem:[%s1 + $0x40] sm:$0xf]
  %v94 = vld [vmem:[%s1 + $0x44] sm:$0xf]
  %v95 = vld [vmem:[%s1 + $0x48] sm:$0xf]
  %v96 = vld [vmem:[%s1 + $0x4c] sm:$0xf]
  %v97 = vld [vmem:[%s1 + $0x50] sm:$0xf]
  %v98 = vld [vmem:[%s1 + $0x54] sm:$0xf]
  %v99 = vld [vmem:[%s1 + $0x58] sm:$0xf]
  %v100 = vld [vmem:[%s1 + $0x5c] sm:$0xf]
  %v101 = vld [vmem:[%s1 + $0x60] sm:$0xf]
  %v102 = vld [vmem:[%s1 + $0x64] sm:$0xf]
  %v103 = vld [vmem:[%s1 + $0x68] sm:$0xf]
  %v104 = vld [vmem:[%s1 + $0x6c] sm:$0xf]
  %v105 = vld [vmem:[%s1 + $0x70] sm:$0xf]
  %v106 = vld [vmem:[%s1 + $0x74] sm:$0xf]
  %v107 = vld [vmem:[%s1 + $0x78] sm:$0xf]
  %v108 = vld [vmem:[%s1 + $0x7c] sm:$0xf]
  %v109 = vld [vmem:[%s1 + $0x80] sm:$0xf]
  %v110 = vld [vmem:[%s1 + $0x84] sm:$0xf]
  %v111 = vld [vmem:[%s1 + $0x88] sm:$0xf]
  %v112 = vld [vmem:[%s1 + $0x8c] sm:$0xf]
  %v113 = vld [vmem:[%s1 + $0x90] sm:$0xf]
  %v114 = vld [vmem:[%s1 + $0x94] sm:$0xf]
  %v115 = vld [vmem:[%s1 + $0x98] sm:$0xf]
  %v116 = vld [vmem:[%s1 + $0x9c] sm:$0xf]
  %v117 = vld [vmem:[%s1 + $0xa0] sm:$0xf]
  %v118 = vld [vmem:[%s1 + $0xa4] sm:$0xf]
  %v119 = vld [vmem:[%s1 + $0xa8] sm:$0xf]
  %v120 = vld [vmem:[%s1 + $0xac] sm:$0xf]
  %v121 = vld [vmem:[%s1 + $0xb0] sm:$0xf]
  %v122 = vld [vmem:[%s1 + $0xb4] sm:$0xf]
  %v123 = vld [vmem:[%s1 + $0xb8] sm:$0xf]
  %v124 = vld [vmem:[%s1 + $0xbc] sm:$0xf]
  %v125 = vld [vmem:[%s1 + $0xc0] sm:$0xf]
  %v126 = vld [vmem:[%s1 + $0xc4] sm:$0xf]
  %v127 = vld [vmem:[%s1 + $0xc8] sm:$0xf]
  %v128 = vld [vmem:[%s1 + $0xcc] sm:$0xf]
  %v129 = vld [vmem:[%s1 + $0xd0] sm:$0xf]
  %v130 = vld [vmem:[%s1 + $0xd4] sm:$0xf]
  %v131 = vld [vmem:[%s1 + $0xd8] sm:$0xf]
  %v132 = vld [vmem:[%s1 + $0xdc] sm:$0xf]
  %v133 = vld [vmem:[%s1 + $0xe0] sm:$0xf]
  %v134 = vld [vmem:[%s1 + $0xe4] sm:$0xf]
  %v135 = vld [vmem:[%s1 + $0xe8] sm:$0xf]
  %v136 = vld [vmem:[%s1 + $0xec] sm:$0xf]
  %v137 = vld [vmem:[%s1 + $0xf0] sm:$0xf]
  %v138 = vld [vmem:[%s1 + $0xf4] sm:$0xf]
  %v139 = vld [vmem:[%s1 + $0xf8] sm:$0xf]
  %v140 = vld [vmem:[%s1 + $0xfc] sm:$0xf]
  %v141 = vld [vmem:[%s1 + $0x100] sm:$0xf]
  %v142 = vld [vmem:[%s1 + $0x104] sm:$0xf]
  %v143 = vld [vmem:[%s1 + $0x108] sm:$0xf]
  %v144 = vld [vmem:[%s1 + $0x10c] sm:$0xf]
  %v145 = vld [vmem:[%s1 + $0x110] sm:$0xf]
  %v146 = vld [vmem:[%s1 + $0x114] sm:$0xf]
  %v147 = vld [vmem:[%s1 + $0x118] sm:$0xf]
  %v148 = vld [vmem:[%s1 + $0x11c] sm:$0xf]
  %v212 = vunpack.c.l.b16 %v14
  %v213 = vunpack.c.h.b16 %v14
  %v214 = vunpack.c.l.b16 %v15
  %v215 = vunpack.c.h.b16 %v15
  %v216 = vunpack.c.l.b16 %v16
  %v217 = vunpack.c.l.b16 %v17
  %v218 = vunpack.c.h.b16 %v17
  %v219 = vunpack.c.l.b16 %v18
  %v220 = vunpack.c.h.b16 %v18
  %v221 = vunpack.c.l.b16 %v19
  %v222 = vunpack.c.l.b16 %v20
  %v223 = vunpack.c.h.b16 %v20
  %v224 = vunpack.c.l.b16 %v21
  %v225 = vunpack.c.h.b16 %v21
  %v226 = vunpack.c.l.b16 %v22
  %v227 = vunpack.c.l.b16 %v23
  %v228 = vunpack.c.h.b16 %v23
  %v229 = vunpack.c.l.b16 %v24
  %v230 = vunpack.c.h.b16 %v24
  %v231 = vunpack.c.l.b16 %v25
  %v232 = vunpack.c.l.b16 %v26
  %v233 = vunpack.c.h.b16 %v26
  %v234 = vunpack.c.l.b16 %v27
  %v235 = vunpack.c.h.b16 %v27
  %v236 = vunpack.c.l.b16 %v28
  %v237 = vunpack.c.l.b16 %v29
  %v238 = vunpack.c.h.b16 %v29
  %v239 = vunpack.c.l.b16 %v30
  %v240 = vunpack.c.h.b16 %v30
  %v241 = vunpack.c.l.b16 %v31
  %v242 = vunpack.c.l.b16 %v32
  %v243 = vunpack.c.h.b16 %v32
  %v244 = vunpack.c.l.b16 %v33
  %v245 = vunpack.c.h.b16 %v33
  %v246 = vunpack.c.l.b16 %v34
  %v247 = vunpack.c.l.b16 %v35
  %v248 = vunpack.c.h.b16 %v35
  %v249 = vunpack.c.l.b16 %v36
  %v250 = vunpack.c.h.b16 %v36
  %v251 = vunpack.c.l.b16 %v37
  %v252 = vunpack.c.l.b16 %v38
  %v253 = vunpack.c.h.b16 %v38
  %v254 = vunpack.c.l.b16 %v39
  %v255 = vunpack.c.h.b16 %v39
  %v256 = vunpack.c.l.b16 %v40
  %v257 = vunpack.c.l.b16 %v41
  %v258 = vunpack.c.h.b16 %v41
  %v259 = vunpack.c.l.b16 %v42
  %v260 = vunpack.c.h.b16 %v42
  %v261 = vunpack.c.l.b16 %v43
  %v262 = vunpack.c.l.b16 %v44
  %v263 = vunpack.c.h.b16 %v44
  %v264 = vunpack.c.l.b16 %v45
  %v265 = vunpack.c.h.b16 %v45
  %v266 = vunpack.c.l.b16 %v46
  %v267 = vunpack.c.l.b16 %v47
  %v268 = vunpack.c.h.b16 %v47
  %v269 = vunpack.c.l.b16 %v48
  %v270 = vunpack.c.h.b16 %v48
  %v271 = vunpack.c.l.b16 %v49
  %v272 = vunpack.c.l.b16 %v50
  %v273 = vunpack.c.h.b16 %v50
  %v274 = vunpack.c.l.b16 %v51
  %v275 = vunpack.c.h.b16 %v51
  %v276 = vunpack.c.l.b16 %v52
  %v277 = vunpack.c.l.b16 %v53
  %v278 = vunpack.c.h.b16 %v53
  %v279 = vunpack.c.l.b16 %v54
  %v280 = vunpack.c.h.b16 %v54
  %v281 = vunpack.c.l.b16 %v55
  %v282 = vunpack.c.l.b16 %v56
  %v283 = vunpack.c.h.b16 %v56
  %v284 = vunpack.c.l.b16 %v57
  %v285 = vunpack.c.h.b16 %v57
  %v286 = vunpack.c.l.b16 %v58
  %v287 = vunpack.c.l.b16 %v59
  %v288 = vunpack.c.h.b16 %v59
  %v289 = vunpack.c.l.b16 %v60
  %v290 = vunpack.c.h.b16 %v60
  %v291 = vunpack.c.l.b16 %v61
  %v292 = vunpack.c.l.b16 %v62
  %v293 = vunpack.c.h.b16 %v62
  %v294 = vunpack.c.l.b16 %v63
  %v295 = vunpack.c.h.b16 %v63
  %v296 = vunpack.c.l.b16 %v64
  %v297 = vunpack.c.l.b16 %v65
  %v298 = vunpack.c.h.b16 %v65
  %v299 = vunpack.c.l.b16 %v66
  %v300 = vunpack.c.h.b16 %v66
  %v301 = vunpack.c.l.b16 %v67
  %v302 = vunpack.c.l.b16 %v68
  %v303 = vunpack.c.h.b16 %v68
  %v304 = vunpack.c.l.b16 %v69
  %v305 = vunpack.c.h.b16 %v69
  %v306 = vunpack.c.l.b16 %v70
  %v307 = vunpack.c.l.b16 %v71
  %v308 = vunpack.c.h.b16 %v71
  %v309 = vunpack.c.l.b16 %v72
  %v310 = vunpack.c.h.b16 %v72
  %v311 = vunpack.c.l.b16 %v73
  %v312 = vunpack.c.l.b16 %v74
  %v313 = vunpack.c.h.b16 %v74
  %v314 = vunpack.c.l.b16 %v75
  %v315 = vunpack.c.h.b16 %v75
  %v316 = vunpack.c.l.b16 %v76
  %v317 = vpack.c.b16 %v217, %v212
  %v318 = vpack.c.b16 %v218, %v213
  %v319 = vpack.c.b16 %v219, %v214
  %v320 = vpack.c.b16 %v220, %v215
  %v321 = vpack.c.b16 %v221, %v216
  %v322 = vpack.c.b16 %v227, %v222
  %v323 = vpack.c.b16 %v228, %v223
  %v324 = vpack.c.b16 %v229, %v224
  %v325 = vpack.c.b16 %v230, %v225
  %v326 = vpack.c.b16 %v231, %v226
  %v327 = vpack.c.b16 %v237, %v232
  %v328 = vpack.c.b16 %v238, %v233
  %v329 = vpack.c.b16 %v239, %v234
  %v330 = vpack.c.b16 %v240, %v235
  %v331 = vpack.c.b16 %v241, %v236
  %v332 = vpack.c.b16 %v247, %v242
  %v333 = vpack.c.b16 %v248, %v243
  %v334 = vpack.c.b16 %v249, %v244
  %v335 = vpack.c.b16 %v250, %v245
  %v336 = vpack.c.b16 %v251, %v246
  %v337 = vpack.c.b16 %v257, %v252
  %v338 = vpack.c.b16 %v258, %v253
  %v339 = vpack.c.b16 %v259, %v254
  %v340 = vpack.c.b16 %v260, %v255
  %v341 = vpack.c.b16 %v261, %v256
  %v342 = vpack.c.b16 %v267, %v262
  %v343 = vpack.c.b16 %v268, %v263
  %v344 = vpack.c.b16 %v269, %v264
  %v345 = vpack.c.b16 %v270, %v265
  %v346 = vpack.c.b16 %v271, %v266
  %v347 = vpack.c.b16 %v277, %v272
  %v348 = vpack.c.b16 %v278, %v273
  %v349 = vpack.c.b16 %v279, %v274
  %v350 = vpack.c.b16 %v280, %v275
  %v351 = vpack.c.b16 %v281, %v276
  %v352 = vpack.c.b16 %v287, %v282
  %v353 = vpack.c.b16 %v288, %v283
  %v354 = vpack.c.b16 %v289, %v284
  %v355 = vpack.c.b16 %v290, %v285
  %v356 = vpack.c.b16 %v291, %v286
  %v357 = vpack.c.b16 %v297, %v292
  %v358 = vpack.c.b16 %v298, %v293
  %v359 = vpack.c.b16 %v299, %v294
  %v360 = vpack.c.b16 %v300, %v295
  %v361 = vpack.c.b16 %v301, %v296
  %v362 = vpack.c.b16 %v307, %v302
  %v363 = vpack.c.b16 %v308, %v303
  %v364 = vpack.c.b16 %v309, %v304
  %v365 = vpack.c.b16 %v310, %v305
  %v366 = vpack.c.b16 %v311, %v306
  %v367 = vpack.c.b16 %v312, %v312
  %v368 = vpack.c.b16 %v313, %v313
  %v369 = vpack.c.b16 %v314, %v314
  %v370 = vpack.c.b16 %v315, %v315
  %v371 = vpack.c.b16 %v316, %v316
  %v488 = vunpack.c.l.b16 %v77
  %v489 = vunpack.c.l.b16 %v78
  %v490 = vunpack.c.l.b16 %v79
  %v491 = vunpack.c.l.b16 %v80
  %v492 = vunpack.c.l.b16 %v81
  %v493 = vunpack.c.l.b16 %v82
  %v494 = vunpack.c.l.b16 %v83
  %v495 = vunpack.c.l.b16 %v84
  %v496 = vunpack.c.l.b16 %v85
  %v497 = vunpack.c.l.b16 %v86
  %v498 = vunpack.c.l.b16 %v87
  %v499 = vunpack.c.l.b16 %v88
  %v500 = vunpack.c.l.b16 %v89
  %v501 = vunpack.c.l.b16 %v90
  %v502 = vunpack.c.l.b16 %v91
  %v503 = vunpack.c.l.b16 %v92
  %v504 = vunpack.c.l.b16 %v93
  %v505 = vunpack.c.l.b16 %v94
  %v506 = vunpack.c.l.b16 %v95
  %v507 = vunpack.c.l.b16 %v96
  %v508 = vunpack.c.l.b16 %v97
  %v509 = vunpack.c.l.b16 %v98
  %v510 = vunpack.c.l.b16 %v99
  %v511 = vunpack.c.l.b16 %v100
  %v512 = vunpack.c.l.b16 %v101
  %v513 = vunpack.c.l.b16 %v102
  %v514 = vunpack.c.l.b16 %v103
  %v515 = vunpack.c.l.b16 %v104
  %v516 = vunpack.c.l.b16 %v105
  %v517 = vunpack.c.l.b16 %v106
  %v518 = vunpack.c.l.b16 %v107
  %v519 = vunpack.c.l.b16 %v108
  %v520 = vunpack.c.l.b16 %v109
  %v521 = vunpack.c.l.b16 %v110
  %v522 = vunpack.c.l.b16 %v111
  %v523 = vunpack.c.l.b16 %v112
  %v524 = vunpack.c.l.b16 %v113
  %v525 = vunpack.c.l.b16 %v114
  %v526 = vunpack.c.l.b16 %v115
  %v527 = vunpack.c.l.b16 %v116
  %v528 = vunpack.c.l.b16 %v117
  %v529 = vunpack.c.l.b16 %v118
  %v530 = vunpack.c.l.b16 %v119
  %v531 = vunpack.c.l.b16 %v120
  %v532 = vunpack.c.l.b16 %v121
  %v533 = vunpack.c.l.b16 %v122
  %v534 = vunpack.c.l.b16 %v123
  %v535 = vunpack.c.l.b16 %v124
  %v536 = vunpack.c.l.b16 %v125
  %v537 = vunpack.c.l.b16 %v126
  %v538 = vunpack.c.l.b16 %v127
  %v539 = vunpack.c.l.b16 %v128
  %v540 = vunpack.c.l.b16 %v129
  %v541 = vunpack.c.l.b16 %v130
  %v542 = vunpack.c.l.b16 %v131
  %v543 = vunpack.c.l.b16 %v132
  %v544 = vunpack.c.l.b16 %v133
  %v545 = vunpack.c.l.b16 %v134
  %v546 = vunpack.c.l.b16 %v135
  %v547 = vunpack.c.l.b16 %v136
  %v548 = vunpack.c.l.b16 %v137
  %v549 = vunpack.c.l.b16 %v138
  %v550 = vunpack.c.l.b16 %v139
  %v551 = vunpack.c.l.b16 %v140
  %v552 = vunpack.c.l.b16 %v141
  %v553 = vunpack.c.l.b16 %v142
  %v554 = vunpack.c.l.b16 %v143
  %v555 = vunpack.c.l.b16 %v144
  %v556 = vunpack.c.l.b16 %v145
  %v557 = vunpack.c.l.b16 %v146
  %v558 = vunpack.c.l.b16 %v147
  %v559 = vunpack.c.l.b16 %v148
  %v560 = vpack.c.b16 %v489, %v488
  %v561 = vpack.c.b16 %v491, %v490
  %v562 = vpack.c.b16 %v493, %v492
  %v563 = vpack.c.b16 %v495, %v494
  %v564 = vpack.c.b16 %v497, %v496
  %v565 = vpack.c.b16 %v499, %v498
  %v566 = vpack.c.b16 %v501, %v500
  %v567 = vpack.c.b16 %v503, %v502
  %v568 = vpack.c.b16 %v505, %v504
  %v569 = vpack.c.b16 %v507, %v506
  %v570 = vpack.c.b16 %v509, %v508
  %v571 = vpack.c.b16 %v511, %v510
  %v572 = vpack.c.b16 %v513, %v512
  %v573 = vpack.c.b16 %v515, %v514
  %v574 = vpack.c.b16 %v517, %v516
  %v575 = vpack.c.b16 %v519, %v518
  %v576 = vpack.c.b16 %v521, %v520
  %v577 = vpack.c.b16 %v523, %v522
  %v578 = vpack.c.b16 %v525, %v524
  %v579 = vpack.c.b16 %v527, %v526
  %v580 = vpack.c.b16 %v529, %v528
  %v581 = vpack.c.b16 %v531, %v530
  %v582 = vpack.c.b16 %v533, %v532
  %v583 = vpack.c.b16 %v535, %v534
  %v584 = vpack.c.b16 %v537, %v536
  %v585 = vpack.c.b16 %v539, %v538
  %v586 = vpack.c.b16 %v541, %v540
  %v587 = vpack.c.b16 %v543, %v542
  %v588 = vpack.c.b16 %v545, %v544
  %v589 = vpack.c.b16 %v547, %v546
  %v590 = vpack.c.b16 %v549, %v548
  %v591 = vpack.c.b16 %v551, %v550
  %v592 = vpack.c.b16 %v553, %v552
  %v593 = vpack.c.b16 %v555, %v554
  %v594 = vpack.c.b16 %v557, %v556
  %v595 = vpack.c.b16 %v559, %v558
  %vm632 = vcmask 523264
  %v634 = vsel %vm632, %v321, 0
  %v637 = vsel %vm632, %v326, 0
  %v640 = vsel %vm632, %v331, 0
  %v643 = vsel %vm632, %v336, 0
  %v646 = vsel %vm632, %v341, 0
  %v649 = vsel %vm632, %v346, 0
  %v652 = vsel %vm632, %v351, 0
  %v655 = vsel %vm632, %v356, 0
  %v658 = vsel %vm632, %v361, 0
  %v661 = vsel %vm632, %v366, 0
  %v664 = vsel %vm632, %v371, 0
  %666 = vmatprep.subr.bf16.mxu0 0
  %667 = vmatpush1.bf16.msra.mxu0 %v567
  %668 = vmatprep.subr.bf16.mxu0 0
  %669 = vmatpush1.bf16.msra.mxu0 %v566
  %670 = vmatprep.subr.bf16.mxu0 0
  %671 = vmatpush1.bf16.msra.mxu0 %v565
  %672 = vmatprep.subr.bf16.mxu0 0
  %673 = vmatpush1.bf16.msra.mxu0 %v564
  %674 = vmatprep.subr.bf16.mxu0 0
  %675 = vmatpush1.bf16.msra.mxu0 %v563
  %676 = vmatprep.subr.bf16.mxu0 0
  %677 = vmatpush1.bf16.msra.mxu0 %v562
  %678 = vmatprep.subr.bf16.mxu0 0
  %679 = vmatpush1.bf16.msra.mxu0 %v561
  %680 = vmatprep.subr.bf16.mxu0 0
  %681 = vmatpush1.bf16.msra.mxu0 %v560
  %682 = vmatprep.subr.bf16.mxu0 0
  %683 = vmatpush2.bf16.msra.mxu0 %v575
  %684 = vmatprep.subr.bf16.mxu0 0
  %685 = vmatpush2.bf16.msra.mxu0 %v574
  %686 = vmatprep.subr.bf16.mxu0 0
  %687 = vmatpush2.bf16.msra.mxu0 %v573
  %688 = vmatprep.subr.bf16.mxu0 0
  %689 = vmatpush2.bf16.msra.mxu0 %v572
  %690 = vmatprep.subr.bf16.mxu0 0
  %691 = vmatpush2.bf16.msra.mxu0 %v571
  %692 = vmatprep.subr.bf16.mxu0 0
  %693 = vmatpush2.bf16.msra.mxu0 %v570
  %694 = vmatprep.subr.bf16.mxu0 0
  %695 = vmatpush2.bf16.msra.mxu0 %v569
  %696 = vmatprep.subr.bf16.mxu0 0
  %697 = vmatpush2.bf16.msra.mxu0 %v568
  %698 = vmatprep.mubr.bf16.mxu0 %v318
  %699 = vmatmul.mubr.bf16.gmra.mxu0 %v317
  %v700 = vpop.f32.mrf.mxu0
  %v701 = vadd.f32 0.0, %v700
  %v702 = vpop.f32.mrf.mxu0
  %v703 = vpop.f32.mrf.mxu0
  %v704 = vadd.f32 0.0, %v703
  %v705 = vpop.f32.mrf.mxu0
  %706 = vmatprep.mubr.bf16.mxu0 %v323
  %707 = vmatmul.mubr.bf16.gmra.mxu0 %v322
  %v708 = vpop.f32.mrf.mxu0
  %v709 = vadd.f32 0.0, %v708
  %v710 = vpop.f32.mrf.mxu0
  %v711 = vpop.f32.mrf.mxu0
  %v712 = vadd.f32 0.0, %v711
  %v713 = vpop.f32.mrf.mxu0
  %714 = vmatprep.mubr.bf16.mxu0 %v328
  %715 = vmatmul.mubr.bf16.gmra.mxu0 %v327
  %v716 = vpop.f32.mrf.mxu0
  %v717 = vadd.f32 0.0, %v716
  %v718 = vpop.f32.mrf.mxu0
  %v719 = vpop.f32.mrf.mxu0
  %v720 = vadd.f32 0.0, %v719
  %v721 = vpop.f32.mrf.mxu0
  %722 = vmatprep.mubr.bf16.mxu0 %v333
  %723 = vmatmul.mubr.bf16.gmra.mxu0 %v332
  %v724 = vpop.f32.mrf.mxu0
  %v725 = vadd.f32 0.0, %v724
  %v726 = vpop.f32.mrf.mxu0
  %v727 = vpop.f32.mrf.mxu0
  %v728 = vadd.f32 0.0, %v727
  %v729 = vpop.f32.mrf.mxu0
  %730 = vmatprep.mubr.bf16.mxu0 %v338
  %731 = vmatmul.mubr.bf16.gmra.mxu0 %v337
  %v732 = vpop.f32.mrf.mxu0
  %v733 = vadd.f32 0.0, %v732
  %v734 = vpop.f32.mrf.mxu0
  %v735 = vpop.f32.mrf.mxu0
  %v736 = vadd.f32 0.0, %v735
  %v737 = vpop.f32.mrf.mxu0
  %738 = vmatprep.mubr.bf16.mxu0 %v343
  %739 = vmatmul.mubr.bf16.gmra.mxu0 %v342
  %v740 = vpop.f32.mrf.mxu0
  %v741 = vadd.f32 0.0, %v740
  %v742 = vpop.f32.mrf.mxu0
  %v743 = vpop.f32.mrf.mxu0
  %v744 = vadd.f32 0.0, %v743
  %v745 = vpop.f32.mrf.mxu0
  %746 = vmatprep.mubr.bf16.mxu0 %v348
  %747 = vmatmul.mubr.bf16.gmra.mxu0 %v347
  %v748 = vpop.f32.mrf.mxu0
  %v749 = vadd.f32 0.0, %v748
  %v750 = vpop.f32.mrf.mxu0
  %v751 = vpop.f32.mrf.mxu0
  %v752 = vadd.f32 0.0, %v751
  %v753 = vpop.f32.mrf.mxu0
  %754 = vmatprep.mubr.bf16.mxu0 %v353
  %755 = vmatmul.mubr.bf16.gmra.mxu0 %v352
  %v756 = vpop.f32.mrf.mxu0
  %v757 = vadd.f32 0.0, %v756
  %v758 = vpop.f32.mrf.mxu0
  %v759 = vpop.f32.mrf.mxu0
  %v760 = vadd.f32 0.0, %v759
  %v761 = vpop.f32.mrf.mxu0
  %762 = vmatprep.mubr.bf16.mxu0 %v358
  %763 = vmatmul.mubr.bf16.gmra.mxu0 %v357
  %v764 = vpop.f32.mrf.mxu0
  %v765 = vadd.f32 0.0, %v764
  %v766 = vpop.f32.mrf.mxu0
  %v767 = vpop.f32.mrf.mxu0
  %v768 = vadd.f32 0.0, %v767
  %v769 = vpop.f32.mrf.mxu0
  %770 = vmatprep.mubr.bf16.mxu0 %v363
  %771 = vmatmul.mubr.bf16.gmra.mxu0 %v362
  %v772 = vpop.f32.mrf.mxu0
  %v773 = vadd.f32 0.0, %v772
  %v774 = vpop.f32.mrf.mxu0
  %v775 = vpop.f32.mrf.mxu0
  %v776 = vadd.f32 0.0, %v775
  %v777 = vpop.f32.mrf.mxu0
  %778 = vmatprep.mubr.bf16.mxu0 %v368
  %779 = vmatmul.mubr.bf16.gmra.mxu0 %v367
  %v780 = vpop.f32.mrf.mxu0
  %v781 = vadd.f32 0.0, %v780
  %v782 = vpop.f32.mrf.mxu0
  %v783 = vpop.f32.mrf.mxu0
  %v784 = vpop.f32.mrf.mxu0
  %785 = vdwg.mxu0
  %786 = vmatprep.subr.bf16.mxu0 0
  %787 = vmatpush1.bf16.msra.mxu0 %v583
  %788 = vmatprep.subr.bf16.mxu0 0
  %789 = vmatpush1.bf16.msra.mxu0 %v582
  %790 = vmatprep.subr.bf16.mxu0 0
  %791 = vmatpush1.bf16.msra.mxu0 %v581
  %792 = vmatprep.subr.bf16.mxu0 0
  %793 = vmatpush1.bf16.msra.mxu0 %v580
  %794 = vmatprep.subr.bf16.mxu0 0
  %795 = vmatpush1.bf16.msra.mxu0 %v579
  %796 = vmatprep.subr.bf16.mxu0 0
  %797 = vmatpush1.bf16.msra.mxu0 %v578
  %798 = vmatprep.subr.bf16.mxu0 0
  %799 = vmatpush1.bf16.msra.mxu0 %v577
  %800 = vmatprep.subr.bf16.mxu0 0
  %801 = vmatpush1.bf16.msra.mxu0 %v576
  %802 = vmatprep.subr.bf16.mxu0 0
  %803 = vmatpush2.bf16.msra.mxu0 %v591
  %804 = vmatprep.subr.bf16.mxu0 0
  %805 = vmatpush2.bf16.msra.mxu0 %v590
  %806 = vmatprep.subr.bf16.mxu0 0
  %807 = vmatpush2.bf16.msra.mxu0 %v589
  %808 = vmatprep.subr.bf16.mxu0 0
  %809 = vmatpush2.bf16.msra.mxu0 %v588
  %810 = vmatprep.subr.bf16.mxu0 0
  %811 = vmatpush2.bf16.msra.mxu0 %v587
  %812 = vmatprep.subr.bf16.mxu0 0
  %813 = vmatpush2.bf16.msra.mxu0 %v586
  %814 = vmatprep.subr.bf16.mxu0 0
  %815 = vmatpush2.bf16.msra.mxu0 %v585
  %816 = vmatprep.subr.bf16.mxu0 0
  %817 = vmatpush2.bf16.msra.mxu0 %v584
  %818 = vmatprep.mubr.bf16.mxu0 %v320
  %819 = vmatmul.mubr.bf16.gmra.mxu0 %v319
  %v820 = vpop.f32.mrf.mxu0
  %v821 = vadd.f32 %v701, %v820
  %v822 = vpop.f32.mrf.mxu0
  %v823 = vpop.f32.mrf.mxu0
  %v824 = vadd.f32 %v704, %v823
  %v825 = vpop.f32.mrf.mxu0
  %826 = vmatprep.mubr.bf16.mxu0 %v325
  %827 = vmatmul.mubr.bf16.gmra.mxu0 %v324
  %v828 = vpop.f32.mrf.mxu0
  %v829 = vadd.f32 %v709, %v828
  %v830 = vpop.f32.mrf.mxu0
  %v831 = vpop.f32.mrf.mxu0
  %v832 = vadd.f32 %v712, %v831
  %v833 = vpop.f32.mrf.mxu0
  %834 = vmatprep.mubr.bf16.mxu0 %v330
  %835 = vmatmul.mubr.bf16.gmra.mxu0 %v329
  %v836 = vpop.f32.mrf.mxu0
  %v837 = vadd.f32 %v717, %v836
  %v838 = vpop.f32.mrf.mxu0
  %v839 = vpop.f32.mrf.mxu0
  %v840 = vadd.f32 %v720, %v839
  %v841 = vpop.f32.mrf.mxu0
  %842 = vmatprep.mubr.bf16.mxu0 %v335
  %843 = vmatmul.mubr.bf16.gmra.mxu0 %v334
  %v844 = vpop.f32.mrf.mxu0
  %v845 = vadd.f32 %v725, %v844
  %v846 = vpop.f32.mrf.mxu0
  %v847 = vpop.f32.mrf.mxu0
  %v848 = vadd.f32 %v728, %v847
  %v849 = vpop.f32.mrf.mxu0
  %850 = vmatprep.mubr.bf16.mxu0 %v340
  %851 = vmatmul.mubr.bf16.gmra.mxu0 %v339
  %v852 = vpop.f32.mrf.mxu0
  %v853 = vadd.f32 %v733, %v852
  %v854 = vpop.f32.mrf.mxu0
  %v855 = vpop.f32.mrf.mxu0
  %v856 = vadd.f32 %v736, %v855
  %v857 = vpop.f32.mrf.mxu0
  %858 = vmatprep.mubr.bf16.mxu0 %v345
  %859 = vmatmul.mubr.bf16.gmra.mxu0 %v344
  %v860 = vpop.f32.mrf.mxu0
  %v861 = vadd.f32 %v741, %v860
  %v862 = vpop.f32.mrf.mxu0
  %v863 = vpop.f32.mrf.mxu0
  %v864 = vadd.f32 %v744, %v863
  %v865 = vpop.f32.mrf.mxu0
  %866 = vmatprep.mubr.bf16.mxu0 %v350
  %867 = vmatmul.mubr.bf16.gmra.mxu0 %v349
  %v868 = vpop.f32.mrf.mxu0
  %v869 = vadd.f32 %v749, %v868
  %v870 = vpop.f32.mrf.mxu0
  %v871 = vpop.f32.mrf.mxu0
  %v872 = vadd.f32 %v752, %v871
  %v873 = vpop.f32.mrf.mxu0
  %874 = vmatprep.mubr.bf16.mxu0 %v355
  %875 = vmatmul.mubr.bf16.gmra.mxu0 %v354
  %v876 = vpop.f32.mrf.mxu0
  %v877 = vadd.f32 %v757, %v876
  %v878 = vpop.f32.mrf.mxu0
  %v879 = vpop.f32.mrf.mxu0
  %v880 = vadd.f32 %v760, %v879
  %v881 = vpop.f32.mrf.mxu0
  %882 = vmatprep.mubr.bf16.mxu0 %v360
  %883 = vmatmul.mubr.bf16.gmra.mxu0 %v359
  %v884 = vpop.f32.mrf.mxu0
  %v885 = vadd.f32 %v765, %v884
  %v886 = vpop.f32.mrf.mxu0
  %v887 = vpop.f32.mrf.mxu0
  %v888 = vadd.f32 %v768, %v887
  %v889 = vpop.f32.mrf.mxu0
  %890 = vmatprep.mubr.bf16.mxu0 %v365
  %891 = vmatmul.mubr.bf16.gmra.mxu0 %v364
  %v892 = vpop.f32.mrf.mxu0
  %v893 = vadd.f32 %v773, %v892
  %v894 = vpop.f32.mrf.mxu0
  %v895 = vpop.f32.mrf.mxu0
  %v896 = vadd.f32 %v776, %v895
  %v897 = vpop.f32.mrf.mxu0
  %898 = vmatprep.mubr.bf16.mxu0 %v370
  %899 = vmatmul.mubr.bf16.gmra.mxu0 %v369
  %v900 = vpop.f32.mrf.mxu0
  %v901 = vadd.f32 %v781, %v900
  %v902 = vpop.f32.mrf.mxu0
  %v903 = vpop.f32.mrf.mxu0
  %v904 = vpop.f32.mrf.mxu0
  %905 = vdwg.mxu0
  %906 = vmatprep.subr.bf16.mxu0 0
  %907 = vmatpush1.bf16.msra.mxu0 0
  %908 = vmatprep.subr.bf16.mxu0 0
  %909 = vmatpush1.bf16.msra.mxu0 0
  %910 = vmatprep.subr.bf16.mxu0 0
  %911 = vmatpush1.bf16.msra.mxu0 0
  %912 = vmatprep.subr.bf16.mxu0 0
  %913 = vmatpush1.bf16.msra.mxu0 0
  %914 = vmatprep.subr.bf16.mxu0 0
  %915 = vmatpush1.bf16.msra.mxu0 %v595
  %916 = vmatprep.subr.bf16.mxu0 0
  %917 = vmatpush1.bf16.msra.mxu0 %v594
  %918 = vmatprep.subr.bf16.mxu0 0
  %919 = vmatpush1.bf16.msra.mxu0 %v593
  %920 = vmatprep.subr.bf16.mxu0 0
  %921 = vmatpush1.bf16.msra.mxu0 %v592
  %922 = vmatprep.subr.bf16.mxu0 0
  %923 = vmatpush2.bf16.msra.mxu0 0
  %924 = vmatprep.subr.bf16.mxu0 0
  %925 = vmatpush2.bf16.msra.mxu0 0
  %926 = vmatprep.subr.bf16.mxu0 0
  %927 = vmatpush2.bf16.msra.mxu0 0
  %928 = vmatprep.subr.bf16.mxu0 0
  %929 = vmatpush2.bf16.msra.mxu0 0
  %930 = vmatprep.subr.bf16.mxu0 0
  %931 = vmatpush2.bf16.msra.mxu0 0
  %932 = vmatprep.subr.bf16.mxu0 0
  %933 = vmatpush2.bf16.msra.mxu0 0
  %934 = vmatprep.subr.bf16.mxu0 0
  %935 = vmatpush2.bf16.msra.mxu0 0
  %936 = vmatprep.subr.bf16.mxu0 0
  %937 = vmatpush2.bf16.msra.mxu0 0
  %938 = vmatprep.mubr.bf16.mxu0 0
  %939 = vmatmul.mubr.bf16.gmra.mxu0 %v634
  %v940 = vpop.f32.mrf.mxu0
  %v941 = vadd.f32 %v821, %v940
  %v942 = vpop.f32.mrf.mxu0
  %v943 = vpop.f32.mrf.mxu0
  %v944 = vadd.f32 %v824, %v943
  %v945 = vpop.f32.mrf.mxu0
  %946 = vmatprep.mubr.bf16.mxu0 0
  %947 = vmatmul.mubr.bf16.gmra.mxu0 %v637
  %v948 = vpop.f32.mrf.mxu0
  %v949 = vadd.f32 %v829, %v948
  %v950 = vpop.f32.mrf.mxu0
  %v951 = vpop.f32.mrf.mxu0
  %v952 = vadd.f32 %v832, %v951
  %v953 = vpop.f32.mrf.mxu0
  %954 = vmatprep.mubr.bf16.mxu0 0
  %955 = vmatmul.mubr.bf16.gmra.mxu0 %v640
  %v956 = vpop.f32.mrf.mxu0
  %v957 = vadd.f32 %v837, %v956
  %v958 = vpop.f32.mrf.mxu0
  %v959 = vpop.f32.mrf.mxu0
  %v960 = vadd.f32 %v840, %v959
  %v961 = vpop.f32.mrf.mxu0
  %962 = vmatprep.mubr.bf16.mxu0 0
  %963 = vmatmul.mubr.bf16.gmra.mxu0 %v643
  %v964 = vpop.f32.mrf.mxu0
  %v965 = vadd.f32 %v845, %v964
  %v966 = vpop.f32.mrf.mxu0
  %v967 = vpop.f32.mrf.mxu0
  %v968 = vadd.f32 %v848, %v967
  %v969 = vpop.f32.mrf.mxu0
  %970 = vmatprep.mubr.bf16.mxu0 0
  %971 = vmatmul.mubr.bf16.gmra.mxu0 %v646
  %v972 = vpop.f32.mrf.mxu0
  %v973 = vadd.f32 %v853, %v972
  %v974 = vpop.f32.mrf.mxu0
  %v975 = vpop.f32.mrf.mxu0
  %v976 = vadd.f32 %v856, %v975
  %v977 = vpop.f32.mrf.mxu0
  %978 = vmatprep.mubr.bf16.mxu0 0
  %979 = vmatmul.mubr.bf16.gmra.mxu0 %v649
  %v980 = vpop.f32.mrf.mxu0
  %v981 = vadd.f32 %v861, %v980
  %v982 = vpop.f32.mrf.mxu0
  %v983 = vpop.f32.mrf.mxu0
  %v984 = vadd.f32 %v864, %v983
  %v985 = vpop.f32.mrf.mxu0
  %986 = vmatprep.mubr.bf16.mxu0 0
  %987 = vmatmul.mubr.bf16.gmra.mxu0 %v652
  %v988 = vpop.f32.mrf.mxu0
  %v989 = vadd.f32 %v869, %v988
  %v990 = vpop.f32.mrf.mxu0
  %v991 = vpop.f32.mrf.mxu0
  %v992 = vadd.f32 %v872, %v991
  %v993 = vpop.f32.mrf.mxu0
  %994 = vmatprep.mubr.bf16.mxu0 0
  %995 = vmatmul.mubr.bf16.gmra.mxu0 %v655
  %v996 = vpop.f32.mrf.mxu0
  %v997 = vadd.f32 %v877, %v996
  %v998 = vpop.f32.mrf.mxu0
  %v999 = vpop.f32.mrf.mxu0
  %v1000 = vadd.f32 %v880, %v999
  %v1001 = vpop.f32.mrf.mxu0
  %1002 = vmatprep.mubr.bf16.mxu0 0
  %1003 = vmatmul.mubr.bf16.gmra.mxu0 %v658
  %v1004 = vpop.f32.mrf.mxu0
  %v1005 = vadd.f32 %v885, %v1004
  %v1006 = vpop.f32.mrf.mxu0
  %v1007 = vpop.f32.mrf.mxu0
  %v1008 = vadd.f32 %v888, %v1007
  %v1009 = vpop.f32.mrf.mxu0
  %1010 = vmatprep.mubr.bf16.mxu0 0
  %1011 = vmatmul.mubr.bf16.gmra.mxu0 %v661
  %v1012 = vpop.f32.mrf.mxu0
  %v1013 = vadd.f32 %v893, %v1012
  %v1014 = vpop.f32.mrf.mxu0
  %v1015 = vpop.f32.mrf.mxu0
  %v1016 = vadd.f32 %v896, %v1015
  %v1017 = vpop.f32.mrf.mxu0
  %1018 = vmatprep.mubr.bf16.mxu0 0
  %1019 = vmatmul.mubr.bf16.gmra.mxu0 %v664
  %v1020 = vpop.f32.mrf.mxu0
  %v1021 = vadd.f32 %v901, %v1020
  %v1022 = vpop.f32.mrf.mxu0
  %v1023 = vpop.f32.mrf.mxu0
  %v1024 = vpop.f32.mrf.mxu0
  %1025 = vdwg.mxu0
  %v1026 = vadd.f32 %v941, %v944
  %v1027 = vadd.f32 %v1026, %v949
  %v1028 = vadd.f32 %v1027, %v952
  %v1029 = vadd.f32 %v1028, %v957
  %v1030 = vadd.f32 %v1029, %v960
  %v1031 = vadd.f32 %v1030, %v965
  %v1032 = vadd.f32 %v1031, %v968
  %v1033 = vadd.f32 %v1032, %v973
  %v1034 = vadd.f32 %v1033, %v976
  %v1035 = vadd.f32 %v1034, %v981
  %v1036 = vadd.f32 %v1035, %v984
  %v1037 = vadd.f32 %v1036, %v989
  %v1038 = vadd.f32 %v1037, %v992
  %v1039 = vadd.f32 %v1038, %v997
  %v1040 = vadd.f32 %v1039, %v1000
  %v1041 = vadd.f32 %v1040, %v1005
  %v1042 = vadd.f32 %v1041, %v1008
  %v1043 = vadd.f32 %v1042, %v1013
  %v1044 = vadd.f32 %v1043, %v1016
  %v1045 = vadd.f32 %v1044, %v1021
  %v1046 = vrot.slane %v1045, 4
  %v1047 = vadd.f32 %v1045, %v1046
  %v1048 = vrot.slane %v1047, 2
  %v1049 = vadd.f32 %v1047, %v1048
  %v1050 = vrot.slane %v1049, 1
  %v1051 = vadd.f32 %v1049, %v1050
  %v1052 = vmul.f32 %v941, %v941
  %v1053 = vmul.f32 %v944, %v944
  %v1054 = vmul.f32 %v949, %v949
  %v1055 = vmul.f32 %v952, %v952
  %v1056 = vmul.f32 %v957, %v957
  %v1057 = vmul.f32 %v960, %v960
  %v1058 = vmul.f32 %v965, %v965
  %v1059 = vmul.f32 %v968, %v968
  %v1060 = vmul.f32 %v973, %v973
  %v1061 = vmul.f32 %v976, %v976
  %v1062 = vmul.f32 %v981, %v981
  %v1063 = vmul.f32 %v984, %v984
  %v1064 = vmul.f32 %v989, %v989
  %v1065 = vmul.f32 %v992, %v992
  %v1066 = vmul.f32 %v997, %v997
  %v1067 = vmul.f32 %v1000, %v1000
  %v1068 = vmul.f32 %v1005, %v1005
  %v1069 = vmul.f32 %v1008, %v1008
  %v1070 = vmul.f32 %v1013, %v1013
  %v1071 = vmul.f32 %v1016, %v1016
  %v1072 = vmul.f32 %v1021, %v1021
  %v1073 = vadd.f32 %v1052, %v1053
  %v1074 = vadd.f32 %v1073, %v1054
  %v1075 = vadd.f32 %v1074, %v1055
  %v1076 = vadd.f32 %v1075, %v1056
  %v1077 = vadd.f32 %v1076, %v1057
  %v1078 = vadd.f32 %v1077, %v1058
  %v1079 = vadd.f32 %v1078, %v1059
  %v1080 = vadd.f32 %v1079, %v1060
  %v1081 = vadd.f32 %v1080, %v1061
  %v1082 = vadd.f32 %v1081, %v1062
  %v1083 = vadd.f32 %v1082, %v1063
  %v1084 = vadd.f32 %v1083, %v1064
  %v1085 = vadd.f32 %v1084, %v1065
  %v1086 = vadd.f32 %v1085, %v1066
  %v1087 = vadd.f32 %v1086, %v1067
  %v1088 = vadd.f32 %v1087, %v1068
  %v1089 = vadd.f32 %v1088, %v1069
  %v1090 = vadd.f32 %v1089, %v1070
  %v1091 = vadd.f32 %v1090, %v1071
  %v1092 = vadd.f32 %v1091, %v1072
  %v1093 = vrot.slane %v1092, 4
  %v1094 = vadd.f32 %v1092, %v1093
  %v1095 = vrot.slane %v1094, 2
  %v1096 = vadd.f32 %v1094, %v1095
  %v1097 = vrot.slane %v1096, 1
  %v1098 = vadd.f32 %v1096, %v1097
  %vm1099 = vcmask 1040384
  %v1100 = vsel %vm1099, %v1051, %v1098
  %1101 = vst [vmem:[%s3] sm:$0x3] %v1100
  %1102 = vst [vmem:[%s2] sm:$0xff] %v941
  %1103 = vst [vmem:[%s2 + $0x8] sm:$0xff] %v944
  %1104 = vst [vmem:[%s2 + $0x10] sm:$0xff] %v949
  %1105 = vst [vmem:[%s2 + $0x18] sm:$0xff] %v952
  %1106 = vst [vmem:[%s2 + $0x20] sm:$0xff] %v957
  %1107 = vst [vmem:[%s2 + $0x28] sm:$0xff] %v960
  %1108 = vst [vmem:[%s2 + $0x30] sm:$0xff] %v965
  %1109 = vst [vmem:[%s2 + $0x38] sm:$0xff] %v968
  %1110 = vst [vmem:[%s2 + $0x40] sm:$0xff] %v973
  %1111 = vst [vmem:[%s2 + $0x48] sm:$0xff] %v976
  %1112 = vst [vmem:[%s2 + $0x50] sm:$0xff] %v981
  %1113 = vst [vmem:[%s2 + $0x58] sm:$0xff] %v984
  %1114 = vst [vmem:[%s2 + $0x60] sm:$0xff] %v989
  %1115 = vst [vmem:[%s2 + $0x68] sm:$0xff] %v992
  %1116 = vst [vmem:[%s2 + $0x70] sm:$0xff] %v997
  %1117 = vst [vmem:[%s2 + $0x78] sm:$0xff] %v1000
  %1118 = vst [vmem:[%s2 + $0x80] sm:$0xff] %v1005
  %1119 = vst [vmem:[%s2 + $0x88] sm:$0xff] %v1008
  %1120 = vst [vmem:[%s2 + $0x90] sm:$0xff] %v1013
  %1121 = vst [vmem:[%s2 + $0x98] sm:$0xff] %v1016
  %1122 = vst [vmem:[%s2 + $0xa0] sm:$0xff] %v1021
  // Predicated region
  $region10: #{encoder_forward_pallas.6} parent=0 // pred_check
    _
  $region11: #{encoder_forward_pallas.6} parent=0 // pred_check_branch
    %1124 = sbr.rel (0) target = $region13
  $region12: #{encoder_forward_pallas.6} parent=0 // pred_region
    _
  $region13: #{encoder_forward_pallas.6} parent=0 // pred_fallthru
    _
  // Predicated region
  $region14: #{encoder_forward_pallas.6} parent=0 // pred_check
    _
  $region15: #{encoder_forward_pallas.6} parent=0 // pred_check_branch
    %1126 = sbr.rel (0) target = $region17
  $region16: #{encoder_forward_pallas.6} parent=0 // pred_region
    _
  $region17: #{encoder_forward_pallas.6} parent=0 // pred_fallthru
    _
  // Predicated region
  $region18: #{encoder_forward_pallas.6} parent=0 // pred_check
    _
  $region19: #{encoder_forward_pallas.6} parent=0 // pred_check_branch
    %1128 = sbr.rel (0) target = $region21
  $region20: #{encoder_forward_pallas.6} parent=0 // pred_region
    _
  $region21: #{encoder_forward_pallas.6} parent=0 // pred_fallthru
    _
  // Predicated region
  $region22: #{encoder_forward_pallas.6} parent=0 // pred_check
    _
  $region23: #{encoder_forward_pallas.6} parent=0 // pred_check_branch
    %1130 = sbr.rel (0) target = $region25
  $region24: #{encoder_forward_pallas.6} parent=0 // pred_region
    _
  $region25: #{encoder_forward_pallas.6} parent=0 // pred_fallthru
    _

// kernel: encoder_forward_pallas.7
$region0: #{encoder_forward_pallas.7}
  #allocation0 [shape = 'u32[]', space=smem, size = 0x4, offset = 0x4, fixed_abs, tag = 'smem constant byte address 0x4 - core index']
  #allocation1 [shape = 'u32[144,128]{1,0:T(1,128)}', space=vmem, size = 0x12000, scoped, tag = 'internal scratch']
  %s0 = inlined_call_operand.vmem [shape: bf16[72,1152], index: 0, kind: input, shape index: {}]
  %s1 = inlined_call_operand.vmem [shape: bf16[1152,256], index: 1, kind: input, shape index: {}]
  %s2 = inlined_call_operand.vmem [shape: f32[72,256], index: 2, kind: output, shape index: {0}]
  %s3 = inlined_call_operand.vmem [shape: f32[1,2,256], index: 3, kind: output, shape index: {1}]
  %4 = xla_tuple %s2, %s3
  %s5 = sld [smem:[#allocation0]]
  $region26: #{encoder_forward_pallas.7} parent=0
    _
  %s7 = ssub.s32 1, %s5
  %s8 = scalar_select 0, %s7, %s5
  // Predicated region
  $region2: #{encoder_forward_pallas.7} parent=0 // pred_check
    _
  $region3: #{encoder_forward_pallas.7} parent=0 // pred_check_branch
    %10 = sbr.rel (0) target = $region5
  $region4: #{encoder_forward_pallas.7} parent=0 // pred_region
    _
  $region5: #{encoder_forward_pallas.7} parent=0 // pred_fallthru
    _
  // Predicated region
  $region6: #{encoder_forward_pallas.7} parent=0 // pred_check
    _
  $region7: #{encoder_forward_pallas.7} parent=0 // pred_check_branch
    %12 = sbr.rel (0) target = $region9
  $region8: #{encoder_forward_pallas.7} parent=0 // pred_region
    _
  $region9: #{encoder_forward_pallas.7} parent=0 // pred_fallthru
    _
  %v14 = vld [vmem:[%s0] sm:$0xff]
  %v15 = vld [vmem:[%s0 + $0x8] sm:$0xff]
  %v16 = vld [vmem:[%s0 + $0x10] sm:$0xff]
  %v17 = vld [vmem:[%s0 + $0x18] sm:$0xff]
  %v18 = vld [vmem:[%s0 + $0x20] sm:$0xf]
  %v19 = vld [vmem:[%s0 + $0x24] sm:$0xff]
  %v20 = vld [vmem:[%s0 + $0x2c] sm:$0xff]
  %v21 = vld [vmem:[%s0 + $0x34] sm:$0xff]
  %v22 = vld [vmem:[%s0 + $0x3c] sm:$0xff]
  %v23 = vld [vmem:[%s0 + $0x44] sm:$0xf]
  %v24 = vld [vmem:[%s0 + $0x48] sm:$0xff]
  %v25 = vld [vmem:[%s0 + $0x50] sm:$0xff]
  %v26 = vld [vmem:[%s0 + $0x58] sm:$0xff]
  %v27 = vld [vmem:[%s0 + $0x60] sm:$0xff]
  %v28 = vld [vmem:[%s0 + $0x68] sm:$0xf]
  %v29 = vld [vmem:[%s0 + $0x6c] sm:$0xff]
  %v30 = vld [vmem:[%s0 + $0x74] sm:$0xff]
  %v31 = vld [vmem:[%s0 + $0x7c] sm:$0xff]
  %v32 = vld [vmem:[%s0 + $0x84] sm:$0xff]
  %v33 = vld [vmem:[%s0 + $0x8c] sm:$0xf]
  %v34 = vld [vmem:[%s0 + $0x90] sm:$0xff]
  %v35 = vld [vmem:[%s0 + $0x98] sm:$0xff]
  %v36 = vld [vmem:[%s0 + $0xa0] sm:$0xff]
  %v37 = vld [vmem:[%s0 + $0xa8] sm:$0xff]
  %v38 = vld [vmem:[%s0 + $0xb0] sm:$0xf]
  %v39 = vld [vmem:[%s0 + $0xb4] sm:$0xff]
  %v40 = vld [vmem:[%s0 + $0xbc] sm:$0xff]
  %v41 = vld [vmem:[%s0 + $0xc4] sm:$0xff]
  %v42 = vld [vmem:[%s0 + $0xcc] sm:$0xff]
  %v43 = vld [vmem:[%s0 + $0xd4] sm:$0xf]
  %v44 = vld [vmem:[%s0 + $0xd8] sm:$0xff]
  %v45 = vld [vmem:[%s0 + $0xe0] sm:$0xff]
  %v46 = vld [vmem:[%s0 + $0xe8] sm:$0xff]
  %v47 = vld [vmem:[%s0 + $0xf0] sm:$0xff]
  %v48 = vld [vmem:[%s0 + $0xf8] sm:$0xf]
  %v49 = vld [vmem:[%s0 + $0xfc] sm:$0xff]
  %v50 = vld [vmem:[%s0 + $0x104] sm:$0xff]
  %v51 = vld [vmem:[%s0 + $0x10c] sm:$0xff]
  %v52 = vld [vmem:[%s0 + $0x114] sm:$0xff]
  %v53 = vld [vmem:[%s0 + $0x11c] sm:$0xf]
  %v54 = vld [vmem:[%s0 + $0x120] sm:$0xff]
  %v55 = vld [vmem:[%s0 + $0x128] sm:$0xff]
  %v56 = vld [vmem:[%s0 + $0x130] sm:$0xff]
  %v57 = vld [vmem:[%s0 + $0x138] sm:$0xff]
  %v58 = vld [vmem:[%s0 + $0x140] sm:$0xf]
  %v59 = vld [vmem:[%s1] sm:$0xff]
  %v60 = vld [vmem:[%s1 + $0x8] sm:$0xff]
  %v61 = vld [vmem:[%s1 + $0x10] sm:$0xff]
  %v62 = vld [vmem:[%s1 + $0x18] sm:$0xff]
  %v63 = vld [vmem:[%s1 + $0x20] sm:$0xff]
  %v64 = vld [vmem:[%s1 + $0x28] sm:$0xff]
  %v65 = vld [vmem:[%s1 + $0x30] sm:$0xff]
  %v66 = vld [vmem:[%s1 + $0x38] sm:$0xff]
  %v67 = vld [vmem:[%s1 + $0x40] sm:$0xff]
  %v68 = vld [vmem:[%s1 + $0x48] sm:$0xff]
  %v69 = vld [vmem:[%s1 + $0x50] sm:$0xff]
  %v70 = vld [vmem:[%s1 + $0x58] sm:$0xff]
  %v71 = vld [vmem:[%s1 + $0x60] sm:$0xff]
  %v72 = vld [vmem:[%s1 + $0x68] sm:$0xff]
  %v73 = vld [vmem:[%s1 + $0x70] sm:$0xff]
  %v74 = vld [vmem:[%s1 + $0x78] sm:$0xff]
  %v75 = vld [vmem:[%s1 + $0x80] sm:$0xff]
  %v76 = vld [vmem:[%s1 + $0x88] sm:$0xff]
  %v77 = vld [vmem:[%s1 + $0x90] sm:$0xff]
  %v78 = vld [vmem:[%s1 + $0x98] sm:$0xff]
  %v79 = vld [vmem:[%s1 + $0xa0] sm:$0xff]
  %v80 = vld [vmem:[%s1 + $0xa8] sm:$0xff]
  %v81 = vld [vmem:[%s1 + $0xb0] sm:$0xff]
  %v82 = vld [vmem:[%s1 + $0xb8] sm:$0xff]
  %v83 = vld [vmem:[%s1 + $0xc0] sm:$0xff]
  %v84 = vld [vmem:[%s1 + $0xc8] sm:$0xff]
  %v85 = vld [vmem:[%s1 + $0xd0] sm:$0xff]
  %v86 = vld [vmem:[%s1 + $0xd8] sm:$0xff]
  %v87 = vld [vmem:[%s1 + $0xe0] sm:$0xff]
  %v88 = vld [vmem:[%s1 + $0xe8] sm:$0xff]
  %v89 = vld [vmem:[%s1 + $0xf0] sm:$0xff]
  %v90 = vld [vmem:[%s1 + $0xf8] sm:$0xff]
  %v91 = vld [vmem:[%s1 + $0x100] sm:$0xff]
  %v92 = vld [vmem:[%s1 + $0x108] sm:$0xff]
  %v93 = vld [vmem:[%s1 + $0x110] sm:$0xff]
  %v94 = vld [vmem:[%s1 + $0x118] sm:$0xff]
  %v95 = vld [vmem:[%s1 + $0x120] sm:$0xff]
  %v96 = vld [vmem:[%s1 + $0x128] sm:$0xff]
  %v97 = vld [vmem:[%s1 + $0x130] sm:$0xff]
  %v98 = vld [vmem:[%s1 + $0x138] sm:$0xff]
  %v99 = vld [vmem:[%s1 + $0x140] sm:$0xff]
  %v100 = vld [vmem:[%s1 + $0x148] sm:$0xff]
  %v101 = vld [vmem:[%s1 + $0x150] sm:$0xff]
  %v102 = vld [vmem:[%s1 + $0x158] sm:$0xff]
  %v103 = vld [vmem:[%s1 + $0x160] sm:$0xff]
  %v104 = vld [vmem:[%s1 + $0x168] sm:$0xff]
  %v105 = vld [vmem:[%s1 + $0x170] sm:$0xff]
  %v106 = vld [vmem:[%s1 + $0x178] sm:$0xff]
  %v107 = vld [vmem:[%s1 + $0x180] sm:$0xff]
  %v108 = vld [vmem:[%s1 + $0x188] sm:$0xff]
  %v109 = vld [vmem:[%s1 + $0x190] sm:$0xff]
  %v110 = vld [vmem:[%s1 + $0x198] sm:$0xff]
  %v111 = vld [vmem:[%s1 + $0x1a0] sm:$0xff]
  %v112 = vld [vmem:[%s1 + $0x1a8] sm:$0xff]
  %v113 = vld [vmem:[%s1 + $0x1b0] sm:$0xff]
  %v114 = vld [vmem:[%s1 + $0x1b8] sm:$0xff]
  %v115 = vld [vmem:[%s1 + $0x1c0] sm:$0xff]
  %v116 = vld [vmem:[%s1 + $0x1c8] sm:$0xff]
  %v117 = vld [vmem:[%s1 + $0x1d0] sm:$0xff]
  %v118 = vld [vmem:[%s1 + $0x1d8] sm:$0xff]
  %v119 = vld [vmem:[%s1 + $0x1e0] sm:$0xff]
  %v120 = vld [vmem:[%s1 + $0x1e8] sm:$0xff]
  %v121 = vld [vmem:[%s1 + $0x1f0] sm:$0xff]
  %v122 = vld [vmem:[%s1 + $0x1f8] sm:$0xff]
  %v123 = vld [vmem:[%s1 + $0x200] sm:$0xff]
  %v124 = vld [vmem:[%s1 + $0x208] sm:$0xff]
  %v125 = vld [vmem:[%s1 + $0x210] sm:$0xff]
  %v126 = vld [vmem:[%s1 + $0x218] sm:$0xff]
  %v127 = vld [vmem:[%s1 + $0x220] sm:$0xff]
  %v128 = vld [vmem:[%s1 + $0x228] sm:$0xff]
  %v129 = vld [vmem:[%s1 + $0x230] sm:$0xff]
  %v130 = vld [vmem:[%s1 + $0x238] sm:$0xff]
  %v131 = vld [vmem:[%s1 + $0x240] sm:$0xff]
  %v132 = vld [vmem:[%s1 + $0x248] sm:$0xff]
  %v133 = vld [vmem:[%s1 + $0x250] sm:$0xff]
  %v134 = vld [vmem:[%s1 + $0x258] sm:$0xff]
  %v135 = vld [vmem:[%s1 + $0x260] sm:$0xff]
  %v136 = vld [vmem:[%s1 + $0x268] sm:$0xff]
  %v137 = vld [vmem:[%s1 + $0x270] sm:$0xff]
  %v138 = vld [vmem:[%s1 + $0x278] sm:$0xff]
  %v139 = vld [vmem:[%s1 + $0x280] sm:$0xff]
  %v140 = vld [vmem:[%s1 + $0x288] sm:$0xff]
  %v141 = vld [vmem:[%s1 + $0x290] sm:$0xff]
  %v142 = vld [vmem:[%s1 + $0x298] sm:$0xff]
  %v143 = vld [vmem:[%s1 + $0x2a0] sm:$0xff]
  %v144 = vld [vmem:[%s1 + $0x2a8] sm:$0xff]
  %v145 = vld [vmem:[%s1 + $0x2b0] sm:$0xff]
  %v146 = vld [vmem:[%s1 + $0x2b8] sm:$0xff]
  %v147 = vld [vmem:[%s1 + $0x2c0] sm:$0xff]
  %v148 = vld [vmem:[%s1 + $0x2c8] sm:$0xff]
  %v149 = vld [vmem:[%s1 + $0x2d0] sm:$0xff]
  %v150 = vld [vmem:[%s1 + $0x2d8] sm:$0xff]
  %v151 = vld [vmem:[%s1 + $0x2e0] sm:$0xff]
  %v152 = vld [vmem:[%s1 + $0x2e8] sm:$0xff]
  %v153 = vld [vmem:[%s1 + $0x2f0] sm:$0xff]
  %v154 = vld [vmem:[%s1 + $0x2f8] sm:$0xff]
  %v155 = vld [vmem:[%s1 + $0x300] sm:$0xff]
  %v156 = vld [vmem:[%s1 + $0x308] sm:$0xff]
  %v157 = vld [vmem:[%s1 + $0x310] sm:$0xff]
  %v158 = vld [vmem:[%s1 + $0x318] sm:$0xff]
  %v159 = vld [vmem:[%s1 + $0x320] sm:$0xff]
  %v160 = vld [vmem:[%s1 + $0x328] sm:$0xff]
  %v161 = vld [vmem:[%s1 + $0x330] sm:$0xff]
  %v162 = vld [vmem:[%s1 + $0x338] sm:$0xff]
  %v163 = vld [vmem:[%s1 + $0x340] sm:$0xff]
  %v164 = vld [vmem:[%s1 + $0x348] sm:$0xff]
  %v165 = vld [vmem:[%s1 + $0x350] sm:$0xff]
  %v166 = vld [vmem:[%s1 + $0x358] sm:$0xff]
  %v167 = vld [vmem:[%s1 + $0x360] sm:$0xff]
  %v168 = vld [vmem:[%s1 + $0x368] sm:$0xff]
  %v169 = vld [vmem:[%s1 + $0x370] sm:$0xff]
  %v170 = vld [vmem:[%s1 + $0x378] sm:$0xff]
  %v171 = vld [vmem:[%s1 + $0x380] sm:$0xff]
  %v172 = vld [vmem:[%s1 + $0x388] sm:$0xff]
  %v173 = vld [vmem:[%s1 + $0x390] sm:$0xff]
  %v174 = vld [vmem:[%s1 + $0x398] sm:$0xff]
  %v175 = vld [vmem:[%s1 + $0x3a0] sm:$0xff]
  %v176 = vld [vmem:[%s1 + $0x3a8] sm:$0xff]
  %v177 = vld [vmem:[%s1 + $0x3b0] sm:$0xff]
  %v178 = vld [vmem:[%s1 + $0x3b8] sm:$0xff]
  %v179 = vld [vmem:[%s1 + $0x3c0] sm:$0xff]
  %v180 = vld [vmem:[%s1 + $0x3c8] sm:$0xff]
  %v181 = vld [vmem:[%s1 + $0x3d0] sm:$0xff]
  %v182 = vld [vmem:[%s1 + $0x3d8] sm:$0xff]
  %v183 = vld [vmem:[%s1 + $0x3e0] sm:$0xff]
  %v184 = vld [vmem:[%s1 + $0x3e8] sm:$0xff]
  %v185 = vld [vmem:[%s1 + $0x3f0] sm:$0xff]
  %v186 = vld [vmem:[%s1 + $0x3f8] sm:$0xff]
  %v187 = vld [vmem:[%s1 + $0x400] sm:$0xff]
  %v188 = vld [vmem:[%s1 + $0x408] sm:$0xff]
  %v189 = vld [vmem:[%s1 + $0x410] sm:$0xff]
  %v190 = vld [vmem:[%s1 + $0x418] sm:$0xff]
  %v191 = vld [vmem:[%s1 + $0x420] sm:$0xff]
  %v192 = vld [vmem:[%s1 + $0x428] sm:$0xff]
  %v193 = vld [vmem:[%s1 + $0x430] sm:$0xff]
  %v194 = vld [vmem:[%s1 + $0x438] sm:$0xff]
  %v195 = vld [vmem:[%s1 + $0x440] sm:$0xff]
  %v196 = vld [vmem:[%s1 + $0x448] sm:$0xff]
  %v197 = vld [vmem:[%s1 + $0x450] sm:$0xff]
  %v198 = vld [vmem:[%s1 + $0x458] sm:$0xff]
  %v199 = vld [vmem:[%s1 + $0x460] sm:$0xff]
  %v200 = vld [vmem:[%s1 + $0x468] sm:$0xff]
  %v201 = vld [vmem:[%s1 + $0x470] sm:$0xff]
  %v202 = vld [vmem:[%s1 + $0x478] sm:$0xff]
  %v248 = vunpack.c.l.b16 %v14
  %v249 = vunpack.c.h.b16 %v14
  %v250 = vunpack.c.l.b16 %v15
  %v251 = vunpack.c.h.b16 %v15
  %v252 = vunpack.c.l.b16 %v16
  %v253 = vunpack.c.h.b16 %v16
  %v254 = vunpack.c.l.b16 %v17
  %v255 = vunpack.c.h.b16 %v17
  %v256 = vunpack.c.l.b16 %v18
  %v257 = vunpack.c.l.b16 %v19
  %v258 = vunpack.c.h.b16 %v19
  %v259 = vunpack.c.l.b16 %v20
  %v260 = vunpack.c.h.b16 %v20
  %v261 = vunpack.c.l.b16 %v21
  %v262 = vunpack.c.h.b16 %v21
  %v263 = vunpack.c.l.b16 %v22
  %v264 = vunpack.c.h.b16 %v22
  %v265 = vunpack.c.l.b16 %v23
  %v266 = vunpack.c.l.b16 %v24
  %v267 = vunpack.c.h.b16 %v24
  %v268 = vunpack.c.l.b16 %v25
  %v269 = vunpack.c.h.b16 %v25
  %v270 = vunpack.c.l.b16 %v26
  %v271 = vunpack.c.h.b16 %v26
  %v272 = vunpack.c.l.b16 %v27
  %v273 = vunpack.c.h.b16 %v27
  %v274 = vunpack.c.l.b16 %v28
  %v275 = vunpack.c.l.b16 %v29
  %v276 = vunpack.c.h.b16 %v29
  %v277 = vunpack.c.l.b16 %v30
  %v278 = vunpack.c.h.b16 %v30
  %v279 = vunpack.c.l.b16 %v31
  %v280 = vunpack.c.h.b16 %v31
  %v281 = vunpack.c.l.b16 %v32
  %v282 = vunpack.c.h.b16 %v32
  %v283 = vunpack.c.l.b16 %v33
  %v284 = vunpack.c.l.b16 %v34
  %v285 = vunpack.c.h.b16 %v34
  %v286 = vunpack.c.l.b16 %v35
  %v287 = vunpack.c.h.b16 %v35
  %v288 = vunpack.c.l.b16 %v36
  %v289 = vunpack.c.h.b16 %v36
  %v290 = vunpack.c.l.b16 %v37
  %v291 = vunpack.c.h.b16 %v37
  %v292 = vunpack.c.l.b16 %v38
  %v293 = vunpack.c.l.b16 %v39
  %v294 = vunpack.c.h.b16 %v39
  %v295 = vunpack.c.l.b16 %v40
  %v296 = vunpack.c.h.b16 %v40
  %v297 = vunpack.c.l.b16 %v41
  %v298 = vunpack.c.h.b16 %v41
  %v299 = vunpack.c.l.b16 %v42
  %v300 = vunpack.c.h.b16 %v42
  %v301 = vunpack.c.l.b16 %v43
  %v302 = vunpack.c.l.b16 %v44
  %v303 = vunpack.c.h.b16 %v44
  %v304 = vunpack.c.l.b16 %v45
  %v305 = vunpack.c.h.b16 %v45
  %v306 = vunpack.c.l.b16 %v46
  %v307 = vunpack.c.h.b16 %v46
  %v308 = vunpack.c.l.b16 %v47
  %v309 = vunpack.c.h.b16 %v47
  %v310 = vunpack.c.l.b16 %v48
  %v311 = vunpack.c.l.b16 %v49
  %v312 = vunpack.c.h.b16 %v49
  %v313 = vunpack.c.l.b16 %v50
  %v314 = vunpack.c.h.b16 %v50
  %v315 = vunpack.c.l.b16 %v51
  %v316 = vunpack.c.h.b16 %v51
  %v317 = vunpack.c.l.b16 %v52
  %v318 = vunpack.c.h.b16 %v52
  %v319 = vunpack.c.l.b16 %v53
  %v320 = vunpack.c.l.b16 %v54
  %v321 = vunpack.c.h.b16 %v54
  %v322 = vunpack.c.l.b16 %v55
  %v323 = vunpack.c.h.b16 %v55
  %v324 = vunpack.c.l.b16 %v56
  %v325 = vunpack.c.h.b16 %v56
  %v326 = vunpack.c.l.b16 %v57
  %v327 = vunpack.c.h.b16 %v57
  %v328 = vunpack.c.l.b16 %v58
  %v329 = vpack.c.b16 %v257, %v248
  %v330 = vpack.c.b16 %v258, %v249
  %v331 = vpack.c.b16 %v259, %v250
  %v332 = vpack.c.b16 %v260, %v251
  %v333 = vpack.c.b16 %v261, %v252
  %v334 = vpack.c.b16 %v262, %v253
  %v335 = vpack.c.b16 %v263, %v254
  %v336 = vpack.c.b16 %v264, %v255
  %v337 = vpack.c.b16 %v265, %v256
  %v338 = vpack.c.b16 %v275, %v266
  %v339 = vpack.c.b16 %v276, %v267
  %v340 = vpack.c.b16 %v277, %v268
  %v341 = vpack.c.b16 %v278, %v269
  %v342 = vpack.c.b16 %v279, %v270
  %v343 = vpack.c.b16 %v280, %v271
  %v344 = vpack.c.b16 %v281, %v272
  %v345 = vpack.c.b16 %v282, %v273
  %v346 = vpack.c.b16 %v283, %v274
  %v347 = vpack.c.b16 %v293, %v284
  %v348 = vpack.c.b16 %v294, %v285
  %v349 = vpack.c.b16 %v295, %v286
  %v350 = vpack.c.b16 %v296, %v287
  %v351 = vpack.c.b16 %v297, %v288
  %v352 = vpack.c.b16 %v298, %v289
  %v353 = vpack.c.b16 %v299, %v290
  %v354 = vpack.c.b16 %v300, %v291
  %v355 = vpack.c.b16 %v301, %v292
  %v356 = vpack.c.b16 %v311, %v302
  %v357 = vpack.c.b16 %v312, %v303
  %v358 = vpack.c.b16 %v313, %v304
  %v359 = vpack.c.b16 %v314, %v305
  %v360 = vpack.c.b16 %v315, %v306
  %v361 = vpack.c.b16 %v316, %v307
  %v362 = vpack.c.b16 %v317, %v308
  %v363 = vpack.c.b16 %v318, %v309
  %v364 = vpack.c.b16 %v319, %v310
  %v365 = vpack.c.b16 %v320, %v320
  %v366 = vpack.c.b16 %v321, %v321
  %v367 = vpack.c.b16 %v322, %v322
  %v368 = vpack.c.b16 %v323, %v323
  %v369 = vpack.c.b16 %v324, %v324
  %v370 = vpack.c.b16 %v325, %v325
  %v371 = vpack.c.b16 %v326, %v326
  %v372 = vpack.c.b16 %v327, %v327
  %v373 = vpack.c.b16 %v328, %v328
  %v563 = vunpack.c.l.b16 %v59
  %v564 = vunpack.c.h.b16 %v59
  %v565 = vunpack.c.l.b16 %v60
  %v566 = vunpack.c.h.b16 %v60
  %v567 = vunpack.c.l.b16 %v61
  %v568 = vunpack.c.h.b16 %v61
  %v569 = vunpack.c.l.b16 %v62
  %v570 = vunpack.c.h.b16 %v62
  %v571 = vunpack.c.l.b16 %v63
  %v572 = vunpack.c.h.b16 %v63
  %v573 = vunpack.c.l.b16 %v64
  %v574 = vunpack.c.h.b16 %v64
  %v575 = vunpack.c.l.b16 %v65
  %v576 = vunpack.c.h.b16 %v65
  %v577 = vunpack.c.l.b16 %v66
  %v578 = vunpack.c.h.b16 %v66
  %v579 = vunpack.c.l.b16 %v67
  %v580 = vunpack.c.h.b16 %v67
  %v581 = vunpack.c.l.b16 %v68
  %v582 = vunpack.c.h.b16 %v68
  %v583 = vunpack.c.l.b16 %v69
  %v584 = vunpack.c.h.b16 %v69
  %v585 = vunpack.c.l.b16 %v70
  %v586 = vunpack.c.h.b16 %v70
  %v587 = vunpack.c.l.b16 %v71
  %v588 = vunpack.c.h.b16 %v71
  %v589 = vunpack.c.l.b16 %v72
  %v590 = vunpack.c.h.b16 %v72
  %v591 = vunpack.c.l.b16 %v73
  %v592 = vunpack.c.h.b16 %v73
  %v593 = vunpack.c.l.b16 %v74
  %v594 = vunpack.c.h.b16 %v74
  %v595 = vunpack.c.l.b16 %v75
  %v596 = vunpack.c.h.b16 %v75
  %v597 = vunpack.c.l.b16 %v76
  %v598 = vunpack.c.h.b16 %v76
  %v599 = vunpack.c.l.b16 %v77
  %v600 = vunpack.c.h.b16 %v77
  %v601 = vunpack.c.l.b16 %v78
  %v602 = vunpack.c.h.b16 %v78
  %v603 = vunpack.c.l.b16 %v79
  %v604 = vunpack.c.h.b16 %v79
  %v605 = vunpack.c.l.b16 %v80
  %v606 = vunpack.c.h.b16 %v80
  %v607 = vunpack.c.l.b16 %v81
  %v608 = vunpack.c.h.b16 %v81
  %v609 = vunpack.c.l.b16 %v82
  %v610 = vunpack.c.h.b16 %v82
  %v611 = vunpack.c.l.b16 %v83
  %v612 = vunpack.c.h.b16 %v83
  %v613 = vunpack.c.l.b16 %v84
  %v614 = vunpack.c.h.b16 %v84
  %v615 = vunpack.c.l.b16 %v85
  %v616 = vunpack.c.h.b16 %v85
  %v617 = vunpack.c.l.b16 %v86
  %v618 = vunpack.c.h.b16 %v86
  %v619 = vunpack.c.l.b16 %v87
  %v620 = vunpack.c.h.b16 %v87
  %v621 = vunpack.c.l.b16 %v88
  %v622 = vunpack.c.h.b16 %v88
  %v623 = vunpack.c.l.b16 %v89
  %v624 = vunpack.c.h.b16 %v89
  %v625 = vunpack.c.l.b16 %v90
  %v626 = vunpack.c.h.b16 %v90
  %v627 = vunpack.c.l.b16 %v91
  %v628 = vunpack.c.h.b16 %v91
  %v629 = vunpack.c.l.b16 %v92
  %v630 = vunpack.c.h.b16 %v92
  %v631 = vunpack.c.l.b16 %v93
  %v632 = vunpack.c.h.b16 %v93
  %v633 = vunpack.c.l.b16 %v94
  %v634 = vunpack.c.h.b16 %v94
  %v635 = vunpack.c.l.b16 %v95
  %v636 = vunpack.c.h.b16 %v95
  %v637 = vunpack.c.l.b16 %v96
  %v638 = vunpack.c.h.b16 %v96
  %v639 = vunpack.c.l.b16 %v97
  %v640 = vunpack.c.h.b16 %v97
  %v641 = vunpack.c.l.b16 %v98
  %v642 = vunpack.c.h.b16 %v98
  %v643 = vunpack.c.l.b16 %v99
  %v644 = vunpack.c.h.b16 %v99
  %v645 = vunpack.c.l.b16 %v100
  %v646 = vunpack.c.h.b16 %v100
  %v647 = vunpack.c.l.b16 %v101
  %v648 = vunpack.c.h.b16 %v101
  %v649 = vunpack.c.l.b16 %v102
  %v650 = vunpack.c.h.b16 %v102
  %v651 = vunpack.c.l.b16 %v103
  %v652 = vunpack.c.h.b16 %v103
  %v653 = vunpack.c.l.b16 %v104
  %v654 = vunpack.c.h.b16 %v104
  %v655 = vunpack.c.l.b16 %v105
  %v656 = vunpack.c.h.b16 %v105
  %v657 = vunpack.c.l.b16 %v106
  %v658 = vunpack.c.h.b16 %v106
  %v659 = vunpack.c.l.b16 %v107
  %v660 = vunpack.c.h.b16 %v107
  %v661 = vunpack.c.l.b16 %v108
  %v662 = vunpack.c.h.b16 %v108
  %v663 = vunpack.c.l.b16 %v109
  %v664 = vunpack.c.h.b16 %v109
  %v665 = vunpack.c.l.b16 %v110
  %v666 = vunpack.c.h.b16 %v110
  %v667 = vunpack.c.l.b16 %v111
  %v668 = vunpack.c.h.b16 %v111
  %v669 = vunpack.c.l.b16 %v112
  %v670 = vunpack.c.h.b16 %v112
  %v671 = vunpack.c.l.b16 %v113
  %v672 = vunpack.c.h.b16 %v113
  %v673 = vunpack.c.l.b16 %v114
  %v674 = vunpack.c.h.b16 %v114
  %v675 = vunpack.c.l.b16 %v115
  %v676 = vunpack.c.h.b16 %v115
  %v677 = vunpack.c.l.b16 %v116
  %v678 = vunpack.c.h.b16 %v116
  %v679 = vunpack.c.l.b16 %v117
  %v680 = vunpack.c.h.b16 %v117
  %v681 = vunpack.c.l.b16 %v118
  %v682 = vunpack.c.h.b16 %v118
  %v683 = vunpack.c.l.b16 %v119
  %v684 = vunpack.c.h.b16 %v119
  %v685 = vunpack.c.l.b16 %v120
  %v686 = vunpack.c.h.b16 %v120
  %v687 = vunpack.c.l.b16 %v121
  %v688 = vunpack.c.h.b16 %v121
  %v689 = vunpack.c.l.b16 %v122
  %v690 = vunpack.c.h.b16 %v122
  %v691 = vunpack.c.l.b16 %v123
  %v692 = vunpack.c.h.b16 %v123
  %v693 = vunpack.c.l.b16 %v124
  %v694 = vunpack.c.h.b16 %v124
  %v695 = vunpack.c.l.b16 %v125
  %v696 = vunpack.c.h.b16 %v125
  %v697 = vunpack.c.l.b16 %v126
  %v698 = vunpack.c.h.b16 %v126
  %v699 = vunpack.c.l.b16 %v127
  %v700 = vunpack.c.h.b16 %v127
  %v701 = vunpack.c.l.b16 %v128
  %v702 = vunpack.c.h.b16 %v128
  %v703 = vunpack.c.l.b16 %v129
  %v704 = vunpack.c.h.b16 %v129
  %v705 = vunpack.c.l.b16 %v130
  %v706 = vunpack.c.h.b16 %v130
  %v707 = vunpack.c.l.b16 %v131
  %v708 = vunpack.c.h.b16 %v131
  %v709 = vunpack.c.l.b16 %v132
  %v710 = vunpack.c.h.b16 %v132
  %v711 = vunpack.c.l.b16 %v133
  %v712 = vunpack.c.h.b16 %v133
  %v713 = vunpack.c.l.b16 %v134
  %v714 = vunpack.c.h.b16 %v134
  %v715 = vunpack.c.l.b16 %v135
  %v716 = vunpack.c.h.b16 %v135
  %v717 = vunpack.c.l.b16 %v136
  %v718 = vunpack.c.h.b16 %v136
  %v719 = vunpack.c.l.b16 %v137
  %v720 = vunpack.c.h.b16 %v137
  %v721 = vunpack.c.l.b16 %v138
  %v722 = vunpack.c.h.b16 %v138
  %v723 = vunpack.c.l.b16 %v139
  %v724 = vunpack.c.h.b16 %v139
  %v725 = vunpack.c.l.b16 %v140
  %v726 = vunpack.c.h.b16 %v140
  %v727 = vunpack.c.l.b16 %v141
  %v728 = vunpack.c.h.b16 %v141
  %v729 = vunpack.c.l.b16 %v142
  %v730 = vunpack.c.h.b16 %v142
  %v731 = vunpack.c.l.b16 %v143
  %v732 = vunpack.c.h.b16 %v143
  %v733 = vunpack.c.l.b16 %v144
  %v734 = vunpack.c.h.b16 %v144
  %v735 = vunpack.c.l.b16 %v145
  %v736 = vunpack.c.h.b16 %v145
  %v737 = vunpack.c.l.b16 %v146
  %v738 = vunpack.c.h.b16 %v146
  %v739 = vunpack.c.l.b16 %v147
  %v740 = vunpack.c.h.b16 %v147
  %v741 = vunpack.c.l.b16 %v148
  %v742 = vunpack.c.h.b16 %v148
  %v743 = vunpack.c.l.b16 %v149
  %v744 = vunpack.c.h.b16 %v149
  %v745 = vunpack.c.l.b16 %v150
  %v746 = vunpack.c.h.b16 %v150
  %v747 = vunpack.c.l.b16 %v151
  %v748 = vunpack.c.h.b16 %v151
  %v749 = vunpack.c.l.b16 %v152
  %v750 = vunpack.c.h.b16 %v152
  %v751 = vunpack.c.l.b16 %v153
  %v752 = vunpack.c.h.b16 %v153
  %v753 = vunpack.c.l.b16 %v154
  %v754 = vunpack.c.h.b16 %v154
  %v755 = vunpack.c.l.b16 %v155
  %v756 = vunpack.c.h.b16 %v155
  %v757 = vunpack.c.l.b16 %v156
  %v758 = vunpack.c.h.b16 %v156
  %v759 = vunpack.c.l.b16 %v157
  %v760 = vunpack.c.h.b16 %v157
  %v761 = vunpack.c.l.b16 %v158
  %v762 = vunpack.c.h.b16 %v158
  %v763 = vunpack.c.l.b16 %v159
  %v764 = vunpack.c.h.b16 %v159
  %v765 = vunpack.c.l.b16 %v160
  %v766 = vunpack.c.h.b16 %v160
  %v767 = vunpack.c.l.b16 %v161
  %v768 = vunpack.c.h.b16 %v161
  %v769 = vunpack.c.l.b16 %v162
  %v770 = vunpack.c.h.b16 %v162
  %v771 = vunpack.c.l.b16 %v163
  %v772 = vunpack.c.h.b16 %v163
  %v773 = vunpack.c.l.b16 %v164
  %v774 = vunpack.c.h.b16 %v164
  %v775 = vunpack.c.l.b16 %v165
  %v776 = vunpack.c.h.b16 %v165
  %v777 = vunpack.c.l.b16 %v166
  %v778 = vunpack.c.h.b16 %v166
  %v779 = vunpack.c.l.b16 %v167
  %v780 = vunpack.c.h.b16 %v167
  %v781 = vunpack.c.l.b16 %v168
  %v782 = vunpack.c.h.b16 %v168
  %v783 = vunpack.c.l.b16 %v169
  %v784 = vunpack.c.h.b16 %v169
  %v785 = vunpack.c.l.b16 %v170
  %v786 = vunpack.c.h.b16 %v170
  %v787 = vunpack.c.l.b16 %v171
  %v788 = vunpack.c.h.b16 %v171
  %v789 = vunpack.c.l.b16 %v172
  %v790 = vunpack.c.h.b16 %v172
  %v791 = vunpack.c.l.b16 %v173
  %v792 = vunpack.c.h.b16 %v173
  %v793 = vunpack.c.l.b16 %v174
  %v794 = vunpack.c.h.b16 %v174
  %v795 = vunpack.c.l.b16 %v175
  %v796 = vunpack.c.h.b16 %v175
  %v797 = vunpack.c.l.b16 %v176
  %v798 = vunpack.c.h.b16 %v176
  %v799 = vunpack.c.l.b16 %v177
  %v800 = vunpack.c.h.b16 %v177
  %v801 = vunpack.c.l.b16 %v178
  %v802 = vunpack.c.h.b16 %v178
  %v803 = vunpack.c.l.b16 %v179
  %v804 = vunpack.c.h.b16 %v179
  %v805 = vunpack.c.l.b16 %v180
  %v806 = vunpack.c.h.b16 %v180
  %v807 = vunpack.c.l.b16 %v181
  %v808 = vunpack.c.h.b16 %v181
  %v809 = vunpack.c.l.b16 %v182
  %v810 = vunpack.c.h.b16 %v182
  %v811 = vunpack.c.l.b16 %v183
  %v812 = vunpack.c.h.b16 %v183
  %v813 = vunpack.c.l.b16 %v184
  %v814 = vunpack.c.h.b16 %v184
  %v815 = vunpack.c.l.b16 %v185
  %v816 = vunpack.c.h.b16 %v185
  %v817 = vunpack.c.l.b16 %v186
  %v818 = vunpack.c.h.b16 %v186
  %v819 = vunpack.c.l.b16 %v187
  %v820 = vunpack.c.h.b16 %v187
  %v821 = vunpack.c.l.b16 %v188
  %v822 = vunpack.c.h.b16 %v188
  %v823 = vunpack.c.l.b16 %v189
  %v824 = vunpack.c.h.b16 %v189
  %v825 = vunpack.c.l.b16 %v190
  %v826 = vunpack.c.h.b16 %v190
  %v827 = vunpack.c.l.b16 %v191
  %v828 = vunpack.c.h.b16 %v191
  %v829 = vunpack.c.l.b16 %v192
  %v830 = vunpack.c.h.b16 %v192
  %v831 = vunpack.c.l.b16 %v193
  %v832 = vunpack.c.h.b16 %v193
  %v833 = vunpack.c.l.b16 %v194
  %v834 = vunpack.c.h.b16 %v194
  %v835 = vunpack.c.l.b16 %v195
  %v836 = vunpack.c.h.b16 %v195
  %v837 = vunpack.c.l.b16 %v196
  %v838 = vunpack.c.h.b16 %v196
  %v839 = vunpack.c.l.b16 %v197
  %v840 = vunpack.c.h.b16 %v197
  %v841 = vunpack.c.l.b16 %v198
  %v842 = vunpack.c.h.b16 %v198
  %v843 = vunpack.c.l.b16 %v199
  %v844 = vunpack.c.h.b16 %v199
  %v845 = vunpack.c.l.b16 %v200
  %v846 = vunpack.c.h.b16 %v200
  %v847 = vunpack.c.l.b16 %v201
  %v848 = vunpack.c.h.b16 %v201
  %v849 = vunpack.c.l.b16 %v202
  %v850 = vunpack.c.h.b16 %v202
  %v851 = vpack.c.b16 %v565, %v563
  %v852 = vpack.c.b16 %v566, %v564
  %v853 = vpack.c.b16 %v569, %v567
  %v854 = vpack.c.b16 %v570, %v568
  %v855 = vpack.c.b16 %v573, %v571
  %v856 = vpack.c.b16 %v574, %v572
  %v857 = vpack.c.b16 %v577, %v575
  %v858 = vpack.c.b16 %v578, %v576
  %v859 = vpack.c.b16 %v581, %v579
  %v860 = vpack.c.b16 %v582, %v580
  %v861 = vpack.c.b16 %v585, %v583
  %v862 = vpack.c.b16 %v586, %v584
  %v863 = vpack.c.b16 %v589, %v587
  %v864 = vpack.c.b16 %v590, %v588
  %v865 = vpack.c.b16 %v593, %v591
  %v866 = vpack.c.b16 %v594, %v592
  %v867 = vpack.c.b16 %v597, %v595
  %v868 = vpack.c.b16 %v598, %v596
  %v869 = vpack.c.b16 %v601, %v599
  %v870 = vpack.c.b16 %v602, %v600
  %v871 = vpack.c.b16 %v605, %v603
  %v872 = vpack.c.b16 %v606, %v604
  %v873 = vpack.c.b16 %v609, %v607
  %v874 = vpack.c.b16 %v610, %v608
  %v875 = vpack.c.b16 %v613, %v611
  %v876 = vpack.c.b16 %v614, %v612
  %v877 = vpack.c.b16 %v617, %v615
  %v878 = vpack.c.b16 %v618, %v616
  %v879 = vpack.c.b16 %v621, %v619
  %v880 = vpack.c.b16 %v622, %v620
  %v881 = vpack.c.b16 %v625, %v623
  %v882 = vpack.c.b16 %v626, %v624
  %v883 = vpack.c.b16 %v629, %v627
  %v884 = vpack.c.b16 %v630, %v628
  %v885 = vpack.c.b16 %v633, %v631
  %v886 = vpack.c.b16 %v634, %v632
  %v887 = vpack.c.b16 %v637, %v635
  %v888 = vpack.c.b16 %v638, %v636
  %v889 = vpack.c.b16 %v641, %v639
  %v890 = vpack.c.b16 %v642, %v640
  %v891 = vpack.c.b16 %v645, %v643
  %v892 = vpack.c.b16 %v646, %v644
  %v893 = vpack.c.b16 %v649, %v647
  %v894 = vpack.c.b16 %v650, %v648
  %v895 = vpack.c.b16 %v653, %v651
  %v896 = vpack.c.b16 %v654, %v652
  %v897 = vpack.c.b16 %v657, %v655
  %v898 = vpack.c.b16 %v658, %v656
  %v899 = vpack.c.b16 %v661, %v659
  %v900 = vpack.c.b16 %v662, %v660
  %v901 = vpack.c.b16 %v665, %v663
  %v902 = vpack.c.b16 %v666, %v664
  %v903 = vpack.c.b16 %v669, %v667
  %v904 = vpack.c.b16 %v670, %v668
  %v905 = vpack.c.b16 %v673, %v671
  %v906 = vpack.c.b16 %v674, %v672
  %v907 = vpack.c.b16 %v677, %v675
  %v908 = vpack.c.b16 %v678, %v676
  %v909 = vpack.c.b16 %v681, %v679
  %v910 = vpack.c.b16 %v682, %v680
  %v911 = vpack.c.b16 %v685, %v683
  %v912 = vpack.c.b16 %v686, %v684
  %v913 = vpack.c.b16 %v689, %v687
  %v914 = vpack.c.b16 %v690, %v688
  %v915 = vpack.c.b16 %v693, %v691
  %v916 = vpack.c.b16 %v694, %v692
  %v917 = vpack.c.b16 %v697, %v695
  %v918 = vpack.c.b16 %v698, %v696
  %v919 = vpack.c.b16 %v701, %v699
  %v920 = vpack.c.b16 %v702, %v700
  %v921 = vpack.c.b16 %v705, %v703
  %v922 = vpack.c.b16 %v706, %v704
  %v923 = vpack.c.b16 %v709, %v707
  %v924 = vpack.c.b16 %v710, %v708
  %v925 = vpack.c.b16 %v713, %v711
  %v926 = vpack.c.b16 %v714, %v712
  %v927 = vpack.c.b16 %v717, %v715
  %v928 = vpack.c.b16 %v718, %v716
  %v929 = vpack.c.b16 %v721, %v719
  %v930 = vpack.c.b16 %v722, %v720
  %v931 = vpack.c.b16 %v725, %v723
  %v932 = vpack.c.b16 %v726, %v724
  %v933 = vpack.c.b16 %v729, %v727
  %v934 = vpack.c.b16 %v730, %v728
  %v935 = vpack.c.b16 %v733, %v731
  %v936 = vpack.c.b16 %v734, %v732
  %v937 = vpack.c.b16 %v737, %v735
  %v938 = vpack.c.b16 %v738, %v736
  %v939 = vpack.c.b16 %v741, %v739
  %v940 = vpack.c.b16 %v742, %v740
  %v941 = vpack.c.b16 %v745, %v743
  %v942 = vpack.c.b16 %v746, %v744
  %v943 = vpack.c.b16 %v749, %v747
  %v944 = vpack.c.b16 %v750, %v748
  %v945 = vpack.c.b16 %v753, %v751
  %v946 = vpack.c.b16 %v754, %v752
  %v947 = vpack.c.b16 %v757, %v755
  %v948 = vpack.c.b16 %v758, %v756
  %v949 = vpack.c.b16 %v761, %v759
  %v950 = vpack.c.b16 %v762, %v760
  %v951 = vpack.c.b16 %v765, %v763
  %v952 = vpack.c.b16 %v766, %v764
  %v953 = vpack.c.b16 %v769, %v767
  %v954 = vpack.c.b16 %v770, %v768
  %v955 = vpack.c.b16 %v773, %v771
  %v956 = vpack.c.b16 %v774, %v772
  %v957 = vpack.c.b16 %v777, %v775
  %v958 = vpack.c.b16 %v778, %v776
  %v959 = vpack.c.b16 %v781, %v779
  %v960 = vpack.c.b16 %v782, %v780
  %v961 = vpack.c.b16 %v785, %v783
  %v962 = vpack.c.b16 %v786, %v784
  %v963 = vpack.c.b16 %v789, %v787
  %v964 = vpack.c.b16 %v790, %v788
  %v965 = vpack.c.b16 %v793, %v791
  %v966 = vpack.c.b16 %v794, %v792
  %v967 = vpack.c.b16 %v797, %v795
  %v968 = vpack.c.b16 %v798, %v796
  %v969 = vpack.c.b16 %v801, %v799
  %v970 = vpack.c.b16 %v802, %v800
  %v971 = vpack.c.b16 %v805, %v803
  %v972 = vpack.c.b16 %v806, %v804
  %v973 = vpack.c.b16 %v809, %v807
  %v974 = vpack.c.b16 %v810, %v808
  %v975 = vpack.c.b16 %v813, %v811
  %v976 = vpack.c.b16 %v814, %v812
  %v977 = vpack.c.b16 %v817, %v815
  %v978 = vpack.c.b16 %v818, %v816
  %v979 = vpack.c.b16 %v821, %v819
  %v980 = vpack.c.b16 %v822, %v820
  %v981 = vpack.c.b16 %v825, %v823
  %v982 = vpack.c.b16 %v826, %v824
  %v983 = vpack.c.b16 %v829, %v827
  %v984 = vpack.c.b16 %v830, %v828
  %v985 = vpack.c.b16 %v833, %v831
  %v986 = vpack.c.b16 %v834, %v832
  %v987 = vpack.c.b16 %v837, %v835
  %v988 = vpack.c.b16 %v838, %v836
  %v989 = vpack.c.b16 %v841, %v839
  %v990 = vpack.c.b16 %v842, %v840
  %v991 = vpack.c.b16 %v845, %v843
  %v992 = vpack.c.b16 %v846, %v844
  %v993 = vpack.c.b16 %v849, %v847
  %v994 = vpack.c.b16 %v850, %v848
  %1139 = vmatprep.subr.bf16.mxu0 %v866
  %1140 = vmatpush1.bf16.msra.mxu0 %v865
  %1141 = vmatprep.subr.bf16.mxu0 %v864
  %1142 = vmatpush1.bf16.msra.mxu0 %v863
  %1143 = vmatprep.subr.bf16.mxu0 %v862
  %1144 = vmatpush1.bf16.msra.mxu0 %v861
  %1145 = vmatprep.subr.bf16.mxu0 %v860
  %1146 = vmatpush1.bf16.msra.mxu0 %v859
  %1147 = vmatprep.subr.bf16.mxu0 %v858
  %1148 = vmatpush1.bf16.msra.mxu0 %v857
  %1149 = vmatprep.subr.bf16.mxu0 %v856
  %1150 = vmatpush1.bf16.msra.mxu0 %v855
  %1151 = vmatprep.subr.bf16.mxu0 %v854
  %1152 = vmatpush1.bf16.msra.mxu0 %v853
  %1153 = vmatprep.subr.bf16.mxu0 %v852
  %1154 = vmatpush1.bf16.msra.mxu0 %v851
  %1155 = vmatprep.subr.bf16.mxu0 %v882
  %1156 = vmatpush2.bf16.msra.mxu0 %v881
  %1157 = vmatprep.subr.bf16.mxu0 %v880
  %1158 = vmatpush2.bf16.msra.mxu0 %v879
  %1159 = vmatprep.subr.bf16.mxu0 %v878
  %1160 = vmatpush2.bf16.msra.mxu0 %v877
  %1161 = vmatprep.subr.bf16.mxu0 %v876
  %1162 = vmatpush2.bf16.msra.mxu0 %v875
  %1163 = vmatprep.subr.bf16.mxu0 %v874
  %1164 = vmatpush2.bf16.msra.mxu0 %v873
  %1165 = vmatprep.subr.bf16.mxu0 %v872
  %1166 = vmatpush2.bf16.msra.mxu0 %v871
  %1167 = vmatprep.subr.bf16.mxu0 %v870
  %1168 = vmatpush2.bf16.msra.mxu0 %v869
  %1169 = vmatprep.subr.bf16.mxu0 %v868
  %1170 = vmatpush2.bf16.msra.mxu0 %v867
  %1171 = vmatprep.mubr.bf16.mxu0 %v330
  %1172 = vmatmul.mubr.bf16.gmra.mxu0 %v329
  %v1173 = vpop.f32.mrf.mxu0
  %v1174 = vadd.f32 0.0, %v1173
  %v1175 = vpop.f32.mrf.mxu0
  %v1176 = vadd.f32 0.0, %v1175
  %v1177 = vpop.f32.mrf.mxu0
  %v1178 = vadd.f32 0.0, %v1177
  %v1179 = vpop.f32.mrf.mxu0
  %v1180 = vadd.f32 0.0, %v1179
  %1181 = vmatprep.mubr.bf16.mxu0 %v339
  %1182 = vmatmul.mubr.bf16.gmra.mxu0 %v338
  %v1183 = vpop.f32.mrf.mxu0
  %v1184 = vadd.f32 0.0, %v1183
  %v1185 = vpop.f32.mrf.mxu0
  %v1186 = vadd.f32 0.0, %v1185
  %v1187 = vpop.f32.mrf.mxu0
  %v1188 = vadd.f32 0.0, %v1187
  %v1189 = vpop.f32.mrf.mxu0
  %v1190 = vadd.f32 0.0, %v1189
  %1191 = vmatprep.mubr.bf16.mxu0 %v348
  %1192 = vmatmul.mubr.bf16.gmra.mxu0 %v347
  %v1193 = vpop.f32.mrf.mxu0
  %v1194 = vadd.f32 0.0, %v1193
  %v1195 = vpop.f32.mrf.mxu0
  %v1196 = vadd.f32 0.0, %v1195
  %v1197 = vpop.f32.mrf.mxu0
  %v1198 = vadd.f32 0.0, %v1197
  %v1199 = vpop.f32.mrf.mxu0
  %v1200 = vadd.f32 0.0, %v1199
  %1201 = vmatprep.mubr.bf16.mxu0 %v357
  %1202 = vmatmul.mubr.bf16.gmra.mxu0 %v356
  %v1203 = vpop.f32.mrf.mxu0
  %v1204 = vadd.f32 0.0, %v1203
  %v1205 = vpop.f32.mrf.mxu0
  %v1206 = vadd.f32 0.0, %v1205
  %v1207 = vpop.f32.mrf.mxu0
  %v1208 = vadd.f32 0.0, %v1207
  %v1209 = vpop.f32.mrf.mxu0
  %v1210 = vadd.f32 0.0, %v1209
  %1211 = vmatprep.mubr.bf16.mxu0 %v366
  %1212 = vmatmul.mubr.bf16.gmra.mxu0 %v365
  %v1213 = vpop.f32.mrf.mxu0
  %v1214 = vadd.f32 0.0, %v1213
  %v1215 = vpop.f32.mrf.mxu0
  %v1216 = vadd.f32 0.0, %v1215
  %v1217 = vpop.f32.mrf.mxu0
  %v1218 = vpop.f32.mrf.mxu0
  %1219 = vdwg.mxu0
  %1220 = vmatprep.subr.bf16.mxu0 %v898
  %1221 = vmatpush1.bf16.msra.mxu0 %v897
  %1222 = vmatprep.subr.bf16.mxu0 %v896
  %1223 = vmatpush1.bf16.msra.mxu0 %v895
  %1224 = vmatprep.subr.bf16.mxu0 %v894
  %1225 = vmatpush1.bf16.msra.mxu0 %v893
  %1226 = vmatprep.subr.bf16.mxu0 %v892
  %1227 = vmatpush1.bf16.msra.mxu0 %v891
  %1228 = vmatprep.subr.bf16.mxu0 %v890
  %1229 = vmatpush1.bf16.msra.mxu0 %v889
  %1230 = vmatprep.subr.bf16.mxu0 %v888
  %1231 = vmatpush1.bf16.msra.mxu0 %v887
  %1232 = vmatprep.subr.bf16.mxu0 %v886
  %1233 = vmatpush1.bf16.msra.mxu0 %v885
  %1234 = vmatprep.subr.bf16.mxu0 %v884
  %1235 = vmatpush1.bf16.msra.mxu0 %v883
  %1236 = vmatprep.subr.bf16.mxu0 %v914
  %1237 = vmatpush2.bf16.msra.mxu0 %v913
  %1238 = vmatprep.subr.bf16.mxu0 %v912
  %1239 = vmatpush2.bf16.msra.mxu0 %v911
  %1240 = vmatprep.subr.bf16.mxu0 %v910
  %1241 = vmatpush2.bf16.msra.mxu0 %v909
  %1242 = vmatprep.subr.bf16.mxu0 %v908
  %1243 = vmatpush2.bf16.msra.mxu0 %v907
  %1244 = vmatprep.subr.bf16.mxu0 %v906
  %1245 = vmatpush2.bf16.msra.mxu0 %v905
  %1246 = vmatprep.subr.bf16.mxu0 %v904
  %1247 = vmatpush2.bf16.msra.mxu0 %v903
  %1248 = vmatprep.subr.bf16.mxu0 %v902
  %1249 = vmatpush2.bf16.msra.mxu0 %v901
  %1250 = vmatprep.subr.bf16.mxu0 %v900
  %1251 = vmatpush2.bf16.msra.mxu0 %v899
  %1252 = vmatprep.mubr.bf16.mxu0 %v332
  %1253 = vmatmul.mubr.bf16.gmra.mxu0 %v331
  %v1254 = vpop.f32.mrf.mxu0
  %v1255 = vadd.f32 %v1174, %v1254
  %v1256 = vpop.f32.mrf.mxu0
  %v1257 = vadd.f32 %v1176, %v1256
  %v1258 = vpop.f32.mrf.mxu0
  %v1259 = vadd.f32 %v1178, %v1258
  %v1260 = vpop.f32.mrf.mxu0
  %v1261 = vadd.f32 %v1180, %v1260
  %1262 = vmatprep.mubr.bf16.mxu0 %v341
  %1263 = vmatmul.mubr.bf16.gmra.mxu0 %v340
  %v1264 = vpop.f32.mrf.mxu0
  %v1265 = vadd.f32 %v1184, %v1264
  %v1266 = vpop.f32.mrf.mxu0
  %v1267 = vadd.f32 %v1186, %v1266
  %v1268 = vpop.f32.mrf.mxu0
  %v1269 = vadd.f32 %v1188, %v1268
  %v1270 = vpop.f32.mrf.mxu0
  %v1271 = vadd.f32 %v1190, %v1270
  %1272 = vmatprep.mubr.bf16.mxu0 %v350
  %1273 = vmatmul.mubr.bf16.gmra.mxu0 %v349
  %v1274 = vpop.f32.mrf.mxu0
  %v1275 = vadd.f32 %v1194, %v1274
  %v1276 = vpop.f32.mrf.mxu0
  %v1277 = vadd.f32 %v1196, %v1276
  %v1278 = vpop.f32.mrf.mxu0
  %v1279 = vadd.f32 %v1198, %v1278
  %v1280 = vpop.f32.mrf.mxu0
  %v1281 = vadd.f32 %v1200, %v1280
  %1282 = vmatprep.mubr.bf16.mxu0 %v359
  %1283 = vmatmul.mubr.bf16.gmra.mxu0 %v358
  %v1284 = vpop.f32.mrf.mxu0
  %v1285 = vadd.f32 %v1204, %v1284
  %v1286 = vpop.f32.mrf.mxu0
  %v1287 = vadd.f32 %v1206, %v1286
  %v1288 = vpop.f32.mrf.mxu0
  %v1289 = vadd.f32 %v1208, %v1288
  %v1290 = vpop.f32.mrf.mxu0
  %v1291 = vadd.f32 %v1210, %v1290
  %1292 = vmatprep.mubr.bf16.mxu0 %v368
  %1293 = vmatmul.mubr.bf16.gmra.mxu0 %v367
  %v1294 = vpop.f32.mrf.mxu0
  %v1295 = vadd.f32 %v1214, %v1294
  %v1296 = vpop.f32.mrf.mxu0
  %v1297 = vadd.f32 %v1216, %v1296
  %v1298 = vpop.f32.mrf.mxu0
  %v1299 = vpop.f32.mrf.mxu0
  %1300 = vdwg.mxu0
  %1301 = vmatprep.subr.bf16.mxu0 %v930
  %1302 = vmatpush1.bf16.msra.mxu0 %v929
  %1303 = vmatprep.subr.bf16.mxu0 %v928
  %1304 = vmatpush1.bf16.msra.mxu0 %v927
  %1305 = vmatprep.subr.bf16.mxu0 %v926
  %1306 = vmatpush1.bf16.msra.mxu0 %v925
  %1307 = vmatprep.subr.bf16.mxu0 %v924
  %1308 = vmatpush1.bf16.msra.mxu0 %v923
  %1309 = vmatprep.subr.bf16.mxu0 %v922
  %1310 = vmatpush1.bf16.msra.mxu0 %v921
  %1311 = vmatprep.subr.bf16.mxu0 %v920
  %1312 = vmatpush1.bf16.msra.mxu0 %v919
  %1313 = vmatprep.subr.bf16.mxu0 %v918
  %1314 = vmatpush1.bf16.msra.mxu0 %v917
  %1315 = vmatprep.subr.bf16.mxu0 %v916
  %1316 = vmatpush1.bf16.msra.mxu0 %v915
  %1317 = vmatprep.subr.bf16.mxu0 %v946
  %1318 = vmatpush2.bf16.msra.mxu0 %v945
  %1319 = vmatprep.subr.bf16.mxu0 %v944
  %1320 = vmatpush2.bf16.msra.mxu0 %v943
  %1321 = vmatprep.subr.bf16.mxu0 %v942
  %1322 = vmatpush2.bf16.msra.mxu0 %v941
  %1323 = vmatprep.subr.bf16.mxu0 %v940
  %1324 = vmatpush2.bf16.msra.mxu0 %v939
  %1325 = vmatprep.subr.bf16.mxu0 %v938
  %1326 = vmatpush2.bf16.msra.mxu0 %v937
  %1327 = vmatprep.subr.bf16.mxu0 %v936
  %1328 = vmatpush2.bf16.msra.mxu0 %v935
  %1329 = vmatprep.subr.bf16.mxu0 %v934
  %1330 = vmatpush2.bf16.msra.mxu0 %v933
  %1331 = vmatprep.subr.bf16.mxu0 %v932
  %1332 = vmatpush2.bf16.msra.mxu0 %v931
  %1333 = vmatprep.mubr.bf16.mxu0 %v334
  %1334 = vmatmul.mubr.bf16.gmra.mxu0 %v333
  %v1335 = vpop.f32.mrf.mxu0
  %v1336 = vadd.f32 %v1255, %v1335
  %v1337 = vpop.f32.mrf.mxu0
  %v1338 = vadd.f32 %v1257, %v1337
  %v1339 = vpop.f32.mrf.mxu0
  %v1340 = vadd.f32 %v1259, %v1339
  %v1341 = vpop.f32.mrf.mxu0
  %v1342 = vadd.f32 %v1261, %v1341
  %1343 = vmatprep.mubr.bf16.mxu0 %v343
  %1344 = vmatmul.mubr.bf16.gmra.mxu0 %v342
  %v1345 = vpop.f32.mrf.mxu0
  %v1346 = vadd.f32 %v1265, %v1345
  %v1347 = vpop.f32.mrf.mxu0
  %v1348 = vadd.f32 %v1267, %v1347
  %v1349 = vpop.f32.mrf.mxu0
  %v1350 = vadd.f32 %v1269, %v1349
  %v1351 = vpop.f32.mrf.mxu0
  %v1352 = vadd.f32 %v1271, %v1351
  %1353 = vmatprep.mubr.bf16.mxu0 %v352
  %1354 = vmatmul.mubr.bf16.gmra.mxu0 %v351
  %v1355 = vpop.f32.mrf.mxu0
  %v1356 = vadd.f32 %v1275, %v1355
  %v1357 = vpop.f32.mrf.mxu0
  %v1358 = vadd.f32 %v1277, %v1357
  %v1359 = vpop.f32.mrf.mxu0
  %v1360 = vadd.f32 %v1279, %v1359
  %v1361 = vpop.f32.mrf.mxu0
  %v1362 = vadd.f32 %v1281, %v1361
  %1363 = vmatprep.mubr.bf16.mxu0 %v361
  %1364 = vmatmul.mubr.bf16.gmra.mxu0 %v360
  %v1365 = vpop.f32.mrf.mxu0
  %v1366 = vadd.f32 %v1285, %v1365
  %v1367 = vpop.f32.mrf.mxu0
  %v1368 = vadd.f32 %v1287, %v1367
  %v1369 = vpop.f32.mrf.mxu0
  %v1370 = vadd.f32 %v1289, %v1369
  %v1371 = vpop.f32.mrf.mxu0
  %v1372 = vadd.f32 %v1291, %v1371
  %1373 = vmatprep.mubr.bf16.mxu0 %v370
  %1374 = vmatmul.mubr.bf16.gmra.mxu0 %v369
  %v1375 = vpop.f32.mrf.mxu0
  %v1376 = vadd.f32 %v1295, %v1375
  %v1377 = vpop.f32.mrf.mxu0
  %v1378 = vadd.f32 %v1297, %v1377
  %v1379 = vpop.f32.mrf.mxu0
  %v1380 = vpop.f32.mrf.mxu0
  %1381 = vdwg.mxu0
  %1382 = vmatprep.subr.bf16.mxu0 %v962
  %1383 = vmatpush1.bf16.msra.mxu0 %v961
  %1384 = vmatprep.subr.bf16.mxu0 %v960
  %1385 = vmatpush1.bf16.msra.mxu0 %v959
  %1386 = vmatprep.subr.bf16.mxu0 %v958
  %1387 = vmatpush1.bf16.msra.mxu0 %v957
  %1388 = vmatprep.subr.bf16.mxu0 %v956
  %1389 = vmatpush1.bf16.msra.mxu0 %v955
  %1390 = vmatprep.subr.bf16.mxu0 %v954
  %1391 = vmatpush1.bf16.msra.mxu0 %v953
  %1392 = vmatprep.subr.bf16.mxu0 %v952
  %1393 = vmatpush1.bf16.msra.mxu0 %v951
  %1394 = vmatprep.subr.bf16.mxu0 %v950
  %1395 = vmatpush1.bf16.msra.mxu0 %v949
  %1396 = vmatprep.subr.bf16.mxu0 %v948
  %1397 = vmatpush1.bf16.msra.mxu0 %v947
  %1398 = vmatprep.subr.bf16.mxu0 %v978
  %1399 = vmatpush2.bf16.msra.mxu0 %v977
  %1400 = vmatprep.subr.bf16.mxu0 %v976
  %1401 = vmatpush2.bf16.msra.mxu0 %v975
  %1402 = vmatprep.subr.bf16.mxu0 %v974
  %1403 = vmatpush2.bf16.msra.mxu0 %v973
  %1404 = vmatprep.subr.bf16.mxu0 %v972
  %1405 = vmatpush2.bf16.msra.mxu0 %v971
  %1406 = vmatprep.subr.bf16.mxu0 %v970
  %1407 = vmatpush2.bf16.msra.mxu0 %v969
  %1408 = vmatprep.subr.bf16.mxu0 %v968
  %1409 = vmatpush2.bf16.msra.mxu0 %v967
  %1410 = vmatprep.subr.bf16.mxu0 %v966
  %1411 = vmatpush2.bf16.msra.mxu0 %v965
  %1412 = vmatprep.subr.bf16.mxu0 %v964
  %1413 = vmatpush2.bf16.msra.mxu0 %v963
  %1414 = vmatprep.mubr.bf16.mxu0 %v336
  %1415 = vmatmul.mubr.bf16.gmra.mxu0 %v335
  %v1416 = vpop.f32.mrf.mxu0
  %v1417 = vadd.f32 %v1336, %v1416
  %v1418 = vpop.f32.mrf.mxu0
  %v1419 = vadd.f32 %v1338, %v1418
  %v1420 = vpop.f32.mrf.mxu0
  %v1421 = vadd.f32 %v1340, %v1420
  %v1422 = vpop.f32.mrf.mxu0
  %v1423 = vadd.f32 %v1342, %v1422
  %1424 = vmatprep.mubr.bf16.mxu0 %v345
  %1425 = vmatmul.mubr.bf16.gmra.mxu0 %v344
  %v1426 = vpop.f32.mrf.mxu0
  %v1427 = vadd.f32 %v1346, %v1426
  %v1428 = vpop.f32.mrf.mxu0
  %v1429 = vadd.f32 %v1348, %v1428
  %v1430 = vpop.f32.mrf.mxu0
  %v1431 = vadd.f32 %v1350, %v1430
  %v1432 = vpop.f32.mrf.mxu0
  %v1433 = vadd.f32 %v1352, %v1432
  %1434 = vmatprep.mubr.bf16.mxu0 %v354
  %1435 = vmatmul.mubr.bf16.gmra.mxu0 %v353
  %v1436 = vpop.f32.mrf.mxu0
  %v1437 = vadd.f32 %v1356, %v1436
  %v1438 = vpop.f32.mrf.mxu0
  %v1439 = vadd.f32 %v1358, %v1438
  %v1440 = vpop.f32.mrf.mxu0
  %v1441 = vadd.f32 %v1360, %v1440
  %v1442 = vpop.f32.mrf.mxu0
  %v1443 = vadd.f32 %v1362, %v1442
  %1444 = vmatprep.mubr.bf16.mxu0 %v363
  %1445 = vmatmul.mubr.bf16.gmra.mxu0 %v362
  %v1446 = vpop.f32.mrf.mxu0
  %v1447 = vadd.f32 %v1366, %v1446
  %v1448 = vpop.f32.mrf.mxu0
  %v1449 = vadd.f32 %v1368, %v1448
  %v1450 = vpop.f32.mrf.mxu0
  %v1451 = vadd.f32 %v1370, %v1450
  %v1452 = vpop.f32.mrf.mxu0
  %v1453 = vadd.f32 %v1372, %v1452
  %1454 = vmatprep.mubr.bf16.mxu0 %v372
  %1455 = vmatmul.mubr.bf16.gmra.mxu0 %v371
  %v1456 = vpop.f32.mrf.mxu0
  %v1457 = vadd.f32 %v1376, %v1456
  %v1458 = vpop.f32.mrf.mxu0
  %v1459 = vadd.f32 %v1378, %v1458
  %v1460 = vpop.f32.mrf.mxu0
  %v1461 = vpop.f32.mrf.mxu0
  %1462 = vdwg.mxu0
  %1463 = vmatprep.subr.bf16.mxu0 %v994
  %1464 = vmatpush1.bf16.msra.mxu0 %v993
  %1465 = vmatprep.subr.bf16.mxu0 %v992
  %1466 = vmatpush1.bf16.msra.mxu0 %v991
  %1467 = vmatprep.subr.bf16.mxu0 %v990
  %1468 = vmatpush1.bf16.msra.mxu0 %v989
  %1469 = vmatprep.subr.bf16.mxu0 %v988
  %1470 = vmatpush1.bf16.msra.mxu0 %v987
  %1471 = vmatprep.subr.bf16.mxu0 %v986
  %1472 = vmatpush1.bf16.msra.mxu0 %v985
  %1473 = vmatprep.subr.bf16.mxu0 %v984
  %1474 = vmatpush1.bf16.msra.mxu0 %v983
  %1475 = vmatprep.subr.bf16.mxu0 %v982
  %1476 = vmatpush1.bf16.msra.mxu0 %v981
  %1477 = vmatprep.subr.bf16.mxu0 %v980
  %1478 = vmatpush1.bf16.msra.mxu0 %v979
  %1479 = vmatprep.subr.bf16.mxu0 0
  %1480 = vmatpush2.bf16.msra.mxu0 0
  %1481 = vmatprep.subr.bf16.mxu0 0
  %1482 = vmatpush2.bf16.msra.mxu0 0
  %1483 = vmatprep.subr.bf16.mxu0 0
  %1484 = vmatpush2.bf16.msra.mxu0 0
  %1485 = vmatprep.subr.bf16.mxu0 0
  %1486 = vmatpush2.bf16.msra.mxu0 0
  %1487 = vmatprep.subr.bf16.mxu0 0
  %1488 = vmatpush2.bf16.msra.mxu0 0
  %1489 = vmatprep.subr.bf16.mxu0 0
  %1490 = vmatpush2.bf16.msra.mxu0 0
  %1491 = vmatprep.subr.bf16.mxu0 0
  %1492 = vmatpush2.bf16.msra.mxu0 0
  %1493 = vmatprep.subr.bf16.mxu0 0
  %1494 = vmatpush2.bf16.msra.mxu0 0
  %1495 = vmatprep.mubr.bf16.mxu0 0
  %1496 = vmatmul.mubr.bf16.gmra.mxu0 %v337
  %v1497 = vpop.f32.mrf.mxu0
  %v1498 = vadd.f32 %v1417, %v1497
  %v1499 = vpop.f32.mrf.mxu0
  %v1500 = vadd.f32 %v1419, %v1499
  %v1501 = vpop.f32.mrf.mxu0
  %v1502 = vadd.f32 %v1421, %v1501
  %v1503 = vpop.f32.mrf.mxu0
  %v1504 = vadd.f32 %v1423, %v1503
  %1505 = vmatprep.mubr.bf16.mxu0 0
  %1506 = vmatmul.mubr.bf16.gmra.mxu0 %v346
  %v1507 = vpop.f32.mrf.mxu0
  %v1508 = vadd.f32 %v1427, %v1507
  %v1509 = vpop.f32.mrf.mxu0
  %v1510 = vadd.f32 %v1429, %v1509
  %v1511 = vpop.f32.mrf.mxu0
  %v1512 = vadd.f32 %v1431, %v1511
  %v1513 = vpop.f32.mrf.mxu0
  %v1514 = vadd.f32 %v1433, %v1513
  %1515 = vmatprep.mubr.bf16.mxu0 0
  %1516 = vmatmul.mubr.bf16.gmra.mxu0 %v355
  %v1517 = vpop.f32.mrf.mxu0
  %v1518 = vadd.f32 %v1437, %v1517
  %v1519 = vpop.f32.mrf.mxu0
  %v1520 = vadd.f32 %v1439, %v1519
  %v1521 = vpop.f32.mrf.mxu0
  %v1522 = vadd.f32 %v1441, %v1521
  %v1523 = vpop.f32.mrf.mxu0
  %v1524 = vadd.f32 %v1443, %v1523
  %1525 = vmatprep.mubr.bf16.mxu0 0
  %1526 = vmatmul.mubr.bf16.gmra.mxu0 %v364
  %v1527 = vpop.f32.mrf.mxu0
  %v1528 = vadd.f32 %v1447, %v1527
  %v1529 = vpop.f32.mrf.mxu0
  %v1530 = vadd.f32 %v1449, %v1529
  %v1531 = vpop.f32.mrf.mxu0
  %v1532 = vadd.f32 %v1451, %v1531
  %v1533 = vpop.f32.mrf.mxu0
  %v1534 = vadd.f32 %v1453, %v1533
  %1535 = vmatprep.mubr.bf16.mxu0 0
  %1536 = vmatmul.mubr.bf16.gmra.mxu0 %v373
  %v1537 = vpop.f32.mrf.mxu0
  %v1538 = vadd.f32 %v1457, %v1537
  %v1539 = vpop.f32.mrf.mxu0
  %v1540 = vadd.f32 %v1459, %v1539
  %v1541 = vpop.f32.mrf.mxu0
  %v1542 = vpop.f32.mrf.mxu0
  %1543 = vdwg.mxu0
  %v1544 = vadd.f32 %v1498, %v1502
  %v1545 = vadd.f32 %v1544, %v1508
  %v1546 = vadd.f32 %v1545, %v1512
  %v1547 = vadd.f32 %v1546, %v1518
  %v1548 = vadd.f32 %v1547, %v1522
  %v1549 = vadd.f32 %v1548, %v1528
  %v1550 = vadd.f32 %v1549, %v1532
  %v1551 = vadd.f32 %v1550, %v1538
  %v1552 = vrot.slane %v1551, 4
  %v1553 = vadd.f32 %v1551, %v1552
  %v1554 = vrot.slane %v1553, 2
  %v1555 = vadd.f32 %v1553, %v1554
  %v1556 = vrot.slane %v1555, 1
  %v1557 = vadd.f32 %v1555, %v1556
  %v1558 = vadd.f32 %v1500, %v1504
  %v1559 = vadd.f32 %v1558, %v1510
  %v1560 = vadd.f32 %v1559, %v1514
  %v1561 = vadd.f32 %v1560, %v1520
  %v1562 = vadd.f32 %v1561, %v1524
  %v1563 = vadd.f32 %v1562, %v1530
  %v1564 = vadd.f32 %v1563, %v1534
  %v1565 = vadd.f32 %v1564, %v1540
  %v1566 = vrot.slane %v1565, 4
  %v1567 = vadd.f32 %v1565, %v1566
  %v1568 = vrot.slane %v1567, 2
  %v1569 = vadd.f32 %v1567, %v1568
  %v1570 = vrot.slane %v1569, 1
  %v1571 = vadd.f32 %v1569, %v1570
  %v1572 = vmul.f32 %v1498, %v1498
  %v1573 = vmul.f32 %v1500, %v1500
  %v1574 = vmul.f32 %v1502, %v1502
  %v1575 = vmul.f32 %v1504, %v1504
  %v1576 = vmul.f32 %v1508, %v1508
  %v1577 = vmul.f32 %v1510, %v1510
  %v1578 = vmul.f32 %v1512, %v1512
  %v1579 = vmul.f32 %v1514, %v1514
  %v1580 = vmul.f32 %v1518, %v1518
  %v1581 = vmul.f32 %v1520, %v1520
  %v1582 = vmul.f32 %v1522, %v1522
  %v1583 = vmul.f32 %v1524, %v1524
  %v1584 = vmul.f32 %v1528, %v1528
  %v1585 = vmul.f32 %v1530, %v1530
  %v1586 = vmul.f32 %v1532, %v1532
  %v1587 = vmul.f32 %v1534, %v1534
  %v1588 = vmul.f32 %v1538, %v1538
  %v1589 = vmul.f32 %v1540, %v1540
  %v1590 = vadd.f32 %v1572, %v1574
  %v1591 = vadd.f32 %v1590, %v1576
  %v1592 = vadd.f32 %v1591, %v1578
  %v1593 = vadd.f32 %v1592, %v1580
  %v1594 = vadd.f32 %v1593, %v1582
  %v1595 = vadd.f32 %v1594, %v1584
  %v1596 = vadd.f32 %v1595, %v1586
  %v1597 = vadd.f32 %v1596, %v1588
  %v1598 = vrot.slane %v1597, 4
  %v1599 = vadd.f32 %v1597, %v1598
  %v1600 = vrot.slane %v1599, 2
  %v1601 = vadd.f32 %v1599, %v1600
  %v1602 = vrot.slane %v1601, 1
  %v1603 = vadd.f32 %v1601, %v1602
  %v1604 = vadd.f32 %v1573, %v1575
  %v1605 = vadd.f32 %v1604, %v1577
  %v1606 = vadd.f32 %v1605, %v1579
  %v1607 = vadd.f32 %v1606, %v1581
  %v1608 = vadd.f32 %v1607, %v1583
  %v1609 = vadd.f32 %v1608, %v1585
  %v1610 = vadd.f32 %v1609, %v1587
  %v1611 = vadd.f32 %v1610, %v1589
  %v1612 = vrot.slane %v1611, 4
  %v1613 = vadd.f32 %v1611, %v1612
  %v1614 = vrot.slane %v1613, 2
  %v1615 = vadd.f32 %v1613, %v1614
  %v1616 = vrot.slane %v1615, 1
  %v1617 = vadd.f32 %v1615, %v1616
  %vm1618 = vcmask 1040384
  %v1619 = vsel %vm1618, %v1557, %v1603
  %v1620 = vsel %vm1618, %v1571, %v1617
  %v1623 = vcombine.low %v1619, %v1620
  %v1625 = vunpack.c.l.s4 1983009808
  %v1626 = vunpack.c.0.s8 %v1625
  %v1627 = vlaneseq
  %v1628 = vshrl.u32 %v1627, 7
  %v1629 = vsub.s32 %v1626, %v1628
  %v1630 = vrot.slane %v1623, %v1629
  %1632 = vst [vmem:[%s3] sm:$0xf] %v1630
  %1633 = vst [vmem:[%s2] sm:$0xff] %v1498
  %1634 = vst [vmem:[%s2 + $0x8] sm:$0xff] %v1500
  %1635 = vst [vmem:[%s2 + $0x10] sm:$0xff] %v1502
  %1636 = vst [vmem:[%s2 + $0x18] sm:$0xff] %v1504
  %1637 = vst [vmem:[%s2 + $0x20] sm:$0xff] %v1508
  %1638 = vst [vmem:[%s2 + $0x28] sm:$0xff] %v1510
  %1639 = vst [vmem:[%s2 + $0x30] sm:$0xff] %v1512
  %1640 = vst [vmem:[%s2 + $0x38] sm:$0xff] %v1514
  %1641 = vst [vmem:[%s2 + $0x40] sm:$0xff] %v1518
  %1642 = vst [vmem:[%s2 + $0x48] sm:$0xff] %v1520
  %1643 = vst [vmem:[%s2 + $0x50] sm:$0xff] %v1522
  %1644 = vst [vmem:[%s2 + $0x58] sm:$0xff] %v1524
  %1645 = vst [vmem:[%s2 + $0x60] sm:$0xff] %v1528
  %1646 = vst [vmem:[%s2 + $0x68] sm:$0xff] %v1530
  %1647 = vst [vmem:[%s2 + $0x70] sm:$0xff] %v1532
  %1648 = vst [vmem:[%s2 + $0x78] sm:$0xff] %v1534
  %1649 = vst [vmem:[%s2 + $0x80] sm:$0xff] %v1538
  %1650 = vst [vmem:[%s2 + $0x88] sm:$0xff] %v1540
  // Predicated region
  $region10: #{encoder_forward_pallas.7} parent=0 // pred_check
    _
  $region11: #{encoder_forward_pallas.7} parent=0 // pred_check_branch
    %1652 = sbr.rel (0) target = $region13
  $region12: #{encoder_forward_pallas.7} parent=0 // pred_region
    _
  $region13: #{encoder_forward_pallas.7} parent=0 // pred_fallthru
    _
  // Predicated region
  $region14: #{encoder_forward_pallas.7} parent=0 // pred_check
    _
  $region15: #{encoder_forward_pallas.7} parent=0 // pred_check_branch
    %1654 = sbr.rel (0) target = $region17
  $region16: #{encoder_forward_pallas.7} parent=0 // pred_region
    _
  $region17: #{encoder_forward_pallas.7} parent=0 // pred_fallthru
    _
  // Predicated region
  $region18: #{encoder_forward_pallas.7} parent=0 // pred_check
    _
  $region19: #{encoder_forward_pallas.7} parent=0 // pred_check_branch
    %1656 = sbr.rel (0) target = $region21
  $region20: #{encoder_forward_pallas.7} parent=0 // pred_region
    _
  $region21: #{encoder_forward_pallas.7} parent=0 // pred_fallthru
    _
  // Predicated region
  $region22: #{encoder_forward_pallas.7} parent=0 // pred_check
    _
  $region23: #{encoder_forward_pallas.7} parent=0 // pred_check_branch
    %1658 = sbr.rel (0) target = $region25
  $region24: #{encoder_forward_pallas.7} parent=0 // pred_region
    _
  $region25: #{encoder_forward_pallas.7} parent=0 // pred_fallthru
    _

// kernel: encoder_forward_pallas.8
$region0: #{encoder_forward_pallas.8}
  #allocation0 [shape = 'u32[]', space=smem, size = 0x4, offset = 0x4, fixed_abs, tag = 'smem constant byte address 0x4 - core index']
  #allocation1 [shape = 'u32[144,128]{1,0:T(1,128)}', space=vmem, size = 0x12000, scoped, tag = 'internal scratch']
  %s0 = inlined_call_operand.vmem [shape: bf16[24,2304], index: 0, kind: input, shape index: {}]
  %s1 = inlined_call_operand.vmem [shape: bf16[2304,512], index: 1, kind: input, shape index: {}]
  %s2 = inlined_call_operand.vmem [shape: f32[24,512], index: 2, kind: output, shape index: {0}]
  %s3 = inlined_call_operand.vmem [shape: f32[1,2,512], index: 3, kind: output, shape index: {1}]
  %4 = xla_tuple %s2, %s3
  %s5 = sld [smem:[#allocation0]]
  $region26: #{encoder_forward_pallas.8} parent=0
    _
  %s7 = ssub.s32 1, %s5
  %s8 = scalar_select 0, %s7, %s5
  // Predicated region
  $region2: #{encoder_forward_pallas.8} parent=0 // pred_check
    _
  $region3: #{encoder_forward_pallas.8} parent=0 // pred_check_branch
    %10 = sbr.rel (0) target = $region5
  $region4: #{encoder_forward_pallas.8} parent=0 // pred_region
    _
  $region5: #{encoder_forward_pallas.8} parent=0 // pred_fallthru
    _
  // Predicated region
  $region6: #{encoder_forward_pallas.8} parent=0 // pred_check
    _
  $region7: #{encoder_forward_pallas.8} parent=0 // pred_check_branch
    %12 = sbr.rel (0) target = $region9
  $region8: #{encoder_forward_pallas.8} parent=0 // pred_region
    _
  $region9: #{encoder_forward_pallas.8} parent=0 // pred_fallthru
    _
  %v13 = vld [vmem:[%s0] sm:$0xff]
  %v14 = vld [vmem:[%s0 + $0x8] sm:$0xff]
  %v15 = vld [vmem:[%s0 + $0x10] sm:$0xff]
  %v16 = vld [vmem:[%s0 + $0x18] sm:$0xff]
  %v17 = vld [vmem:[%s0 + $0x20] sm:$0xff]
  %v18 = vld [vmem:[%s0 + $0x28] sm:$0xff]
  %v19 = vld [vmem:[%s0 + $0x30] sm:$0xff]
  %v20 = vld [vmem:[%s0 + $0x38] sm:$0xff]
  %v21 = vld [vmem:[%s0 + $0x40] sm:$0xff]
  %v22 = vld [vmem:[%s0 + $0x48] sm:$0xff]
  %v23 = vld [vmem:[%s0 + $0x50] sm:$0xff]
  %v24 = vld [vmem:[%s0 + $0x58] sm:$0xff]
  %v25 = vld [vmem:[%s0 + $0x60] sm:$0xff]
  %v26 = vld [vmem:[%s0 + $0x68] sm:$0xff]
  %v27 = vld [vmem:[%s0 + $0x70] sm:$0xff]
  %v28 = vld [vmem:[%s0 + $0x78] sm:$0xff]
  %v29 = vld [vmem:[%s0 + $0x80] sm:$0xff]
  %v30 = vld [vmem:[%s0 + $0x88] sm:$0xff]
  %v31 = vld [vmem:[%s0 + $0x90] sm:$0xff]
  %v32 = vld [vmem:[%s0 + $0x98] sm:$0xff]
  %v33 = vld [vmem:[%s0 + $0xa0] sm:$0xff]
  %v34 = vld [vmem:[%s0 + $0xa8] sm:$0xff]
  %v35 = vld [vmem:[%s0 + $0xb0] sm:$0xff]
  %v36 = vld [vmem:[%s0 + $0xb8] sm:$0xff]
  %v37 = vld [vmem:[%s0 + $0xc0] sm:$0xff]
  %v38 = vld [vmem:[%s0 + $0xc8] sm:$0xff]
  %v39 = vld [vmem:[%s0 + $0xd0] sm:$0xff]
  %v40 = vld [vmem:[%s1] sm:$0xff]
  %v41 = vld [vmem:[%s1 + $0x8] sm:$0xff]
  %v42 = vld [vmem:[%s1 + $0x10] sm:$0xff]
  %v43 = vld [vmem:[%s1 + $0x18] sm:$0xff]
  %v44 = vld [vmem:[%s1 + $0x20] sm:$0xff]
  %v45 = vld [vmem:[%s1 + $0x28] sm:$0xff]
  %v46 = vld [vmem:[%s1 + $0x30] sm:$0xff]
  %v47 = vld [vmem:[%s1 + $0x38] sm:$0xff]
  %v48 = vld [vmem:[%s1 + $0x40] sm:$0xff]
  %v49 = vld [vmem:[%s1 + $0x48] sm:$0xff]
  %v50 = vld [vmem:[%s1 + $0x50] sm:$0xff]
  %v51 = vld [vmem:[%s1 + $0x58] sm:$0xff]
  %v52 = vld [vmem:[%s1 + $0x60] sm:$0xff]
  %v53 = vld [vmem:[%s1 + $0x68] sm:$0xff]
  %v54 = vld [vmem:[%s1 + $0x70] sm:$0xff]
  %v55 = vld [vmem:[%s1 + $0x78] sm:$0xff]
  %v56 = vld [vmem:[%s1 + $0x80] sm:$0xff]
  %v57 = vld [vmem:[%s1 + $0x88] sm:$0xff]
  %v58 = vld [vmem:[%s1 + $0x90] sm:$0xff]
  %v59 = vld [vmem:[%s1 + $0x98] sm:$0xff]
  %v60 = vld [vmem:[%s1 + $0xa0] sm:$0xff]
  %v61 = vld [vmem:[%s1 + $0xa8] sm:$0xff]
  %v62 = vld [vmem:[%s1 + $0xb0] sm:$0xff]
  %v63 = vld [vmem:[%s1 + $0xb8] sm:$0xff]
  %v64 = vld [vmem:[%s1 + $0xc0] sm:$0xff]
  %v65 = vld [vmem:[%s1 + $0xc8] sm:$0xff]
  %v66 = vld [vmem:[%s1 + $0xd0] sm:$0xff]
  %v67 = vld [vmem:[%s1 + $0xd8] sm:$0xff]
  %v68 = vld [vmem:[%s1 + $0xe0] sm:$0xff]
  %v69 = vld [vmem:[%s1 + $0xe8] sm:$0xff]
  %v70 = vld [vmem:[%s1 + $0xf0] sm:$0xff]
  %v71 = vld [vmem:[%s1 + $0xf8] sm:$0xff]
  %v72 = vld [vmem:[%s1 + $0x100] sm:$0xff]
  %v73 = vld [vmem:[%s1 + $0x108] sm:$0xff]
  %v74 = vld [vmem:[%s1 + $0x110] sm:$0xff]
  %v75 = vld [vmem:[%s1 + $0x118] sm:$0xff]
  %v76 = vld [vmem:[%s1 + $0x120] sm:$0xff]
  %v77 = vld [vmem:[%s1 + $0x128] sm:$0xff]
  %v78 = vld [vmem:[%s1 + $0x130] sm:$0xff]
  %v79 = vld [vmem:[%s1 + $0x138] sm:$0xff]
  %v80 = vld [vmem:[%s1 + $0x140] sm:$0xff]
  %v81 = vld [vmem:[%s1 + $0x148] sm:$0xff]
  %v82 = vld [vmem:[%s1 + $0x150] sm:$0xff]
  %v83 = vld [vmem:[%s1 + $0x158] sm:$0xff]
  %v84 = vld [vmem:[%s1 + $0x160] sm:$0xff]
  %v85 = vld [vmem:[%s1 + $0x168] sm:$0xff]
  %v86 = vld [vmem:[%s1 + $0x170] sm:$0xff]
  %v87 = vld [vmem:[%s1 + $0x178] sm:$0xff]
  %v88 = vld [vmem:[%s1 + $0x180] sm:$0xff]
  %v89 = vld [vmem:[%s1 + $0x188] sm:$0xff]
  %v90 = vld [vmem:[%s1 + $0x190] sm:$0xff]
  %v91 = vld [vmem:[%s1 + $0x198] sm:$0xff]
  %v92 = vld [vmem:[%s1 + $0x1a0] sm:$0xff]
  %v93 = vld [vmem:[%s1 + $0x1a8] sm:$0xff]
  %v94 = vld [vmem:[%s1 + $0x1b0] sm:$0xff]
  %v95 = vld [vmem:[%s1 + $0x1b8] sm:$0xff]
  %v96 = vld [vmem:[%s1 + $0x1c0] sm:$0xff]
  %v97 = vld [vmem:[%s1 + $0x1c8] sm:$0xff]
  %v98 = vld [vmem:[%s1 + $0x1d0] sm:$0xff]
  %v99 = vld [vmem:[%s1 + $0x1d8] sm:$0xff]
  %v100 = vld [vmem:[%s1 + $0x1e0] sm:$0xff]
  %v101 = vld [vmem:[%s1 + $0x1e8] sm:$0xff]
  %v102 = vld [vmem:[%s1 + $0x1f0] sm:$0xff]
  %v103 = vld [vmem:[%s1 + $0x1f8] sm:$0xff]
  %v104 = vld [vmem:[%s1 + $0x200] sm:$0xff]
  %v105 = vld [vmem:[%s1 + $0x208] sm:$0xff]
  %v106 = vld [vmem:[%s1 + $0x210] sm:$0xff]
  %v107 = vld [vmem:[%s1 + $0x218] sm:$0xff]
  %v108 = vld [vmem:[%s1 + $0x220] sm:$0xff]
  %v109 = vld [vmem:[%s1 + $0x228] sm:$0xff]
  %v110 = vld [vmem:[%s1 + $0x230] sm:$0xff]
  %v111 = vld [vmem:[%s1 + $0x238] sm:$0xff]
  %v112 = vld [vmem:[%s1 + $0x240] sm:$0xff]
  %v113 = vld [vmem:[%s1 + $0x248] sm:$0xff]
  %v114 = vld [vmem:[%s1 + $0x250] sm:$0xff]
  %v115 = vld [vmem:[%s1 + $0x258] sm:$0xff]
  %v116 = vld [vmem:[%s1 + $0x260] sm:$0xff]
  %v117 = vld [vmem:[%s1 + $0x268] sm:$0xff]
  %v118 = vld [vmem:[%s1 + $0x270] sm:$0xff]
  %v119 = vld [vmem:[%s1 + $0x278] sm:$0xff]
  %v120 = vld [vmem:[%s1 + $0x280] sm:$0xff]
  %v121 = vld [vmem:[%s1 + $0x288] sm:$0xff]
  %v122 = vld [vmem:[%s1 + $0x290] sm:$0xff]
  %v123 = vld [vmem:[%s1 + $0x298] sm:$0xff]
  %v124 = vld [vmem:[%s1 + $0x2a0] sm:$0xff]
  %v125 = vld [vmem:[%s1 + $0x2a8] sm:$0xff]
  %v126 = vld [vmem:[%s1 + $0x2b0] sm:$0xff]
  %v127 = vld [vmem:[%s1 + $0x2b8] sm:$0xff]
  %v128 = vld [vmem:[%s1 + $0x2c0] sm:$0xff]
  %v129 = vld [vmem:[%s1 + $0x2c8] sm:$0xff]
  %v130 = vld [vmem:[%s1 + $0x2d0] sm:$0xff]
  %v131 = vld [vmem:[%s1 + $0x2d8] sm:$0xff]
  %v132 = vld [vmem:[%s1 + $0x2e0] sm:$0xff]
  %v133 = vld [vmem:[%s1 + $0x2e8] sm:$0xff]
  %v134 = vld [vmem:[%s1 + $0x2f0] sm:$0xff]
  %v135 = vld [vmem:[%s1 + $0x2f8] sm:$0xff]
  %v136 = vld [vmem:[%s1 + $0x300] sm:$0xff]
  %v137 = vld [vmem:[%s1 + $0x308] sm:$0xff]
  %v138 = vld [vmem:[%s1 + $0x310] sm:$0xff]
  %v139 = vld [vmem:[%s1 + $0x318] sm:$0xff]
  %v140 = vld [vmem:[%s1 + $0x320] sm:$0xff]
  %v141 = vld [vmem:[%s1 + $0x328] sm:$0xff]
  %v142 = vld [vmem:[%s1 + $0x330] sm:$0xff]
  %v143 = vld [vmem:[%s1 + $0x338] sm:$0xff]
  %v144 = vld [vmem:[%s1 + $0x340] sm:$0xff]
  %v145 = vld [vmem:[%s1 + $0x348] sm:$0xff]
  %v146 = vld [vmem:[%s1 + $0x350] sm:$0xff]
  %v147 = vld [vmem:[%s1 + $0x358] sm:$0xff]
  %v148 = vld [vmem:[%s1 + $0x360] sm:$0xff]
  %v149 = vld [vmem:[%s1 + $0x368] sm:$0xff]
  %v150 = vld [vmem:[%s1 + $0x370] sm:$0xff]
  %v151 = vld [vmem:[%s1 + $0x378] sm:$0xff]
  %v152 = vld [vmem:[%s1 + $0x380] sm:$0xff]
  %v153 = vld [vmem:[%s1 + $0x388] sm:$0xff]
  %v154 = vld [vmem:[%s1 + $0x390] sm:$0xff]
  %v155 = vld [vmem:[%s1 + $0x398] sm:$0xff]
  %v156 = vld [vmem:[%s1 + $0x3a0] sm:$0xff]
  %v157 = vld [vmem:[%s1 + $0x3a8] sm:$0xff]
  %v158 = vld [vmem:[%s1 + $0x3b0] sm:$0xff]
  %v159 = vld [vmem:[%s1 + $0x3b8] sm:$0xff]
  %v160 = vld [vmem:[%s1 + $0x3c0] sm:$0xff]
  %v161 = vld [vmem:[%s1 + $0x3c8] sm:$0xff]
  %v162 = vld [vmem:[%s1 + $0x3d0] sm:$0xff]
  %v163 = vld [vmem:[%s1 + $0x3d8] sm:$0xff]
  %v164 = vld [vmem:[%s1 + $0x3e0] sm:$0xff]
  %v165 = vld [vmem:[%s1 + $0x3e8] sm:$0xff]
  %v166 = vld [vmem:[%s1 + $0x3f0] sm:$0xff]
  %v167 = vld [vmem:[%s1 + $0x3f8] sm:$0xff]
  %v168 = vld [vmem:[%s1 + $0x400] sm:$0xff]
  %v169 = vld [vmem:[%s1 + $0x408] sm:$0xff]
  %v170 = vld [vmem:[%s1 + $0x410] sm:$0xff]
  %v171 = vld [vmem:[%s1 + $0x418] sm:$0xff]
  %v172 = vld [vmem:[%s1 + $0x420] sm:$0xff]
  %v173 = vld [vmem:[%s1 + $0x428] sm:$0xff]
  %v174 = vld [vmem:[%s1 + $0x430] sm:$0xff]
  %v175 = vld [vmem:[%s1 + $0x438] sm:$0xff]
  %v176 = vld [vmem:[%s1 + $0x440] sm:$0xff]
  %v177 = vld [vmem:[%s1 + $0x448] sm:$0xff]
  %v178 = vld [vmem:[%s1 + $0x450] sm:$0xff]
  %v179 = vld [vmem:[%s1 + $0x458] sm:$0xff]
  %v180 = vld [vmem:[%s1 + $0x460] sm:$0xff]
  %v181 = vld [vmem:[%s1 + $0x468] sm:$0xff]
  %v182 = vld [vmem:[%s1 + $0x470] sm:$0xff]
  %v183 = vld [vmem:[%s1 + $0x478] sm:$0xff]
  %v184 = vld [vmem:[%s1 + $0x480] sm:$0xff]
  %v185 = vld [vmem:[%s1 + $0x488] sm:$0xff]
  %v186 = vld [vmem:[%s1 + $0x490] sm:$0xff]
  %v187 = vld [vmem:[%s1 + $0x498] sm:$0xff]
  %v188 = vld [vmem:[%s1 + $0x4a0] sm:$0xff]
  %v189 = vld [vmem:[%s1 + $0x4a8] sm:$0xff]
  %v190 = vld [vmem:[%s1 + $0x4b0] sm:$0xff]
  %v191 = vld [vmem:[%s1 + $0x4b8] sm:$0xff]
  %v192 = vld [vmem:[%s1 + $0x4c0] sm:$0xff]
  %v193 = vld [vmem:[%s1 + $0x4c8] sm:$0xff]
  %v194 = vld [vmem:[%s1 + $0x4d0] sm:$0xff]
  %v195 = vld [vmem:[%s1 + $0x4d8] sm:$0xff]
  %v196 = vld [vmem:[%s1 + $0x4e0] sm:$0xff]
  %v197 = vld [vmem:[%s1 + $0x4e8] sm:$0xff]
  %v198 = vld [vmem:[%s1 + $0x4f0] sm:$0xff]
  %v199 = vld [vmem:[%s1 + $0x4f8] sm:$0xff]
  %v200 = vld [vmem:[%s1 + $0x500] sm:$0xff]
  %v201 = vld [vmem:[%s1 + $0x508] sm:$0xff]
  %v202 = vld [vmem:[%s1 + $0x510] sm:$0xff]
  %v203 = vld [vmem:[%s1 + $0x518] sm:$0xff]
  %v204 = vld [vmem:[%s1 + $0x520] sm:$0xff]
  %v205 = vld [vmem:[%s1 + $0x528] sm:$0xff]
  %v206 = vld [vmem:[%s1 + $0x530] sm:$0xff]
  %v207 = vld [vmem:[%s1 + $0x538] sm:$0xff]
  %v208 = vld [vmem:[%s1 + $0x540] sm:$0xff]
  %v209 = vld [vmem:[%s1 + $0x548] sm:$0xff]
  %v210 = vld [vmem:[%s1 + $0x550] sm:$0xff]
  %v211 = vld [vmem:[%s1 + $0x558] sm:$0xff]
  %v212 = vld [vmem:[%s1 + $0x560] sm:$0xff]
  %v213 = vld [vmem:[%s1 + $0x568] sm:$0xff]
  %v214 = vld [vmem:[%s1 + $0x570] sm:$0xff]
  %v215 = vld [vmem:[%s1 + $0x578] sm:$0xff]
  %v216 = vld [vmem:[%s1 + $0x580] sm:$0xff]
  %v217 = vld [vmem:[%s1 + $0x588] sm:$0xff]
  %v218 = vld [vmem:[%s1 + $0x590] sm:$0xff]
  %v219 = vld [vmem:[%s1 + $0x598] sm:$0xff]
  %v220 = vld [vmem:[%s1 + $0x5a0] sm:$0xff]
  %v221 = vld [vmem:[%s1 + $0x5a8] sm:$0xff]
  %v222 = vld [vmem:[%s1 + $0x5b0] sm:$0xff]
  %v223 = vld [vmem:[%s1 + $0x5b8] sm:$0xff]
  %v224 = vld [vmem:[%s1 + $0x5c0] sm:$0xff]
  %v225 = vld [vmem:[%s1 + $0x5c8] sm:$0xff]
  %v226 = vld [vmem:[%s1 + $0x5d0] sm:$0xff]
  %v227 = vld [vmem:[%s1 + $0x5d8] sm:$0xff]
  %v228 = vld [vmem:[%s1 + $0x5e0] sm:$0xff]
  %v229 = vld [vmem:[%s1 + $0x5e8] sm:$0xff]
  %v230 = vld [vmem:[%s1 + $0x5f0] sm:$0xff]
  %v231 = vld [vmem:[%s1 + $0x5f8] sm:$0xff]
  %v232 = vld [vmem:[%s1 + $0x600] sm:$0xff]
  %v233 = vld [vmem:[%s1 + $0x608] sm:$0xff]
  %v234 = vld [vmem:[%s1 + $0x610] sm:$0xff]
  %v235 = vld [vmem:[%s1 + $0x618] sm:$0xff]
  %v236 = vld [vmem:[%s1 + $0x620] sm:$0xff]
  %v237 = vld [vmem:[%s1 + $0x628] sm:$0xff]
  %v238 = vld [vmem:[%s1 + $0x630] sm:$0xff]
  %v239 = vld [vmem:[%s1 + $0x638] sm:$0xff]
  %v240 = vld [vmem:[%s1 + $0x640] sm:$0xff]
  %v241 = vld [vmem:[%s1 + $0x648] sm:$0xff]
  %v242 = vld [vmem:[%s1 + $0x650] sm:$0xff]
  %v243 = vld [vmem:[%s1 + $0x658] sm:$0xff]
  %v244 = vld [vmem:[%s1 + $0x660] sm:$0xff]
  %v245 = vld [vmem:[%s1 + $0x668] sm:$0xff]
  %v246 = vld [vmem:[%s1 + $0x670] sm:$0xff]
  %v247 = vld [vmem:[%s1 + $0x678] sm:$0xff]
  %v248 = vld [vmem:[%s1 + $0x680] sm:$0xff]
  %v249 = vld [vmem:[%s1 + $0x688] sm:$0xff]
  %v250 = vld [vmem:[%s1 + $0x690] sm:$0xff]
  %v251 = vld [vmem:[%s1 + $0x698] sm:$0xff]
  %v252 = vld [vmem:[%s1 + $0x6a0] sm:$0xff]
  %v253 = vld [vmem:[%s1 + $0x6a8] sm:$0xff]
  %v254 = vld [vmem:[%s1 + $0x6b0] sm:$0xff]
  %v255 = vld [vmem:[%s1 + $0x6b8] sm:$0xff]
  %v256 = vld [vmem:[%s1 + $0x6c0] sm:$0xff]
  %v257 = vld [vmem:[%s1 + $0x6c8] sm:$0xff]
  %v258 = vld [vmem:[%s1 + $0x6d0] sm:$0xff]
  %v259 = vld [vmem:[%s1 + $0x6d8] sm:$0xff]
  %v260 = vld [vmem:[%s1 + $0x6e0] sm:$0xff]
  %v261 = vld [vmem:[%s1 + $0x6e8] sm:$0xff]
  %v262 = vld [vmem:[%s1 + $0x6f0] sm:$0xff]
  %v263 = vld [vmem:[%s1 + $0x6f8] sm:$0xff]
  %v264 = vld [vmem:[%s1 + $0x700] sm:$0xff]
  %v265 = vld [vmem:[%s1 + $0x708] sm:$0xff]
  %v266 = vld [vmem:[%s1 + $0x710] sm:$0xff]
  %v267 = vld [vmem:[%s1 + $0x718] sm:$0xff]
  %v268 = vld [vmem:[%s1 + $0x720] sm:$0xff]
  %v269 = vld [vmem:[%s1 + $0x728] sm:$0xff]
  %v270 = vld [vmem:[%s1 + $0x730] sm:$0xff]
  %v271 = vld [vmem:[%s1 + $0x738] sm:$0xff]
  %v272 = vld [vmem:[%s1 + $0x740] sm:$0xff]
  %v273 = vld [vmem:[%s1 + $0x748] sm:$0xff]
  %v274 = vld [vmem:[%s1 + $0x750] sm:$0xff]
  %v275 = vld [vmem:[%s1 + $0x758] sm:$0xff]
  %v276 = vld [vmem:[%s1 + $0x760] sm:$0xff]
  %v277 = vld [vmem:[%s1 + $0x768] sm:$0xff]
  %v278 = vld [vmem:[%s1 + $0x770] sm:$0xff]
  %v279 = vld [vmem:[%s1 + $0x778] sm:$0xff]
  %v280 = vld [vmem:[%s1 + $0x780] sm:$0xff]
  %v281 = vld [vmem:[%s1 + $0x788] sm:$0xff]
  %v282 = vld [vmem:[%s1 + $0x790] sm:$0xff]
  %v283 = vld [vmem:[%s1 + $0x798] sm:$0xff]
  %v284 = vld [vmem:[%s1 + $0x7a0] sm:$0xff]
  %v285 = vld [vmem:[%s1 + $0x7a8] sm:$0xff]
  %v286 = vld [vmem:[%s1 + $0x7b0] sm:$0xff]
  %v287 = vld [vmem:[%s1 + $0x7b8] sm:$0xff]
  %v288 = vld [vmem:[%s1 + $0x7c0] sm:$0xff]
  %v289 = vld [vmem:[%s1 + $0x7c8] sm:$0xff]
  %v290 = vld [vmem:[%s1 + $0x7d0] sm:$0xff]
  %v291 = vld [vmem:[%s1 + $0x7d8] sm:$0xff]
  %v292 = vld [vmem:[%s1 + $0x7e0] sm:$0xff]
  %v293 = vld [vmem:[%s1 + $0x7e8] sm:$0xff]
  %v294 = vld [vmem:[%s1 + $0x7f0] sm:$0xff]
  %v295 = vld [vmem:[%s1 + $0x7f8] sm:$0xff]
  %v296 = vld [vmem:[%s1 + $0x800] sm:$0xff]
  %v297 = vld [vmem:[%s1 + $0x808] sm:$0xff]
  %v298 = vld [vmem:[%s1 + $0x810] sm:$0xff]
  %v299 = vld [vmem:[%s1 + $0x818] sm:$0xff]
  %v300 = vld [vmem:[%s1 + $0x820] sm:$0xff]
  %v301 = vld [vmem:[%s1 + $0x828] sm:$0xff]
  %v302 = vld [vmem:[%s1 + $0x830] sm:$0xff]
  %v303 = vld [vmem:[%s1 + $0x838] sm:$0xff]
  %v304 = vld [vmem:[%s1 + $0x840] sm:$0xff]
  %v305 = vld [vmem:[%s1 + $0x848] sm:$0xff]
  %v306 = vld [vmem:[%s1 + $0x850] sm:$0xff]
  %v307 = vld [vmem:[%s1 + $0x858] sm:$0xff]
  %v308 = vld [vmem:[%s1 + $0x860] sm:$0xff]
  %v309 = vld [vmem:[%s1 + $0x868] sm:$0xff]
  %v310 = vld [vmem:[%s1 + $0x870] sm:$0xff]
  %v311 = vld [vmem:[%s1 + $0x878] sm:$0xff]
  %v312 = vld [vmem:[%s1 + $0x880] sm:$0xff]
  %v313 = vld [vmem:[%s1 + $0x888] sm:$0xff]
  %v314 = vld [vmem:[%s1 + $0x890] sm:$0xff]
  %v315 = vld [vmem:[%s1 + $0x898] sm:$0xff]
  %v316 = vld [vmem:[%s1 + $0x8a0] sm:$0xff]
  %v317 = vld [vmem:[%s1 + $0x8a8] sm:$0xff]
  %v318 = vld [vmem:[%s1 + $0x8b0] sm:$0xff]
  %v319 = vld [vmem:[%s1 + $0x8b8] sm:$0xff]
  %v320 = vld [vmem:[%s1 + $0x8c0] sm:$0xff]
  %v321 = vld [vmem:[%s1 + $0x8c8] sm:$0xff]
  %v322 = vld [vmem:[%s1 + $0x8d0] sm:$0xff]
  %v323 = vld [vmem:[%s1 + $0x8d8] sm:$0xff]
  %v324 = vld [vmem:[%s1 + $0x8e0] sm:$0xff]
  %v325 = vld [vmem:[%s1 + $0x8e8] sm:$0xff]
  %v326 = vld [vmem:[%s1 + $0x8f0] sm:$0xff]
  %v327 = vld [vmem:[%s1 + $0x8f8] sm:$0xff]
  %v328 = vld [vmem:[%s1 + $0x900] sm:$0xff]
  %v329 = vld [vmem:[%s1 + $0x908] sm:$0xff]
  %v330 = vld [vmem:[%s1 + $0x910] sm:$0xff]
  %v331 = vld [vmem:[%s1 + $0x918] sm:$0xff]
  %v332 = vld [vmem:[%s1 + $0x920] sm:$0xff]
  %v333 = vld [vmem:[%s1 + $0x928] sm:$0xff]
  %v334 = vld [vmem:[%s1 + $0x930] sm:$0xff]
  %v335 = vld [vmem:[%s1 + $0x938] sm:$0xff]
  %v336 = vld [vmem:[%s1 + $0x940] sm:$0xff]
  %v337 = vld [vmem:[%s1 + $0x948] sm:$0xff]
  %v338 = vld [vmem:[%s1 + $0x950] sm:$0xff]
  %v339 = vld [vmem:[%s1 + $0x958] sm:$0xff]
  %v340 = vld [vmem:[%s1 + $0x960] sm:$0xff]
  %v341 = vld [vmem:[%s1 + $0x968] sm:$0xff]
  %v342 = vld [vmem:[%s1 + $0x970] sm:$0xff]
  %v343 = vld [vmem:[%s1 + $0x978] sm:$0xff]
  %v344 = vld [vmem:[%s1 + $0x980] sm:$0xff]
  %v345 = vld [vmem:[%s1 + $0x988] sm:$0xff]
  %v346 = vld [vmem:[%s1 + $0x990] sm:$0xff]
  %v347 = vld [vmem:[%s1 + $0x998] sm:$0xff]
  %v348 = vld [vmem:[%s1 + $0x9a0] sm:$0xff]
  %v349 = vld [vmem:[%s1 + $0x9a8] sm:$0xff]
  %v350 = vld [vmem:[%s1 + $0x9b0] sm:$0xff]
  %v351 = vld [vmem:[%s1 + $0x9b8] sm:$0xff]
  %v352 = vld [vmem:[%s1 + $0x9c0] sm:$0xff]
  %v353 = vld [vmem:[%s1 + $0x9c8] sm:$0xff]
  %v354 = vld [vmem:[%s1 + $0x9d0] sm:$0xff]
  %v355 = vld [vmem:[%s1 + $0x9d8] sm:$0xff]
  %v356 = vld [vmem:[%s1 + $0x9e0] sm:$0xff]
  %v357 = vld [vmem:[%s1 + $0x9e8] sm:$0xff]
  %v358 = vld [vmem:[%s1 + $0x9f0] sm:$0xff]
  %v359 = vld [vmem:[%s1 + $0x9f8] sm:$0xff]
  %v360 = vld [vmem:[%s1 + $0xa00] sm:$0xff]
  %v361 = vld [vmem:[%s1 + $0xa08] sm:$0xff]
  %v362 = vld [vmem:[%s1 + $0xa10] sm:$0xff]
  %v363 = vld [vmem:[%s1 + $0xa18] sm:$0xff]
  %v364 = vld [vmem:[%s1 + $0xa20] sm:$0xff]
  %v365 = vld [vmem:[%s1 + $0xa28] sm:$0xff]
  %v366 = vld [vmem:[%s1 + $0xa30] sm:$0xff]
  %v367 = vld [vmem:[%s1 + $0xa38] sm:$0xff]
  %v368 = vld [vmem:[%s1 + $0xa40] sm:$0xff]
  %v369 = vld [vmem:[%s1 + $0xa48] sm:$0xff]
  %v370 = vld [vmem:[%s1 + $0xa50] sm:$0xff]
  %v371 = vld [vmem:[%s1 + $0xa58] sm:$0xff]
  %v372 = vld [vmem:[%s1 + $0xa60] sm:$0xff]
  %v373 = vld [vmem:[%s1 + $0xa68] sm:$0xff]
  %v374 = vld [vmem:[%s1 + $0xa70] sm:$0xff]
  %v375 = vld [vmem:[%s1 + $0xa78] sm:$0xff]
  %v376 = vld [vmem:[%s1 + $0xa80] sm:$0xff]
  %v377 = vld [vmem:[%s1 + $0xa88] sm:$0xff]
  %v378 = vld [vmem:[%s1 + $0xa90] sm:$0xff]
  %v379 = vld [vmem:[%s1 + $0xa98] sm:$0xff]
  %v380 = vld [vmem:[%s1 + $0xaa0] sm:$0xff]
  %v381 = vld [vmem:[%s1 + $0xaa8] sm:$0xff]
  %v382 = vld [vmem:[%s1 + $0xab0] sm:$0xff]
  %v383 = vld [vmem:[%s1 + $0xab8] sm:$0xff]
  %v384 = vld [vmem:[%s1 + $0xac0] sm:$0xff]
  %v385 = vld [vmem:[%s1 + $0xac8] sm:$0xff]
  %v386 = vld [vmem:[%s1 + $0xad0] sm:$0xff]
  %v387 = vld [vmem:[%s1 + $0xad8] sm:$0xff]
  %v388 = vld [vmem:[%s1 + $0xae0] sm:$0xff]
  %v389 = vld [vmem:[%s1 + $0xae8] sm:$0xff]
  %v390 = vld [vmem:[%s1 + $0xaf0] sm:$0xff]
  %v391 = vld [vmem:[%s1 + $0xaf8] sm:$0xff]
  %v392 = vld [vmem:[%s1 + $0xb00] sm:$0xff]
  %v393 = vld [vmem:[%s1 + $0xb08] sm:$0xff]
  %v394 = vld [vmem:[%s1 + $0xb10] sm:$0xff]
  %v395 = vld [vmem:[%s1 + $0xb18] sm:$0xff]
  %v396 = vld [vmem:[%s1 + $0xb20] sm:$0xff]
  %v397 = vld [vmem:[%s1 + $0xb28] sm:$0xff]
  %v398 = vld [vmem:[%s1 + $0xb30] sm:$0xff]
  %v399 = vld [vmem:[%s1 + $0xb38] sm:$0xff]
  %v400 = vld [vmem:[%s1 + $0xb40] sm:$0xff]
  %v401 = vld [vmem:[%s1 + $0xb48] sm:$0xff]
  %v402 = vld [vmem:[%s1 + $0xb50] sm:$0xff]
  %v403 = vld [vmem:[%s1 + $0xb58] sm:$0xff]
  %v404 = vld [vmem:[%s1 + $0xb60] sm:$0xff]
  %v405 = vld [vmem:[%s1 + $0xb68] sm:$0xff]
  %v406 = vld [vmem:[%s1 + $0xb70] sm:$0xff]
  %v407 = vld [vmem:[%s1 + $0xb78] sm:$0xff]
  %v408 = vld [vmem:[%s1 + $0xb80] sm:$0xff]
  %v409 = vld [vmem:[%s1 + $0xb88] sm:$0xff]
  %v410 = vld [vmem:[%s1 + $0xb90] sm:$0xff]
  %v411 = vld [vmem:[%s1 + $0xb98] sm:$0xff]
  %v412 = vld [vmem:[%s1 + $0xba0] sm:$0xff]
  %v413 = vld [vmem:[%s1 + $0xba8] sm:$0xff]
  %v414 = vld [vmem:[%s1 + $0xbb0] sm:$0xff]
  %v415 = vld [vmem:[%s1 + $0xbb8] sm:$0xff]
  %v416 = vld [vmem:[%s1 + $0xbc0] sm:$0xff]
  %v417 = vld [vmem:[%s1 + $0xbc8] sm:$0xff]
  %v418 = vld [vmem:[%s1 + $0xbd0] sm:$0xff]
  %v419 = vld [vmem:[%s1 + $0xbd8] sm:$0xff]
  %v420 = vld [vmem:[%s1 + $0xbe0] sm:$0xff]
  %v421 = vld [vmem:[%s1 + $0xbe8] sm:$0xff]
  %v422 = vld [vmem:[%s1 + $0xbf0] sm:$0xff]
  %v423 = vld [vmem:[%s1 + $0xbf8] sm:$0xff]
  %v424 = vld [vmem:[%s1 + $0xc00] sm:$0xff]
  %v425 = vld [vmem:[%s1 + $0xc08] sm:$0xff]
  %v426 = vld [vmem:[%s1 + $0xc10] sm:$0xff]
  %v427 = vld [vmem:[%s1 + $0xc18] sm:$0xff]
  %v428 = vld [vmem:[%s1 + $0xc20] sm:$0xff]
  %v429 = vld [vmem:[%s1 + $0xc28] sm:$0xff]
  %v430 = vld [vmem:[%s1 + $0xc30] sm:$0xff]
  %v431 = vld [vmem:[%s1 + $0xc38] sm:$0xff]
  %v432 = vld [vmem:[%s1 + $0xc40] sm:$0xff]
  %v433 = vld [vmem:[%s1 + $0xc48] sm:$0xff]
  %v434 = vld [vmem:[%s1 + $0xc50] sm:$0xff]
  %v435 = vld [vmem:[%s1 + $0xc58] sm:$0xff]
  %v436 = vld [vmem:[%s1 + $0xc60] sm:$0xff]
  %v437 = vld [vmem:[%s1 + $0xc68] sm:$0xff]
  %v438 = vld [vmem:[%s1 + $0xc70] sm:$0xff]
  %v439 = vld [vmem:[%s1 + $0xc78] sm:$0xff]
  %v440 = vld [vmem:[%s1 + $0xc80] sm:$0xff]
  %v441 = vld [vmem:[%s1 + $0xc88] sm:$0xff]
  %v442 = vld [vmem:[%s1 + $0xc90] sm:$0xff]
  %v443 = vld [vmem:[%s1 + $0xc98] sm:$0xff]
  %v444 = vld [vmem:[%s1 + $0xca0] sm:$0xff]
  %v445 = vld [vmem:[%s1 + $0xca8] sm:$0xff]
  %v446 = vld [vmem:[%s1 + $0xcb0] sm:$0xff]
  %v447 = vld [vmem:[%s1 + $0xcb8] sm:$0xff]
  %v448 = vld [vmem:[%s1 + $0xcc0] sm:$0xff]
  %v449 = vld [vmem:[%s1 + $0xcc8] sm:$0xff]
  %v450 = vld [vmem:[%s1 + $0xcd0] sm:$0xff]
  %v451 = vld [vmem:[%s1 + $0xcd8] sm:$0xff]
  %v452 = vld [vmem:[%s1 + $0xce0] sm:$0xff]
  %v453 = vld [vmem:[%s1 + $0xce8] sm:$0xff]
  %v454 = vld [vmem:[%s1 + $0xcf0] sm:$0xff]
  %v455 = vld [vmem:[%s1 + $0xcf8] sm:$0xff]
  %v456 = vld [vmem:[%s1 + $0xd00] sm:$0xff]
  %v457 = vld [vmem:[%s1 + $0xd08] sm:$0xff]
  %v458 = vld [vmem:[%s1 + $0xd10] sm:$0xff]
  %v459 = vld [vmem:[%s1 + $0xd18] sm:$0xff]
  %v460 = vld [vmem:[%s1 + $0xd20] sm:$0xff]
  %v461 = vld [vmem:[%s1 + $0xd28] sm:$0xff]
  %v462 = vld [vmem:[%s1 + $0xd30] sm:$0xff]
  %v463 = vld [vmem:[%s1 + $0xd38] sm:$0xff]
  %v464 = vld [vmem:[%s1 + $0xd40] sm:$0xff]
  %v465 = vld [vmem:[%s1 + $0xd48] sm:$0xff]
  %v466 = vld [vmem:[%s1 + $0xd50] sm:$0xff]
  %v467 = vld [vmem:[%s1 + $0xd58] sm:$0xff]
  %v468 = vld [vmem:[%s1 + $0xd60] sm:$0xff]
  %v469 = vld [vmem:[%s1 + $0xd68] sm:$0xff]
  %v470 = vld [vmem:[%s1 + $0xd70] sm:$0xff]
  %v471 = vld [vmem:[%s1 + $0xd78] sm:$0xff]
  %v472 = vld [vmem:[%s1 + $0xd80] sm:$0xff]
  %v473 = vld [vmem:[%s1 + $0xd88] sm:$0xff]
  %v474 = vld [vmem:[%s1 + $0xd90] sm:$0xff]
  %v475 = vld [vmem:[%s1 + $0xd98] sm:$0xff]
  %v476 = vld [vmem:[%s1 + $0xda0] sm:$0xff]
  %v477 = vld [vmem:[%s1 + $0xda8] sm:$0xff]
  %v478 = vld [vmem:[%s1 + $0xdb0] sm:$0xff]
  %v479 = vld [vmem:[%s1 + $0xdb8] sm:$0xff]
  %v480 = vld [vmem:[%s1 + $0xdc0] sm:$0xff]
  %v481 = vld [vmem:[%s1 + $0xdc8] sm:$0xff]
  %v482 = vld [vmem:[%s1 + $0xdd0] sm:$0xff]
  %v483 = vld [vmem:[%s1 + $0xdd8] sm:$0xff]
  %v484 = vld [vmem:[%s1 + $0xde0] sm:$0xff]
  %v485 = vld [vmem:[%s1 + $0xde8] sm:$0xff]
  %v486 = vld [vmem:[%s1 + $0xdf0] sm:$0xff]
  %v487 = vld [vmem:[%s1 + $0xdf8] sm:$0xff]
  %v488 = vld [vmem:[%s1 + $0xe00] sm:$0xff]
  %v489 = vld [vmem:[%s1 + $0xe08] sm:$0xff]
  %v490 = vld [vmem:[%s1 + $0xe10] sm:$0xff]
  %v491 = vld [vmem:[%s1 + $0xe18] sm:$0xff]
  %v492 = vld [vmem:[%s1 + $0xe20] sm:$0xff]
  %v493 = vld [vmem:[%s1 + $0xe28] sm:$0xff]
  %v494 = vld [vmem:[%s1 + $0xe30] sm:$0xff]
  %v495 = vld [vmem:[%s1 + $0xe38] sm:$0xff]
  %v496 = vld [vmem:[%s1 + $0xe40] sm:$0xff]
  %v497 = vld [vmem:[%s1 + $0xe48] sm:$0xff]
  %v498 = vld [vmem:[%s1 + $0xe50] sm:$0xff]
  %v499 = vld [vmem:[%s1 + $0xe58] sm:$0xff]
  %v500 = vld [vmem:[%s1 + $0xe60] sm:$0xff]
  %v501 = vld [vmem:[%s1 + $0xe68] sm:$0xff]
  %v502 = vld [vmem:[%s1 + $0xe70] sm:$0xff]
  %v503 = vld [vmem:[%s1 + $0xe78] sm:$0xff]
  %v504 = vld [vmem:[%s1 + $0xe80] sm:$0xff]
  %v505 = vld [vmem:[%s1 + $0xe88] sm:$0xff]
  %v506 = vld [vmem:[%s1 + $0xe90] sm:$0xff]
  %v507 = vld [vmem:[%s1 + $0xe98] sm:$0xff]
  %v508 = vld [vmem:[%s1 + $0xea0] sm:$0xff]
  %v509 = vld [vmem:[%s1 + $0xea8] sm:$0xff]
  %v510 = vld [vmem:[%s1 + $0xeb0] sm:$0xff]
  %v511 = vld [vmem:[%s1 + $0xeb8] sm:$0xff]
  %v512 = vld [vmem:[%s1 + $0xec0] sm:$0xff]
  %v513 = vld [vmem:[%s1 + $0xec8] sm:$0xff]
  %v514 = vld [vmem:[%s1 + $0xed0] sm:$0xff]
  %v515 = vld [vmem:[%s1 + $0xed8] sm:$0xff]
  %v516 = vld [vmem:[%s1 + $0xee0] sm:$0xff]
  %v517 = vld [vmem:[%s1 + $0xee8] sm:$0xff]
  %v518 = vld [vmem:[%s1 + $0xef0] sm:$0xff]
  %v519 = vld [vmem:[%s1 + $0xef8] sm:$0xff]
  %v520 = vld [vmem:[%s1 + $0xf00] sm:$0xff]
  %v521 = vld [vmem:[%s1 + $0xf08] sm:$0xff]
  %v522 = vld [vmem:[%s1 + $0xf10] sm:$0xff]
  %v523 = vld [vmem:[%s1 + $0xf18] sm:$0xff]
  %v524 = vld [vmem:[%s1 + $0xf20] sm:$0xff]
  %v525 = vld [vmem:[%s1 + $0xf28] sm:$0xff]
  %v526 = vld [vmem:[%s1 + $0xf30] sm:$0xff]
  %v527 = vld [vmem:[%s1 + $0xf38] sm:$0xff]
  %v528 = vld [vmem:[%s1 + $0xf40] sm:$0xff]
  %v529 = vld [vmem:[%s1 + $0xf48] sm:$0xff]
  %v530 = vld [vmem:[%s1 + $0xf50] sm:$0xff]
  %v531 = vld [vmem:[%s1 + $0xf58] sm:$0xff]
  %v532 = vld [vmem:[%s1 + $0xf60] sm:$0xff]
  %v533 = vld [vmem:[%s1 + $0xf68] sm:$0xff]
  %v534 = vld [vmem:[%s1 + $0xf70] sm:$0xff]
  %v535 = vld [vmem:[%s1 + $0xf78] sm:$0xff]
  %v536 = vld [vmem:[%s1 + $0xf80] sm:$0xff]
  %v537 = vld [vmem:[%s1 + $0xf88] sm:$0xff]
  %v538 = vld [vmem:[%s1 + $0xf90] sm:$0xff]
  %v539 = vld [vmem:[%s1 + $0xf98] sm:$0xff]
  %v540 = vld [vmem:[%s1 + $0xfa0] sm:$0xff]
  %v541 = vld [vmem:[%s1 + $0xfa8] sm:$0xff]
  %v542 = vld [vmem:[%s1 + $0xfb0] sm:$0xff]
  %v543 = vld [vmem:[%s1 + $0xfb8] sm:$0xff]
  %v544 = vld [vmem:[%s1 + $0xfc0] sm:$0xff]
  %v545 = vld [vmem:[%s1 + $0xfc8] sm:$0xff]
  %v546 = vld [vmem:[%s1 + $0xfd0] sm:$0xff]
  %v547 = vld [vmem:[%s1 + $0xfd8] sm:$0xff]
  %v548 = vld [vmem:[%s1 + $0xfe0] sm:$0xff]
  %v549 = vld [vmem:[%s1 + $0xfe8] sm:$0xff]
  %v550 = vld [vmem:[%s1 + $0xff0] sm:$0xff]
  %v551 = vld [vmem:[%s1 + $0xff8] sm:$0xff]
  %v552 = vld [vmem:[%s1 + $0x1000] sm:$0xff]
  %v553 = vld [vmem:[%s1 + $0x1008] sm:$0xff]
  %v554 = vld [vmem:[%s1 + $0x1010] sm:$0xff]
  %v555 = vld [vmem:[%s1 + $0x1018] sm:$0xff]
  %v556 = vld [vmem:[%s1 + $0x1020] sm:$0xff]
  %v557 = vld [vmem:[%s1 + $0x1028] sm:$0xff]
  %v558 = vld [vmem:[%s1 + $0x1030] sm:$0xff]
  %v559 = vld [vmem:[%s1 + $0x1038] sm:$0xff]
  %v560 = vld [vmem:[%s1 + $0x1040] sm:$0xff]
  %v561 = vld [vmem:[%s1 + $0x1048] sm:$0xff]
  %v562 = vld [vmem:[%s1 + $0x1050] sm:$0xff]
  %v563 = vld [vmem:[%s1 + $0x1058] sm:$0xff]
  %v564 = vld [vmem:[%s1 + $0x1060] sm:$0xff]
  %v565 = vld [vmem:[%s1 + $0x1068] sm:$0xff]
  %v566 = vld [vmem:[%s1 + $0x1070] sm:$0xff]
  %v567 = vld [vmem:[%s1 + $0x1078] sm:$0xff]
  %v568 = vld [vmem:[%s1 + $0x1080] sm:$0xff]
  %v569 = vld [vmem:[%s1 + $0x1088] sm:$0xff]
  %v570 = vld [vmem:[%s1 + $0x1090] sm:$0xff]
  %v571 = vld [vmem:[%s1 + $0x1098] sm:$0xff]
  %v572 = vld [vmem:[%s1 + $0x10a0] sm:$0xff]
  %v573 = vld [vmem:[%s1 + $0x10a8] sm:$0xff]
  %v574 = vld [vmem:[%s1 + $0x10b0] sm:$0xff]
  %v575 = vld [vmem:[%s1 + $0x10b8] sm:$0xff]
  %v576 = vld [vmem:[%s1 + $0x10c0] sm:$0xff]
  %v577 = vld [vmem:[%s1 + $0x10c8] sm:$0xff]
  %v578 = vld [vmem:[%s1 + $0x10d0] sm:$0xff]
  %v579 = vld [vmem:[%s1 + $0x10d8] sm:$0xff]
  %v580 = vld [vmem:[%s1 + $0x10e0] sm:$0xff]
  %v581 = vld [vmem:[%s1 + $0x10e8] sm:$0xff]
  %v582 = vld [vmem:[%s1 + $0x10f0] sm:$0xff]
  %v583 = vld [vmem:[%s1 + $0x10f8] sm:$0xff]
  %v584 = vld [vmem:[%s1 + $0x1100] sm:$0xff]
  %v585 = vld [vmem:[%s1 + $0x1108] sm:$0xff]
  %v586 = vld [vmem:[%s1 + $0x1110] sm:$0xff]
  %v587 = vld [vmem:[%s1 + $0x1118] sm:$0xff]
  %v588 = vld [vmem:[%s1 + $0x1120] sm:$0xff]
  %v589 = vld [vmem:[%s1 + $0x1128] sm:$0xff]
  %v590 = vld [vmem:[%s1 + $0x1130] sm:$0xff]
  %v591 = vld [vmem:[%s1 + $0x1138] sm:$0xff]
  %v592 = vld [vmem:[%s1 + $0x1140] sm:$0xff]
  %v593 = vld [vmem:[%s1 + $0x1148] sm:$0xff]
  %v594 = vld [vmem:[%s1 + $0x1150] sm:$0xff]
  %v595 = vld [vmem:[%s1 + $0x1158] sm:$0xff]
  %v596 = vld [vmem:[%s1 + $0x1160] sm:$0xff]
  %v597 = vld [vmem:[%s1 + $0x1168] sm:$0xff]
  %v598 = vld [vmem:[%s1 + $0x1170] sm:$0xff]
  %v599 = vld [vmem:[%s1 + $0x1178] sm:$0xff]
  %v600 = vld [vmem:[%s1 + $0x1180] sm:$0xff]
  %v601 = vld [vmem:[%s1 + $0x1188] sm:$0xff]
  %v602 = vld [vmem:[%s1 + $0x1190] sm:$0xff]
  %v603 = vld [vmem:[%s1 + $0x1198] sm:$0xff]
  %v604 = vld [vmem:[%s1 + $0x11a0] sm:$0xff]
  %v605 = vld [vmem:[%s1 + $0x11a8] sm:$0xff]
  %v606 = vld [vmem:[%s1 + $0x11b0] sm:$0xff]
  %v607 = vld [vmem:[%s1 + $0x11b8] sm:$0xff]
  %v608 = vld [vmem:[%s1 + $0x11c0] sm:$0xff]
  %v609 = vld [vmem:[%s1 + $0x11c8] sm:$0xff]
  %v610 = vld [vmem:[%s1 + $0x11d0] sm:$0xff]
  %v611 = vld [vmem:[%s1 + $0x11d8] sm:$0xff]
  %v612 = vld [vmem:[%s1 + $0x11e0] sm:$0xff]
  %v613 = vld [vmem:[%s1 + $0x11e8] sm:$0xff]
  %v614 = vld [vmem:[%s1 + $0x11f0] sm:$0xff]
  %v615 = vld [vmem:[%s1 + $0x11f8] sm:$0xff]
  %v643 = vunpack.c.l.b16 %v13
  %v644 = vunpack.c.h.b16 %v13
  %v645 = vunpack.c.l.b16 %v14
  %v646 = vunpack.c.h.b16 %v14
  %v647 = vunpack.c.l.b16 %v15
  %v648 = vunpack.c.h.b16 %v15
  %v649 = vunpack.c.l.b16 %v16
  %v650 = vunpack.c.h.b16 %v16
  %v651 = vunpack.c.l.b16 %v17
  %v652 = vunpack.c.h.b16 %v17
  %v653 = vunpack.c.l.b16 %v18
  %v654 = vunpack.c.h.b16 %v18
  %v655 = vunpack.c.l.b16 %v19
  %v656 = vunpack.c.h.b16 %v19
  %v657 = vunpack.c.l.b16 %v20
  %v658 = vunpack.c.h.b16 %v20
  %v659 = vunpack.c.l.b16 %v21
  %v660 = vunpack.c.h.b16 %v21
  %v661 = vunpack.c.l.b16 %v22
  %v662 = vunpack.c.h.b16 %v22
  %v663 = vunpack.c.l.b16 %v23
  %v664 = vunpack.c.h.b16 %v23
  %v665 = vunpack.c.l.b16 %v24
  %v666 = vunpack.c.h.b16 %v24
  %v667 = vunpack.c.l.b16 %v25
  %v668 = vunpack.c.h.b16 %v25
  %v669 = vunpack.c.l.b16 %v26
  %v670 = vunpack.c.h.b16 %v26
  %v671 = vunpack.c.l.b16 %v27
  %v672 = vunpack.c.h.b16 %v27
  %v673 = vunpack.c.l.b16 %v28
  %v674 = vunpack.c.h.b16 %v28
  %v675 = vunpack.c.l.b16 %v29
  %v676 = vunpack.c.h.b16 %v29
  %v677 = vunpack.c.l.b16 %v30
  %v678 = vunpack.c.h.b16 %v30
  %v679 = vunpack.c.l.b16 %v31
  %v680 = vunpack.c.h.b16 %v31
  %v681 = vunpack.c.l.b16 %v32
  %v682 = vunpack.c.h.b16 %v32
  %v683 = vunpack.c.l.b16 %v33
  %v684 = vunpack.c.h.b16 %v33
  %v685 = vunpack.c.l.b16 %v34
  %v686 = vunpack.c.h.b16 %v34
  %v687 = vunpack.c.l.b16 %v35
  %v688 = vunpack.c.h.b16 %v35
  %v689 = vunpack.c.l.b16 %v36
  %v690 = vunpack.c.h.b16 %v36
  %v691 = vunpack.c.l.b16 %v37
  %v692 = vunpack.c.h.b16 %v37
  %v693 = vunpack.c.l.b16 %v38
  %v694 = vunpack.c.h.b16 %v38
  %v695 = vunpack.c.l.b16 %v39
  %v696 = vunpack.c.h.b16 %v39
  %v697 = vpack.c.b16 %v661, %v643
  %v698 = vpack.c.b16 %v662, %v644
  %v699 = vpack.c.b16 %v663, %v645
  %v700 = vpack.c.b16 %v664, %v646
  %v701 = vpack.c.b16 %v665, %v647
  %v702 = vpack.c.b16 %v666, %v648
  %v703 = vpack.c.b16 %v667, %v649
  %v704 = vpack.c.b16 %v668, %v650
  %v705 = vpack.c.b16 %v669, %v651
  %v706 = vpack.c.b16 %v670, %v652
  %v707 = vpack.c.b16 %v671, %v653
  %v708 = vpack.c.b16 %v672, %v654
  %v709 = vpack.c.b16 %v673, %v655
  %v710 = vpack.c.b16 %v674, %v656
  %v711 = vpack.c.b16 %v675, %v657
  %v712 = vpack.c.b16 %v676, %v658
  %v713 = vpack.c.b16 %v677, %v659
  %v714 = vpack.c.b16 %v678, %v660
  %v715 = vpack.c.b16 %v679, %v679
  %v716 = vpack.c.b16 %v680, %v680
  %v717 = vpack.c.b16 %v681, %v681
  %v718 = vpack.c.b16 %v682, %v682
  %v719 = vpack.c.b16 %v683, %v683
  %v720 = vpack.c.b16 %v684, %v684
  %v721 = vpack.c.b16 %v685, %v685
  %v722 = vpack.c.b16 %v686, %v686
  %v723 = vpack.c.b16 %v687, %v687
  %v724 = vpack.c.b16 %v688, %v688
  %v725 = vpack.c.b16 %v689, %v689
  %v726 = vpack.c.b16 %v690, %v690
  %v727 = vpack.c.b16 %v691, %v691
  %v728 = vpack.c.b16 %v692, %v692
  %v729 = vpack.c.b16 %v693, %v693
  %v730 = vpack.c.b16 %v694, %v694
  %v731 = vpack.c.b16 %v695, %v695
  %v732 = vpack.c.b16 %v696, %v696
  %v1345 = vunpack.c.l.b16 %v40
  %v1346 = vunpack.c.h.b16 %v40
  %v1347 = vunpack.c.l.b16 %v41
  %v1348 = vunpack.c.h.b16 %v41
  %v1349 = vunpack.c.l.b16 %v42
  %v1350 = vunpack.c.h.b16 %v42
  %v1351 = vunpack.c.l.b16 %v43
  %v1352 = vunpack.c.h.b16 %v43
  %v1353 = vunpack.c.l.b16 %v44
  %v1354 = vunpack.c.h.b16 %v44
  %v1355 = vunpack.c.l.b16 %v45
  %v1356 = vunpack.c.h.b16 %v45
  %v1357 = vunpack.c.l.b16 %v46
  %v1358 = vunpack.c.h.b16 %v46
  %v1359 = vunpack.c.l.b16 %v47
  %v1360 = vunpack.c.h.b16 %v47
  %v1361 = vunpack.c.l.b16 %v48
  %v1362 = vunpack.c.h.b16 %v48
  %v1363 = vunpack.c.l.b16 %v49
  %v1364 = vunpack.c.h.b16 %v49
  %v1365 = vunpack.c.l.b16 %v50
  %v1366 = vunpack.c.h.b16 %v50
  %v1367 = vunpack.c.l.b16 %v51
  %v1368 = vunpack.c.h.b16 %v51
  %v1369 = vunpack.c.l.b16 %v52
  %v1370 = vunpack.c.h.b16 %v52
  %v1371 = vunpack.c.l.b16 %v53
  %v1372 = vunpack.c.h.b16 %v53
  %v1373 = vunpack.c.l.b16 %v54
  %v1374 = vunpack.c.h.b16 %v54
  %v1375 = vunpack.c.l.b16 %v55
  %v1376 = vunpack.c.h.b16 %v55
  %v1377 = vunpack.c.l.b16 %v56
  %v1378 = vunpack.c.h.b16 %v56
  %v1379 = vunpack.c.l.b16 %v57
  %v1380 = vunpack.c.h.b16 %v57
  %v1381 = vunpack.c.l.b16 %v58
  %v1382 = vunpack.c.h.b16 %v58
  %v1383 = vunpack.c.l.b16 %v59
  %v1384 = vunpack.c.h.b16 %v59
  %v1385 = vunpack.c.l.b16 %v60
  %v1386 = vunpack.c.h.b16 %v60
  %v1387 = vunpack.c.l.b16 %v61
  %v1388 = vunpack.c.h.b16 %v61
  %v1389 = vunpack.c.l.b16 %v62
  %v1390 = vunpack.c.h.b16 %v62
  %v1391 = vunpack.c.l.b16 %v63
  %v1392 = vunpack.c.h.b16 %v63
  %v1393 = vunpack.c.l.b16 %v64
  %v1394 = vunpack.c.h.b16 %v64
  %v1395 = vunpack.c.l.b16 %v65
  %v1396 = vunpack.c.h.b16 %v65
  %v1397 = vunpack.c.l.b16 %v66
  %v1398 = vunpack.c.h.b16 %v66
  %v1399 = vunpack.c.l.b16 %v67
  %v1400 = vunpack.c.h.b16 %v67
  %v1401 = vunpack.c.l.b16 %v68
  %v1402 = vunpack.c.h.b16 %v68
  %v1403 = vunpack.c.l.b16 %v69
  %v1404 = vunpack.c.h.b16 %v69
  %v1405 = vunpack.c.l.b16 %v70
  %v1406 = vunpack.c.h.b16 %v70
  %v1407 = vunpack.c.l.b16 %v71
  %v1408 = vunpack.c.h.b16 %v71
  %v1409 = vunpack.c.l.b16 %v72
  %v1410 = vunpack.c.h.b16 %v72
  %v1411 = vunpack.c.l.b16 %v73
  %v1412 = vunpack.c.h.b16 %v73
  %v1413 = vunpack.c.l.b16 %v74
  %v1414 = vunpack.c.h.b16 %v74
  %v1415 = vunpack.c.l.b16 %v75
  %v1416 = vunpack.c.h.b16 %v75
  %v1417 = vunpack.c.l.b16 %v76
  %v1418 = vunpack.c.h.b16 %v76
  %v1419 = vunpack.c.l.b16 %v77
  %v1420 = vunpack.c.h.b16 %v77
  %v1421 = vunpack.c.l.b16 %v78
  %v1422 = vunpack.c.h.b16 %v78
  %v1423 = vunpack.c.l.b16 %v79
  %v1424 = vunpack.c.h.b16 %v79
  %v1425 = vunpack.c.l.b16 %v80
  %v1426 = vunpack.c.h.b16 %v80
  %v1427 = vunpack.c.l.b16 %v81
  %v1428 = vunpack.c.h.b16 %v81
  %v1429 = vunpack.c.l.b16 %v82
  %v1430 = vunpack.c.h.b16 %v82
  %v1431 = vunpack.c.l.b16 %v83
  %v1432 = vunpack.c.h.b16 %v83
  %v1433 = vunpack.c.l.b16 %v84
  %v1434 = vunpack.c.h.b16 %v84
  %v1435 = vunpack.c.l.b16 %v85
  %v1436 = vunpack.c.h.b16 %v85
  %v1437 = vunpack.c.l.b16 %v86
  %v1438 = vunpack.c.h.b16 %v86
  %v1439 = vunpack.c.l.b16 %v87
  %v1440 = vunpack.c.h.b16 %v87
  %v1441 = vunpack.c.l.b16 %v88
  %v1442 = vunpack.c.h.b16 %v88
  %v1443 = vunpack.c.l.b16 %v89
  %v1444 = vunpack.c.h.b16 %v89
  %v1445 = vunpack.c.l.b16 %v90
  %v1446 = vunpack.c.h.b16 %v90
  %v1447 = vunpack.c.l.b16 %v91
  %v1448 = vunpack.c.h.b16 %v91
  %v1449 = vunpack.c.l.b16 %v92
  %v1450 = vunpack.c.h.b16 %v92
  %v1451 = vunpack.c.l.b16 %v93
  %v1452 = vunpack.c.h.b16 %v93
  %v1453 = vunpack.c.l.b16 %v94
  %v1454 = vunpack.c.h.b16 %v94
  %v1455 = vunpack.c.l.b16 %v95
  %v1456 = vunpack.c.h.b16 %v95
  %v1457 = vunpack.c.l.b16 %v96
  %v1458 = vunpack.c.h.b16 %v96
  %v1459 = vunpack.c.l.b16 %v97
  %v1460 = vunpack.c.h.b16 %v97
  %v1461 = vunpack.c.l.b16 %v98
  %v1462 = vunpack.c.h.b16 %v98
  %v1463 = vunpack.c.l.b16 %v99
  %v1464 = vunpack.c.h.b16 %v99
  %v1465 = vunpack.c.l.b16 %v100
  %v1466 = vunpack.c.h.b16 %v100
  %v1467 = vunpack.c.l.b16 %v101
  %v1468 = vunpack.c.h.b16 %v101
  %v1469 = vunpack.c.l.b16 %v102
  %v1470 = vunpack.c.h.b16 %v102
  %v1471 = vunpack.c.l.b16 %v103
  %v1472 = vunpack.c.h.b16 %v103
  %v1473 = vunpack.c.l.b16 %v104
  %v1474 = vunpack.c.h.b16 %v104
  %v1475 = vunpack.c.l.b16 %v105
  %v1476 = vunpack.c.h.b16 %v105
  %v1477 = vunpack.c.l.b16 %v106
  %v1478 = vunpack.c.h.b16 %v106
  %v1479 = vunpack.c.l.b16 %v107
  %v1480 = vunpack.c.h.b16 %v107
  %v1481 = vunpack.c.l.b16 %v108
  %v1482 = vunpack.c.h.b16 %v108
  %v1483 = vunpack.c.l.b16 %v109
  %v1484 = vunpack.c.h.b16 %v109
  %v1485 = vunpack.c.l.b16 %v110
  %v1486 = vunpack.c.h.b16 %v110
  %v1487 = vunpack.c.l.b16 %v111
  %v1488 = vunpack.c.h.b16 %v111
  %v1489 = vunpack.c.l.b16 %v112
  %v1490 = vunpack.c.h.b16 %v112
  %v1491 = vunpack.c.l.b16 %v113
  %v1492 = vunpack.c.h.b16 %v113
  %v1493 = vunpack.c.l.b16 %v114
  %v1494 = vunpack.c.h.b16 %v114
  %v1495 = vunpack.c.l.b16 %v115
  %v1496 = vunpack.c.h.b16 %v115
  %v1497 = vunpack.c.l.b16 %v116
  %v1498 = vunpack.c.h.b16 %v116
  %v1499 = vunpack.c.l.b16 %v117
  %v1500 = vunpack.c.h.b16 %v117
  %v1501 = vunpack.c.l.b16 %v118
  %v1502 = vunpack.c.h.b16 %v118
  %v1503 = vunpack.c.l.b16 %v119
  %v1504 = vunpack.c.h.b16 %v119
  %v1505 = vunpack.c.l.b16 %v120
  %v1506 = vunpack.c.h.b16 %v120
  %v1507 = vunpack.c.l.b16 %v121
  %v1508 = vunpack.c.h.b16 %v121
  %v1509 = vunpack.c.l.b16 %v122
  %v1510 = vunpack.c.h.b16 %v122
  %v1511 = vunpack.c.l.b16 %v123
  %v1512 = vunpack.c.h.b16 %v123
  %v1513 = vunpack.c.l.b16 %v124
  %v1514 = vunpack.c.h.b16 %v124
  %v1515 = vunpack.c.l.b16 %v125
  %v1516 = vunpack.c.h.b16 %v125
  %v1517 = vunpack.c.l.b16 %v126
  %v1518 = vunpack.c.h.b16 %v126
  %v1519 = vunpack.c.l.b16 %v127
  %v1520 = vunpack.c.h.b16 %v127
  %v1521 = vunpack.c.l.b16 %v128
  %v1522 = vunpack.c.h.b16 %v128
  %v1523 = vunpack.c.l.b16 %v129
  %v1524 = vunpack.c.h.b16 %v129
  %v1525 = vunpack.c.l.b16 %v130
  %v1526 = vunpack.c.h.b16 %v130
  %v1527 = vunpack.c.l.b16 %v131
  %v1528 = vunpack.c.h.b16 %v131
  %v1529 = vunpack.c.l.b16 %v132
  %v1530 = vunpack.c.h.b16 %v132
  %v1531 = vunpack.c.l.b16 %v133
  %v1532 = vunpack.c.h.b16 %v133
  %v1533 = vunpack.c.l.b16 %v134
  %v1534 = vunpack.c.h.b16 %v134
  %v1535 = vunpack.c.l.b16 %v135
  %v1536 = vunpack.c.h.b16 %v135
  %v1537 = vunpack.c.l.b16 %v136
  %v1538 = vunpack.c.h.b16 %v136
  %v1539 = vunpack.c.l.b16 %v137
  %v1540 = vunpack.c.h.b16 %v137
  %v1541 = vunpack.c.l.b16 %v138
  %v1542 = vunpack.c.h.b16 %v138
  %v1543 = vunpack.c.l.b16 %v139
  %v1544 = vunpack.c.h.b16 %v139
  %v1545 = vunpack.c.l.b16 %v140
  %v1546 = vunpack.c.h.b16 %v140
  %v1547 = vunpack.c.l.b16 %v141
  %v1548 = vunpack.c.h.b16 %v141
  %v1549 = vunpack.c.l.b16 %v142
  %v1550 = vunpack.c.h.b16 %v142
  %v1551 = vunpack.c.l.b16 %v143
  %v1552 = vunpack.c.h.b16 %v143
  %v1553 = vunpack.c.l.b16 %v144
  %v1554 = vunpack.c.h.b16 %v144
  %v1555 = vunpack.c.l.b16 %v145
  %v1556 = vunpack.c.h.b16 %v145
  %v1557 = vunpack.c.l.b16 %v146
  %v1558 = vunpack.c.h.b16 %v146
  %v1559 = vunpack.c.l.b16 %v147
  %v1560 = vunpack.c.h.b16 %v147
  %v1561 = vunpack.c.l.b16 %v148
  %v1562 = vunpack.c.h.b16 %v148
  %v1563 = vunpack.c.l.b16 %v149
  %v1564 = vunpack.c.h.b16 %v149
  %v1565 = vunpack.c.l.b16 %v150
  %v1566 = vunpack.c.h.b16 %v150
  %v1567 = vunpack.c.l.b16 %v151
  %v1568 = vunpack.c.h.b16 %v151
  %v1569 = vunpack.c.l.b16 %v152
  %v1570 = vunpack.c.h.b16 %v152
  %v1571 = vunpack.c.l.b16 %v153
  %v1572 = vunpack.c.h.b16 %v153
  %v1573 = vunpack.c.l.b16 %v154
  %v1574 = vunpack.c.h.b16 %v154
  %v1575 = vunpack.c.l.b16 %v155
  %v1576 = vunpack.c.h.b16 %v155
  %v1577 = vunpack.c.l.b16 %v156
  %v1578 = vunpack.c.h.b16 %v156
  %v1579 = vunpack.c.l.b16 %v157
  %v1580 = vunpack.c.h.b16 %v157
  %v1581 = vunpack.c.l.b16 %v158
  %v1582 = vunpack.c.h.b16 %v158
  %v1583 = vunpack.c.l.b16 %v159
  %v1584 = vunpack.c.h.b16 %v159
  %v1585 = vunpack.c.l.b16 %v160
  %v1586 = vunpack.c.h.b16 %v160
  %v1587 = vunpack.c.l.b16 %v161
  %v1588 = vunpack.c.h.b16 %v161
  %v1589 = vunpack.c.l.b16 %v162
  %v1590 = vunpack.c.h.b16 %v162
  %v1591 = vunpack.c.l.b16 %v163
  %v1592 = vunpack.c.h.b16 %v163
  %v1593 = vunpack.c.l.b16 %v164
  %v1594 = vunpack.c.h.b16 %v164
  %v1595 = vunpack.c.l.b16 %v165
  %v1596 = vunpack.c.h.b16 %v165
  %v1597 = vunpack.c.l.b16 %v166
  %v1598 = vunpack.c.h.b16 %v166
  %v1599 = vunpack.c.l.b16 %v167
  %v1600 = vunpack.c.h.b16 %v167
  %v1601 = vunpack.c.l.b16 %v168
  %v1602 = vunpack.c.h.b16 %v168
  %v1603 = vunpack.c.l.b16 %v169
  %v1604 = vunpack.c.h.b16 %v169
  %v1605 = vunpack.c.l.b16 %v170
  %v1606 = vunpack.c.h.b16 %v170
  %v1607 = vunpack.c.l.b16 %v171
  %v1608 = vunpack.c.h.b16 %v171
  %v1609 = vunpack.c.l.b16 %v172
  %v1610 = vunpack.c.h.b16 %v172
  %v1611 = vunpack.c.l.b16 %v173
  %v1612 = vunpack.c.h.b16 %v173
  %v1613 = vunpack.c.l.b16 %v174
  %v1614 = vunpack.c.h.b16 %v174
  %v1615 = vunpack.c.l.b16 %v175
  %v1616 = vunpack.c.h.b16 %v175
  %v1617 = vunpack.c.l.b16 %v176
  %v1618 = vunpack.c.h.b16 %v176
  %v1619 = vunpack.c.l.b16 %v177
  %v1620 = vunpack.c.h.b16 %v177
  %v1621 = vunpack.c.l.b16 %v178
  %v1622 = vunpack.c.h.b16 %v178
  %v1623 = vunpack.c.l.b16 %v179
  %v1624 = vunpack.c.h.b16 %v179
  %v1625 = vunpack.c.l.b16 %v180
  %v1626 = vunpack.c.h.b16 %v180
  %v1627 = vunpack.c.l.b16 %v181
  %v1628 = vunpack.c.h.b16 %v181
  %v1629 = vunpack.c.l.b16 %v182
  %v1630 = vunpack.c.h.b16 %v182
  %v1631 = vunpack.c.l.b16 %v183
  %v1632 = vunpack.c.h.b16 %v183
  %v1633 = vunpack.c.l.b16 %v184
  %v1634 = vunpack.c.h.b16 %v184
  %v1635 = vunpack.c.l.b16 %v185
  %v1636 = vunpack.c.h.b16 %v185
  %v1637 = vunpack.c.l.b16 %v186
  %v1638 = vunpack.c.h.b16 %v186
  %v1639 = vunpack.c.l.b16 %v187
  %v1640 = vunpack.c.h.b16 %v187
  %v1641 = vunpack.c.l.b16 %v188
  %v1642 = vunpack.c.h.b16 %v188
  %v1643 = vunpack.c.l.b16 %v189
  %v1644 = vunpack.c.h.b16 %v189
  %v1645 = vunpack.c.l.b16 %v190
  %v1646 = vunpack.c.h.b16 %v190
  %v1647 = vunpack.c.l.b16 %v191
  %v1648 = vunpack.c.h.b16 %v191
  %v1649 = vunpack.c.l.b16 %v192
  %v1650 = vunpack.c.h.b16 %v192
  %v1651 = vunpack.c.l.b16 %v193
  %v1652 = vunpack.c.h.b16 %v193
  %v1653 = vunpack.c.l.b16 %v194
  %v1654 = vunpack.c.h.b16 %v194
  %v1655 = vunpack.c.l.b16 %v195
  %v1656 = vunpack.c.h.b16 %v195
  %v1657 = vunpack.c.l.b16 %v196
  %v1658 = vunpack.c.h.b16 %v196
  %v1659 = vunpack.c.l.b16 %v197
  %v1660 = vunpack.c.h.b16 %v197
  %v1661 = vunpack.c.l.b16 %v198
  %v1662 = vunpack.c.h.b16 %v198
  %v1663 = vunpack.c.l.b16 %v199
  %v1664 = vunpack.c.h.b16 %v199
  %v1665 = vunpack.c.l.b16 %v200
  %v1666 = vunpack.c.h.b16 %v200
  %v1667 = vunpack.c.l.b16 %v201
  %v1668 = vunpack.c.h.b16 %v201
  %v1669 = vunpack.c.l.b16 %v202
  %v1670 = vunpack.c.h.b16 %v202
  %v1671 = vunpack.c.l.b16 %v203
  %v1672 = vunpack.c.h.b16 %v203
  %v1673 = vunpack.c.l.b16 %v204
  %v1674 = vunpack.c.h.b16 %v204
  %v1675 = vunpack.c.l.b16 %v205
  %v1676 = vunpack.c.h.b16 %v205
  %v1677 = vunpack.c.l.b16 %v206
  %v1678 = vunpack.c.h.b16 %v206
  %v1679 = vunpack.c.l.b16 %v207
  %v1680 = vunpack.c.h.b16 %v207
  %v1681 = vunpack.c.l.b16 %v208
  %v1682 = vunpack.c.h.b16 %v208
  %v1683 = vunpack.c.l.b16 %v209
  %v1684 = vunpack.c.h.b16 %v209
  %v1685 = vunpack.c.l.b16 %v210
  %v1686 = vunpack.c.h.b16 %v210
  %v1687 = vunpack.c.l.b16 %v211
  %v1688 = vunpack.c.h.b16 %v211
  %v1689 = vunpack.c.l.b16 %v212
  %v1690 = vunpack.c.h.b16 %v212
  %v1691 = vunpack.c.l.b16 %v213
  %v1692 = vunpack.c.h.b16 %v213
  %v1693 = vunpack.c.l.b16 %v214
  %v1694 = vunpack.c.h.b16 %v214
  %v1695 = vunpack.c.l.b16 %v215
  %v1696 = vunpack.c.h.b16 %v215
  %v1697 = vunpack.c.l.b16 %v216
  %v1698 = vunpack.c.h.b16 %v216
  %v1699 = vunpack.c.l.b16 %v217
  %v1700 = vunpack.c.h.b16 %v217
  %v1701 = vunpack.c.l.b16 %v218
  %v1702 = vunpack.c.h.b16 %v218
  %v1703 = vunpack.c.l.b16 %v219
  %v1704 = vunpack.c.h.b16 %v219
  %v1705 = vunpack.c.l.b16 %v220
  %v1706 = vunpack.c.h.b16 %v220
  %v1707 = vunpack.c.l.b16 %v221
  %v1708 = vunpack.c.h.b16 %v221
  %v1709 = vunpack.c.l.b16 %v222
  %v1710 = vunpack.c.h.b16 %v222
  %v1711 = vunpack.c.l.b16 %v223
  %v1712 = vunpack.c.h.b16 %v223
  %v1713 = vunpack.c.l.b16 %v224
  %v1714 = vunpack.c.h.b16 %v224
  %v1715 = vunpack.c.l.b16 %v225
  %v1716 = vunpack.c.h.b16 %v225
  %v1717 = vunpack.c.l.b16 %v226
  %v1718 = vunpack.c.h.b16 %v226
  %v1719 = vunpack.c.l.b16 %v227
  %v1720 = vunpack.c.h.b16 %v227
  %v1721 = vunpack.c.l.b16 %v228
  %v1722 = vunpack.c.h.b16 %v228
  %v1723 = vunpack.c.l.b16 %v229
  %v1724 = vunpack.c.h.b16 %v229
  %v1725 = vunpack.c.l.b16 %v230
  %v1726 = vunpack.c.h.b16 %v230
  %v1727 = vunpack.c.l.b16 %v231
  %v1728 = vunpack.c.h.b16 %v231
  %v1729 = vunpack.c.l.b16 %v232
  %v1730 = vunpack.c.h.b16 %v232
  %v1731 = vunpack.c.l.b16 %v233
  %v1732 = vunpack.c.h.b16 %v233
  %v1733 = vunpack.c.l.b16 %v234
  %v1734 = vunpack.c.h.b16 %v234
  %v1735 = vunpack.c.l.b16 %v235
  %v1736 = vunpack.c.h.b16 %v235
  %v1737 = vunpack.c.l.b16 %v236
  %v1738 = vunpack.c.h.b16 %v236
  %v1739 = vunpack.c.l.b16 %v237
  %v1740 = vunpack.c.h.b16 %v237
  %v1741 = vunpack.c.l.b16 %v238
  %v1742 = vunpack.c.h.b16 %v238
  %v1743 = vunpack.c.l.b16 %v239
  %v1744 = vunpack.c.h.b16 %v239
  %v1745 = vunpack.c.l.b16 %v240
  %v1746 = vunpack.c.h.b16 %v240
  %v1747 = vunpack.c.l.b16 %v241
  %v1748 = vunpack.c.h.b16 %v241
  %v1749 = vunpack.c.l.b16 %v242
  %v1750 = vunpack.c.h.b16 %v242
  %v1751 = vunpack.c.l.b16 %v243
  %v1752 = vunpack.c.h.b16 %v243
  %v1753 = vunpack.c.l.b16 %v244
  %v1754 = vunpack.c.h.b16 %v244
  %v1755 = vunpack.c.l.b16 %v245
  %v1756 = vunpack.c.h.b16 %v245
  %v1757 = vunpack.c.l.b16 %v246
  %v1758 = vunpack.c.h.b16 %v246
  %v1759 = vunpack.c.l.b16 %v247
  %v1760 = vunpack.c.h.b16 %v247
  %v1761 = vunpack.c.l.b16 %v248
  %v1762 = vunpack.c.h.b16 %v248
  %v1763 = vunpack.c.l.b16 %v249
  %v1764 = vunpack.c.h.b16 %v249
  %v1765 = vunpack.c.l.b16 %v250
  %v1766 = vunpack.c.h.b16 %v250
  %v1767 = vunpack.c.l.b16 %v251
  %v1768 = vunpack.c.h.b16 %v251
  %v1769 = vunpack.c.l.b16 %v252
  %v1770 = vunpack.c.h.b16 %v252
  %v1771 = vunpack.c.l.b16 %v253
  %v1772 = vunpack.c.h.b16 %v253
  %v1773 = vunpack.c.l.b16 %v254
  %v1774 = vunpack.c.h.b16 %v254
  %v1775 = vunpack.c.l.b16 %v255
  %v1776 = vunpack.c.h.b16 %v255
  %v1777 = vunpack.c.l.b16 %v256
  %v1778 = vunpack.c.h.b16 %v256
  %v1779 = vunpack.c.l.b16 %v257
  %v1780 = vunpack.c.h.b16 %v257
  %v1781 = vunpack.c.l.b16 %v258
  %v1782 = vunpack.c.h.b16 %v258
  %v1783 = vunpack.c.l.b16 %v259
  %v1784 = vunpack.c.h.b16 %v259
  %v1785 = vunpack.c.l.b16 %v260
  %v1786 = vunpack.c.h.b16 %v260
  %v1787 = vunpack.c.l.b16 %v261
  %v1788 = vunpack.c.h.b16 %v261
  %v1789 = vunpack.c.l.b16 %v262
  %v1790 = vunpack.c.h.b16 %v262
  %v1791 = vunpack.c.l.b16 %v263
  %v1792 = vunpack.c.h.b16 %v263
  %v1793 = vunpack.c.l.b16 %v264
  %v1794 = vunpack.c.h.b16 %v264
  %v1795 = vunpack.c.l.b16 %v265
  %v1796 = vunpack.c.h.b16 %v265
  %v1797 = vunpack.c.l.b16 %v266
  %v1798 = vunpack.c.h.b16 %v266
  %v1799 = vunpack.c.l.b16 %v267
  %v1800 = vunpack.c.h.b16 %v267
  %v1801 = vunpack.c.l.b16 %v268
  %v1802 = vunpack.c.h.b16 %v268
  %v1803 = vunpack.c.l.b16 %v269
  %v1804 = vunpack.c.h.b16 %v269
  %v1805 = vunpack.c.l.b16 %v270
  %v1806 = vunpack.c.h.b16 %v270
  %v1807 = vunpack.c.l.b16 %v271
  %v1808 = vunpack.c.h.b16 %v271
  %v1809 = vunpack.c.l.b16 %v272
  %v1810 = vunpack.c.h.b16 %v272
  %v1811 = vunpack.c.l.b16 %v273
  %v1812 = vunpack.c.h.b16 %v273
  %v1813 = vunpack.c.l.b16 %v274
  %v1814 = vunpack.c.h.b16 %v274
  %v1815 = vunpack.c.l.b16 %v275
  %v1816 = vunpack.c.h.b16 %v275
  %v1817 = vunpack.c.l.b16 %v276
  %v1818 = vunpack.c.h.b16 %v276
  %v1819 = vunpack.c.l.b16 %v277
  %v1820 = vunpack.c.h.b16 %v277
  %v1821 = vunpack.c.l.b16 %v278
  %v1822 = vunpack.c.h.b16 %v278
  %v1823 = vunpack.c.l.b16 %v279
  %v1824 = vunpack.c.h.b16 %v279
  %v1825 = vunpack.c.l.b16 %v280
  %v1826 = vunpack.c.h.b16 %v280
  %v1827 = vunpack.c.l.b16 %v281
  %v1828 = vunpack.c.h.b16 %v281
  %v1829 = vunpack.c.l.b16 %v282
  %v1830 = vunpack.c.h.b16 %v282
  %v1831 = vunpack.c.l.b16 %v283
  %v1832 = vunpack.c.h.b16 %v283
  %v1833 = vunpack.c.l.b16 %v284
  %v1834 = vunpack.c.h.b16 %v284
  %v1835 = vunpack.c.l.b16 %v285
  %v1836 = vunpack.c.h.b16 %v285
  %v1837 = vunpack.c.l.b16 %v286
  %v1838 = vunpack.c.h.b16 %v286
  %v1839 = vunpack.c.l.b16 %v287
  %v1840 = vunpack.c.h.b16 %v287
  %v1841 = vunpack.c.l.b16 %v288
  %v1842 = vunpack.c.h.b16 %v288
  %v1843 = vunpack.c.l.b16 %v289
  %v1844 = vunpack.c.h.b16 %v289
  %v1845 = vunpack.c.l.b16 %v290
  %v1846 = vunpack.c.h.b16 %v290
  %v1847 = vunpack.c.l.b16 %v291
  %v1848 = vunpack.c.h.b16 %v291
  %v1849 = vunpack.c.l.b16 %v292
  %v1850 = vunpack.c.h.b16 %v292
  %v1851 = vunpack.c.l.b16 %v293
  %v1852 = vunpack.c.h.b16 %v293
  %v1853 = vunpack.c.l.b16 %v294
  %v1854 = vunpack.c.h.b16 %v294
  %v1855 = vunpack.c.l.b16 %v295
  %v1856 = vunpack.c.h.b16 %v295
  %v1857 = vunpack.c.l.b16 %v296
  %v1858 = vunpack.c.h.b16 %v296
  %v1859 = vunpack.c.l.b16 %v297
  %v1860 = vunpack.c.h.b16 %v297
  %v1861 = vunpack.c.l.b16 %v298
  %v1862 = vunpack.c.h.b16 %v298
  %v1863 = vunpack.c.l.b16 %v299
  %v1864 = vunpack.c.h.b16 %v299
  %v1865 = vunpack.c.l.b16 %v300
  %v1866 = vunpack.c.h.b16 %v300
  %v1867 = vunpack.c.l.b16 %v301
  %v1868 = vunpack.c.h.b16 %v301
  %v1869 = vunpack.c.l.b16 %v302
  %v1870 = vunpack.c.h.b16 %v302
  %v1871 = vunpack.c.l.b16 %v303
  %v1872 = vunpack.c.h.b16 %v303
  %v1873 = vunpack.c.l.b16 %v304
  %v1874 = vunpack.c.h.b16 %v304
  %v1875 = vunpack.c.l.b16 %v305
  %v1876 = vunpack.c.h.b16 %v305
  %v1877 = vunpack.c.l.b16 %v306
  %v1878 = vunpack.c.h.b16 %v306
  %v1879 = vunpack.c.l.b16 %v307
  %v1880 = vunpack.c.h.b16 %v307
  %v1881 = vunpack.c.l.b16 %v308
  %v1882 = vunpack.c.h.b16 %v308
  %v1883 = vunpack.c.l.b16 %v309
  %v1884 = vunpack.c.h.b16 %v309
  %v1885 = vunpack.c.l.b16 %v310
  %v1886 = vunpack.c.h.b16 %v310
  %v1887 = vunpack.c.l.b16 %v311
  %v1888 = vunpack.c.h.b16 %v311
  %v1889 = vunpack.c.l.b16 %v312
  %v1890 = vunpack.c.h.b16 %v312
  %v1891 = vunpack.c.l.b16 %v313
  %v1892 = vunpack.c.h.b16 %v313
  %v1893 = vunpack.c.l.b16 %v314
  %v1894 = vunpack.c.h.b16 %v314
  %v1895 = vunpack.c.l.b16 %v315
  %v1896 = vunpack.c.h.b16 %v315
  %v1897 = vunpack.c.l.b16 %v316
  %v1898 = vunpack.c.h.b16 %v316
  %v1899 = vunpack.c.l.b16 %v317
  %v1900 = vunpack.c.h.b16 %v317
  %v1901 = vunpack.c.l.b16 %v318
  %v1902 = vunpack.c.h.b16 %v318
  %v1903 = vunpack.c.l.b16 %v319
  %v1904 = vunpack.c.h.b16 %v319
  %v1905 = vunpack.c.l.b16 %v320
  %v1906 = vunpack.c.h.b16 %v320
  %v1907 = vunpack.c.l.b16 %v321
  %v1908 = vunpack.c.h.b16 %v321
  %v1909 = vunpack.c.l.b16 %v322
  %v1910 = vunpack.c.h.b16 %v322
  %v1911 = vunpack.c.l.b16 %v323
  %v1912 = vunpack.c.h.b16 %v323
  %v1913 = vunpack.c.l.b16 %v324
  %v1914 = vunpack.c.h.b16 %v324
  %v1915 = vunpack.c.l.b16 %v325
  %v1916 = vunpack.c.h.b16 %v325
  %v1917 = vunpack.c.l.b16 %v326
  %v1918 = vunpack.c.h.b16 %v326
  %v1919 = vunpack.c.l.b16 %v327
  %v1920 = vunpack.c.h.b16 %v327
  %v1921 = vunpack.c.l.b16 %v328
  %v1922 = vunpack.c.h.b16 %v328
  %v1923 = vunpack.c.l.b16 %v329
  %v1924 = vunpack.c.h.b16 %v329
  %v1925 = vunpack.c.l.b16 %v330
  %v1926 = vunpack.c.h.b16 %v330
  %v1927 = vunpack.c.l.b16 %v331
  %v1928 = vunpack.c.h.b16 %v331
  %v1929 = vunpack.c.l.b16 %v332
  %v1930 = vunpack.c.h.b16 %v332
  %v1931 = vunpack.c.l.b16 %v333
  %v1932 = vunpack.c.h.b16 %v333
  %v1933 = vunpack.c.l.b16 %v334
  %v1934 = vunpack.c.h.b16 %v334
  %v1935 = vunpack.c.l.b16 %v335
  %v1936 = vunpack.c.h.b16 %v335
  %v1937 = vunpack.c.l.b16 %v336
  %v1938 = vunpack.c.h.b16 %v336
  %v1939 = vunpack.c.l.b16 %v337
  %v1940 = vunpack.c.h.b16 %v337
  %v1941 = vunpack.c.l.b16 %v338
  %v1942 = vunpack.c.h.b16 %v338
  %v1943 = vunpack.c.l.b16 %v339
  %v1944 = vunpack.c.h.b16 %v339
  %v1945 = vunpack.c.l.b16 %v340
  %v1946 = vunpack.c.h.b16 %v340
  %v1947 = vunpack.c.l.b16 %v341
  %v1948 = vunpack.c.h.b16 %v341
  %v1949 = vunpack.c.l.b16 %v342
  %v1950 = vunpack.c.h.b16 %v342
  %v1951 = vunpack.c.l.b16 %v343
  %v1952 = vunpack.c.h.b16 %v343
  %v1953 = vunpack.c.l.b16 %v344
  %v1954 = vunpack.c.h.b16 %v344
  %v1955 = vunpack.c.l.b16 %v345
  %v1956 = vunpack.c.h.b16 %v345
  %v1957 = vunpack.c.l.b16 %v346
  %v1958 = vunpack.c.h.b16 %v346
  %v1959 = vunpack.c.l.b16 %v347
  %v1960 = vunpack.c.h.b16 %v347
  %v1961 = vunpack.c.l.b16 %v348
  %v1962 = vunpack.c.h.b16 %v348
  %v1963 = vunpack.c.l.b16 %v349
  %v1964 = vunpack.c.h.b16 %v349
  %v1965 = vunpack.c.l.b16 %v350
  %v1966 = vunpack.c.h.b16 %v350
  %v1967 = vunpack.c.l.b16 %v351
  %v1968 = vunpack.c.h.b16 %v351
  %v1969 = vunpack.c.l.b16 %v352
  %v1970 = vunpack.c.h.b16 %v352
  %v1971 = vunpack.c.l.b16 %v353
  %v1972 = vunpack.c.h.b16 %v353
  %v1973 = vunpack.c.l.b16 %v354
  %v1974 = vunpack.c.h.b16 %v354
  %v1975 = vunpack.c.l.b16 %v355
  %v1976 = vunpack.c.h.b16 %v355
  %v1977 = vunpack.c.l.b16 %v356
  %v1978 = vunpack.c.h.b16 %v356
  %v1979 = vunpack.c.l.b16 %v357
  %v1980 = vunpack.c.h.b16 %v357
  %v1981 = vunpack.c.l.b16 %v358
  %v1982 = vunpack.c.h.b16 %v358
  %v1983 = vunpack.c.l.b16 %v359
  %v1984 = vunpack.c.h.b16 %v359
  %v1985 = vunpack.c.l.b16 %v360
  %v1986 = vunpack.c.h.b16 %v360
  %v1987 = vunpack.c.l.b16 %v361
  %v1988 = vunpack.c.h.b16 %v361
  %v1989 = vunpack.c.l.b16 %v362
  %v1990 = vunpack.c.h.b16 %v362
  %v1991 = vunpack.c.l.b16 %v363
  %v1992 = vunpack.c.h.b16 %v363
  %v1993 = vunpack.c.l.b16 %v364
  %v1994 = vunpack.c.h.b16 %v364
  %v1995 = vunpack.c.l.b16 %v365
  %v1996 = vunpack.c.h.b16 %v365
  %v1997 = vunpack.c.l.b16 %v366
  %v1998 = vunpack.c.h.b16 %v366
  %v1999 = vunpack.c.l.b16 %v367
  %v2000 = vunpack.c.h.b16 %v367
  %v2001 = vunpack.c.l.b16 %v368
  %v2002 = vunpack.c.h.b16 %v368
  %v2003 = vunpack.c.l.b16 %v369
  %v2004 = vunpack.c.h.b16 %v369
  %v2005 = vunpack.c.l.b16 %v370
  %v2006 = vunpack.c.h.b16 %v370
  %v2007 = vunpack.c.l.b16 %v371
  %v2008 = vunpack.c.h.b16 %v371
  %v2009 = vunpack.c.l.b16 %v372
  %v2010 = vunpack.c.h.b16 %v372
  %v2011 = vunpack.c.l.b16 %v373
  %v2012 = vunpack.c.h.b16 %v373
  %v2013 = vunpack.c.l.b16 %v374
  %v2014 = vunpack.c.h.b16 %v374
  %v2015 = vunpack.c.l.b16 %v375
  %v2016 = vunpack.c.h.b16 %v375
  %v2017 = vunpack.c.l.b16 %v376
  %v2018 = vunpack.c.h.b16 %v376
  %v2019 = vunpack.c.l.b16 %v377
  %v2020 = vunpack.c.h.b16 %v377
  %v2021 = vunpack.c.l.b16 %v378
  %v2022 = vunpack.c.h.b16 %v378
  %v2023 = vunpack.c.l.b16 %v379
  %v2024 = vunpack.c.h.b16 %v379
  %v2025 = vunpack.c.l.b16 %v380
  %v2026 = vunpack.c.h.b16 %v380
  %v2027 = vunpack.c.l.b16 %v381
  %v2028 = vunpack.c.h.b16 %v381
  %v2029 = vunpack.c.l.b16 %v382
  %v2030 = vunpack.c.h.b16 %v382
  %v2031 = vunpack.c.l.b16 %v383
  %v2032 = vunpack.c.h.b16 %v383
  %v2033 = vunpack.c.l.b16 %v384
  %v2034 = vunpack.c.h.b16 %v384
  %v2035 = vunpack.c.l.b16 %v385
  %v2036 = vunpack.c.h.b16 %v385
  %v2037 = vunpack.c.l.b16 %v386
  %v2038 = vunpack.c.h.b16 %v386
  %v2039 = vunpack.c.l.b16 %v387
  %v2040 = vunpack.c.h.b16 %v387
  %v2041 = vunpack.c.l.b16 %v388
  %v2042 = vunpack.c.h.b16 %v388
  %v2043 = vunpack.c.l.b16 %v389
  %v2044 = vunpack.c.h.b16 %v389
  %v2045 = vunpack.c.l.b16 %v390
  %v2046 = vunpack.c.h.b16 %v390
  %v2047 = vunpack.c.l.b16 %v391
  %v2048 = vunpack.c.h.b16 %v391
  %v2049 = vunpack.c.l.b16 %v392
  %v2050 = vunpack.c.h.b16 %v392
  %v2051 = vunpack.c.l.b16 %v393
  %v2052 = vunpack.c.h.b16 %v393
  %v2053 = vunpack.c.l.b16 %v394
  %v2054 = vunpack.c.h.b16 %v394
  %v2055 = vunpack.c.l.b16 %v395
  %v2056 = vunpack.c.h.b16 %v395
  %v2057 = vunpack.c.l.b16 %v396
  %v2058 = vunpack.c.h.b16 %v396
  %v2059 = vunpack.c.l.b16 %v397
  %v2060 = vunpack.c.h.b16 %v397
  %v2061 = vunpack.c.l.b16 %v398
  %v2062 = vunpack.c.h.b16 %v398
  %v2063 = vunpack.c.l.b16 %v399
  %v2064 = vunpack.c.h.b16 %v399
  %v2065 = vunpack.c.l.b16 %v400
  %v2066 = vunpack.c.h.b16 %v400
  %v2067 = vunpack.c.l.b16 %v401
  %v2068 = vunpack.c.h.b16 %v401
  %v2069 = vunpack.c.l.b16 %v402
  %v2070 = vunpack.c.h.b16 %v402
  %v2071 = vunpack.c.l.b16 %v403
  %v2072 = vunpack.c.h.b16 %v403
  %v2073 = vunpack.c.l.b16 %v404
  %v2074 = vunpack.c.h.b16 %v404
  %v2075 = vunpack.c.l.b16 %v405
  %v2076 = vunpack.c.h.b16 %v405
  %v2077 = vunpack.c.l.b16 %v406
  %v2078 = vunpack.c.h.b16 %v406
  %v2079 = vunpack.c.l.b16 %v407
  %v2080 = vunpack.c.h.b16 %v407
  %v2081 = vunpack.c.l.b16 %v408
  %v2082 = vunpack.c.h.b16 %v408
  %v2083 = vunpack.c.l.b16 %v409
  %v2084 = vunpack.c.h.b16 %v409
  %v2085 = vunpack.c.l.b16 %v410
  %v2086 = vunpack.c.h.b16 %v410
  %v2087 = vunpack.c.l.b16 %v411
  %v2088 = vunpack.c.h.b16 %v411
  %v2089 = vunpack.c.l.b16 %v412
  %v2090 = vunpack.c.h.b16 %v412
  %v2091 = vunpack.c.l.b16 %v413
  %v2092 = vunpack.c.h.b16 %v413
  %v2093 = vunpack.c.l.b16 %v414
  %v2094 = vunpack.c.h.b16 %v414
  %v2095 = vunpack.c.l.b16 %v415
  %v2096 = vunpack.c.h.b16 %v415
  %v2097 = vunpack.c.l.b16 %v416
  %v2098 = vunpack.c.h.b16 %v416
  %v2099 = vunpack.c.l.b16 %v417
  %v2100 = vunpack.c.h.b16 %v417
  %v2101 = vunpack.c.l.b16 %v418
  %v2102 = vunpack.c.h.b16 %v418
  %v2103 = vunpack.c.l.b16 %v419
  %v2104 = vunpack.c.h.b16 %v419
  %v2105 = vunpack.c.l.b16 %v420
  %v2106 = vunpack.c.h.b16 %v420
  %v2107 = vunpack.c.l.b16 %v421
  %v2108 = vunpack.c.h.b16 %v421
  %v2109 = vunpack.c.l.b16 %v422
  %v2110 = vunpack.c.h.b16 %v422
  %v2111 = vunpack.c.l.b16 %v423
  %v2112 = vunpack.c.h.b16 %v423
  %v2113 = vunpack.c.l.b16 %v424
  %v2114 = vunpack.c.h.b16 %v424
  %v2115 = vunpack.c.l.b16 %v425
  %v2116 = vunpack.c.h.b16 %v425
  %v2117 = vunpack.c.l.b16 %v426
  %v2118 = vunpack.c.h.b16 %v426
  %v2119 = vunpack.c.l.b16 %v427
  %v2120 = vunpack.c.h.b16 %v427
  %v2121 = vunpack.c.l.b16 %v428
  %v2122 = vunpack.c.h.b16 %v428
  %v2123 = vunpack.c.l.b16 %v429
  %v2124 = vunpack.c.h.b16 %v429
  %v2125 = vunpack.c.l.b16 %v430
  %v2126 = vunpack.c.h.b16 %v430
  %v2127 = vunpack.c.l.b16 %v431
  %v2128 = vunpack.c.h.b16 %v431
  %v2129 = vunpack.c.l.b16 %v432
  %v2130 = vunpack.c.h.b16 %v432
  %v2131 = vunpack.c.l.b16 %v433
  %v2132 = vunpack.c.h.b16 %v433
  %v2133 = vunpack.c.l.b16 %v434
  %v2134 = vunpack.c.h.b16 %v434
  %v2135 = vunpack.c.l.b16 %v435
  %v2136 = vunpack.c.h.b16 %v435
  %v2137 = vunpack.c.l.b16 %v436
  %v2138 = vunpack.c.h.b16 %v436
  %v2139 = vunpack.c.l.b16 %v437
  %v2140 = vunpack.c.h.b16 %v437
  %v2141 = vunpack.c.l.b16 %v438
  %v2142 = vunpack.c.h.b16 %v438
  %v2143 = vunpack.c.l.b16 %v439
  %v2144 = vunpack.c.h.b16 %v439
  %v2145 = vunpack.c.l.b16 %v440
  %v2146 = vunpack.c.h.b16 %v440
  %v2147 = vunpack.c.l.b16 %v441
  %v2148 = vunpack.c.h.b16 %v441
  %v2149 = vunpack.c.l.b16 %v442
  %v2150 = vunpack.c.h.b16 %v442
  %v2151 = vunpack.c.l.b16 %v443
  %v2152 = vunpack.c.h.b16 %v443
  %v2153 = vunpack.c.l.b16 %v444
  %v2154 = vunpack.c.h.b16 %v444
  %v2155 = vunpack.c.l.b16 %v445
  %v2156 = vunpack.c.h.b16 %v445
  %v2157 = vunpack.c.l.b16 %v446
  %v2158 = vunpack.c.h.b16 %v446
  %v2159 = vunpack.c.l.b16 %v447
  %v2160 = vunpack.c.h.b16 %v447
  %v2161 = vunpack.c.l.b16 %v448
  %v2162 = vunpack.c.h.b16 %v448
  %v2163 = vunpack.c.l.b16 %v449
  %v2164 = vunpack.c.h.b16 %v449
  %v2165 = vunpack.c.l.b16 %v450
  %v2166 = vunpack.c.h.b16 %v450
  %v2167 = vunpack.c.l.b16 %v451
  %v2168 = vunpack.c.h.b16 %v451
  %v2169 = vunpack.c.l.b16 %v452
  %v2170 = vunpack.c.h.b16 %v452
  %v2171 = vunpack.c.l.b16 %v453
  %v2172 = vunpack.c.h.b16 %v453
  %v2173 = vunpack.c.l.b16 %v454
  %v2174 = vunpack.c.h.b16 %v454
  %v2175 = vunpack.c.l.b16 %v455
  %v2176 = vunpack.c.h.b16 %v455
  %v2177 = vunpack.c.l.b16 %v456
  %v2178 = vunpack.c.h.b16 %v456
  %v2179 = vunpack.c.l.b16 %v457
  %v2180 = vunpack.c.h.b16 %v457
  %v2181 = vunpack.c.l.b16 %v458
  %v2182 = vunpack.c.h.b16 %v458
  %v2183 = vunpack.c.l.b16 %v459
  %v2184 = vunpack.c.h.b16 %v459
  %v2185 = vunpack.c.l.b16 %v460
  %v2186 = vunpack.c.h.b16 %v460
  %v2187 = vunpack.c.l.b16 %v461
  %v2188 = vunpack.c.h.b16 %v461
  %v2189 = vunpack.c.l.b16 %v462
  %v2190 = vunpack.c.h.b16 %v462
  %v2191 = vunpack.c.l.b16 %v463
  %v2192 = vunpack.c.h.b16 %v463
  %v2193 = vunpack.c.l.b16 %v464
  %v2194 = vunpack.c.h.b16 %v464
  %v2195 = vunpack.c.l.b16 %v465
  %v2196 = vunpack.c.h.b16 %v465
  %v2197 = vunpack.c.l.b16 %v466
  %v2198 = vunpack.c.h.b16 %v466
  %v2199 = vunpack.c.l.b16 %v467
  %v2200 = vunpack.c.h.b16 %v467
  %v2201 = vunpack.c.l.b16 %v468
  %v2202 = vunpack.c.h.b16 %v468
  %v2203 = vunpack.c.l.b16 %v469
  %v2204 = vunpack.c.h.b16 %v469
  %v2205 = vunpack.c.l.b16 %v470
  %v2206 = vunpack.c.h.b16 %v470
  %v2207 = vunpack.c.l.b16 %v471
  %v2208 = vunpack.c.h.b16 %v471
  %v2209 = vunpack.c.l.b16 %v472
  %v2210 = vunpack.c.h.b16 %v472
  %v2211 = vunpack.c.l.b16 %v473
  %v2212 = vunpack.c.h.b16 %v473
  %v2213 = vunpack.c.l.b16 %v474
  %v2214 = vunpack.c.h.b16 %v474
  %v2215 = vunpack.c.l.b16 %v475
  %v2216 = vunpack.c.h.b16 %v475
  %v2217 = vunpack.c.l.b16 %v476
  %v2218 = vunpack.c.h.b16 %v476
  %v2219 = vunpack.c.l.b16 %v477
  %v2220 = vunpack.c.h.b16 %v477
  %v2221 = vunpack.c.l.b16 %v478
  %v2222 = vunpack.c.h.b16 %v478
  %v2223 = vunpack.c.l.b16 %v479
  %v2224 = vunpack.c.h.b16 %v479
  %v2225 = vunpack.c.l.b16 %v480
  %v2226 = vunpack.c.h.b16 %v480
  %v2227 = vunpack.c.l.b16 %v481
  %v2228 = vunpack.c.h.b16 %v481
  %v2229 = vunpack.c.l.b16 %v482
  %v2230 = vunpack.c.h.b16 %v482
  %v2231 = vunpack.c.l.b16 %v483
  %v2232 = vunpack.c.h.b16 %v483
  %v2233 = vunpack.c.l.b16 %v484
  %v2234 = vunpack.c.h.b16 %v484
  %v2235 = vunpack.c.l.b16 %v485
  %v2236 = vunpack.c.h.b16 %v485
  %v2237 = vunpack.c.l.b16 %v486
  %v2238 = vunpack.c.h.b16 %v486
  %v2239 = vunpack.c.l.b16 %v487
  %v2240 = vunpack.c.h.b16 %v487
  %v2241 = vunpack.c.l.b16 %v488
  %v2242 = vunpack.c.h.b16 %v488
  %v2243 = vunpack.c.l.b16 %v489
  %v2244 = vunpack.c.h.b16 %v489
  %v2245 = vunpack.c.l.b16 %v490
  %v2246 = vunpack.c.h.b16 %v490
  %v2247 = vunpack.c.l.b16 %v491
  %v2248 = vunpack.c.h.b16 %v491
  %v2249 = vunpack.c.l.b16 %v492
  %v2250 = vunpack.c.h.b16 %v492
  %v2251 = vunpack.c.l.b16 %v493
  %v2252 = vunpack.c.h.b16 %v493
  %v2253 = vunpack.c.l.b16 %v494
  %v2254 = vunpack.c.h.b16 %v494
  %v2255 = vunpack.c.l.b16 %v495
  %v2256 = vunpack.c.h.b16 %v495
  %v2257 = vunpack.c.l.b16 %v496
  %v2258 = vunpack.c.h.b16 %v496
  %v2259 = vunpack.c.l.b16 %v497
  %v2260 = vunpack.c.h.b16 %v497
  %v2261 = vunpack.c.l.b16 %v498
  %v2262 = vunpack.c.h.b16 %v498
  %v2263 = vunpack.c.l.b16 %v499
  %v2264 = vunpack.c.h.b16 %v499
  %v2265 = vunpack.c.l.b16 %v500
  %v2266 = vunpack.c.h.b16 %v500
  %v2267 = vunpack.c.l.b16 %v501
  %v2268 = vunpack.c.h.b16 %v501
  %v2269 = vunpack.c.l.b16 %v502
  %v2270 = vunpack.c.h.b16 %v502
  %v2271 = vunpack.c.l.b16 %v503
  %v2272 = vunpack.c.h.b16 %v503
  %v2273 = vunpack.c.l.b16 %v504
  %v2274 = vunpack.c.h.b16 %v504
  %v2275 = vunpack.c.l.b16 %v505
  %v2276 = vunpack.c.h.b16 %v505
  %v2277 = vunpack.c.l.b16 %v506
  %v2278 = vunpack.c.h.b16 %v506
  %v2279 = vunpack.c.l.b16 %v507
  %v2280 = vunpack.c.h.b16 %v507
  %v2281 = vunpack.c.l.b16 %v508
  %v2282 = vunpack.c.h.b16 %v508
  %v2283 = vunpack.c.l.b16 %v509
  %v2284 = vunpack.c.h.b16 %v509
  %v2285 = vunpack.c.l.b16 %v510
  %v2286 = vunpack.c.h.b16 %v510
  %v2287 = vunpack.c.l.b16 %v511
  %v2288 = vunpack.c.h.b16 %v511
  %v2289 = vunpack.c.l.b16 %v512
  %v2290 = vunpack.c.h.b16 %v512
  %v2291 = vunpack.c.l.b16 %v513
  %v2292 = vunpack.c.h.b16 %v513
  %v2293 = vunpack.c.l.b16 %v514
  %v2294 = vunpack.c.h.b16 %v514
  %v2295 = vunpack.c.l.b16 %v515
  %v2296 = vunpack.c.h.b16 %v515
  %v2297 = vunpack.c.l.b16 %v516
  %v2298 = vunpack.c.h.b16 %v516
  %v2299 = vunpack.c.l.b16 %v517
  %v2300 = vunpack.c.h.b16 %v517
  %v2301 = vunpack.c.l.b16 %v518
  %v2302 = vunpack.c.h.b16 %v518
  %v2303 = vunpack.c.l.b16 %v519
  %v2304 = vunpack.c.h.b16 %v519
  %v2305 = vunpack.c.l.b16 %v520
  %v2306 = vunpack.c.h.b16 %v520
  %v2307 = vunpack.c.l.b16 %v521
  %v2308 = vunpack.c.h.b16 %v521
  %v2309 = vunpack.c.l.b16 %v522
  %v2310 = vunpack.c.h.b16 %v522
  %v2311 = vunpack.c.l.b16 %v523
  %v2312 = vunpack.c.h.b16 %v523
  %v2313 = vunpack.c.l.b16 %v524
  %v2314 = vunpack.c.h.b16 %v524
  %v2315 = vunpack.c.l.b16 %v525
  %v2316 = vunpack.c.h.b16 %v525
  %v2317 = vunpack.c.l.b16 %v526
  %v2318 = vunpack.c.h.b16 %v526
  %v2319 = vunpack.c.l.b16 %v527
  %v2320 = vunpack.c.h.b16 %v527
  %v2321 = vunpack.c.l.b16 %v528
  %v2322 = vunpack.c.h.b16 %v528
  %v2323 = vunpack.c.l.b16 %v529
  %v2324 = vunpack.c.h.b16 %v529
  %v2325 = vunpack.c.l.b16 %v530
  %v2326 = vunpack.c.h.b16 %v530
  %v2327 = vunpack.c.l.b16 %v531
  %v2328 = vunpack.c.h.b16 %v531
  %v2329 = vunpack.c.l.b16 %v532
  %v2330 = vunpack.c.h.b16 %v532
  %v2331 = vunpack.c.l.b16 %v533
  %v2332 = vunpack.c.h.b16 %v533
  %v2333 = vunpack.c.l.b16 %v534
  %v2334 = vunpack.c.h.b16 %v534
  %v2335 = vunpack.c.l.b16 %v535
  %v2336 = vunpack.c.h.b16 %v535
  %v2337 = vunpack.c.l.b16 %v536
  %v2338 = vunpack.c.h.b16 %v536
  %v2339 = vunpack.c.l.b16 %v537
  %v2340 = vunpack.c.h.b16 %v537
  %v2341 = vunpack.c.l.b16 %v538
  %v2342 = vunpack.c.h.b16 %v538
  %v2343 = vunpack.c.l.b16 %v539
  %v2344 = vunpack.c.h.b16 %v539
  %v2345 = vunpack.c.l.b16 %v540
  %v2346 = vunpack.c.h.b16 %v540
  %v2347 = vunpack.c.l.b16 %v541
  %v2348 = vunpack.c.h.b16 %v541
  %v2349 = vunpack.c.l.b16 %v542
  %v2350 = vunpack.c.h.b16 %v542
  %v2351 = vunpack.c.l.b16 %v543
  %v2352 = vunpack.c.h.b16 %v543
  %v2353 = vunpack.c.l.b16 %v544
  %v2354 = vunpack.c.h.b16 %v544
  %v2355 = vunpack.c.l.b16 %v545
  %v2356 = vunpack.c.h.b16 %v545
  %v2357 = vunpack.c.l.b16 %v546
  %v2358 = vunpack.c.h.b16 %v546
  %v2359 = vunpack.c.l.b16 %v547
  %v2360 = vunpack.c.h.b16 %v547
  %v2361 = vunpack.c.l.b16 %v548
  %v2362 = vunpack.c.h.b16 %v548
  %v2363 = vunpack.c.l.b16 %v549
  %v2364 = vunpack.c.h.b16 %v549
  %v2365 = vunpack.c.l.b16 %v550
  %v2366 = vunpack.c.h.b16 %v550
  %v2367 = vunpack.c.l.b16 %v551
  %v2368 = vunpack.c.h.b16 %v551
  %v2369 = vunpack.c.l.b16 %v552
  %v2370 = vunpack.c.h.b16 %v552
  %v2371 = vunpack.c.l.b16 %v553
  %v2372 = vunpack.c.h.b16 %v553
  %v2373 = vunpack.c.l.b16 %v554
  %v2374 = vunpack.c.h.b16 %v554
  %v2375 = vunpack.c.l.b16 %v555
  %v2376 = vunpack.c.h.b16 %v555
  %v2377 = vunpack.c.l.b16 %v556
  %v2378 = vunpack.c.h.b16 %v556
  %v2379 = vunpack.c.l.b16 %v557
  %v2380 = vunpack.c.h.b16 %v557
  %v2381 = vunpack.c.l.b16 %v558
  %v2382 = vunpack.c.h.b16 %v558
  %v2383 = vunpack.c.l.b16 %v559
  %v2384 = vunpack.c.h.b16 %v559
  %v2385 = vunpack.c.l.b16 %v560
  %v2386 = vunpack.c.h.b16 %v560
  %v2387 = vunpack.c.l.b16 %v561
  %v2388 = vunpack.c.h.b16 %v561
  %v2389 = vunpack.c.l.b16 %v562
  %v2390 = vunpack.c.h.b16 %v562
  %v2391 = vunpack.c.l.b16 %v563
  %v2392 = vunpack.c.h.b16 %v563
  %v2393 = vunpack.c.l.b16 %v564
  %v2394 = vunpack.c.h.b16 %v564
  %v2395 = vunpack.c.l.b16 %v565
  %v2396 = vunpack.c.h.b16 %v565
  %v2397 = vunpack.c.l.b16 %v566
  %v2398 = vunpack.c.h.b16 %v566
  %v2399 = vunpack.c.l.b16 %v567
  %v2400 = vunpack.c.h.b16 %v567
  %v2401 = vunpack.c.l.b16 %v568
  %v2402 = vunpack.c.h.b16 %v568
  %v2403 = vunpack.c.l.b16 %v569
  %v2404 = vunpack.c.h.b16 %v569
  %v2405 = vunpack.c.l.b16 %v570
  %v2406 = vunpack.c.h.b16 %v570
  %v2407 = vunpack.c.l.b16 %v571
  %v2408 = vunpack.c.h.b16 %v571
  %v2409 = vunpack.c.l.b16 %v572
  %v2410 = vunpack.c.h.b16 %v572
  %v2411 = vunpack.c.l.b16 %v573
  %v2412 = vunpack.c.h.b16 %v573
  %v2413 = vunpack.c.l.b16 %v574
  %v2414 = vunpack.c.h.b16 %v574
  %v2415 = vunpack.c.l.b16 %v575
  %v2416 = vunpack.c.h.b16 %v575
  %v2417 = vunpack.c.l.b16 %v576
  %v2418 = vunpack.c.h.b16 %v576
  %v2419 = vunpack.c.l.b16 %v577
  %v2420 = vunpack.c.h.b16 %v577
  %v2421 = vunpack.c.l.b16 %v578
  %v2422 = vunpack.c.h.b16 %v578
  %v2423 = vunpack.c.l.b16 %v579
  %v2424 = vunpack.c.h.b16 %v579
  %v2425 = vunpack.c.l.b16 %v580
  %v2426 = vunpack.c.h.b16 %v580
  %v2427 = vunpack.c.l.b16 %v581
  %v2428 = vunpack.c.h.b16 %v581
  %v2429 = vunpack.c.l.b16 %v582
  %v2430 = vunpack.c.h.b16 %v582
  %v2431 = vunpack.c.l.b16 %v583
  %v2432 = vunpack.c.h.b16 %v583
  %v2433 = vunpack.c.l.b16 %v584
  %v2434 = vunpack.c.h.b16 %v584
  %v2435 = vunpack.c.l.b16 %v585
  %v2436 = vunpack.c.h.b16 %v585
  %v2437 = vunpack.c.l.b16 %v586
  %v2438 = vunpack.c.h.b16 %v586
  %v2439 = vunpack.c.l.b16 %v587
  %v2440 = vunpack.c.h.b16 %v587
  %v2441 = vunpack.c.l.b16 %v588
  %v2442 = vunpack.c.h.b16 %v588
  %v2443 = vunpack.c.l.b16 %v589
  %v2444 = vunpack.c.h.b16 %v589
  %v2445 = vunpack.c.l.b16 %v590
  %v2446 = vunpack.c.h.b16 %v590
  %v2447 = vunpack.c.l.b16 %v591
  %v2448 = vunpack.c.h.b16 %v591
  %v2449 = vunpack.c.l.b16 %v592
  %v2450 = vunpack.c.h.b16 %v592
  %v2451 = vunpack.c.l.b16 %v593
  %v2452 = vunpack.c.h.b16 %v593
  %v2453 = vunpack.c.l.b16 %v594
  %v2454 = vunpack.c.h.b16 %v594
  %v2455 = vunpack.c.l.b16 %v595
  %v2456 = vunpack.c.h.b16 %v595
  %v2457 = vunpack.c.l.b16 %v596
  %v2458 = vunpack.c.h.b16 %v596
  %v2459 = vunpack.c.l.b16 %v597
  %v2460 = vunpack.c.h.b16 %v597
  %v2461 = vunpack.c.l.b16 %v598
  %v2462 = vunpack.c.h.b16 %v598
  %v2463 = vunpack.c.l.b16 %v599
  %v2464 = vunpack.c.h.b16 %v599
  %v2465 = vunpack.c.l.b16 %v600
  %v2466 = vunpack.c.h.b16 %v600
  %v2467 = vunpack.c.l.b16 %v601
  %v2468 = vunpack.c.h.b16 %v601
  %v2469 = vunpack.c.l.b16 %v602
  %v2470 = vunpack.c.h.b16 %v602
  %v2471 = vunpack.c.l.b16 %v603
  %v2472 = vunpack.c.h.b16 %v603
  %v2473 = vunpack.c.l.b16 %v604
  %v2474 = vunpack.c.h.b16 %v604
  %v2475 = vunpack.c.l.b16 %v605
  %v2476 = vunpack.c.h.b16 %v605
  %v2477 = vunpack.c.l.b16 %v606
  %v2478 = vunpack.c.h.b16 %v606
  %v2479 = vunpack.c.l.b16 %v607
  %v2480 = vunpack.c.h.b16 %v607
  %v2481 = vunpack.c.l.b16 %v608
  %v2482 = vunpack.c.h.b16 %v608
  %v2483 = vunpack.c.l.b16 %v609
  %v2484 = vunpack.c.h.b16 %v609
  %v2485 = vunpack.c.l.b16 %v610
  %v2486 = vunpack.c.h.b16 %v610
  %v2487 = vunpack.c.l.b16 %v611
  %v2488 = vunpack.c.h.b16 %v611
  %v2489 = vunpack.c.l.b16 %v612
  %v2490 = vunpack.c.h.b16 %v612
  %v2491 = vunpack.c.l.b16 %v613
  %v2492 = vunpack.c.h.b16 %v613
  %v2493 = vunpack.c.l.b16 %v614
  %v2494 = vunpack.c.h.b16 %v614
  %v2495 = vunpack.c.l.b16 %v615
  %v2496 = vunpack.c.h.b16 %v615
  %v2497 = vpack.c.b16 %v1349, %v1345
  %v2498 = vpack.c.b16 %v1350, %v1346
  %v2499 = vpack.c.b16 %v1351, %v1347
  %v2500 = vpack.c.b16 %v1352, %v1348
  %v2501 = vpack.c.b16 %v1357, %v1353
  %v2502 = vpack.c.b16 %v1358, %v1354
  %v2503 = vpack.c.b16 %v1359, %v1355
  %v2504 = vpack.c.b16 %v1360, %v1356
  %v2505 = vpack.c.b16 %v1365, %v1361
  %v2506 = vpack.c.b16 %v1366, %v1362
  %v2507 = vpack.c.b16 %v1367, %v1363
  %v2508 = vpack.c.b16 %v1368, %v1364
  %v2509 = vpack.c.b16 %v1373, %v1369
  %v2510 = vpack.c.b16 %v1374, %v1370
  %v2511 = vpack.c.b16 %v1375, %v1371
  %v2512 = vpack.c.b16 %v1376, %v1372
  %v2513 = vpack.c.b16 %v1381, %v1377
  %v2514 = vpack.c.b16 %v1382, %v1378
  %v2515 = vpack.c.b16 %v1383, %v1379
  %v2516 = vpack.c.b16 %v1384, %v1380
  %v2517 = vpack.c.b16 %v1389, %v1385
  %v2518 = vpack.c.b16 %v1390, %v1386
  %v2519 = vpack.c.b16 %v1391, %v1387
  %v2520 = vpack.c.b16 %v1392, %v1388
  %v2521 = vpack.c.b16 %v1397, %v1393
  %v2522 = vpack.c.b16 %v1398, %v1394
  %v2523 = vpack.c.b16 %v1399, %v1395
  %v2524 = vpack.c.b16 %v1400, %v1396
  %v2525 = vpack.c.b16 %v1405, %v1401
  %v2526 = vpack.c.b16 %v1406, %v1402
  %v2527 = vpack.c.b16 %v1407, %v1403
  %v2528 = vpack.c.b16 %v1408, %v1404
  %v2529 = vpack.c.b16 %v1413, %v1409
  %v2530 = vpack.c.b16 %v1414, %v1410
  %v2531 = vpack.c.b16 %v1415, %v1411
  %v2532 = vpack.c.b16 %v1416, %v1412
  %v2533 = vpack.c.b16 %v1421, %v1417
  %v2534 = vpack.c.b16 %v1422, %v1418
  %v2535 = vpack.c.b16 %v1423, %v1419
  %v2536 = vpack.c.b16 %v1424, %v1420
  %v2537 = vpack.c.b16 %v1429, %v1425
  %v2538 = vpack.c.b16 %v1430, %v1426
  %v2539 = vpack.c.b16 %v1431, %v1427
  %v2540 = vpack.c.b16 %v1432, %v1428
  %v2541 = vpack.c.b16 %v1437, %v1433
  %v2542 = vpack.c.b16 %v1438, %v1434
  %v2543 = vpack.c.b16 %v1439, %v1435
  %v2544 = vpack.c.b16 %v1440, %v1436
  %v2545 = vpack.c.b16 %v1445, %v1441
  %v2546 = vpack.c.b16 %v1446, %v1442
  %v2547 = vpack.c.b16 %v1447, %v1443
  %v2548 = vpack.c.b16 %v1448, %v1444
  %v2549 = vpack.c.b16 %v1453, %v1449
  %v2550 = vpack.c.b16 %v1454, %v1450
  %v2551 = vpack.c.b16 %v1455, %v1451
  %v2552 = vpack.c.b16 %v1456, %v1452
  %v2553 = vpack.c.b16 %v1461, %v1457
  %v2554 = vpack.c.b16 %v1462, %v1458
  %v2555 = vpack.c.b16 %v1463, %v1459
  %v2556 = vpack.c.b16 %v1464, %v1460
  %v2557 = vpack.c.b16 %v1469, %v1465
  %v2558 = vpack.c.b16 %v1470, %v1466
  %v2559 = vpack.c.b16 %v1471, %v1467
  %v2560 = vpack.c.b16 %v1472, %v1468
  %v2561 = vpack.c.b16 %v1477, %v1473
  %v2562 = vpack.c.b16 %v1478, %v1474
  %v2563 = vpack.c.b16 %v1479, %v1475
  %v2564 = vpack.c.b16 %v1480, %v1476
  %v2565 = vpack.c.b16 %v1485, %v1481
  %v2566 = vpack.c.b16 %v1486, %v1482
  %v2567 = vpack.c.b16 %v1487, %v1483
  %v2568 = vpack.c.b16 %v1488, %v1484
  %v2569 = vpack.c.b16 %v1493, %v1489
  %v2570 = vpack.c.b16 %v1494, %v1490
  %v2571 = vpack.c.b16 %v1495, %v1491
  %v2572 = vpack.c.b16 %v1496, %v1492
  %v2573 = vpack.c.b16 %v1501, %v1497
  %v2574 = vpack.c.b16 %v1502, %v1498
  %v2575 = vpack.c.b16 %v1503, %v1499
  %v2576 = vpack.c.b16 %v1504, %v1500
  %v2577 = vpack.c.b16 %v1509, %v1505
  %v2578 = vpack.c.b16 %v1510, %v1506
  %v2579 = vpack.c.b16 %v1511, %v1507
  %v2580 = vpack.c.b16 %v1512, %v1508
  %v2581 = vpack.c.b16 %v1517, %v1513
  %v2582 = vpack.c.b16 %v1518, %v1514
  %v2583 = vpack.c.b16 %v1519, %v1515
  %v2584 = vpack.c.b16 %v1520, %v1516
  %v2585 = vpack.c.b16 %v1525, %v1521
  %v2586 = vpack.c.b16 %v1526, %v1522
  %v2587 = vpack.c.b16 %v1527, %v1523
  %v2588 = vpack.c.b16 %v1528, %v1524
  %v2589 = vpack.c.b16 %v1533, %v1529
  %v2590 = vpack.c.b16 %v1534, %v1530
  %v2591 = vpack.c.b16 %v1535, %v1531
  %v2592 = vpack.c.b16 %v1536, %v1532
  %v2593 = vpack.c.b16 %v1541, %v1537
  %v2594 = vpack.c.b16 %v1542, %v1538
  %v2595 = vpack.c.b16 %v1543, %v1539
  %v2596 = vpack.c.b16 %v1544, %v1540
  %v2597 = vpack.c.b16 %v1549, %v1545
  %v2598 = vpack.c.b16 %v1550, %v1546
  %v2599 = vpack.c.b16 %v1551, %v1547
  %v2600 = vpack.c.b16 %v1552, %v1548
  %v2601 = vpack.c.b16 %v1557, %v1553
  %v2602 = vpack.c.b16 %v1558, %v1554
  %v2603 = vpack.c.b16 %v1559, %v1555
  %v2604 = vpack.c.b16 %v1560, %v1556
  %v2605 = vpack.c.b16 %v1565, %v1561
  %v2606 = vpack.c.b16 %v1566, %v1562
  %v2607 = vpack.c.b16 %v1567, %v1563
  %v2608 = vpack.c.b16 %v1568, %v1564
  %v2609 = vpack.c.b16 %v1573, %v1569
  %v2610 = vpack.c.b16 %v1574, %v1570
  %v2611 = vpack.c.b16 %v1575, %v1571
  %v2612 = vpack.c.b16 %v1576, %v1572
  %v2613 = vpack.c.b16 %v1581, %v1577
  %v2614 = vpack.c.b16 %v1582, %v1578
  %v2615 = vpack.c.b16 %v1583, %v1579
  %v2616 = vpack.c.b16 %v1584, %v1580
  %v2617 = vpack.c.b16 %v1589, %v1585
  %v2618 = vpack.c.b16 %v1590, %v1586
  %v2619 = vpack.c.b16 %v1591, %v1587
  %v2620 = vpack.c.b16 %v1592, %v1588
  %v2621 = vpack.c.b16 %v1597, %v1593
  %v2622 = vpack.c.b16 %v1598, %v1594
  %v2623 = vpack.c.b16 %v1599, %v1595
  %v2624 = vpack.c.b16 %v1600, %v1596
  %v2625 = vpack.c.b16 %v1605, %v1601
  %v2626 = vpack.c.b16 %v1606, %v1602
  %v2627 = vpack.c.b16 %v1607, %v1603
  %v2628 = vpack.c.b16 %v1608, %v1604
  %v2629 = vpack.c.b16 %v1613, %v1609
  %v2630 = vpack.c.b16 %v1614, %v1610
  %v2631 = vpack.c.b16 %v1615, %v1611
  %v2632 = vpack.c.b16 %v1616, %v1612
  %v2633 = vpack.c.b16 %v1621, %v1617
  %v2634 = vpack.c.b16 %v1622, %v1618
  %v2635 = vpack.c.b16 %v1623, %v1619
  %v2636 = vpack.c.b16 %v1624, %v1620
  %v2637 = vpack.c.b16 %v1629, %v1625
  %v2638 = vpack.c.b16 %v1630, %v1626
  %v2639 = vpack.c.b16 %v1631, %v1627
  %v2640 = vpack.c.b16 %v1632, %v1628
  %v2641 = vpack.c.b16 %v1637, %v1633
  %v2642 = vpack.c.b16 %v1638, %v1634
  %v2643 = vpack.c.b16 %v1639, %v1635
  %v2644 = vpack.c.b16 %v1640, %v1636
  %v2645 = vpack.c.b16 %v1645, %v1641
  %v2646 = vpack.c.b16 %v1646, %v1642
  %v2647 = vpack.c.b16 %v1647, %v1643
  %v2648 = vpack.c.b16 %v1648, %v1644
  %v2649 = vpack.c.b16 %v1653, %v1649
  %v2650 = vpack.c.b16 %v1654, %v1650
  %v2651 = vpack.c.b16 %v1655, %v1651
  %v2652 = vpack.c.b16 %v1656, %v1652
  %v2653 = vpack.c.b16 %v1661, %v1657
  %v2654 = vpack.c.b16 %v1662, %v1658
  %v2655 = vpack.c.b16 %v1663, %v1659
  %v2656 = vpack.c.b16 %v1664, %v1660
  %v2657 = vpack.c.b16 %v1669, %v1665
  %v2658 = vpack.c.b16 %v1670, %v1666
  %v2659 = vpack.c.b16 %v1671, %v1667
  %v2660 = vpack.c.b16 %v1672, %v1668
  %v2661 = vpack.c.b16 %v1677, %v1673
  %v2662 = vpack.c.b16 %v1678, %v1674
  %v2663 = vpack.c.b16 %v1679, %v1675
  %v2664 = vpack.c.b16 %v1680, %v1676
  %v2665 = vpack.c.b16 %v1685, %v1681
  %v2666 = vpack.c.b16 %v1686, %v1682
  %v2667 = vpack.c.b16 %v1687, %v1683
  %v2668 = vpack.c.b16 %v1688, %v1684
  %v2669 = vpack.c.b16 %v1693, %v1689
  %v2670 = vpack.c.b16 %v1694, %v1690
  %v2671 = vpack.c.b16 %v1695, %v1691
  %v2672 = vpack.c.b16 %v1696, %v1692
  %v2673 = vpack.c.b16 %v1701, %v1697
  %v2674 = vpack.c.b16 %v1702, %v1698
  %v2675 = vpack.c.b16 %v1703, %v1699
  %v2676 = vpack.c.b16 %v1704, %v1700
  %v2677 = vpack.c.b16 %v1709, %v1705
  %v2678 = vpack.c.b16 %v1710, %v1706
  %v2679 = vpack.c.b16 %v1711, %v1707
  %v2680 = vpack.c.b16 %v1712, %v1708
  %v2681 = vpack.c.b16 %v1717, %v1713
  %v2682 = vpack.c.b16 %v1718, %v1714
  %v2683 = vpack.c.b16 %v1719, %v1715
  %v2684 = vpack.c.b16 %v1720, %v1716
  %v2685 = vpack.c.b16 %v1725, %v1721
  %v2686 = vpack.c.b16 %v1726, %v1722
  %v2687 = vpack.c.b16 %v1727, %v1723
  %v2688 = vpack.c.b16 %v1728, %v1724
  %v2689 = vpack.c.b16 %v1733, %v1729
  %v2690 = vpack.c.b16 %v1734, %v1730
  %v2691 = vpack.c.b16 %v1735, %v1731
  %v2692 = vpack.c.b16 %v1736, %v1732
  %v2693 = vpack.c.b16 %v1741, %v1737
  %v2694 = vpack.c.b16 %v1742, %v1738
  %v2695 = vpack.c.b16 %v1743, %v1739
  %v2696 = vpack.c.b16 %v1744, %v1740
  %v2697 = vpack.c.b16 %v1749, %v1745
  %v2698 = vpack.c.b16 %v1750, %v1746
  %v2699 = vpack.c.b16 %v1751, %v1747
  %v2700 = vpack.c.b16 %v1752, %v1748
  %v2701 = vpack.c.b16 %v1757, %v1753
  %v2702 = vpack.c.b16 %v1758, %v1754
  %v2703 = vpack.c.b16 %v1759, %v1755
  %v2704 = vpack.c.b16 %v1760, %v1756
  %v2705 = vpack.c.b16 %v1765, %v1761
  %v2706 = vpack.c.b16 %v1766, %v1762
  %v2707 = vpack.c.b16 %v1767, %v1763
  %v2708 = vpack.c.b16 %v1768, %v1764
  %v2709 = vpack.c.b16 %v1773, %v1769
  %v2710 = vpack.c.b16 %v1774, %v1770
  %v2711 = vpack.c.b16 %v1775, %v1771
  %v2712 = vpack.c.b16 %v1776, %v1772
  %v2713 = vpack.c.b16 %v1781, %v1777
  %v2714 = vpack.c.b16 %v1782, %v1778
  %v2715 = vpack.c.b16 %v1783, %v1779
  %v2716 = vpack.c.b16 %v1784, %v1780
  %v2717 = vpack.c.b16 %v1789, %v1785
  %v2718 = vpack.c.b16 %v1790, %v1786
  %v2719 = vpack.c.b16 %v1791, %v1787
  %v2720 = vpack.c.b16 %v1792, %v1788
  %v2721 = vpack.c.b16 %v1797, %v1793
  %v2722 = vpack.c.b16 %v1798, %v1794
  %v2723 = vpack.c.b16 %v1799, %v1795
  %v2724 = vpack.c.b16 %v1800, %v1796
  %v2725 = vpack.c.b16 %v1805, %v1801
  %v2726 = vpack.c.b16 %v1806, %v1802
  %v2727 = vpack.c.b16 %v1807, %v1803
  %v2728 = vpack.c.b16 %v1808, %v1804
  %v2729 = vpack.c.b16 %v1813, %v1809
  %v2730 = vpack.c.b16 %v1814, %v1810
  %v2731 = vpack.c.b16 %v1815, %v1811
  %v2732 = vpack.c.b16 %v1816, %v1812
  %v2733 = vpack.c.b16 %v1821, %v1817
  %v2734 = vpack.c.b16 %v1822, %v1818
  %v2735 = vpack.c.b16 %v1823, %v1819
  %v2736 = vpack.c.b16 %v1824, %v1820
  %v2737 = vpack.c.b16 %v1829, %v1825
  %v2738 = vpack.c.b16 %v1830, %v1826
  %v2739 = vpack.c.b16 %v1831, %v1827
  %v2740 = vpack.c.b16 %v1832, %v1828
  %v2741 = vpack.c.b16 %v1837, %v1833
  %v2742 = vpack.c.b16 %v1838, %v1834
  %v2743 = vpack.c.b16 %v1839, %v1835
  %v2744 = vpack.c.b16 %v1840, %v1836
  %v2745 = vpack.c.b16 %v1845, %v1841
  %v2746 = vpack.c.b16 %v1846, %v1842
  %v2747 = vpack.c.b16 %v1847, %v1843
  %v2748 = vpack.c.b16 %v1848, %v1844
  %v2749 = vpack.c.b16 %v1853, %v1849
  %v2750 = vpack.c.b16 %v1854, %v1850
  %v2751 = vpack.c.b16 %v1855, %v1851
  %v2752 = vpack.c.b16 %v1856, %v1852
  %v2753 = vpack.c.b16 %v1861, %v1857
  %v2754 = vpack.c.b16 %v1862, %v1858
  %v2755 = vpack.c.b16 %v1863, %v1859
  %v2756 = vpack.c.b16 %v1864, %v1860
  %v2757 = vpack.c.b16 %v1869, %v1865
  %v2758 = vpack.c.b16 %v1870, %v1866
  %v2759 = vpack.c.b16 %v1871, %v1867
  %v2760 = vpack.c.b16 %v1872, %v1868
  %v2761 = vpack.c.b16 %v1877, %v1873
  %v2762 = vpack.c.b16 %v1878, %v1874
  %v2763 = vpack.c.b16 %v1879, %v1875
  %v2764 = vpack.c.b16 %v1880, %v1876
  %v2765 = vpack.c.b16 %v1885, %v1881
  %v2766 = vpack.c.b16 %v1886, %v1882
  %v2767 = vpack.c.b16 %v1887, %v1883
  %v2768 = vpack.c.b16 %v1888, %v1884
  %v2769 = vpack.c.b16 %v1893, %v1889
  %v2770 = vpack.c.b16 %v1894, %v1890
  %v2771 = vpack.c.b16 %v1895, %v1891
  %v2772 = vpack.c.b16 %v1896, %v1892
  %v2773 = vpack.c.b16 %v1901, %v1897
  %v2774 = vpack.c.b16 %v1902, %v1898
  %v2775 = vpack.c.b16 %v1903, %v1899
  %v2776 = vpack.c.b16 %v1904, %v1900
  %v2777 = vpack.c.b16 %v1909, %v1905
  %v2778 = vpack.c.b16 %v1910, %v1906
  %v2779 = vpack.c.b16 %v1911, %v1907
  %v2780 = vpack.c.b16 %v1912, %v1908
  %v2781 = vpack.c.b16 %v1917, %v1913
  %v2782 = vpack.c.b16 %v1918, %v1914
  %v2783 = vpack.c.b16 %v1919, %v1915
  %v2784 = vpack.c.b16 %v1920, %v1916
  %v2785 = vpack.c.b16 %v1925, %v1921
  %v2786 = vpack.c.b16 %v1926, %v1922
  %v2787 = vpack.c.b16 %v1927, %v1923
  %v2788 = vpack.c.b16 %v1928, %v1924
  %v2789 = vpack.c.b16 %v1933, %v1929
  %v2790 = vpack.c.b16 %v1934, %v1930
  %v2791 = vpack.c.b16 %v1935, %v1931
  %v2792 = vpack.c.b16 %v1936, %v1932
  %v2793 = vpack.c.b16 %v1941, %v1937
  %v2794 = vpack.c.b16 %v1942, %v1938
  %v2795 = vpack.c.b16 %v1943, %v1939
  %v2796 = vpack.c.b16 %v1944, %v1940
  %v2797 = vpack.c.b16 %v1949, %v1945
  %v2798 = vpack.c.b16 %v1950, %v1946
  %v2799 = vpack.c.b16 %v1951, %v1947
  %v2800 = vpack.c.b16 %v1952, %v1948
  %v2801 = vpack.c.b16 %v1957, %v1953
  %v2802 = vpack.c.b16 %v1958, %v1954
  %v2803 = vpack.c.b16 %v1959, %v1955
  %v2804 = vpack.c.b16 %v1960, %v1956
  %v2805 = vpack.c.b16 %v1965, %v1961
  %v2806 = vpack.c.b16 %v1966, %v1962
  %v2807 = vpack.c.b16 %v1967, %v1963
  %v2808 = vpack.c.b16 %v1968, %v1964
  %v2809 = vpack.c.b16 %v1973, %v1969
  %v2810 = vpack.c.b16 %v1974, %v1970
  %v2811 = vpack.c.b16 %v1975, %v1971
  %v2812 = vpack.c.b16 %v1976, %v1972
  %v2813 = vpack.c.b16 %v1981, %v1977
  %v2814 = vpack.c.b16 %v1982, %v1978
  %v2815 = vpack.c.b16 %v1983, %v1979
  %v2816 = vpack.c.b16 %v1984, %v1980
  %v2817 = vpack.c.b16 %v1989, %v1985
  %v2818 = vpack.c.b16 %v1990, %v1986
  %v2819 = vpack.c.b16 %v1991, %v1987
  %v2820 = vpack.c.b16 %v1992, %v1988
  %v2821 = vpack.c.b16 %v1997, %v1993
  %v2822 = vpack.c.b16 %v1998, %v1994
  %v2823 = vpack.c.b16 %v1999, %v1995
  %v2824 = vpack.c.b16 %v2000, %v1996
  %v2825 = vpack.c.b16 %v2005, %v2001
  %v2826 = vpack.c.b16 %v2006, %v2002
  %v2827 = vpack.c.b16 %v2007, %v2003
  %v2828 = vpack.c.b16 %v2008, %v2004
  %v2829 = vpack.c.b16 %v2013, %v2009
  %v2830 = vpack.c.b16 %v2014, %v2010
  %v2831 = vpack.c.b16 %v2015, %v2011
  %v2832 = vpack.c.b16 %v2016, %v2012
  %v2833 = vpack.c.b16 %v2021, %v2017
  %v2834 = vpack.c.b16 %v2022, %v2018
  %v2835 = vpack.c.b16 %v2023, %v2019
  %v2836 = vpack.c.b16 %v2024, %v2020
  %v2837 = vpack.c.b16 %v2029, %v2025
  %v2838 = vpack.c.b16 %v2030, %v2026
  %v2839 = vpack.c.b16 %v2031, %v2027
  %v2840 = vpack.c.b16 %v2032, %v2028
  %v2841 = vpack.c.b16 %v2037, %v2033
  %v2842 = vpack.c.b16 %v2038, %v2034
  %v2843 = vpack.c.b16 %v2039, %v2035
  %v2844 = vpack.c.b16 %v2040, %v2036
  %v2845 = vpack.c.b16 %v2045, %v2041
  %v2846 = vpack.c.b16 %v2046, %v2042
  %v2847 = vpack.c.b16 %v2047, %v2043
  %v2848 = vpack.c.b16 %v2048, %v2044
  %v2849 = vpack.c.b16 %v2053, %v2049
  %v2850 = vpack.c.b16 %v2054, %v2050
  %v2851 = vpack.c.b16 %v2055, %v2051
  %v2852 = vpack.c.b16 %v2056, %v2052
  %v2853 = vpack.c.b16 %v2061, %v2057
  %v2854 = vpack.c.b16 %v2062, %v2058
  %v2855 = vpack.c.b16 %v2063, %v2059
  %v2856 = vpack.c.b16 %v2064, %v2060
  %v2857 = vpack.c.b16 %v2069, %v2065
  %v2858 = vpack.c.b16 %v2070, %v2066
  %v2859 = vpack.c.b16 %v2071, %v2067
  %v2860 = vpack.c.b16 %v2072, %v2068
  %v2861 = vpack.c.b16 %v2077, %v2073
  %v2862 = vpack.c.b16 %v2078, %v2074
  %v2863 = vpack.c.b16 %v2079, %v2075
  %v2864 = vpack.c.b16 %v2080, %v2076
  %v2865 = vpack.c.b16 %v2085, %v2081
  %v2866 = vpack.c.b16 %v2086, %v2082
  %v2867 = vpack.c.b16 %v2087, %v2083
  %v2868 = vpack.c.b16 %v2088, %v2084
  %v2869 = vpack.c.b16 %v2093, %v2089
  %v2870 = vpack.c.b16 %v2094, %v2090
  %v2871 = vpack.c.b16 %v2095, %v2091
  %v2872 = vpack.c.b16 %v2096, %v2092
  %v2873 = vpack.c.b16 %v2101, %v2097
  %v2874 = vpack.c.b16 %v2102, %v2098
  %v2875 = vpack.c.b16 %v2103, %v2099
  %v2876 = vpack.c.b16 %v2104, %v2100
  %v2877 = vpack.c.b16 %v2109, %v2105
  %v2878 = vpack.c.b16 %v2110, %v2106
  %v2879 = vpack.c.b16 %v2111, %v2107
  %v2880 = vpack.c.b16 %v2112, %v2108
  %v2881 = vpack.c.b16 %v2117, %v2113
  %v2882 = vpack.c.b16 %v2118, %v2114
  %v2883 = vpack.c.b16 %v2119, %v2115
  %v2884 = vpack.c.b16 %v2120, %v2116
  %v2885 = vpack.c.b16 %v2125, %v2121
  %v2886 = vpack.c.b16 %v2126, %v2122
  %v2887 = vpack.c.b16 %v2127, %v2123
  %v2888 = vpack.c.b16 %v2128, %v2124
  %v2889 = vpack.c.b16 %v2133, %v2129
  %v2890 = vpack.c.b16 %v2134, %v2130
  %v2891 = vpack.c.b16 %v2135, %v2131
  %v2892 = vpack.c.b16 %v2136, %v2132
  %v2893 = vpack.c.b16 %v2141, %v2137
  %v2894 = vpack.c.b16 %v2142, %v2138
  %v2895 = vpack.c.b16 %v2143, %v2139
  %v2896 = vpack.c.b16 %v2144, %v2140
  %v2897 = vpack.c.b16 %v2149, %v2145
  %v2898 = vpack.c.b16 %v2150, %v2146
  %v2899 = vpack.c.b16 %v2151, %v2147
  %v2900 = vpack.c.b16 %v2152, %v2148
  %v2901 = vpack.c.b16 %v2157, %v2153
  %v2902 = vpack.c.b16 %v2158, %v2154
  %v2903 = vpack.c.b16 %v2159, %v2155
  %v2904 = vpack.c.b16 %v2160, %v2156
  %v2905 = vpack.c.b16 %v2165, %v2161
  %v2906 = vpack.c.b16 %v2166, %v2162
  %v2907 = vpack.c.b16 %v2167, %v2163
  %v2908 = vpack.c.b16 %v2168, %v2164
  %v2909 = vpack.c.b16 %v2173, %v2169
  %v2910 = vpack.c.b16 %v2174, %v2170
  %v2911 = vpack.c.b16 %v2175, %v2171
  %v2912 = vpack.c.b16 %v2176, %v2172
  %v2913 = vpack.c.b16 %v2181, %v2177
  %v2914 = vpack.c.b16 %v2182, %v2178
  %v2915 = vpack.c.b16 %v2183, %v2179
  %v2916 = vpack.c.b16 %v2184, %v2180
  %v2917 = vpack.c.b16 %v2189, %v2185
  %v2918 = vpack.c.b16 %v2190, %v2186
  %v2919 = vpack.c.b16 %v2191, %v2187
  %v2920 = vpack.c.b16 %v2192, %v2188
  %v2921 = vpack.c.b16 %v2197, %v2193
  %v2922 = vpack.c.b16 %v2198, %v2194
  %v2923 = vpack.c.b16 %v2199, %v2195
  %v2924 = vpack.c.b16 %v2200, %v2196
  %v2925 = vpack.c.b16 %v2205, %v2201
  %v2926 = vpack.c.b16 %v2206, %v2202
  %v2927 = vpack.c.b16 %v2207, %v2203
  %v2928 = vpack.c.b16 %v2208, %v2204
  %v2929 = vpack.c.b16 %v2213, %v2209
  %v2930 = vpack.c.b16 %v2214, %v2210
  %v2931 = vpack.c.b16 %v2215, %v2211
  %v2932 = vpack.c.b16 %v2216, %v2212
  %v2933 = vpack.c.b16 %v2221, %v2217
  %v2934 = vpack.c.b16 %v2222, %v2218
  %v2935 = vpack.c.b16 %v2223, %v2219
  %v2936 = vpack.c.b16 %v2224, %v2220
  %v2937 = vpack.c.b16 %v2229, %v2225
  %v2938 = vpack.c.b16 %v2230, %v2226
  %v2939 = vpack.c.b16 %v2231, %v2227
  %v2940 = vpack.c.b16 %v2232, %v2228
  %v2941 = vpack.c.b16 %v2237, %v2233
  %v2942 = vpack.c.b16 %v2238, %v2234
  %v2943 = vpack.c.b16 %v2239, %v2235
  %v2944 = vpack.c.b16 %v2240, %v2236
  %v2945 = vpack.c.b16 %v2245, %v2241
  %v2946 = vpack.c.b16 %v2246, %v2242
  %v2947 = vpack.c.b16 %v2247, %v2243
  %v2948 = vpack.c.b16 %v2248, %v2244
  %v2949 = vpack.c.b16 %v2253, %v2249
  %v2950 = vpack.c.b16 %v2254, %v2250
  %v2951 = vpack.c.b16 %v2255, %v2251
  %v2952 = vpack.c.b16 %v2256, %v2252
  %v2953 = vpack.c.b16 %v2261, %v2257
  %v2954 = vpack.c.b16 %v2262, %v2258
  %v2955 = vpack.c.b16 %v2263, %v2259
  %v2956 = vpack.c.b16 %v2264, %v2260
  %v2957 = vpack.c.b16 %v2269, %v2265
  %v2958 = vpack.c.b16 %v2270, %v2266
  %v2959 = vpack.c.b16 %v2271, %v2267
  %v2960 = vpack.c.b16 %v2272, %v2268
  %v2961 = vpack.c.b16 %v2277, %v2273
  %v2962 = vpack.c.b16 %v2278, %v2274
  %v2963 = vpack.c.b16 %v2279, %v2275
  %v2964 = vpack.c.b16 %v2280, %v2276
  %v2965 = vpack.c.b16 %v2285, %v2281
  %v2966 = vpack.c.b16 %v2286, %v2282
  %v2967 = vpack.c.b16 %v2287, %v2283
  %v2968 = vpack.c.b16 %v2288, %v2284
  %v2969 = vpack.c.b16 %v2293, %v2289
  %v2970 = vpack.c.b16 %v2294, %v2290
  %v2971 = vpack.c.b16 %v2295, %v2291
  %v2972 = vpack.c.b16 %v2296, %v2292
  %v2973 = vpack.c.b16 %v2301, %v2297
  %v2974 = vpack.c.b16 %v2302, %v2298
  %v2975 = vpack.c.b16 %v2303, %v2299
  %v2976 = vpack.c.b16 %v2304, %v2300
  %v2977 = vpack.c.b16 %v2309, %v2305
  %v2978 = vpack.c.b16 %v2310, %v2306
  %v2979 = vpack.c.b16 %v2311, %v2307
  %v2980 = vpack.c.b16 %v2312, %v2308
  %v2981 = vpack.c.b16 %v2317, %v2313
  %v2982 = vpack.c.b16 %v2318, %v2314
  %v2983 = vpack.c.b16 %v2319, %v2315
  %v2984 = vpack.c.b16 %v2320, %v2316
  %v2985 = vpack.c.b16 %v2325, %v2321
  %v2986 = vpack.c.b16 %v2326, %v2322
  %v2987 = vpack.c.b16 %v2327, %v2323
  %v2988 = vpack.c.b16 %v2328, %v2324
  %v2989 = vpack.c.b16 %v2333, %v2329
  %v2990 = vpack.c.b16 %v2334, %v2330
  %v2991 = vpack.c.b16 %v2335, %v2331
  %v2992 = vpack.c.b16 %v2336, %v2332
  %v2993 = vpack.c.b16 %v2341, %v2337
  %v2994 = vpack.c.b16 %v2342, %v2338
  %v2995 = vpack.c.b16 %v2343, %v2339
  %v2996 = vpack.c.b16 %v2344, %v2340
  %v2997 = vpack.c.b16 %v2349, %v2345
  %v2998 = vpack.c.b16 %v2350, %v2346
  %v2999 = vpack.c.b16 %v2351, %v2347
  %v3000 = vpack.c.b16 %v2352, %v2348
  %v3001 = vpack.c.b16 %v2357, %v2353
  %v3002 = vpack.c.b16 %v2358, %v2354
  %v3003 = vpack.c.b16 %v2359, %v2355
  %v3004 = vpack.c.b16 %v2360, %v2356
  %v3005 = vpack.c.b16 %v2365, %v2361
  %v3006 = vpack.c.b16 %v2366, %v2362
  %v3007 = vpack.c.b16 %v2367, %v2363
  %v3008 = vpack.c.b16 %v2368, %v2364
  %v3009 = vpack.c.b16 %v2373, %v2369
  %v3010 = vpack.c.b16 %v2374, %v2370
  %v3011 = vpack.c.b16 %v2375, %v2371
  %v3012 = vpack.c.b16 %v2376, %v2372
  %v3013 = vpack.c.b16 %v2381, %v2377
  %v3014 = vpack.c.b16 %v2382, %v2378
  %v3015 = vpack.c.b16 %v2383, %v2379
  %v3016 = vpack.c.b16 %v2384, %v2380
  %v3017 = vpack.c.b16 %v2389, %v2385
  %v3018 = vpack.c.b16 %v2390, %v2386
  %v3019 = vpack.c.b16 %v2391, %v2387
  %v3020 = vpack.c.b16 %v2392, %v2388
  %v3021 = vpack.c.b16 %v2397, %v2393
  %v3022 = vpack.c.b16 %v2398, %v2394
  %v3023 = vpack.c.b16 %v2399, %v2395
  %v3024 = vpack.c.b16 %v2400, %v2396
  %v3025 = vpack.c.b16 %v2405, %v2401
  %v3026 = vpack.c.b16 %v2406, %v2402
  %v3027 = vpack.c.b16 %v2407, %v2403
  %v3028 = vpack.c.b16 %v2408, %v2404
  %v3029 = vpack.c.b16 %v2413, %v2409
  %v3030 = vpack.c.b16 %v2414, %v2410
  %v3031 = vpack.c.b16 %v2415, %v2411
  %v3032 = vpack.c.b16 %v2416, %v2412
  %v3033 = vpack.c.b16 %v2421, %v2417
  %v3034 = vpack.c.b16 %v2422, %v2418
  %v3035 = vpack.c.b16 %v2423, %v2419
  %v3036 = vpack.c.b16 %v2424, %v2420
  %v3037 = vpack.c.b16 %v2429, %v2425
  %v3038 = vpack.c.b16 %v2430, %v2426
  %v3039 = vpack.c.b16 %v2431, %v2427
  %v3040 = vpack.c.b16 %v2432, %v2428
  %v3041 = vpack.c.b16 %v2437, %v2433
  %v3042 = vpack.c.b16 %v2438, %v2434
  %v3043 = vpack.c.b16 %v2439, %v2435
  %v3044 = vpack.c.b16 %v2440, %v2436
  %v3045 = vpack.c.b16 %v2445, %v2441
  %v3046 = vpack.c.b16 %v2446, %v2442
  %v3047 = vpack.c.b16 %v2447, %v2443
  %v3048 = vpack.c.b16 %v2448, %v2444
  %v3049 = vpack.c.b16 %v2453, %v2449
  %v3050 = vpack.c.b16 %v2454, %v2450
  %v3051 = vpack.c.b16 %v2455, %v2451
  %v3052 = vpack.c.b16 %v2456, %v2452
  %v3053 = vpack.c.b16 %v2461, %v2457
  %v3054 = vpack.c.b16 %v2462, %v2458
  %v3055 = vpack.c.b16 %v2463, %v2459
  %v3056 = vpack.c.b16 %v2464, %v2460
  %v3057 = vpack.c.b16 %v2469, %v2465
  %v3058 = vpack.c.b16 %v2470, %v2466
  %v3059 = vpack.c.b16 %v2471, %v2467
  %v3060 = vpack.c.b16 %v2472, %v2468
  %v3061 = vpack.c.b16 %v2477, %v2473
  %v3062 = vpack.c.b16 %v2478, %v2474
  %v3063 = vpack.c.b16 %v2479, %v2475
  %v3064 = vpack.c.b16 %v2480, %v2476
  %v3065 = vpack.c.b16 %v2485, %v2481
  %v3066 = vpack.c.b16 %v2486, %v2482
  %v3067 = vpack.c.b16 %v2487, %v2483
  %v3068 = vpack.c.b16 %v2488, %v2484
  %v3069 = vpack.c.b16 %v2493, %v2489
  %v3070 = vpack.c.b16 %v2494, %v2490
  %v3071 = vpack.c.b16 %v2495, %v2491
  %v3072 = vpack.c.b16 %v2496, %v2492
  %3649 = vmatprep.subr.bf16.mxu0 %v2526
  %3650 = vmatpush1.bf16.msra.mxu0 %v2525
  %3651 = vmatprep.subr.bf16.mxu0 %v2522
  %3652 = vmatpush1.bf16.msra.mxu0 %v2521
  %3653 = vmatprep.subr.bf16.mxu0 %v2518
  %3654 = vmatpush1.bf16.msra.mxu0 %v2517
  %3655 = vmatprep.subr.bf16.mxu0 %v2514
  %3656 = vmatpush1.bf16.msra.mxu0 %v2513
  %3657 = vmatprep.subr.bf16.mxu0 %v2510
  %3658 = vmatpush1.bf16.msra.mxu0 %v2509
  %3659 = vmatprep.subr.bf16.mxu0 %v2506
  %3660 = vmatpush1.bf16.msra.mxu0 %v2505
  %3661 = vmatprep.subr.bf16.mxu0 %v2502
  %3662 = vmatpush1.bf16.msra.mxu0 %v2501
  %3663 = vmatprep.subr.bf16.mxu0 %v2498
  %3664 = vmatpush1.bf16.msra.mxu0 %v2497
  %3665 = vmatprep.subr.bf16.mxu0 %v2558
  %3666 = vmatpush2.bf16.msra.mxu0 %v2557
  %3667 = vmatprep.subr.bf16.mxu0 %v2554
  %3668 = vmatpush2.bf16.msra.mxu0 %v2553
  %3669 = vmatprep.subr.bf16.mxu0 %v2550
  %3670 = vmatpush2.bf16.msra.mxu0 %v2549
  %3671 = vmatprep.subr.bf16.mxu0 %v2546
  %3672 = vmatpush2.bf16.msra.mxu0 %v2545
  %3673 = vmatprep.subr.bf16.mxu0 %v2542
  %3674 = vmatpush2.bf16.msra.mxu0 %v2541
  %3675 = vmatprep.subr.bf16.mxu0 %v2538
  %3676 = vmatpush2.bf16.msra.mxu0 %v2537
  %3677 = vmatprep.subr.bf16.mxu0 %v2534
  %3678 = vmatpush2.bf16.msra.mxu0 %v2533
  %3679 = vmatprep.subr.bf16.mxu0 %v2530
  %3680 = vmatpush2.bf16.msra.mxu0 %v2529
  %3681 = vmatprep.mubr.bf16.mxu0 %v698
  %3682 = vmatmul.mubr.bf16.gmra.mxu0 %v697
  %v3683 = vpop.f32.mrf.mxu0
  %v3684 = vadd.f32 0.0, %v3683
  %v3685 = vpop.f32.mrf.mxu0
  %v3686 = vadd.f32 0.0, %v3685
  %v3687 = vpop.f32.mrf.mxu0
  %v3688 = vadd.f32 0.0, %v3687
  %v3689 = vpop.f32.mrf.mxu0
  %v3690 = vadd.f32 0.0, %v3689
  %3691 = vmatprep.mubr.bf16.mxu0 %v716
  %3692 = vmatmul.mubr.bf16.gmra.mxu0 %v715
  %v3693 = vpop.f32.mrf.mxu0
  %v3694 = vadd.f32 0.0, %v3693
  %v3695 = vpop.f32.mrf.mxu0
  %v3696 = vadd.f32 0.0, %v3695
  %v3697 = vpop.f32.mrf.mxu0
  %v3698 = vpop.f32.mrf.mxu0
  %3699 = vdwg.mxu0
  %3700 = vmatprep.subr.bf16.mxu0 %v2590
  %3701 = vmatpush1.bf16.msra.mxu0 %v2589
  %3702 = vmatprep.subr.bf16.mxu0 %v2586
  %3703 = vmatpush1.bf16.msra.mxu0 %v2585
  %3704 = vmatprep.subr.bf16.mxu0 %v2582
  %3705 = vmatpush1.bf16.msra.mxu0 %v2581
  %3706 = vmatprep.subr.bf16.mxu0 %v2578
  %3707 = vmatpush1.bf16.msra.mxu0 %v2577
  %3708 = vmatprep.subr.bf16.mxu0 %v2574
  %3709 = vmatpush1.bf16.msra.mxu0 %v2573
  %3710 = vmatprep.subr.bf16.mxu0 %v2570
  %3711 = vmatpush1.bf16.msra.mxu0 %v2569
  %3712 = vmatprep.subr.bf16.mxu0 %v2566
  %3713 = vmatpush1.bf16.msra.mxu0 %v2565
  %3714 = vmatprep.subr.bf16.mxu0 %v2562
  %3715 = vmatpush1.bf16.msra.mxu0 %v2561
  %3716 = vmatprep.subr.bf16.mxu0 %v2622
  %3717 = vmatpush2.bf16.msra.mxu0 %v2621
  %3718 = vmatprep.subr.bf16.mxu0 %v2618
  %3719 = vmatpush2.bf16.msra.mxu0 %v2617
  %3720 = vmatprep.subr.bf16.mxu0 %v2614
  %3721 = vmatpush2.bf16.msra.mxu0 %v2613
  %3722 = vmatprep.subr.bf16.mxu0 %v2610
  %3723 = vmatpush2.bf16.msra.mxu0 %v2609
  %3724 = vmatprep.subr.bf16.mxu0 %v2606
  %3725 = vmatpush2.bf16.msra.mxu0 %v2605
  %3726 = vmatprep.subr.bf16.mxu0 %v2602
  %3727 = vmatpush2.bf16.msra.mxu0 %v2601
  %3728 = vmatprep.subr.bf16.mxu0 %v2598
  %3729 = vmatpush2.bf16.msra.mxu0 %v2597
  %3730 = vmatprep.subr.bf16.mxu0 %v2594
  %3731 = vmatpush2.bf16.msra.mxu0 %v2593
  %3732 = vmatprep.mubr.bf16.mxu0 %v700
  %3733 = vmatmul.mubr.bf16.gmra.mxu0 %v699
  %v3734 = vpop.f32.mrf.mxu0
  %v3735 = vadd.f32 %v3684, %v3734
  %v3736 = vpop.f32.mrf.mxu0
  %v3737 = vadd.f32 %v3686, %v3736
  %v3738 = vpop.f32.mrf.mxu0
  %v3739 = vadd.f32 %v3688, %v3738
  %v3740 = vpop.f32.mrf.mxu0
  %v3741 = vadd.f32 %v3690, %v3740
  %3742 = vmatprep.mubr.bf16.mxu0 %v718
  %3743 = vmatmul.mubr.bf16.gmra.mxu0 %v717
  %v3744 = vpop.f32.mrf.mxu0
  %v3745 = vadd.f32 %v3694, %v3744
  %v3746 = vpop.f32.mrf.mxu0
  %v3747 = vadd.f32 %v3696, %v3746
  %v3748 = vpop.f32.mrf.mxu0
  %v3749 = vpop.f32.mrf.mxu0
  %3750 = vdwg.mxu0
  %3751 = vmatprep.subr.bf16.mxu0 %v2654
  %3752 = vmatpush1.bf16.msra.mxu0 %v2653
  %3753 = vmatprep.subr.bf16.mxu0 %v2650
  %3754 = vmatpush1.bf16.msra.mxu0 %v2649
  %3755 = vmatprep.subr.bf16.mxu0 %v2646
  %3756 = vmatpush1.bf16.msra.mxu0 %v2645
  %3757 = vmatprep.subr.bf16.mxu0 %v2642
  %3758 = vmatpush1.bf16.msra.mxu0 %v2641
  %3759 = vmatprep.subr.bf16.mxu0 %v2638
  %3760 = vmatpush1.bf16.msra.mxu0 %v2637
  %3761 = vmatprep.subr.bf16.mxu0 %v2634
  %3762 = vmatpush1.bf16.msra.mxu0 %v2633
  %3763 = vmatprep.subr.bf16.mxu0 %v2630
  %3764 = vmatpush1.bf16.msra.mxu0 %v2629
  %3765 = vmatprep.subr.bf16.mxu0 %v2626
  %3766 = vmatpush1.bf16.msra.mxu0 %v2625
  %3767 = vmatprep.subr.bf16.mxu0 %v2686
  %3768 = vmatpush2.bf16.msra.mxu0 %v2685
  %3769 = vmatprep.subr.bf16.mxu0 %v2682
  %3770 = vmatpush2.bf16.msra.mxu0 %v2681
  %3771 = vmatprep.subr.bf16.mxu0 %v2678
  %3772 = vmatpush2.bf16.msra.mxu0 %v2677
  %3773 = vmatprep.subr.bf16.mxu0 %v2674
  %3774 = vmatpush2.bf16.msra.mxu0 %v2673
  %3775 = vmatprep.subr.bf16.mxu0 %v2670
  %3776 = vmatpush2.bf16.msra.mxu0 %v2669
  %3777 = vmatprep.subr.bf16.mxu0 %v2666
  %3778 = vmatpush2.bf16.msra.mxu0 %v2665
  %3779 = vmatprep.subr.bf16.mxu0 %v2662
  %3780 = vmatpush2.bf16.msra.mxu0 %v2661
  %3781 = vmatprep.subr.bf16.mxu0 %v2658
  %3782 = vmatpush2.bf16.msra.mxu0 %v2657
  %3783 = vmatprep.mubr.bf16.mxu0 %v702
  %3784 = vmatmul.mubr.bf16.gmra.mxu0 %v701
  %v3785 = vpop.f32.mrf.mxu0
  %v3786 = vadd.f32 %v3735, %v3785
  %v3787 = vpop.f32.mrf.mxu0
  %v3788 = vadd.f32 %v3737, %v3787
  %v3789 = vpop.f32.mrf.mxu0
  %v3790 = vadd.f32 %v3739, %v3789
  %v3791 = vpop.f32.mrf.mxu0
  %v3792 = vadd.f32 %v3741, %v3791
  %3793 = vmatprep.mubr.bf16.mxu0 %v720
  %3794 = vmatmul.mubr.bf16.gmra.mxu0 %v719
  %v3795 = vpop.f32.mrf.mxu0
  %v3796 = vadd.f32 %v3745, %v3795
  %v3797 = vpop.f32.mrf.mxu0
  %v3798 = vadd.f32 %v3747, %v3797
  %v3799 = vpop.f32.mrf.mxu0
  %v3800 = vpop.f32.mrf.mxu0
  %3801 = vdwg.mxu0
  %3802 = vmatprep.subr.bf16.mxu0 %v2718
  %3803 = vmatpush1.bf16.msra.mxu0 %v2717
  %3804 = vmatprep.subr.bf16.mxu0 %v2714
  %3805 = vmatpush1.bf16.msra.mxu0 %v2713
  %3806 = vmatprep.subr.bf16.mxu0 %v2710
  %3807 = vmatpush1.bf16.msra.mxu0 %v2709
  %3808 = vmatprep.subr.bf16.mxu0 %v2706
  %3809 = vmatpush1.bf16.msra.mxu0 %v2705
  %3810 = vmatprep.subr.bf16.mxu0 %v2702
  %3811 = vmatpush1.bf16.msra.mxu0 %v2701
  %3812 = vmatprep.subr.bf16.mxu0 %v2698
  %3813 = vmatpush1.bf16.msra.mxu0 %v2697
  %3814 = vmatprep.subr.bf16.mxu0 %v2694
  %3815 = vmatpush1.bf16.msra.mxu0 %v2693
  %3816 = vmatprep.subr.bf16.mxu0 %v2690
  %3817 = vmatpush1.bf16.msra.mxu0 %v2689
  %3818 = vmatprep.subr.bf16.mxu0 %v2750
  %3819 = vmatpush2.bf16.msra.mxu0 %v2749
  %3820 = vmatprep.subr.bf16.mxu0 %v2746
  %3821 = vmatpush2.bf16.msra.mxu0 %v2745
  %3822 = vmatprep.subr.bf16.mxu0 %v2742
  %3823 = vmatpush2.bf16.msra.mxu0 %v2741
  %3824 = vmatprep.subr.bf16.mxu0 %v2738
  %3825 = vmatpush2.bf16.msra.mxu0 %v2737
  %3826 = vmatprep.subr.bf16.mxu0 %v2734
  %3827 = vmatpush2.bf16.msra.mxu0 %v2733
  %3828 = vmatprep.subr.bf16.mxu0 %v2730
  %3829 = vmatpush2.bf16.msra.mxu0 %v2729
  %3830 = vmatprep.subr.bf16.mxu0 %v2726
  %3831 = vmatpush2.bf16.msra.mxu0 %v2725
  %3832 = vmatprep.subr.bf16.mxu0 %v2722
  %3833 = vmatpush2.bf16.msra.mxu0 %v2721
  %3834 = vmatprep.mubr.bf16.mxu0 %v704
  %3835 = vmatmul.mubr.bf16.gmra.mxu0 %v703
  %v3836 = vpop.f32.mrf.mxu0
  %v3837 = vadd.f32 %v3786, %v3836
  %v3838 = vpop.f32.mrf.mxu0
  %v3839 = vadd.f32 %v3788, %v3838
  %v3840 = vpop.f32.mrf.mxu0
  %v3841 = vadd.f32 %v3790, %v3840
  %v3842 = vpop.f32.mrf.mxu0
  %v3843 = vadd.f32 %v3792, %v3842
  %3844 = vmatprep.mubr.bf16.mxu0 %v722
  %3845 = vmatmul.mubr.bf16.gmra.mxu0 %v721
  %v3846 = vpop.f32.mrf.mxu0
  %v3847 = vadd.f32 %v3796, %v3846
  %v3848 = vpop.f32.mrf.mxu0
  %v3849 = vadd.f32 %v3798, %v3848
  %v3850 = vpop.f32.mrf.mxu0
  %v3851 = vpop.f32.mrf.mxu0
  %3852 = vdwg.mxu0
  %3853 = vmatprep.subr.bf16.mxu0 %v2782
  %3854 = vmatpush1.bf16.msra.mxu0 %v2781
  %3855 = vmatprep.subr.bf16.mxu0 %v2778
  %3856 = vmatpush1.bf16.msra.mxu0 %v2777
  %3857 = vmatprep.subr.bf16.mxu0 %v2774
  %3858 = vmatpush1.bf16.msra.mxu0 %v2773
  %3859 = vmatprep.subr.bf16.mxu0 %v2770
  %3860 = vmatpush1.bf16.msra.mxu0 %v2769
  %3861 = vmatprep.subr.bf16.mxu0 %v2766
  %3862 = vmatpush1.bf16.msra.mxu0 %v2765
  %3863 = vmatprep.subr.bf16.mxu0 %v2762
  %3864 = vmatpush1.bf16.msra.mxu0 %v2761
  %3865 = vmatprep.subr.bf16.mxu0 %v2758
  %3866 = vmatpush1.bf16.msra.mxu0 %v2757
  %3867 = vmatprep.subr.bf16.mxu0 %v2754
  %3868 = vmatpush1.bf16.msra.mxu0 %v2753
  %3869 = vmatprep.subr.bf16.mxu0 %v2814
  %3870 = vmatpush2.bf16.msra.mxu0 %v2813
  %3871 = vmatprep.subr.bf16.mxu0 %v2810
  %3872 = vmatpush2.bf16.msra.mxu0 %v2809
  %3873 = vmatprep.subr.bf16.mxu0 %v2806
  %3874 = vmatpush2.bf16.msra.mxu0 %v2805
  %3875 = vmatprep.subr.bf16.mxu0 %v2802
  %3876 = vmatpush2.bf16.msra.mxu0 %v2801
  %3877 = vmatprep.subr.bf16.mxu0 %v2798
  %3878 = vmatpush2.bf16.msra.mxu0 %v2797
  %3879 = vmatprep.subr.bf16.mxu0 %v2794
  %3880 = vmatpush2.bf16.msra.mxu0 %v2793
  %3881 = vmatprep.subr.bf16.mxu0 %v2790
  %3882 = vmatpush2.bf16.msra.mxu0 %v2789
  %3883 = vmatprep.subr.bf16.mxu0 %v2786
  %3884 = vmatpush2.bf16.msra.mxu0 %v2785
  %3885 = vmatprep.mubr.bf16.mxu0 %v706
  %3886 = vmatmul.mubr.bf16.gmra.mxu0 %v705
  %v3887 = vpop.f32.mrf.mxu0
  %v3888 = vadd.f32 %v3837, %v3887
  %v3889 = vpop.f32.mrf.mxu0
  %v3890 = vadd.f32 %v3839, %v3889
  %v3891 = vpop.f32.mrf.mxu0
  %v3892 = vadd.f32 %v3841, %v3891
  %v3893 = vpop.f32.mrf.mxu0
  %v3894 = vadd.f32 %v3843, %v3893
  %3895 = vmatprep.mubr.bf16.mxu0 %v724
  %3896 = vmatmul.mubr.bf16.gmra.mxu0 %v723
  %v3897 = vpop.f32.mrf.mxu0
  %v3898 = vadd.f32 %v3847, %v3897
  %v3899 = vpop.f32.mrf.mxu0
  %v3900 = vadd.f32 %v3849, %v3899
  %v3901 = vpop.f32.mrf.mxu0
  %v3902 = vpop.f32.mrf.mxu0
  %3903 = vdwg.mxu0
  %3904 = vmatprep.subr.bf16.mxu0 %v2846
  %3905 = vmatpush1.bf16.msra.mxu0 %v2845
  %3906 = vmatprep.subr.bf16.mxu0 %v2842
  %3907 = vmatpush1.bf16.msra.mxu0 %v2841
  %3908 = vmatprep.subr.bf16.mxu0 %v2838
  %3909 = vmatpush1.bf16.msra.mxu0 %v2837
  %3910 = vmatprep.subr.bf16.mxu0 %v2834
  %3911 = vmatpush1.bf16.msra.mxu0 %v2833
  %3912 = vmatprep.subr.bf16.mxu0 %v2830
  %3913 = vmatpush1.bf16.msra.mxu0 %v2829
  %3914 = vmatprep.subr.bf16.mxu0 %v2826
  %3915 = vmatpush1.bf16.msra.mxu0 %v2825
  %3916 = vmatprep.subr.bf16.mxu0 %v2822
  %3917 = vmatpush1.bf16.msra.mxu0 %v2821
  %3918 = vmatprep.subr.bf16.mxu0 %v2818
  %3919 = vmatpush1.bf16.msra.mxu0 %v2817
  %3920 = vmatprep.subr.bf16.mxu0 %v2878
  %3921 = vmatpush2.bf16.msra.mxu0 %v2877
  %3922 = vmatprep.subr.bf16.mxu0 %v2874
  %3923 = vmatpush2.bf16.msra.mxu0 %v2873
  %3924 = vmatprep.subr.bf16.mxu0 %v2870
  %3925 = vmatpush2.bf16.msra.mxu0 %v2869
  %3926 = vmatprep.subr.bf16.mxu0 %v2866
  %3927 = vmatpush2.bf16.msra.mxu0 %v2865
  %3928 = vmatprep.subr.bf16.mxu0 %v2862
  %3929 = vmatpush2.bf16.msra.mxu0 %v2861
  %3930 = vmatprep.subr.bf16.mxu0 %v2858
  %3931 = vmatpush2.bf16.msra.mxu0 %v2857
  %3932 = vmatprep.subr.bf16.mxu0 %v2854
  %3933 = vmatpush2.bf16.msra.mxu0 %v2853
  %3934 = vmatprep.subr.bf16.mxu0 %v2850
  %3935 = vmatpush2.bf16.msra.mxu0 %v2849
  %3936 = vmatprep.mubr.bf16.mxu0 %v708
  %3937 = vmatmul.mubr.bf16.gmra.mxu0 %v707
  %v3938 = vpop.f32.mrf.mxu0
  %v3939 = vadd.f32 %v3888, %v3938
  %v3940 = vpop.f32.mrf.mxu0
  %v3941 = vadd.f32 %v3890, %v3940
  %v3942 = vpop.f32.mrf.mxu0
  %v3943 = vadd.f32 %v3892, %v3942
  %v3944 = vpop.f32.mrf.mxu0
  %v3945 = vadd.f32 %v3894, %v3944
  %3946 = vmatprep.mubr.bf16.mxu0 %v726
  %3947 = vmatmul.mubr.bf16.gmra.mxu0 %v725
  %v3948 = vpop.f32.mrf.mxu0
  %v3949 = vadd.f32 %v3898, %v3948
  %v3950 = vpop.f32.mrf.mxu0
  %v3951 = vadd.f32 %v3900, %v3950
  %v3952 = vpop.f32.mrf.mxu0
  %v3953 = vpop.f32.mrf.mxu0
  %3954 = vdwg.mxu0
  %3955 = vmatprep.subr.bf16.mxu0 %v2910
  %3956 = vmatpush1.bf16.msra.mxu0 %v2909
  %3957 = vmatprep.subr.bf16.mxu0 %v2906
  %3958 = vmatpush1.bf16.msra.mxu0 %v2905
  %3959 = vmatprep.subr.bf16.mxu0 %v2902
  %3960 = vmatpush1.bf16.msra.mxu0 %v2901
  %3961 = vmatprep.subr.bf16.mxu0 %v2898
  %3962 = vmatpush1.bf16.msra.mxu0 %v2897
  %3963 = vmatprep.subr.bf16.mxu0 %v2894
  %3964 = vmatpush1.bf16.msra.mxu0 %v2893
  %3965 = vmatprep.subr.bf16.mxu0 %v2890
  %3966 = vmatpush1.bf16.msra.mxu0 %v2889
  %3967 = vmatprep.subr.bf16.mxu0 %v2886
  %3968 = vmatpush1.bf16.msra.mxu0 %v2885
  %3969 = vmatprep.subr.bf16.mxu0 %v2882
  %3970 = vmatpush1.bf16.msra.mxu0 %v2881
  %3971 = vmatprep.subr.bf16.mxu0 %v2942
  %3972 = vmatpush2.bf16.msra.mxu0 %v2941
  %3973 = vmatprep.subr.bf16.mxu0 %v2938
  %3974 = vmatpush2.bf16.msra.mxu0 %v2937
  %3975 = vmatprep.subr.bf16.mxu0 %v2934
  %3976 = vmatpush2.bf16.msra.mxu0 %v2933
  %3977 = vmatprep.subr.bf16.mxu0 %v2930
  %3978 = vmatpush2.bf16.msra.mxu0 %v2929
  %3979 = vmatprep.subr.bf16.mxu0 %v2926
  %3980 = vmatpush2.bf16.msra.mxu0 %v2925
  %3981 = vmatprep.subr.bf16.mxu0 %v2922
  %3982 = vmatpush2.bf16.msra.mxu0 %v2921
  %3983 = vmatprep.subr.bf16.mxu0 %v2918
  %3984 = vmatpush2.bf16.msra.mxu0 %v2917
  %3985 = vmatprep.subr.bf16.mxu0 %v2914
  %3986 = vmatpush2.bf16.msra.mxu0 %v2913
  %3987 = vmatprep.mubr.bf16.mxu0 %v710
  %3988 = vmatmul.mubr.bf16.gmra.mxu0 %v709
  %v3989 = vpop.f32.mrf.mxu0
  %v3990 = vadd.f32 %v3939, %v3989
  %v3991 = vpop.f32.mrf.mxu0
  %v3992 = vadd.f32 %v3941, %v3991
  %v3993 = vpop.f32.mrf.mxu0
  %v3994 = vadd.f32 %v3943, %v3993
  %v3995 = vpop.f32.mrf.mxu0
  %v3996 = vadd.f32 %v3945, %v3995
  %3997 = vmatprep.mubr.bf16.mxu0 %v728
  %3998 = vmatmul.mubr.bf16.gmra.mxu0 %v727
  %v3999 = vpop.f32.mrf.mxu0
  %v4000 = vadd.f32 %v3949, %v3999
  %v4001 = vpop.f32.mrf.mxu0
  %v4002 = vadd.f32 %v3951, %v4001
  %v4003 = vpop.f32.mrf.mxu0
  %v4004 = vpop.f32.mrf.mxu0
  %4005 = vdwg.mxu0
  %4006 = vmatprep.subr.bf16.mxu0 %v2974
  %4007 = vmatpush1.bf16.msra.mxu0 %v2973
  %4008 = vmatprep.subr.bf16.mxu0 %v2970
  %4009 = vmatpush1.bf16.msra.mxu0 %v2969
  %4010 = vmatprep.subr.bf16.mxu0 %v2966
  %4011 = vmatpush1.bf16.msra.mxu0 %v2965
  %4012 = vmatprep.subr.bf16.mxu0 %v2962
  %4013 = vmatpush1.bf16.msra.mxu0 %v2961
  %4014 = vmatprep.subr.bf16.mxu0 %v2958
  %4015 = vmatpush1.bf16.msra.mxu0 %v2957
  %4016 = vmatprep.subr.bf16.mxu0 %v2954
  %4017 = vmatpush1.bf16.msra.mxu0 %v2953
  %4018 = vmatprep.subr.bf16.mxu0 %v2950
  %4019 = vmatpush1.bf16.msra.mxu0 %v2949
  %4020 = vmatprep.subr.bf16.mxu0 %v2946
  %4021 = vmatpush1.bf16.msra.mxu0 %v2945
  %4022 = vmatprep.subr.bf16.mxu0 %v3006
  %4023 = vmatpush2.bf16.msra.mxu0 %v3005
  %4024 = vmatprep.subr.bf16.mxu0 %v3002
  %4025 = vmatpush2.bf16.msra.mxu0 %v3001
  %4026 = vmatprep.subr.bf16.mxu0 %v2998
  %4027 = vmatpush2.bf16.msra.mxu0 %v2997
  %4028 = vmatprep.subr.bf16.mxu0 %v2994
  %4029 = vmatpush2.bf16.msra.mxu0 %v2993
  %4030 = vmatprep.subr.bf16.mxu0 %v2990
  %4031 = vmatpush2.bf16.msra.mxu0 %v2989
  %4032 = vmatprep.subr.bf16.mxu0 %v2986
  %4033 = vmatpush2.bf16.msra.mxu0 %v2985
  %4034 = vmatprep.subr.bf16.mxu0 %v2982
  %4035 = vmatpush2.bf16.msra.mxu0 %v2981
  %4036 = vmatprep.subr.bf16.mxu0 %v2978
  %4037 = vmatpush2.bf16.msra.mxu0 %v2977
  %4038 = vmatprep.mubr.bf16.mxu0 %v712
  %4039 = vmatmul.mubr.bf16.gmra.mxu0 %v711
  %v4040 = vpop.f32.mrf.mxu0
  %v4041 = vadd.f32 %v3990, %v4040
  %v4042 = vpop.f32.mrf.mxu0
  %v4043 = vadd.f32 %v3992, %v4042
  %v4044 = vpop.f32.mrf.mxu0
  %v4045 = vadd.f32 %v3994, %v4044
  %v4046 = vpop.f32.mrf.mxu0
  %v4047 = vadd.f32 %v3996, %v4046
  %4048 = vmatprep.mubr.bf16.mxu0 %v730
  %4049 = vmatmul.mubr.bf16.gmra.mxu0 %v729
  %v4050 = vpop.f32.mrf.mxu0
  %v4051 = vadd.f32 %v4000, %v4050
  %v4052 = vpop.f32.mrf.mxu0
  %v4053 = vadd.f32 %v4002, %v4052
  %v4054 = vpop.f32.mrf.mxu0
  %v4055 = vpop.f32.mrf.mxu0
  %4056 = vdwg.mxu0
  %4057 = vmatprep.subr.bf16.mxu0 %v3038
  %4058 = vmatpush1.bf16.msra.mxu0 %v3037
  %4059 = vmatprep.subr.bf16.mxu0 %v3034
  %4060 = vmatpush1.bf16.msra.mxu0 %v3033
  %4061 = vmatprep.subr.bf16.mxu0 %v3030
  %4062 = vmatpush1.bf16.msra.mxu0 %v3029
  %4063 = vmatprep.subr.bf16.mxu0 %v3026
  %4064 = vmatpush1.bf16.msra.mxu0 %v3025
  %4065 = vmatprep.subr.bf16.mxu0 %v3022
  %4066 = vmatpush1.bf16.msra.mxu0 %v3021
  %4067 = vmatprep.subr.bf16.mxu0 %v3018
  %4068 = vmatpush1.bf16.msra.mxu0 %v3017
  %4069 = vmatprep.subr.bf16.mxu0 %v3014
  %4070 = vmatpush1.bf16.msra.mxu0 %v3013
  %4071 = vmatprep.subr.bf16.mxu0 %v3010
  %4072 = vmatpush1.bf16.msra.mxu0 %v3009
  %4073 = vmatprep.subr.bf16.mxu0 %v3070
  %4074 = vmatpush2.bf16.msra.mxu0 %v3069
  %4075 = vmatprep.subr.bf16.mxu0 %v3066
  %4076 = vmatpush2.bf16.msra.mxu0 %v3065
  %4077 = vmatprep.subr.bf16.mxu0 %v3062
  %4078 = vmatpush2.bf16.msra.mxu0 %v3061
  %4079 = vmatprep.subr.bf16.mxu0 %v3058
  %4080 = vmatpush2.bf16.msra.mxu0 %v3057
  %4081 = vmatprep.subr.bf16.mxu0 %v3054
  %4082 = vmatpush2.bf16.msra.mxu0 %v3053
  %4083 = vmatprep.subr.bf16.mxu0 %v3050
  %4084 = vmatpush2.bf16.msra.mxu0 %v3049
  %4085 = vmatprep.subr.bf16.mxu0 %v3046
  %4086 = vmatpush2.bf16.msra.mxu0 %v3045
  %4087 = vmatprep.subr.bf16.mxu0 %v3042
  %4088 = vmatpush2.bf16.msra.mxu0 %v3041
  %4089 = vmatprep.mubr.bf16.mxu0 %v714
  %4090 = vmatmul.mubr.bf16.gmra.mxu0 %v713
  %v4091 = vpop.f32.mrf.mxu0
  %v4092 = vadd.f32 %v4041, %v4091
  %v4093 = vpop.f32.mrf.mxu0
  %v4094 = vadd.f32 %v4043, %v4093
  %v4095 = vpop.f32.mrf.mxu0
  %v4096 = vadd.f32 %v4045, %v4095
  %v4097 = vpop.f32.mrf.mxu0
  %v4098 = vadd.f32 %v4047, %v4097
  %4099 = vmatprep.mubr.bf16.mxu0 %v732
  %4100 = vmatmul.mubr.bf16.gmra.mxu0 %v731
  %v4101 = vpop.f32.mrf.mxu0
  %v4102 = vadd.f32 %v4051, %v4101
  %v4103 = vpop.f32.mrf.mxu0
  %v4104 = vadd.f32 %v4053, %v4103
  %v4105 = vpop.f32.mrf.mxu0
  %v4106 = vpop.f32.mrf.mxu0
  %4107 = vdwg.mxu0
  %4108 = vmatprep.subr.bf16.mxu0 %v2528
  %4109 = vmatpush1.bf16.msra.mxu0 %v2527
  %4110 = vmatprep.subr.bf16.mxu0 %v2524
  %4111 = vmatpush1.bf16.msra.mxu0 %v2523
  %4112 = vmatprep.subr.bf16.mxu0 %v2520
  %4113 = vmatpush1.bf16.msra.mxu0 %v2519
  %4114 = vmatprep.subr.bf16.mxu0 %v2516
  %4115 = vmatpush1.bf16.msra.mxu0 %v2515
  %4116 = vmatprep.subr.bf16.mxu0 %v2512
  %4117 = vmatpush1.bf16.msra.mxu0 %v2511
  %4118 = vmatprep.subr.bf16.mxu0 %v2508
  %4119 = vmatpush1.bf16.msra.mxu0 %v2507
  %4120 = vmatprep.subr.bf16.mxu0 %v2504
  %4121 = vmatpush1.bf16.msra.mxu0 %v2503
  %4122 = vmatprep.subr.bf16.mxu0 %v2500
  %4123 = vmatpush1.bf16.msra.mxu0 %v2499
  %4124 = vmatprep.subr.bf16.mxu0 %v2560
  %4125 = vmatpush2.bf16.msra.mxu0 %v2559
  %4126 = vmatprep.subr.bf16.mxu0 %v2556
  %4127 = vmatpush2.bf16.msra.mxu0 %v2555
  %4128 = vmatprep.subr.bf16.mxu0 %v2552
  %4129 = vmatpush2.bf16.msra.mxu0 %v2551
  %4130 = vmatprep.subr.bf16.mxu0 %v2548
  %4131 = vmatpush2.bf16.msra.mxu0 %v2547
  %4132 = vmatprep.subr.bf16.mxu0 %v2544
  %4133 = vmatpush2.bf16.msra.mxu0 %v2543
  %4134 = vmatprep.subr.bf16.mxu0 %v2540
  %4135 = vmatpush2.bf16.msra.mxu0 %v2539
  %4136 = vmatprep.subr.bf16.mxu0 %v2536
  %4137 = vmatpush2.bf16.msra.mxu0 %v2535
  %4138 = vmatprep.subr.bf16.mxu0 %v2532
  %4139 = vmatpush2.bf16.msra.mxu0 %v2531
  %4140 = vmatprep.mubr.bf16.mxu0 %v698
  %4141 = vmatmul.mubr.bf16.gmra.mxu0 %v697
  %v4142 = vpop.f32.mrf.mxu0
  %v4143 = vadd.f32 0.0, %v4142
  %v4144 = vpop.f32.mrf.mxu0
  %v4145 = vadd.f32 0.0, %v4144
  %v4146 = vpop.f32.mrf.mxu0
  %v4147 = vadd.f32 0.0, %v4146
  %v4148 = vpop.f32.mrf.mxu0
  %v4149 = vadd.f32 0.0, %v4148
  %4150 = vmatprep.mubr.bf16.mxu0 %v716
  %4151 = vmatmul.mubr.bf16.gmra.mxu0 %v715
  %v4152 = vpop.f32.mrf.mxu0
  %v4153 = vadd.f32 0.0, %v4152
  %v4154 = vpop.f32.mrf.mxu0
  %v4155 = vadd.f32 0.0, %v4154
  %v4156 = vpop.f32.mrf.mxu0
  %v4157 = vpop.f32.mrf.mxu0
  %4158 = vdwg.mxu0
  %4159 = vmatprep.subr.bf16.mxu0 %v2592
  %4160 = vmatpush1.bf16.msra.mxu0 %v2591
  %4161 = vmatprep.subr.bf16.mxu0 %v2588
  %4162 = vmatpush1.bf16.msra.mxu0 %v2587
  %4163 = vmatprep.subr.bf16.mxu0 %v2584
  %4164 = vmatpush1.bf16.msra.mxu0 %v2583
  %4165 = vmatprep.subr.bf16.mxu0 %v2580
  %4166 = vmatpush1.bf16.msra.mxu0 %v2579
  %4167 = vmatprep.subr.bf16.mxu0 %v2576
  %4168 = vmatpush1.bf16.msra.mxu0 %v2575
  %4169 = vmatprep.subr.bf16.mxu0 %v2572
  %4170 = vmatpush1.bf16.msra.mxu0 %v2571
  %4171 = vmatprep.subr.bf16.mxu0 %v2568
  %4172 = vmatpush1.bf16.msra.mxu0 %v2567
  %4173 = vmatprep.subr.bf16.mxu0 %v2564
  %4174 = vmatpush1.bf16.msra.mxu0 %v2563
  %4175 = vmatprep.subr.bf16.mxu0 %v2624
  %4176 = vmatpush2.bf16.msra.mxu0 %v2623
  %4177 = vmatprep.subr.bf16.mxu0 %v2620
  %4178 = vmatpush2.bf16.msra.mxu0 %v2619
  %4179 = vmatprep.subr.bf16.mxu0 %v2616
  %4180 = vmatpush2.bf16.msra.mxu0 %v2615
  %4181 = vmatprep.subr.bf16.mxu0 %v2612
  %4182 = vmatpush2.bf16.msra.mxu0 %v2611
  %4183 = vmatprep.subr.bf16.mxu0 %v2608
  %4184 = vmatpush2.bf16.msra.mxu0 %v2607
  %4185 = vmatprep.subr.bf16.mxu0 %v2604
  %4186 = vmatpush2.bf16.msra.mxu0 %v2603
  %4187 = vmatprep.subr.bf16.mxu0 %v2600
  %4188 = vmatpush2.bf16.msra.mxu0 %v2599
  %4189 = vmatprep.subr.bf16.mxu0 %v2596
  %4190 = vmatpush2.bf16.msra.mxu0 %v2595
  %4191 = vmatprep.mubr.bf16.mxu0 %v700
  %4192 = vmatmul.mubr.bf16.gmra.mxu0 %v699
  %v4193 = vpop.f32.mrf.mxu0
  %v4194 = vadd.f32 %v4143, %v4193
  %v4195 = vpop.f32.mrf.mxu0
  %v4196 = vadd.f32 %v4145, %v4195
  %v4197 = vpop.f32.mrf.mxu0
  %v4198 = vadd.f32 %v4147, %v4197
  %v4199 = vpop.f32.mrf.mxu0
  %v4200 = vadd.f32 %v4149, %v4199
  %4201 = vmatprep.mubr.bf16.mxu0 %v718
  %4202 = vmatmul.mubr.bf16.gmra.mxu0 %v717
  %v4203 = vpop.f32.mrf.mxu0
  %v4204 = vadd.f32 %v4153, %v4203
  %v4205 = vpop.f32.mrf.mxu0
  %v4206 = vadd.f32 %v4155, %v4205
  %v4207 = vpop.f32.mrf.mxu0
  %v4208 = vpop.f32.mrf.mxu0
  %4209 = vdwg.mxu0
  %4210 = vmatprep.subr.bf16.mxu0 %v2656
  %4211 = vmatpush1.bf16.msra.mxu0 %v2655
  %4212 = vmatprep.subr.bf16.mxu0 %v2652
  %4213 = vmatpush1.bf16.msra.mxu0 %v2651
  %4214 = vmatprep.subr.bf16.mxu0 %v2648
  %4215 = vmatpush1.bf16.msra.mxu0 %v2647
  %4216 = vmatprep.subr.bf16.mxu0 %v2644
  %4217 = vmatpush1.bf16.msra.mxu0 %v2643
  %4218 = vmatprep.subr.bf16.mxu0 %v2640
  %4219 = vmatpush1.bf16.msra.mxu0 %v2639
  %4220 = vmatprep.subr.bf16.mxu0 %v2636
  %4221 = vmatpush1.bf16.msra.mxu0 %v2635
  %4222 = vmatprep.subr.bf16.mxu0 %v2632
  %4223 = vmatpush1.bf16.msra.mxu0 %v2631
  %4224 = vmatprep.subr.bf16.mxu0 %v2628
  %4225 = vmatpush1.bf16.msra.mxu0 %v2627
  %4226 = vmatprep.subr.bf16.mxu0 %v2688
  %4227 = vmatpush2.bf16.msra.mxu0 %v2687
  %4228 = vmatprep.subr.bf16.mxu0 %v2684
  %4229 = vmatpush2.bf16.msra.mxu0 %v2683
  %4230 = vmatprep.subr.bf16.mxu0 %v2680
  %4231 = vmatpush2.bf16.msra.mxu0 %v2679
  %4232 = vmatprep.subr.bf16.mxu0 %v2676
  %4233 = vmatpush2.bf16.msra.mxu0 %v2675
  %4234 = vmatprep.subr.bf16.mxu0 %v2672
  %4235 = vmatpush2.bf16.msra.mxu0 %v2671
  %4236 = vmatprep.subr.bf16.mxu0 %v2668
  %4237 = vmatpush2.bf16.msra.mxu0 %v2667
  %4238 = vmatprep.subr.bf16.mxu0 %v2664
  %4239 = vmatpush2.bf16.msra.mxu0 %v2663
  %4240 = vmatprep.subr.bf16.mxu0 %v2660
  %4241 = vmatpush2.bf16.msra.mxu0 %v2659
  %4242 = vmatprep.mubr.bf16.mxu0 %v702
  %4243 = vmatmul.mubr.bf16.gmra.mxu0 %v701
  %v4244 = vpop.f32.mrf.mxu0
  %v4245 = vadd.f32 %v4194, %v4244
  %v4246 = vpop.f32.mrf.mxu0
  %v4247 = vadd.f32 %v4196, %v4246
  %v4248 = vpop.f32.mrf.mxu0
  %v4249 = vadd.f32 %v4198, %v4248
  %v4250 = vpop.f32.mrf.mxu0
  %v4251 = vadd.f32 %v4200, %v4250
  %4252 = vmatprep.mubr.bf16.mxu0 %v720
  %4253 = vmatmul.mubr.bf16.gmra.mxu0 %v719
  %v4254 = vpop.f32.mrf.mxu0
  %v4255 = vadd.f32 %v4204, %v4254
  %v4256 = vpop.f32.mrf.mxu0
  %v4257 = vadd.f32 %v4206, %v4256
  %v4258 = vpop.f32.mrf.mxu0
  %v4259 = vpop.f32.mrf.mxu0
  %4260 = vdwg.mxu0
  %4261 = vmatprep.subr.bf16.mxu0 %v2720
  %4262 = vmatpush1.bf16.msra.mxu0 %v2719
  %4263 = vmatprep.subr.bf16.mxu0 %v2716
  %4264 = vmatpush1.bf16.msra.mxu0 %v2715
  %4265 = vmatprep.subr.bf16.mxu0 %v2712
  %4266 = vmatpush1.bf16.msra.mxu0 %v2711
  %4267 = vmatprep.subr.bf16.mxu0 %v2708
  %4268 = vmatpush1.bf16.msra.mxu0 %v2707
  %4269 = vmatprep.subr.bf16.mxu0 %v2704
  %4270 = vmatpush1.bf16.msra.mxu0 %v2703
  %4271 = vmatprep.subr.bf16.mxu0 %v2700
  %4272 = vmatpush1.bf16.msra.mxu0 %v2699
  %4273 = vmatprep.subr.bf16.mxu0 %v2696
  %4274 = vmatpush1.bf16.msra.mxu0 %v2695
  %4275 = vmatprep.subr.bf16.mxu0 %v2692
  %4276 = vmatpush1.bf16.msra.mxu0 %v2691
  %4277 = vmatprep.subr.bf16.mxu0 %v2752
  %4278 = vmatpush2.bf16.msra.mxu0 %v2751
  %4279 = vmatprep.subr.bf16.mxu0 %v2748
  %4280 = vmatpush2.bf16.msra.mxu0 %v2747
  %4281 = vmatprep.subr.bf16.mxu0 %v2744
  %4282 = vmatpush2.bf16.msra.mxu0 %v2743
  %4283 = vmatprep.subr.bf16.mxu0 %v2740
  %4284 = vmatpush2.bf16.msra.mxu0 %v2739
  %4285 = vmatprep.subr.bf16.mxu0 %v2736
  %4286 = vmatpush2.bf16.msra.mxu0 %v2735
  %4287 = vmatprep.subr.bf16.mxu0 %v2732
  %4288 = vmatpush2.bf16.msra.mxu0 %v2731
  %4289 = vmatprep.subr.bf16.mxu0 %v2728
  %4290 = vmatpush2.bf16.msra.mxu0 %v2727
  %4291 = vmatprep.subr.bf16.mxu0 %v2724
  %4292 = vmatpush2.bf16.msra.mxu0 %v2723
  %4293 = vmatprep.mubr.bf16.mxu0 %v704
  %4294 = vmatmul.mubr.bf16.gmra.mxu0 %v703
  %v4295 = vpop.f32.mrf.mxu0
  %v4296 = vadd.f32 %v4245, %v4295
  %v4297 = vpop.f32.mrf.mxu0
  %v4298 = vadd.f32 %v4247, %v4297
  %v4299 = vpop.f32.mrf.mxu0
  %v4300 = vadd.f32 %v4249, %v4299
  %v4301 = vpop.f32.mrf.mxu0
  %v4302 = vadd.f32 %v4251, %v4301
  %4303 = vmatprep.mubr.bf16.mxu0 %v722
  %4304 = vmatmul.mubr.bf16.gmra.mxu0 %v721
  %v4305 = vpop.f32.mrf.mxu0
  %v4306 = vadd.f32 %v4255, %v4305
  %v4307 = vpop.f32.mrf.mxu0
  %v4308 = vadd.f32 %v4257, %v4307
  %v4309 = vpop.f32.mrf.mxu0
  %v4310 = vpop.f32.mrf.mxu0
  %4311 = vdwg.mxu0
  %4312 = vmatprep.subr.bf16.mxu0 %v2784
  %4313 = vmatpush1.bf16.msra.mxu0 %v2783
  %4314 = vmatprep.subr.bf16.mxu0 %v2780
  %4315 = vmatpush1.bf16.msra.mxu0 %v2779
  %4316 = vmatprep.subr.bf16.mxu0 %v2776
  %4317 = vmatpush1.bf16.msra.mxu0 %v2775
  %4318 = vmatprep.subr.bf16.mxu0 %v2772
  %4319 = vmatpush1.bf16.msra.mxu0 %v2771
  %4320 = vmatprep.subr.bf16.mxu0 %v2768
  %4321 = vmatpush1.bf16.msra.mxu0 %v2767
  %4322 = vmatprep.subr.bf16.mxu0 %v2764
  %4323 = vmatpush1.bf16.msra.mxu0 %v2763
  %4324 = vmatprep.subr.bf16.mxu0 %v2760
  %4325 = vmatpush1.bf16.msra.mxu0 %v2759
  %4326 = vmatprep.subr.bf16.mxu0 %v2756
  %4327 = vmatpush1.bf16.msra.mxu0 %v2755
  %4328 = vmatprep.subr.bf16.mxu0 %v2816
  %4329 = vmatpush2.bf16.msra.mxu0 %v2815
  %4330 = vmatprep.subr.bf16.mxu0 %v2812
  %4331 = vmatpush2.bf16.msra.mxu0 %v2811
  %4332 = vmatprep.subr.bf16.mxu0 %v2808
  %4333 = vmatpush2.bf16.msra.mxu0 %v2807
  %4334 = vmatprep.subr.bf16.mxu0 %v2804
  %4335 = vmatpush2.bf16.msra.mxu0 %v2803
  %4336 = vmatprep.subr.bf16.mxu0 %v2800
  %4337 = vmatpush2.bf16.msra.mxu0 %v2799
  %4338 = vmatprep.subr.bf16.mxu0 %v2796
  %4339 = vmatpush2.bf16.msra.mxu0 %v2795
  %4340 = vmatprep.subr.bf16.mxu0 %v2792
  %4341 = vmatpush2.bf16.msra.mxu0 %v2791
  %4342 = vmatprep.subr.bf16.mxu0 %v2788
  %4343 = vmatpush2.bf16.msra.mxu0 %v2787
  %4344 = vmatprep.mubr.bf16.mxu0 %v706
  %4345 = vmatmul.mubr.bf16.gmra.mxu0 %v705
  %v4346 = vpop.f32.mrf.mxu0
  %v4347 = vadd.f32 %v4296, %v4346
  %v4348 = vpop.f32.mrf.mxu0
  %v4349 = vadd.f32 %v4298, %v4348
  %v4350 = vpop.f32.mrf.mxu0
  %v4351 = vadd.f32 %v4300, %v4350
  %v4352 = vpop.f32.mrf.mxu0
  %v4353 = vadd.f32 %v4302, %v4352
  %4354 = vmatprep.mubr.bf16.mxu0 %v724
  %4355 = vmatmul.mubr.bf16.gmra.mxu0 %v723
  %v4356 = vpop.f32.mrf.mxu0
  %v4357 = vadd.f32 %v4306, %v4356
  %v4358 = vpop.f32.mrf.mxu0
  %v4359 = vadd.f32 %v4308, %v4358
  %v4360 = vpop.f32.mrf.mxu0
  %v4361 = vpop.f32.mrf.mxu0
  %4362 = vdwg.mxu0
  %4363 = vmatprep.subr.bf16.mxu0 %v2848
  %4364 = vmatpush1.bf16.msra.mxu0 %v2847
  %4365 = vmatprep.subr.bf16.mxu0 %v2844
  %4366 = vmatpush1.bf16.msra.mxu0 %v2843
  %4367 = vmatprep.subr.bf16.mxu0 %v2840
  %4368 = vmatpush1.bf16.msra.mxu0 %v2839
  %4369 = vmatprep.subr.bf16.mxu0 %v2836
  %4370 = vmatpush1.bf16.msra.mxu0 %v2835
  %4371 = vmatprep.subr.bf16.mxu0 %v2832
  %4372 = vmatpush1.bf16.msra.mxu0 %v2831
  %4373 = vmatprep.subr.bf16.mxu0 %v2828
  %4374 = vmatpush1.bf16.msra.mxu0 %v2827
  %4375 = vmatprep.subr.bf16.mxu0 %v2824
  %4376 = vmatpush1.bf16.msra.mxu0 %v2823
  %4377 = vmatprep.subr.bf16.mxu0 %v2820
  %4378 = vmatpush1.bf16.msra.mxu0 %v2819
  %4379 = vmatprep.subr.bf16.mxu0 %v2880
  %4380 = vmatpush2.bf16.msra.mxu0 %v2879
  %4381 = vmatprep.subr.bf16.mxu0 %v2876
  %4382 = vmatpush2.bf16.msra.mxu0 %v2875
  %4383 = vmatprep.subr.bf16.mxu0 %v2872
  %4384 = vmatpush2.bf16.msra.mxu0 %v2871
  %4385 = vmatprep.subr.bf16.mxu0 %v2868
  %4386 = vmatpush2.bf16.msra.mxu0 %v2867
  %4387 = vmatprep.subr.bf16.mxu0 %v2864
  %4388 = vmatpush2.bf16.msra.mxu0 %v2863
  %4389 = vmatprep.subr.bf16.mxu0 %v2860
  %4390 = vmatpush2.bf16.msra.mxu0 %v2859
  %4391 = vmatprep.subr.bf16.mxu0 %v2856
  %4392 = vmatpush2.bf16.msra.mxu0 %v2855
  %4393 = vmatprep.subr.bf16.mxu0 %v2852
  %4394 = vmatpush2.bf16.msra.mxu0 %v2851
  %4395 = vmatprep.mubr.bf16.mxu0 %v708
  %4396 = vmatmul.mubr.bf16.gmra.mxu0 %v707
  %v4397 = vpop.f32.mrf.mxu0
  %v4398 = vadd.f32 %v4347, %v4397
  %v4399 = vpop.f32.mrf.mxu0
  %v4400 = vadd.f32 %v4349, %v4399
  %v4401 = vpop.f32.mrf.mxu0
  %v4402 = vadd.f32 %v4351, %v4401
  %v4403 = vpop.f32.mrf.mxu0
  %v4404 = vadd.f32 %v4353, %v4403
  %4405 = vmatprep.mubr.bf16.mxu0 %v726
  %4406 = vmatmul.mubr.bf16.gmra.mxu0 %v725
  %v4407 = vpop.f32.mrf.mxu0
  %v4408 = vadd.f32 %v4357, %v4407
  %v4409 = vpop.f32.mrf.mxu0
  %v4410 = vadd.f32 %v4359, %v4409
  %v4411 = vpop.f32.mrf.mxu0
  %v4412 = vpop.f32.mrf.mxu0
  %4413 = vdwg.mxu0
  %4414 = vmatprep.subr.bf16.mxu0 %v2912
  %4415 = vmatpush1.bf16.msra.mxu0 %v2911
  %4416 = vmatprep.subr.bf16.mxu0 %v2908
  %4417 = vmatpush1.bf16.msra.mxu0 %v2907
  %4418 = vmatprep.subr.bf16.mxu0 %v2904
  %4419 = vmatpush1.bf16.msra.mxu0 %v2903
  %4420 = vmatprep.subr.bf16.mxu0 %v2900
  %4421 = vmatpush1.bf16.msra.mxu0 %v2899
  %4422 = vmatprep.subr.bf16.mxu0 %v2896
  %4423 = vmatpush1.bf16.msra.mxu0 %v2895
  %4424 = vmatprep.subr.bf16.mxu0 %v2892
  %4425 = vmatpush1.bf16.msra.mxu0 %v2891
  %4426 = vmatprep.subr.bf16.mxu0 %v2888
  %4427 = vmatpush1.bf16.msra.mxu0 %v2887
  %4428 = vmatprep.subr.bf16.mxu0 %v2884
  %4429 = vmatpush1.bf16.msra.mxu0 %v2883
  %4430 = vmatprep.subr.bf16.mxu0 %v2944
  %4431 = vmatpush2.bf16.msra.mxu0 %v2943
  %4432 = vmatprep.subr.bf16.mxu0 %v2940
  %4433 = vmatpush2.bf16.msra.mxu0 %v2939
  %4434 = vmatprep.subr.bf16.mxu0 %v2936
  %4435 = vmatpush2.bf16.msra.mxu0 %v2935
  %4436 = vmatprep.subr.bf16.mxu0 %v2932
  %4437 = vmatpush2.bf16.msra.mxu0 %v2931
  %4438 = vmatprep.subr.bf16.mxu0 %v2928
  %4439 = vmatpush2.bf16.msra.mxu0 %v2927
  %4440 = vmatprep.subr.bf16.mxu0 %v2924
  %4441 = vmatpush2.bf16.msra.mxu0 %v2923
  %4442 = vmatprep.subr.bf16.mxu0 %v2920
  %4443 = vmatpush2.bf16.msra.mxu0 %v2919
  %4444 = vmatprep.subr.bf16.mxu0 %v2916
  %4445 = vmatpush2.bf16.msra.mxu0 %v2915
  %4446 = vmatprep.mubr.bf16.mxu0 %v710
  %4447 = vmatmul.mubr.bf16.gmra.mxu0 %v709
  %v4448 = vpop.f32.mrf.mxu0
  %v4449 = vadd.f32 %v4398, %v4448
  %v4450 = vpop.f32.mrf.mxu0
  %v4451 = vadd.f32 %v4400, %v4450
  %v4452 = vpop.f32.mrf.mxu0
  %v4453 = vadd.f32 %v4402, %v4452
  %v4454 = vpop.f32.mrf.mxu0
  %v4455 = vadd.f32 %v4404, %v4454
  %4456 = vmatprep.mubr.bf16.mxu0 %v728
  %4457 = vmatmul.mubr.bf16.gmra.mxu0 %v727
  %v4458 = vpop.f32.mrf.mxu0
  %v4459 = vadd.f32 %v4408, %v4458
  %v4460 = vpop.f32.mrf.mxu0
  %v4461 = vadd.f32 %v4410, %v4460
  %v4462 = vpop.f32.mrf.mxu0
  %v4463 = vpop.f32.mrf.mxu0
  %4464 = vdwg.mxu0
  %4465 = vmatprep.subr.bf16.mxu0 %v2976
  %4466 = vmatpush1.bf16.msra.mxu0 %v2975
  %4467 = vmatprep.subr.bf16.mxu0 %v2972
  %4468 = vmatpush1.bf16.msra.mxu0 %v2971
  %4469 = vmatprep.subr.bf16.mxu0 %v2968
  %4470 = vmatpush1.bf16.msra.mxu0 %v2967
  %4471 = vmatprep.subr.bf16.mxu0 %v2964
  %4472 = vmatpush1.bf16.msra.mxu0 %v2963
  %4473 = vmatprep.subr.bf16.mxu0 %v2960
  %4474 = vmatpush1.bf16.msra.mxu0 %v2959
  %4475 = vmatprep.subr.bf16.mxu0 %v2956
  %4476 = vmatpush1.bf16.msra.mxu0 %v2955
  %4477 = vmatprep.subr.bf16.mxu0 %v2952
  %4478 = vmatpush1.bf16.msra.mxu0 %v2951
  %4479 = vmatprep.subr.bf16.mxu0 %v2948
  %4480 = vmatpush1.bf16.msra.mxu0 %v2947
  %4481 = vmatprep.subr.bf16.mxu0 %v3008
  %4482 = vmatpush2.bf16.msra.mxu0 %v3007
  %4483 = vmatprep.subr.bf16.mxu0 %v3004
  %4484 = vmatpush2.bf16.msra.mxu0 %v3003
  %4485 = vmatprep.subr.bf16.mxu0 %v3000
  %4486 = vmatpush2.bf16.msra.mxu0 %v2999
  %4487 = vmatprep.subr.bf16.mxu0 %v2996
  %4488 = vmatpush2.bf16.msra.mxu0 %v2995
  %4489 = vmatprep.subr.bf16.mxu0 %v2992
  %4490 = vmatpush2.bf16.msra.mxu0 %v2991
  %4491 = vmatprep.subr.bf16.mxu0 %v2988
  %4492 = vmatpush2.bf16.msra.mxu0 %v2987
  %4493 = vmatprep.subr.bf16.mxu0 %v2984
  %4494 = vmatpush2.bf16.msra.mxu0 %v2983
  %4495 = vmatprep.subr.bf16.mxu0 %v2980
  %4496 = vmatpush2.bf16.msra.mxu0 %v2979
  %4497 = vmatprep.mubr.bf16.mxu0 %v712
  %4498 = vmatmul.mubr.bf16.gmra.mxu0 %v711
  %v4499 = vpop.f32.mrf.mxu0
  %v4500 = vadd.f32 %v4449, %v4499
  %v4501 = vpop.f32.mrf.mxu0
  %v4502 = vadd.f32 %v4451, %v4501
  %v4503 = vpop.f32.mrf.mxu0
  %v4504 = vadd.f32 %v4453, %v4503
  %v4505 = vpop.f32.mrf.mxu0
  %v4506 = vadd.f32 %v4455, %v4505
  %4507 = vmatprep.mubr.bf16.mxu0 %v730
  %4508 = vmatmul.mubr.bf16.gmra.mxu0 %v729
  %v4509 = vpop.f32.mrf.mxu0
  %v4510 = vadd.f32 %v4459, %v4509
  %v4511 = vpop.f32.mrf.mxu0
  %v4512 = vadd.f32 %v4461, %v4511
  %v4513 = vpop.f32.mrf.mxu0
  %v4514 = vpop.f32.mrf.mxu0
  %4515 = vdwg.mxu0
  %4516 = vmatprep.subr.bf16.mxu0 %v3040
  %4517 = vmatpush1.bf16.msra.mxu0 %v3039
  %4518 = vmatprep.subr.bf16.mxu0 %v3036
  %4519 = vmatpush1.bf16.msra.mxu0 %v3035
  %4520 = vmatprep.subr.bf16.mxu0 %v3032
  %4521 = vmatpush1.bf16.msra.mxu0 %v3031
  %4522 = vmatprep.subr.bf16.mxu0 %v3028
  %4523 = vmatpush1.bf16.msra.mxu0 %v3027
  %4524 = vmatprep.subr.bf16.mxu0 %v3024
  %4525 = vmatpush1.bf16.msra.mxu0 %v3023
  %4526 = vmatprep.subr.bf16.mxu0 %v3020
  %4527 = vmatpush1.bf16.msra.mxu0 %v3019
  %4528 = vmatprep.subr.bf16.mxu0 %v3016
  %4529 = vmatpush1.bf16.msra.mxu0 %v3015
  %4530 = vmatprep.subr.bf16.mxu0 %v3012
  %4531 = vmatpush1.bf16.msra.mxu0 %v3011
  %4532 = vmatprep.subr.bf16.mxu0 %v3072
  %4533 = vmatpush2.bf16.msra.mxu0 %v3071
  %4534 = vmatprep.subr.bf16.mxu0 %v3068
  %4535 = vmatpush2.bf16.msra.mxu0 %v3067
  %4536 = vmatprep.subr.bf16.mxu0 %v3064
  %4537 = vmatpush2.bf16.msra.mxu0 %v3063
  %4538 = vmatprep.subr.bf16.mxu0 %v3060
  %4539 = vmatpush2.bf16.msra.mxu0 %v3059
  %4540 = vmatprep.subr.bf16.mxu0 %v3056
  %4541 = vmatpush2.bf16.msra.mxu0 %v3055
  %4542 = vmatprep.subr.bf16.mxu0 %v3052
  %4543 = vmatpush2.bf16.msra.mxu0 %v3051
  %4544 = vmatprep.subr.bf16.mxu0 %v3048
  %4545 = vmatpush2.bf16.msra.mxu0 %v3047
  %4546 = vmatprep.subr.bf16.mxu0 %v3044
  %4547 = vmatpush2.bf16.msra.mxu0 %v3043
  %4548 = vmatprep.mubr.bf16.mxu0 %v714
  %4549 = vmatmul.mubr.bf16.gmra.mxu0 %v713
  %v4550 = vpop.f32.mrf.mxu0
  %v4551 = vadd.f32 %v4500, %v4550
  %v4552 = vpop.f32.mrf.mxu0
  %v4553 = vadd.f32 %v4502, %v4552
  %v4554 = vpop.f32.mrf.mxu0
  %v4555 = vadd.f32 %v4504, %v4554
  %v4556 = vpop.f32.mrf.mxu0
  %v4557 = vadd.f32 %v4506, %v4556
  %4558 = vmatprep.mubr.bf16.mxu0 %v732
  %4559 = vmatmul.mubr.bf16.gmra.mxu0 %v731
  %v4560 = vpop.f32.mrf.mxu0
  %v4561 = vadd.f32 %v4510, %v4560
  %v4562 = vpop.f32.mrf.mxu0
  %v4563 = vadd.f32 %v4512, %v4562
  %v4564 = vpop.f32.mrf.mxu0
  %v4565 = vpop.f32.mrf.mxu0
  %4566 = vdwg.mxu0
  %v4567 = vadd.f32 %v4092, %v4096
  %v4568 = vadd.f32 %v4567, %v4102
  %v4569 = vrot.slane %v4568, 4
  %v4570 = vadd.f32 %v4568, %v4569
  %v4571 = vrot.slane %v4570, 2
  %v4572 = vadd.f32 %v4570, %v4571
  %v4573 = vrot.slane %v4572, 1
  %v4574 = vadd.f32 %v4572, %v4573
  %v4575 = vadd.f32 %v4094, %v4098
  %v4576 = vadd.f32 %v4575, %v4104
  %v4577 = vrot.slane %v4576, 4
  %v4578 = vadd.f32 %v4576, %v4577
  %v4579 = vrot.slane %v4578, 2
  %v4580 = vadd.f32 %v4578, %v4579
  %v4581 = vrot.slane %v4580, 1
  %v4582 = vadd.f32 %v4580, %v4581
  %v4583 = vadd.f32 %v4551, %v4555
  %v4584 = vadd.f32 %v4583, %v4561
  %v4585 = vrot.slane %v4584, 4
  %v4586 = vadd.f32 %v4584, %v4585
  %v4587 = vrot.slane %v4586, 2
  %v4588 = vadd.f32 %v4586, %v4587
  %v4589 = vrot.slane %v4588, 1
  %v4590 = vadd.f32 %v4588, %v4589
  %v4591 = vadd.f32 %v4553, %v4557
  %v4592 = vadd.f32 %v4591, %v4563
  %v4593 = vrot.slane %v4592, 4
  %v4594 = vadd.f32 %v4592, %v4593
  %v4595 = vrot.slane %v4594, 2
  %v4596 = vadd.f32 %v4594, %v4595
  %v4597 = vrot.slane %v4596, 1
  %v4598 = vadd.f32 %v4596, %v4597
  %v4599 = vmul.f32 %v4092, %v4092
  %v4600 = vmul.f32 %v4094, %v4094
  %v4601 = vmul.f32 %v4551, %v4551
  %v4602 = vmul.f32 %v4553, %v4553
  %v4603 = vmul.f32 %v4096, %v4096
  %v4604 = vmul.f32 %v4098, %v4098
  %v4605 = vmul.f32 %v4555, %v4555
  %v4606 = vmul.f32 %v4557, %v4557
  %v4607 = vmul.f32 %v4102, %v4102
  %v4608 = vmul.f32 %v4104, %v4104
  %v4609 = vmul.f32 %v4561, %v4561
  %v4610 = vmul.f32 %v4563, %v4563
  %v4611 = vadd.f32 %v4599, %v4603
  %v4612 = vadd.f32 %v4611, %v4607
  %v4613 = vrot.slane %v4612, 4
  %v4614 = vadd.f32 %v4612, %v4613
  %v4615 = vrot.slane %v4614, 2
  %v4616 = vadd.f32 %v4614, %v4615
  %v4617 = vrot.slane %v4616, 1
  %v4618 = vadd.f32 %v4616, %v4617
  %v4619 = vadd.f32 %v4600, %v4604
  %v4620 = vadd.f32 %v4619, %v4608
  %v4621 = vrot.slane %v4620, 4
  %v4622 = vadd.f32 %v4620, %v4621
  %v4623 = vrot.slane %v4622, 2
  %v4624 = vadd.f32 %v4622, %v4623
  %v4625 = vrot.slane %v4624, 1
  %v4626 = vadd.f32 %v4624, %v4625
  %v4627 = vadd.f32 %v4601, %v4605
  %v4628 = vadd.f32 %v4627, %v4609
  %v4629 = vrot.slane %v4628, 4
  %v4630 = vadd.f32 %v4628, %v4629
  %v4631 = vrot.slane %v4630, 2
  %v4632 = vadd.f32 %v4630, %v4631
  %v4633 = vrot.slane %v4632, 1
  %v4634 = vadd.f32 %v4632, %v4633
  %v4635 = vadd.f32 %v4602, %v4606
  %v4636 = vadd.f32 %v4635, %v4610
  %v4637 = vrot.slane %v4636, 4
  %v4638 = vadd.f32 %v4636, %v4637
  %v4639 = vrot.slane %v4638, 2
  %v4640 = vadd.f32 %v4638, %v4639
  %v4641 = vrot.slane %v4640, 1
  %v4642 = vadd.f32 %v4640, %v4641
  %vm4643 = vcmask 1040384
  %v4644 = vsel %vm4643, %v4574, %v4618
  %v4645 = vsel %vm4643, %v4582, %v4626
  %v4646 = vsel %vm4643, %v4590, %v4634
  %v4647 = vsel %vm4643, %v4598, %v4642
  %v4652 = vcombine.low %v4644, %v4645
  %v4653 = vcombine.low %v4646, %v4647
  %v4655 = vunpack.c.l.s4 1983009808
  %v4656 = vunpack.c.0.s8 %v4655
  %v4657 = vlaneseq
  %v4658 = vshrl.u32 %v4657, 7
  %v4659 = vsub.s32 %v4656, %v4658
  %v4660 = vrot.slane %v4652, %v4659
  %v4662 = vunpack.c.l.s4 1983009808
  %v4663 = vunpack.c.0.s8 %v4662
  %v4664 = vlaneseq
  %v4665 = vshrl.u32 %v4664, 7
  %v4666 = vsub.s32 %v4663, %v4665
  %v4667 = vrot.slane %v4653, %v4666
  %v4668 = vcombine.low %v4660, %v4667
  %4670 = vst [vmem:[%s3] sm:$0xff] %v4668
  %4671 = vst [vmem:[%s2] sm:$0xff] %v4092
  %4672 = vst [vmem:[%s2 + $0x8] sm:$0xff] %v4094
  %4673 = vst [vmem:[%s2 + $0x10] sm:$0xff] %v4551
  %4674 = vst [vmem:[%s2 + $0x18] sm:$0xff] %v4553
  %4675 = vst [vmem:[%s2 + $0x20] sm:$0xff] %v4096
  %4676 = vst [vmem:[%s2 + $0x28] sm:$0xff] %v4098
  %4677 = vst [vmem:[%s2 + $0x30] sm:$0xff] %v4555
  %4678 = vst [vmem:[%s2 + $0x38] sm:$0xff] %v4557
  %4679 = vst [vmem:[%s2 + $0x40] sm:$0xff] %v4102
  %4680 = vst [vmem:[%s2 + $0x48] sm:$0xff] %v4104
  %4681 = vst [vmem:[%s2 + $0x50] sm:$0xff] %v4561
  %4682 = vst [vmem:[%s2 + $0x58] sm:$0xff] %v4563
  // Predicated region
  $region10: #{encoder_forward_pallas.8} parent=0 // pred_check
    _
  $region11: #{encoder_forward_pallas.8} parent=0 // pred_check_branch
    %4684 = sbr.rel (0) target = $region13
  $region12: #{encoder_forward_pallas.8} parent=0 // pred_region
    _
  $region13: #{encoder_forward_pallas.8} parent=0 // pred_fallthru
    _
  // Predicated region
  $region14: #{encoder_forward_pallas.8} parent=0 // pred_check
    _
  $region15: #{encoder_forward_pallas.8} parent=0 // pred_check_branch
    %4686 = sbr.rel (0) target = $region17
  $region16: #{encoder_forward_pallas.8} parent=0 // pred_region
    _
  $region17: #{encoder_forward_pallas.8} parent=0 // pred_fallthru
    _
  // Predicated region
  $region18: #{encoder_forward_pallas.8} parent=0 // pred_check
    _
  $region19: #{encoder_forward_pallas.8} parent=0 // pred_check_branch
    %4688 = sbr.rel (0) target = $region21
  $region20: #{encoder_forward_pallas.8} parent=0 // pred_region
    _
  $region21: #{encoder_forward_pallas.8} parent=0 // pred_fallthru
    _
  // Predicated region
  $region22: #{encoder_forward_pallas.8} parent=0 // pred_check
    _
  $region23: #{encoder_forward_pallas.8} parent=0 // pred_check_branch
    %4690 = sbr.rel (0) target = $region25
  $region24: #{encoder_forward_pallas.8} parent=0 // pred_region
    _
  $region25: #{encoder_forward_pallas.8} parent=0 // pred_fallthru
    _

// kernel: encoder_forward_pallas.9
$region0: #{encoder_forward_pallas.9}
  #allocation0 [shape = 'u32[]', space=smem, size = 0x4, offset = 0x4, fixed_abs, tag = 'smem constant byte address 0x4 - core index']
  #allocation1 [shape = 'u32[144,128]{1,0:T(1,128)}', space=vmem, size = 0x12000, scoped, tag = 'internal scratch']
  #allocation2 [shape = 'f32[8,128]{1,0:T(8,128)}', space=vmem, size = 0x1000, scoped, tag = 'scratch operand']
  %s0 = inlined_call_operand.vmem [shape: f32[8,4608], index: 0, kind: input, shape index: {}]
  %s1 = inlined_call_operand.vmem [shape: bf16[4608,128], index: 1, kind: input, shape index: {}]
  %s2 = inlined_call_operand.vmem [shape: f32[1,4608], index: 2, kind: input, shape index: {}]
  %s3 = inlined_call_operand.vmem [shape: f32[1,4608], index: 3, kind: input, shape index: {}]
  %s4 = inlined_call_operand.vmem [shape: f32[8,128], index: 4, kind: output, shape index: {}]
  %s5 = sld [smem:[#allocation0]]
  $region57: #{encoder_forward_pallas.9} parent=0
    _
  %s7 = ssub.s32 1, %s5
  %s8 = scalar_select 0, %s7, %s5
  loop: start=0, step=1, limit=4
  $region2: #{encoder_forward_pallas.9} parent=0 // loop_pre_header
    _
  $region3: #{encoder_forward_pallas.9} parent=0 // loop_header
    %s10 = sphi 0, %s14
    %p11 = scmp.ge.s32.totalorder %s10, 4
    %s17 = sphi 0, %s29
    %s18 = sphi 0, %s25
    %s19 = sphi 0, %s17
    %s20 = sphi 0, %s18
    %s21 = sphi 0, %s19
    %s22 = sphi 0, %s20
    %s34 = sphi 0, %s36
    %s37 = sphi 0, %s34
    %s38 = sphi 0, %s37
    %s54 = sphi 0, %s38
    %s60 = sphi 0, %s62
    %s63 = sphi 0, %s60
    %s64 = sphi 0, %s63
    %s80 = sphi 0, %s64
    %s86 = sphi 0, %s88
    %s89 = sphi 0, %s86
    %s90 = sphi 0, %s89
    %s106 = sphi 0, %s90
    %s112 = sphi 0, %s114
    %s115 = sphi 0, %s112
    %s116 = sphi 0, %s115
    %s132 = sphi 0, %s116
    %s138 = sphi 0, %s140
    %s141 = sphi 0, %s138
    %s142 = sphi 0, %s141
    %s158 = sphi 0, %s142
  $region4: #{encoder_forward_pallas.9} parent=0 // loop_header_branch
    %13 = sbr.rel (%p11) target = $region8
  $region5: #{encoder_forward_pallas.9} parent=0 // loop_body
    %s15 = ssub.s32 %s10, 1
    %s16 = ssub.s32 %s10, 2
    %s23 = sadd.s32 1, %s18
    %p24 = scmp.ge.s32.totalorder %s23, 2
    %s25 = scalar_select %p24, 0, %s23
    %s26 = sadd.s32 1, %s17
    %s27 = scalar_select %p24, %s26, %s17
    %p28 = scmp.ge.s32.totalorder %s27, 1
    %s29 = scalar_select %p28, 0, %s27
    %s30 = ssub.s32 %s17, %s29
    %s31 = ssub.s32 %s18, %s25
    %s32 = sor.u32 %s30, %s31
    %p33 = scmp.eq.s32.totalorder %s32, 0
    %s35 = sadd.s32 %s34, 1
    %s36 = scalar_select %p33, %s34, %s35
    %p39 = pneg %p33
    %p40 = scmp.eq.s32.totalorder %s10, 1
    %p41 = por %p39, %p40
    %p42 = scmp.ne.s32.totalorder %s34, %s37
    %p43 = scmp.eq.s32.totalorder %s10, 0
    %p44 = por %p42, %p43
    %p45 = scmp.ne.s32.totalorder %s34, %s37
    %p46 = scmp.eq.s32.totalorder %s15, 1
    %p47 = por %p45, %p46
    %p48 = scmp.ne.s32.totalorder %s37, %s38
    %p49 = scmp.eq.s32.totalorder %s15, 0
    %p50 = por %p48, %p49
    %p51 = scmp.ne.s32.totalorder %s37, %s38
    %p52 = scmp.eq.s32.totalorder %s16, 1
    %p53 = por %p51, %p52
    %p55 = scmp.ne.s32.totalorder %s38, %s54
    %p56 = scmp.eq.s32.totalorder %s16, 0
    %p57 = por %p55, %p56
    %s58 = ssub.s32 %s18, %s25
    %p59 = scmp.eq.s32.totalorder %s58, 0
    %s61 = sadd.s32 %s60, 1
    %s62 = scalar_select %p59, %s60, %s61
    %p65 = pneg %p59
    %p66 = scmp.eq.s32.totalorder %s10, 1
    %p67 = por %p65, %p66
    %p68 = scmp.ne.s32.totalorder %s60, %s63
    %p69 = scmp.eq.s32.totalorder %s10, 0
    %p70 = por %p68, %p69
    %p71 = scmp.ne.s32.totalorder %s60, %s63
    %p72 = scmp.eq.s32.totalorder %s15, 1
    %p73 = por %p71, %p72
    %p74 = scmp.ne.s32.totalorder %s63, %s64
    %p75 = scmp.eq.s32.totalorder %s15, 0
    %p76 = por %p74, %p75
    %p77 = scmp.ne.s32.totalorder %s63, %s64
    %p78 = scmp.eq.s32.totalorder %s16, 1
    %p79 = por %p77, %p78
    %p81 = scmp.ne.s32.totalorder %s64, %s80
    %p82 = scmp.eq.s32.totalorder %s16, 0
    %p83 = por %p81, %p82
    %s84 = ssub.s32 %s18, %s25
    %p85 = scmp.eq.s32.totalorder %s84, 0
    %s87 = sadd.s32 %s86, 1
    %s88 = scalar_select %p85, %s86, %s87
    %p91 = pneg %p85
    %p92 = scmp.eq.s32.totalorder %s10, 1
    %p93 = por %p91, %p92
    %p94 = scmp.ne.s32.totalorder %s86, %s89
    %p95 = scmp.eq.s32.totalorder %s10, 0
    %p96 = por %p94, %p95
    %p97 = scmp.ne.s32.totalorder %s86, %s89
    %p98 = scmp.eq.s32.totalorder %s15, 1
    %p99 = por %p97, %p98
    %p100 = scmp.ne.s32.totalorder %s89, %s90
    %p101 = scmp.eq.s32.totalorder %s15, 0
    %p102 = por %p100, %p101
    %p103 = scmp.ne.s32.totalorder %s89, %s90
    %p104 = scmp.eq.s32.totalorder %s16, 1
    %p105 = por %p103, %p104
    %p107 = scmp.ne.s32.totalorder %s90, %s106
    %p108 = scmp.eq.s32.totalorder %s16, 0
    %p109 = por %p107, %p108
    %s110 = ssub.s32 %s18, %s25
    %p111 = scmp.eq.s32.totalorder %s110, 0
    %s113 = sadd.s32 %s112, 1
    %s114 = scalar_select %p111, %s112, %s113
    %p117 = pneg %p111
    %p118 = scmp.eq.s32.totalorder %s10, 1
    %p119 = por %p117, %p118
    %p120 = scmp.ne.s32.totalorder %s112, %s115
    %p121 = scmp.eq.s32.totalorder %s10, 0
    %p122 = por %p120, %p121
    %p123 = scmp.ne.s32.totalorder %s112, %s115
    %p124 = scmp.eq.s32.totalorder %s15, 1
    %p125 = por %p123, %p124
    %p126 = scmp.ne.s32.totalorder %s115, %s116
    %p127 = scmp.eq.s32.totalorder %s15, 0
    %p128 = por %p126, %p127
    %p129 = scmp.ne.s32.totalorder %s115, %s116
    %p130 = scmp.eq.s32.totalorder %s16, 1
    %p131 = por %p129, %p130
    %p133 = scmp.ne.s32.totalorder %s116, %s132
    %p134 = scmp.eq.s32.totalorder %s16, 0
    %p135 = por %p133, %p134
    %s136 = ssub.s32 %s17, %s29
    %p137 = scmp.eq.s32.totalorder %s136, 0
    %s139 = sadd.s32 %s138, 1
    %s140 = scalar_select %p137, %s138, %s139
    %p143 = pneg %p137
    %p144 = scmp.eq.s32.totalorder %s10, 1
    %p145 = por %p143, %p144
    %p146 = scmp.ne.s32.totalorder %s138, %s141
    %p147 = scmp.eq.s32.totalorder %s10, 0
    %p148 = por %p146, %p147
    %p149 = scmp.ne.s32.totalorder %s138, %s141
    %p150 = scmp.eq.s32.totalorder %s15, 1
    %p151 = por %p149, %p150
    %p152 = scmp.ne.s32.totalorder %s141, %s142
    %p153 = scmp.eq.s32.totalorder %s15, 0
    %p154 = por %p152, %p153
    %p155 = scmp.ne.s32.totalorder %s141, %s142
    %p156 = scmp.eq.s32.totalorder %s16, 1
    %p157 = por %p155, %p156
    %p159 = scmp.ne.s32.totalorder %s142, %s158
    %p160 = scmp.eq.s32.totalorder %s16, 0
    %p161 = por %p159, %p160
    %p162 = scmp.le.s32.totalorder 1, %s10
    %p163 = scmp.lt.s32.totalorder %s10, 3
    %p164 = pnand %p162, %p163
    %p165 = pneg %p164
    // Predicated region
    $region9: #{encoder_forward_pallas.9} parent=5 // pred_check
      _
    $region10: #{encoder_forward_pallas.9} parent=5 // pred_check_branch
      %167 = sbr.rel (%p164) target = $region12
    $region11: #{encoder_forward_pallas.9} parent=5 // pred_region
      %s168 = ssub.s32 %s10, 1
    $region12: #{encoder_forward_pallas.9} parent=5 // pred_fallthru
      _
    %p169 = scmp.lt.s32.totalorder %s10, 2
    // Predicated region
    $region13: #{encoder_forward_pallas.9} parent=5 // pred_check
      %p170 = pneg %p169
    $region14: #{encoder_forward_pallas.9} parent=5 // pred_check_branch
      %172 = sbr.rel (%p170) target = $region16
    $region15: #{encoder_forward_pallas.9} parent=5 // pred_region
      // Predicated region
      $region17: #{encoder_forward_pallas.9} parent=15 // pred_check
        %p173 = pneg %p44
      $region18: #{encoder_forward_pallas.9} parent=15 // pred_check_branch
        %175 = sbr.rel (%p173) target = $region20
      $region19: #{encoder_forward_pallas.9} parent=15 // pred_region
        %s176 = smul.u32 18, %s18
        %p177 = scmp.lt.s32.totalorder %s17, 0
        %s178 = scalar_select %p177, %s17, 0
        %p179 = scmp.lt.s32.totalorder %s176, 35
        %s180 = scalar_select %p179, %s176, 35
        %s181 = smul.addr %s178, 36
        %s182 = sadd.s32 %s180, %s181
        %s183 = smul.addr %s182, 8
        %s184 = scalar_lea.vmem %s0, %s183
        %s185 = smul.u32 18, %s18
      $region20: #{encoder_forward_pallas.9} parent=15 // pred_fallthru
        _
      // Predicated region
      $region21: #{encoder_forward_pallas.9} parent=15 // pred_check
        %p186 = pneg %p70
      $region22: #{encoder_forward_pallas.9} parent=15 // pred_check_branch
        %188 = sbr.rel (%p186) target = $region24
      $region23: #{encoder_forward_pallas.9} parent=15 // pred_region
        %s189 = smul.u32 288, %s18
        %p190 = scmp.lt.s32.totalorder %s189, 575
        %s191 = scalar_select %p190, %s189, 575
        %s192 = smul.addr %s191, 4
        %s193 = scalar_lea.vmem %s1, %s192
        %s194 = smul.u32 288, %s18
      $region24: #{encoder_forward_pallas.9} parent=15 // pred_fallthru
        _
      // Predicated region
      $region25: #{encoder_forward_pallas.9} parent=15 // pred_check
        %p195 = pneg %p96
      $region26: #{encoder_forward_pallas.9} parent=15 // pred_check_branch
        %197 = sbr.rel (%p195) target = $region28
      $region27: #{encoder_forward_pallas.9} parent=15 // pred_region
        %s198 = smul.u32 18, %s18
        %p199 = scmp.lt.s32.totalorder %s198, 35
        %s200 = scalar_select %p199, %s198, 35
        %s201 = scalar_lea.vmem %s2, %s200
        %s202 = smul.u32 18, %s18
      $region28: #{encoder_forward_pallas.9} parent=15 // pred_fallthru
        _
      // Predicated region
      $region29: #{encoder_forward_pallas.9} parent=15 // pred_check
        %p203 = pneg %p122
      $region30: #{encoder_forward_pallas.9} parent=15 // pred_check_branch
        %205 = sbr.rel (%p203) target = $region32
      $region31: #{encoder_forward_pallas.9} parent=15 // pred_region
        %s206 = smul.u32 18, %s18
        %p207 = scmp.lt.s32.totalorder %s206, 35
        %s208 = scalar_select %p207, %s206, 35
        %s209 = scalar_lea.vmem %s3, %s208
        %s210 = smul.u32 18, %s18
      $region32: #{encoder_forward_pallas.9} parent=15 // pred_fallthru
        _
    $region16: #{encoder_forward_pallas.9} parent=5 // pred_fallthru
      _
    %p211 = scmp.le.s32.totalorder 1, %s10
    %p212 = scmp.lt.s32.totalorder %s10, 3
    %p213 = pnand %p211, %p212
    %p214 = pneg %p213
    // Predicated region
    $region33: #{encoder_forward_pallas.9} parent=5 // pred_check
      _
    $region34: #{encoder_forward_pallas.9} parent=5 // pred_check_branch
      %216 = sbr.rel (%p213) target = $region36
    $region35: #{encoder_forward_pallas.9} parent=5 // pred_region
      %s217 = ssub.s32 %s10, 1
      %s218 = smul.u32 18, %s20
      %p219 = scmp.lt.s32.totalorder %s19, 0
      %s220 = scalar_select %p219, %s19, 0
      %p221 = scmp.lt.s32.totalorder %s218, 35
      %s222 = scalar_select %p221, %s218, 35
      %s223 = smul.addr %s220, 36
      %s224 = sadd.s32 %s222, %s223
      %s225 = smul.addr %s224, 8
      %s226 = scalar_lea.vmem %s0, %s225
      %p227 = pneg %p50
      %p228 = pneg %p47
      %s229 = smul.u32 288, %s20
      %p230 = scmp.lt.s32.totalorder %s229, 575
      %s231 = scalar_select %p230, %s229, 575
      %s232 = smul.addr %s231, 4
      %s233 = scalar_lea.vmem %s1, %s232
      %p234 = pneg %p76
      %p235 = pneg %p73
      %s236 = smul.u32 18, %s20
      %p237 = scmp.lt.s32.totalorder %s236, 35
      %s238 = scalar_select %p237, %s236, 35
      %s239 = scalar_lea.vmem %s2, %s238
      %p240 = pneg %p102
      %p241 = pneg %p99
      %s242 = smul.u32 18, %s20
      %p243 = scmp.lt.s32.totalorder %s242, 35
      %s244 = scalar_select %p243, %s242, 35
      %s245 = scalar_lea.vmem %s3, %s244
      %p246 = pneg %p128
      %p247 = pneg %p125
      %p248 = pneg %p154
      %p249 = pneg %p151
      %p250 = scmp.lt.s32.totalorder %s19, 0
      %s251 = scalar_select %p250, %s19, 0
      %s252 = smul.addr %s251, 8
      %s253 = scalar_lea.vmem %s4, %s252
      %s254 = smul.u32 18, %s20
      %p255 = scmp.lt.s32.totalorder %s19, 0
      %s256 = scalar_select %p255, %s19, 0
      %p257 = scmp.lt.s32.totalorder %s254, 35
      %s258 = scalar_select %p257, %s254, 35
      %s259 = smul.addr %s256, 36
      %s260 = sadd.s32 %s258, %s259
      %s261 = smul.addr %s260, 8
      %s262 = scalar_lea.vmem %s0, %s261
      %s263 = smul.u32 18, %s20
      %s264 = smul.u32 288, %s20
      %p265 = scmp.lt.s32.totalorder %s264, 575
      %s266 = scalar_select %p265, %s264, 575
      %s267 = smul.addr %s266, 4
      %s268 = scalar_lea.vmem %s1, %s267
      %s269 = smul.u32 288, %s20
      %s270 = smul.u32 18, %s20
      %p271 = scmp.lt.s32.totalorder %s270, 35
      %s272 = scalar_select %p271, %s270, 35
      %s273 = scalar_lea.vmem %s2, %s272
      %s274 = smul.u32 18, %s20
      %s275 = smul.u32 18, %s20
      %p276 = scmp.lt.s32.totalorder %s275, 35
      %s277 = scalar_select %p276, %s275, 35
      %s278 = scalar_lea.vmem %s3, %s277
      %s279 = smul.u32 18, %s20
      %p280 = scmp.lt.s32.totalorder %s19, 0
      %s281 = scalar_select %p280, %s19, 0
      %s282 = smul.addr %s281, 8
      %s283 = scalar_lea.vmem %s4, %s282
      %v285 = vld [vmem:[%s262] sm:$0xff]
      %v286 = vld [vmem:[%s262 + $0x8] sm:$0xff]
      %v287 = vld [vmem:[%s262 + $0x10] sm:$0xff]
      %v288 = vld [vmem:[%s262 + $0x18] sm:$0xff]
      %v289 = vld [vmem:[%s262 + $0x20] sm:$0xff]
      %v290 = vld [vmem:[%s262 + $0x28] sm:$0xff]
      %v291 = vld [vmem:[%s262 + $0x30] sm:$0xff]
      %v292 = vld [vmem:[%s262 + $0x38] sm:$0xff]
      %v293 = vld [vmem:[%s262 + $0x40] sm:$0xff]
      %v294 = vld [vmem:[%s262 + $0x48] sm:$0xff]
      %v295 = vld [vmem:[%s262 + $0x50] sm:$0xff]
      %v296 = vld [vmem:[%s262 + $0x58] sm:$0xff]
      %v297 = vld [vmem:[%s262 + $0x60] sm:$0xff]
      %v298 = vld [vmem:[%s262 + $0x68] sm:$0xff]
      %v299 = vld [vmem:[%s262 + $0x70] sm:$0xff]
      %v300 = vld [vmem:[%s262 + $0x78] sm:$0xff]
      %v301 = vld [vmem:[%s262 + $0x80] sm:$0xff]
      %v302 = vld [vmem:[%s262 + $0x88] sm:$0xff]
      %v303 = vld [vmem:[%s273] sm:$0xff]
      %v304 = vld [vmem:[%s273 + $0x8] sm:$0xff]
      %v305 = vld [vmem:[%s273 + $0x10] sm:$0x3]
      %v309 = vlaneseq
      %v310 = vshrl.u32 %v309, 7
      %v311 = vsub.s32 0, %v310
      %v312 = vrot.slane %v303, %v311
      %v313 = vlaneseq
      %v314 = vshrl.u32 %v313, 7
      %v315 = vsub.s32 1, %v314
      %v316 = vrot.slane %v303, %v315
      %v317 = vlaneseq
      %v318 = vshrl.u32 %v317, 7
      %v319 = vsub.s32 2, %v318
      %v320 = vrot.slane %v303, %v319
      %v321 = vlaneseq
      %v322 = vshrl.u32 %v321, 7
      %v323 = vsub.s32 3, %v322
      %v324 = vrot.slane %v303, %v323
      %v325 = vlaneseq
      %v326 = vshrl.u32 %v325, 7
      %v327 = vsub.s32 4, %v326
      %v328 = vrot.slane %v303, %v327
      %v329 = vlaneseq
      %v330 = vshrl.u32 %v329, 7
      %v331 = vsub.s32 5, %v330
      %v332 = vrot.slane %v303, %v331
      %v333 = vlaneseq
      %v334 = vshrl.u32 %v333, 7
      %v335 = vsub.s32 6, %v334
      %v336 = vrot.slane %v303, %v335
      %v337 = vlaneseq
      %v338 = vshrl.u32 %v337, 7
      %v339 = vsub.s32 7, %v338
      %v340 = vrot.slane %v303, %v339
      %v341 = vlaneseq
      %v342 = vshrl.u32 %v341, 7
      %v343 = vsub.s32 0, %v342
      %v344 = vrot.slane %v304, %v343
      %v345 = vlaneseq
      %v346 = vshrl.u32 %v345, 7
      %v347 = vsub.s32 1, %v346
      %v348 = vrot.slane %v304, %v347
      %v349 = vlaneseq
      %v350 = vshrl.u32 %v349, 7
      %v351 = vsub.s32 2, %v350
      %v352 = vrot.slane %v304, %v351
      %v353 = vlaneseq
      %v354 = vshrl.u32 %v353, 7
      %v355 = vsub.s32 3, %v354
      %v356 = vrot.slane %v304, %v355
      %v357 = vlaneseq
      %v358 = vshrl.u32 %v357, 7
      %v359 = vsub.s32 4, %v358
      %v360 = vrot.slane %v304, %v359
      %v361 = vlaneseq
      %v362 = vshrl.u32 %v361, 7
      %v363 = vsub.s32 5, %v362
      %v364 = vrot.slane %v304, %v363
      %v365 = vlaneseq
      %v366 = vshrl.u32 %v365, 7
      %v367 = vsub.s32 6, %v366
      %v368 = vrot.slane %v304, %v367
      %v369 = vlaneseq
      %v370 = vshrl.u32 %v369, 7
      %v371 = vsub.s32 7, %v370
      %v372 = vrot.slane %v304, %v371
      %v373 = vlaneseq
      %v374 = vshrl.u32 %v373, 7
      %v375 = vsub.s32 0, %v374
      %v376 = vrot.slane %v305, %v375
      %v377 = vlaneseq
      %v378 = vshrl.u32 %v377, 7
      %v379 = vsub.s32 1, %v378
      %v380 = vrot.slane %v305, %v379
      %v399 = vmul.f32 %v285, %v312
      %v400 = vmul.f32 %v286, %v316
      %v401 = vmul.f32 %v287, %v320
      %v402 = vmul.f32 %v288, %v324
      %v403 = vmul.f32 %v289, %v328
      %v404 = vmul.f32 %v290, %v332
      %v405 = vmul.f32 %v291, %v336
      %v406 = vmul.f32 %v292, %v340
      %v407 = vmul.f32 %v293, %v344
      %v408 = vmul.f32 %v294, %v348
      %v409 = vmul.f32 %v295, %v352
      %v410 = vmul.f32 %v296, %v356
      %v411 = vmul.f32 %v297, %v360
      %v412 = vmul.f32 %v298, %v364
      %v413 = vmul.f32 %v299, %v368
      %v414 = vmul.f32 %v300, %v372
      %v415 = vmul.f32 %v301, %v376
      %v416 = vmul.f32 %v302, %v380
      %v417 = vld [vmem:[%s278] sm:$0xff]
      %v418 = vld [vmem:[%s278 + $0x8] sm:$0xff]
      %v419 = vld [vmem:[%s278 + $0x10] sm:$0x3]
      %v423 = vlaneseq
      %v424 = vshrl.u32 %v423, 7
      %v425 = vsub.s32 0, %v424
      %v426 = vrot.slane %v417, %v425
      %v427 = vlaneseq
      %v428 = vshrl.u32 %v427, 7
      %v429 = vsub.s32 1, %v428
      %v430 = vrot.slane %v417, %v429
      %v431 = vlaneseq
      %v432 = vshrl.u32 %v431, 7
      %v433 = vsub.s32 2, %v432
      %v434 = vrot.slane %v417, %v433
      %v435 = vlaneseq
      %v436 = vshrl.u32 %v435, 7
      %v437 = vsub.s32 3, %v436
      %v438 = vrot.slane %v417, %v437
      %v439 = vlaneseq
      %v440 = vshrl.u32 %v439, 7
      %v441 = vsub.s32 4, %v440
      %v442 = vrot.slane %v417, %v441
      %v443 = vlaneseq
      %v444 = vshrl.u32 %v443, 7
      %v445 = vsub.s32 5, %v444
      %v446 = vrot.slane %v417, %v445
      %v447 = vlaneseq
      %v448 = vshrl.u32 %v447, 7
      %v449 = vsub.s32 6, %v448
      %v450 = vrot.slane %v417, %v449
      %v451 = vlaneseq
      %v452 = vshrl.u32 %v451, 7
      %v453 = vsub.s32 7, %v452
      %v454 = vrot.slane %v417, %v453
      %v455 = vlaneseq
      %v456 = vshrl.u32 %v455, 7
      %v457 = vsub.s32 0, %v456
      %v458 = vrot.slane %v418, %v457
      %v459 = vlaneseq
      %v460 = vshrl.u32 %v459, 7
      %v461 = vsub.s32 1, %v460
      %v462 = vrot.slane %v418, %v461
      %v463 = vlaneseq
      %v464 = vshrl.u32 %v463, 7
      %v465 = vsub.s32 2, %v464
      %v466 = vrot.slane %v418, %v465
      %v467 = vlaneseq
      %v468 = vshrl.u32 %v467, 7
      %v469 = vsub.s32 3, %v468
      %v470 = vrot.slane %v418, %v469
      %v471 = vlaneseq
      %v472 = vshrl.u32 %v471, 7
      %v473 = vsub.s32 4, %v472
      %v474 = vrot.slane %v418, %v473
      %v475 = vlaneseq
      %v476 = vshrl.u32 %v475, 7
      %v477 = vsub.s32 5, %v476
      %v478 = vrot.slane %v418, %v477
      %v479 = vlaneseq
      %v480 = vshrl.u32 %v479, 7
      %v481 = vsub.s32 6, %v480
      %v482 = vrot.slane %v418, %v481
      %v483 = vlaneseq
      %v484 = vshrl.u32 %v483, 7
      %v485 = vsub.s32 7, %v484
      %v486 = vrot.slane %v418, %v485
      %v487 = vlaneseq
      %v488 = vshrl.u32 %v487, 7
      %v489 = vsub.s32 0, %v488
      %v490 = vrot.slane %v419, %v489
      %v491 = vlaneseq
      %v492 = vshrl.u32 %v491, 7
      %v493 = vsub.s32 1, %v492
      %v494 = vrot.slane %v419, %v493
      %v513 = vadd.f32 %v399, %v426
      %v514 = vadd.f32 %v400, %v430
      %v515 = vadd.f32 %v401, %v434
      %v516 = vadd.f32 %v402, %v438
      %v517 = vadd.f32 %v403, %v442
      %v518 = vadd.f32 %v404, %v446
      %v519 = vadd.f32 %v405, %v450
      %v520 = vadd.f32 %v406, %v454
      %v521 = vadd.f32 %v407, %v458
      %v522 = vadd.f32 %v408, %v462
      %v523 = vadd.f32 %v409, %v466
      %v524 = vadd.f32 %v410, %v470
      %v525 = vadd.f32 %v411, %v474
      %v526 = vadd.f32 %v412, %v478
      %v527 = vadd.f32 %v413, %v482
      %v528 = vadd.f32 %v414, %v486
      %v529 = vadd.f32 %v415, %v490
      %v530 = vadd.f32 %v416, %v494
      %vm531 = vcmp.ge.f32.partialorder %v513, 0.0
      %vm532 = vcmp.ge.f32.partialorder %v514, 0.0
      %vm533 = vcmp.ge.f32.partialorder %v515, 0.0
      %vm534 = vcmp.ge.f32.partialorder %v516, 0.0
      %vm535 = vcmp.ge.f32.partialorder %v517, 0.0
      %vm536 = vcmp.ge.f32.partialorder %v518, 0.0
      %vm537 = vcmp.ge.f32.partialorder %v519, 0.0
      %vm538 = vcmp.ge.f32.partialorder %v520, 0.0
      %vm539 = vcmp.ge.f32.partialorder %v521, 0.0
      %vm540 = vcmp.ge.f32.partialorder %v522, 0.0
      %vm541 = vcmp.ge.f32.partialorder %v523, 0.0
      %vm542 = vcmp.ge.f32.partialorder %v524, 0.0
      %vm543 = vcmp.ge.f32.partialorder %v525, 0.0
      %vm544 = vcmp.ge.f32.partialorder %v526, 0.0
      %vm545 = vcmp.ge.f32.partialorder %v527, 0.0
      %vm546 = vcmp.ge.f32.partialorder %v528, 0.0
      %vm547 = vcmp.ge.f32.partialorder %v529, 0.0
      %vm548 = vcmp.ge.f32.partialorder %v530, 0.0
      %v549 = vmul.f32 %v513, 0.2
      %v550 = vmul.f32 %v514, 0.2
      %v551 = vmul.f32 %v515, 0.2
      %v552 = vmul.f32 %v516, 0.2
      %v553 = vmul.f32 %v517, 0.2
      %v554 = vmul.f32 %v518, 0.2
      %v555 = vmul.f32 %v519, 0.2
      %v556 = vmul.f32 %v520, 0.2
      %v557 = vmul.f32 %v521, 0.2
      %v558 = vmul.f32 %v522, 0.2
      %v559 = vmul.f32 %v523, 0.2
      %v560 = vmul.f32 %v524, 0.2
      %v561 = vmul.f32 %v525, 0.2
      %v562 = vmul.f32 %v526, 0.2
      %v563 = vmul.f32 %v527, 0.2
      %v564 = vmul.f32 %v528, 0.2
      %v565 = vmul.f32 %v529, 0.2
      %v566 = vmul.f32 %v530, 0.2
      %v567 = vsel %vm531, %v513, %v549
      %v568 = vsel %vm532, %v514, %v550
      %v569 = vsel %vm533, %v515, %v551
      %v570 = vsel %vm534, %v516, %v552
      %v571 = vsel %vm535, %v517, %v553
      %v572 = vsel %vm536, %v518, %v554
      %v573 = vsel %vm537, %v519, %v555
      %v574 = vsel %vm538, %v520, %v556
      %v575 = vsel %vm539, %v521, %v557
      %v576 = vsel %vm540, %v522, %v558
      %v577 = vsel %vm541, %v523, %v559
      %v578 = vsel %vm542, %v524, %v560
      %v579 = vsel %vm543, %v525, %v561
      %v580 = vsel %vm544, %v526, %v562
      %v581 = vsel %vm545, %v527, %v563
      %v582 = vsel %vm546, %v528, %v564
      %v583 = vsel %vm547, %v529, %v565
      %v584 = vsel %vm548, %v530, %v566
      %v585 = vpack.c.bf16 %v567, %v567
      %v586 = vpack.c.bf16 %v568, %v568
      %v587 = vpack.c.bf16 %v569, %v569
      %v588 = vpack.c.bf16 %v570, %v570
      %v589 = vpack.c.bf16 %v571, %v571
      %v590 = vpack.c.bf16 %v572, %v572
      %v591 = vpack.c.bf16 %v573, %v573
      %v592 = vpack.c.bf16 %v574, %v574
      %v593 = vpack.c.bf16 %v575, %v575
      %v594 = vpack.c.bf16 %v576, %v576
      %v595 = vpack.c.bf16 %v577, %v577
      %v596 = vpack.c.bf16 %v578, %v578
      %v597 = vpack.c.bf16 %v579, %v579
      %v598 = vpack.c.bf16 %v580, %v580
      %v599 = vpack.c.bf16 %v581, %v581
      %v600 = vpack.c.bf16 %v582, %v582
      %v601 = vpack.c.bf16 %v583, %v583
      %v602 = vpack.c.bf16 %v584, %v584
      %v603 = vld [vmem:[%s268] sm:$0xf]
      %v604 = vld [vmem:[%s268 + $0x4] sm:$0xf]
      %v605 = vld [vmem:[%s268 + $0x8] sm:$0xf]
      %v606 = vld [vmem:[%s268 + $0xc] sm:$0xf]
      %v607 = vld [vmem:[%s268 + $0x10] sm:$0xf]
      %v608 = vld [vmem:[%s268 + $0x14] sm:$0xf]
      %v609 = vld [vmem:[%s268 + $0x18] sm:$0xf]
      %v610 = vld [vmem:[%s268 + $0x1c] sm:$0xf]
      %v611 = vld [vmem:[%s268 + $0x20] sm:$0xf]
      %v612 = vld [vmem:[%s268 + $0x24] sm:$0xf]
      %v613 = vld [vmem:[%s268 + $0x28] sm:$0xf]
      %v614 = vld [vmem:[%s268 + $0x2c] sm:$0xf]
      %v615 = vld [vmem:[%s268 + $0x30] sm:$0xf]
      %v616 = vld [vmem:[%s268 + $0x34] sm:$0xf]
      %v617 = vld [vmem:[%s268 + $0x38] sm:$0xf]
      %v618 = vld [vmem:[%s268 + $0x3c] sm:$0xf]
      %v619 = vld [vmem:[%s268 + $0x40] sm:$0xf]
      %v620 = vld [vmem:[%s268 + $0x44] sm:$0xf]
      %v621 = vld [vmem:[%s268 + $0x48] sm:$0xf]
      %v622 = vld [vmem:[%s268 + $0x4c] sm:$0xf]
      %v623 = vld [vmem:[%s268 + $0x50] sm:$0xf]
      %v624 = vld [vmem:[%s268 + $0x54] sm:$0xf]
      %v625 = vld [vmem:[%s268 + $0x58] sm:$0xf]
      %v626 = vld [vmem:[%s268 + $0x5c] sm:$0xf]
      %v627 = vld [vmem:[%s268 + $0x60] sm:$0xf]
      %v628 = vld [vmem:[%s268 + $0x64] sm:$0xf]
      %v629 = vld [vmem:[%s268 + $0x68] sm:$0xf]
      %v630 = vld [vmem:[%s268 + $0x6c] sm:$0xf]
      %v631 = vld [vmem:[%s268 + $0x70] sm:$0xf]
      %v632 = vld [vmem:[%s268 + $0x74] sm:$0xf]
      %v633 = vld [vmem:[%s268 + $0x78] sm:$0xf]
      %v634 = vld [vmem:[%s268 + $0x7c] sm:$0xf]
      %v635 = vld [vmem:[%s268 + $0x80] sm:$0xf]
      %v636 = vld [vmem:[%s268 + $0x84] sm:$0xf]
      %v637 = vld [vmem:[%s268 + $0x88] sm:$0xf]
      %v638 = vld [vmem:[%s268 + $0x8c] sm:$0xf]
      %v639 = vld [vmem:[%s268 + $0x90] sm:$0xf]
      %v640 = vld [vmem:[%s268 + $0x94] sm:$0xf]
      %v641 = vld [vmem:[%s268 + $0x98] sm:$0xf]
      %v642 = vld [vmem:[%s268 + $0x9c] sm:$0xf]
      %v643 = vld [vmem:[%s268 + $0xa0] sm:$0xf]
      %v644 = vld [vmem:[%s268 + $0xa4] sm:$0xf]
      %v645 = vld [vmem:[%s268 + $0xa8] sm:$0xf]
      %v646 = vld [vmem:[%s268 + $0xac] sm:$0xf]
      %v647 = vld [vmem:[%s268 + $0xb0] sm:$0xf]
      %v648 = vld [vmem:[%s268 + $0xb4] sm:$0xf]
      %v649 = vld [vmem:[%s268 + $0xb8] sm:$0xf]
      %v650 = vld [vmem:[%s268 + $0xbc] sm:$0xf]
      %v651 = vld [vmem:[%s268 + $0xc0] sm:$0xf]
      %v652 = vld [vmem:[%s268 + $0xc4] sm:$0xf]
      %v653 = vld [vmem:[%s268 + $0xc8] sm:$0xf]
      %v654 = vld [vmem:[%s268 + $0xcc] sm:$0xf]
      %v655 = vld [vmem:[%s268 + $0xd0] sm:$0xf]
      %v656 = vld [vmem:[%s268 + $0xd4] sm:$0xf]
      %v657 = vld [vmem:[%s268 + $0xd8] sm:$0xf]
      %v658 = vld [vmem:[%s268 + $0xdc] sm:$0xf]
      %v659 = vld [vmem:[%s268 + $0xe0] sm:$0xf]
      %v660 = vld [vmem:[%s268 + $0xe4] sm:$0xf]
      %v661 = vld [vmem:[%s268 + $0xe8] sm:$0xf]
      %v662 = vld [vmem:[%s268 + $0xec] sm:$0xf]
      %v663 = vld [vmem:[%s268 + $0xf0] sm:$0xf]
      %v664 = vld [vmem:[%s268 + $0xf4] sm:$0xf]
      %v665 = vld [vmem:[%s268 + $0xf8] sm:$0xf]
      %v666 = vld [vmem:[%s268 + $0xfc] sm:$0xf]
      %v667 = vld [vmem:[%s268 + $0x100] sm:$0xf]
      %v668 = vld [vmem:[%s268 + $0x104] sm:$0xf]
      %v669 = vld [vmem:[%s268 + $0x108] sm:$0xf]
      %v670 = vld [vmem:[%s268 + $0x10c] sm:$0xf]
      %v671 = vld [vmem:[%s268 + $0x110] sm:$0xf]
      %v672 = vld [vmem:[%s268 + $0x114] sm:$0xf]
      %v673 = vld [vmem:[%s268 + $0x118] sm:$0xf]
      %v674 = vld [vmem:[%s268 + $0x11c] sm:$0xf]
      %v675 = vld [vmem:[%s268 + $0x120] sm:$0xf]
      %v676 = vld [vmem:[%s268 + $0x124] sm:$0xf]
      %v677 = vld [vmem:[%s268 + $0x128] sm:$0xf]
      %v678 = vld [vmem:[%s268 + $0x12c] sm:$0xf]
      %v679 = vld [vmem:[%s268 + $0x130] sm:$0xf]
      %v680 = vld [vmem:[%s268 + $0x134] sm:$0xf]
      %v681 = vld [vmem:[%s268 + $0x138] sm:$0xf]
      %v682 = vld [vmem:[%s268 + $0x13c] sm:$0xf]
      %v683 = vld [vmem:[%s268 + $0x140] sm:$0xf]
      %v684 = vld [vmem:[%s268 + $0x144] sm:$0xf]
      %v685 = vld [vmem:[%s268 + $0x148] sm:$0xf]
      %v686 = vld [vmem:[%s268 + $0x14c] sm:$0xf]
      %v687 = vld [vmem:[%s268 + $0x150] sm:$0xf]
      %v688 = vld [vmem:[%s268 + $0x154] sm:$0xf]
      %v689 = vld [vmem:[%s268 + $0x158] sm:$0xf]
      %v690 = vld [vmem:[%s268 + $0x15c] sm:$0xf]
      %v691 = vld [vmem:[%s268 + $0x160] sm:$0xf]
      %v692 = vld [vmem:[%s268 + $0x164] sm:$0xf]
      %v693 = vld [vmem:[%s268 + $0x168] sm:$0xf]
      %v694 = vld [vmem:[%s268 + $0x16c] sm:$0xf]
      %v695 = vld [vmem:[%s268 + $0x170] sm:$0xf]
      %v696 = vld [vmem:[%s268 + $0x174] sm:$0xf]
      %v697 = vld [vmem:[%s268 + $0x178] sm:$0xf]
      %v698 = vld [vmem:[%s268 + $0x17c] sm:$0xf]
      %v699 = vld [vmem:[%s268 + $0x180] sm:$0xf]
      %v700 = vld [vmem:[%s268 + $0x184] sm:$0xf]
      %v701 = vld [vmem:[%s268 + $0x188] sm:$0xf]
      %v702 = vld [vmem:[%s268 + $0x18c] sm:$0xf]
      %v703 = vld [vmem:[%s268 + $0x190] sm:$0xf]
      %v704 = vld [vmem:[%s268 + $0x194] sm:$0xf]
      %v705 = vld [vmem:[%s268 + $0x198] sm:$0xf]
      %v706 = vld [vmem:[%s268 + $0x19c] sm:$0xf]
      %v707 = vld [vmem:[%s268 + $0x1a0] sm:$0xf]
      %v708 = vld [vmem:[%s268 + $0x1a4] sm:$0xf]
      %v709 = vld [vmem:[%s268 + $0x1a8] sm:$0xf]
      %v710 = vld [vmem:[%s268 + $0x1ac] sm:$0xf]
      %v711 = vld [vmem:[%s268 + $0x1b0] sm:$0xf]
      %v712 = vld [vmem:[%s268 + $0x1b4] sm:$0xf]
      %v713 = vld [vmem:[%s268 + $0x1b8] sm:$0xf]
      %v714 = vld [vmem:[%s268 + $0x1bc] sm:$0xf]
      %v715 = vld [vmem:[%s268 + $0x1c0] sm:$0xf]
      %v716 = vld [vmem:[%s268 + $0x1c4] sm:$0xf]
      %v717 = vld [vmem:[%s268 + $0x1c8] sm:$0xf]
      %v718 = vld [vmem:[%s268 + $0x1cc] sm:$0xf]
      %v719 = vld [vmem:[%s268 + $0x1d0] sm:$0xf]
      %v720 = vld [vmem:[%s268 + $0x1d4] sm:$0xf]
      %v721 = vld [vmem:[%s268 + $0x1d8] sm:$0xf]
      %v722 = vld [vmem:[%s268 + $0x1dc] sm:$0xf]
      %v723 = vld [vmem:[%s268 + $0x1e0] sm:$0xf]
      %v724 = vld [vmem:[%s268 + $0x1e4] sm:$0xf]
      %v725 = vld [vmem:[%s268 + $0x1e8] sm:$0xf]
      %v726 = vld [vmem:[%s268 + $0x1ec] sm:$0xf]
      %v727 = vld [vmem:[%s268 + $0x1f0] sm:$0xf]
      %v728 = vld [vmem:[%s268 + $0x1f4] sm:$0xf]
      %v729 = vld [vmem:[%s268 + $0x1f8] sm:$0xf]
      %v730 = vld [vmem:[%s268 + $0x1fc] sm:$0xf]
      %v731 = vld [vmem:[%s268 + $0x200] sm:$0xf]
      %v732 = vld [vmem:[%s268 + $0x204] sm:$0xf]
      %v733 = vld [vmem:[%s268 + $0x208] sm:$0xf]
      %v734 = vld [vmem:[%s268 + $0x20c] sm:$0xf]
      %v735 = vld [vmem:[%s268 + $0x210] sm:$0xf]
      %v736 = vld [vmem:[%s268 + $0x214] sm:$0xf]
      %v737 = vld [vmem:[%s268 + $0x218] sm:$0xf]
      %v738 = vld [vmem:[%s268 + $0x21c] sm:$0xf]
      %v739 = vld [vmem:[%s268 + $0x220] sm:$0xf]
      %v740 = vld [vmem:[%s268 + $0x224] sm:$0xf]
      %v741 = vld [vmem:[%s268 + $0x228] sm:$0xf]
      %v742 = vld [vmem:[%s268 + $0x22c] sm:$0xf]
      %v743 = vld [vmem:[%s268 + $0x230] sm:$0xf]
      %v744 = vld [vmem:[%s268 + $0x234] sm:$0xf]
      %v745 = vld [vmem:[%s268 + $0x238] sm:$0xf]
      %v746 = vld [vmem:[%s268 + $0x23c] sm:$0xf]
      %v747 = vld [vmem:[%s268 + $0x240] sm:$0xf]
      %v748 = vld [vmem:[%s268 + $0x244] sm:$0xf]
      %v749 = vld [vmem:[%s268 + $0x248] sm:$0xf]
      %v750 = vld [vmem:[%s268 + $0x24c] sm:$0xf]
      %v751 = vld [vmem:[%s268 + $0x250] sm:$0xf]
      %v752 = vld [vmem:[%s268 + $0x254] sm:$0xf]
      %v753 = vld [vmem:[%s268 + $0x258] sm:$0xf]
      %v754 = vld [vmem:[%s268 + $0x25c] sm:$0xf]
      %v755 = vld [vmem:[%s268 + $0x260] sm:$0xf]
      %v756 = vld [vmem:[%s268 + $0x264] sm:$0xf]
      %v757 = vld [vmem:[%s268 + $0x268] sm:$0xf]
      %v758 = vld [vmem:[%s268 + $0x26c] sm:$0xf]
      %v759 = vld [vmem:[%s268 + $0x270] sm:$0xf]
      %v760 = vld [vmem:[%s268 + $0x274] sm:$0xf]
      %v761 = vld [vmem:[%s268 + $0x278] sm:$0xf]
      %v762 = vld [vmem:[%s268 + $0x27c] sm:$0xf]
      %v763 = vld [vmem:[%s268 + $0x280] sm:$0xf]
      %v764 = vld [vmem:[%s268 + $0x284] sm:$0xf]
      %v765 = vld [vmem:[%s268 + $0x288] sm:$0xf]
      %v766 = vld [vmem:[%s268 + $0x28c] sm:$0xf]
      %v767 = vld [vmem:[%s268 + $0x290] sm:$0xf]
      %v768 = vld [vmem:[%s268 + $0x294] sm:$0xf]
      %v769 = vld [vmem:[%s268 + $0x298] sm:$0xf]
      %v770 = vld [vmem:[%s268 + $0x29c] sm:$0xf]
      %v771 = vld [vmem:[%s268 + $0x2a0] sm:$0xf]
      %v772 = vld [vmem:[%s268 + $0x2a4] sm:$0xf]
      %v773 = vld [vmem:[%s268 + $0x2a8] sm:$0xf]
      %v774 = vld [vmem:[%s268 + $0x2ac] sm:$0xf]
      %v775 = vld [vmem:[%s268 + $0x2b0] sm:$0xf]
      %v776 = vld [vmem:[%s268 + $0x2b4] sm:$0xf]
      %v777 = vld [vmem:[%s268 + $0x2b8] sm:$0xf]
      %v778 = vld [vmem:[%s268 + $0x2bc] sm:$0xf]
      %v779 = vld [vmem:[%s268 + $0x2c0] sm:$0xf]
      %v780 = vld [vmem:[%s268 + $0x2c4] sm:$0xf]
      %v781 = vld [vmem:[%s268 + $0x2c8] sm:$0xf]
      %v782 = vld [vmem:[%s268 + $0x2cc] sm:$0xf]
      %v783 = vld [vmem:[%s268 + $0x2d0] sm:$0xf]
      %v784 = vld [vmem:[%s268 + $0x2d4] sm:$0xf]
      %v785 = vld [vmem:[%s268 + $0x2d8] sm:$0xf]
      %v786 = vld [vmem:[%s268 + $0x2dc] sm:$0xf]
      %v787 = vld [vmem:[%s268 + $0x2e0] sm:$0xf]
      %v788 = vld [vmem:[%s268 + $0x2e4] sm:$0xf]
      %v789 = vld [vmem:[%s268 + $0x2e8] sm:$0xf]
      %v790 = vld [vmem:[%s268 + $0x2ec] sm:$0xf]
      %v791 = vld [vmem:[%s268 + $0x2f0] sm:$0xf]
      %v792 = vld [vmem:[%s268 + $0x2f4] sm:$0xf]
      %v793 = vld [vmem:[%s268 + $0x2f8] sm:$0xf]
      %v794 = vld [vmem:[%s268 + $0x2fc] sm:$0xf]
      %v795 = vld [vmem:[%s268 + $0x300] sm:$0xf]
      %v796 = vld [vmem:[%s268 + $0x304] sm:$0xf]
      %v797 = vld [vmem:[%s268 + $0x308] sm:$0xf]
      %v798 = vld [vmem:[%s268 + $0x30c] sm:$0xf]
      %v799 = vld [vmem:[%s268 + $0x310] sm:$0xf]
      %v800 = vld [vmem:[%s268 + $0x314] sm:$0xf]
      %v801 = vld [vmem:[%s268 + $0x318] sm:$0xf]
      %v802 = vld [vmem:[%s268 + $0x31c] sm:$0xf]
      %v803 = vld [vmem:[%s268 + $0x320] sm:$0xf]
      %v804 = vld [vmem:[%s268 + $0x324] sm:$0xf]
      %v805 = vld [vmem:[%s268 + $0x328] sm:$0xf]
      %v806 = vld [vmem:[%s268 + $0x32c] sm:$0xf]
      %v807 = vld [vmem:[%s268 + $0x330] sm:$0xf]
      %v808 = vld [vmem:[%s268 + $0x334] sm:$0xf]
      %v809 = vld [vmem:[%s268 + $0x338] sm:$0xf]
      %v810 = vld [vmem:[%s268 + $0x33c] sm:$0xf]
      %v811 = vld [vmem:[%s268 + $0x340] sm:$0xf]
      %v812 = vld [vmem:[%s268 + $0x344] sm:$0xf]
      %v813 = vld [vmem:[%s268 + $0x348] sm:$0xf]
      %v814 = vld [vmem:[%s268 + $0x34c] sm:$0xf]
      %v815 = vld [vmem:[%s268 + $0x350] sm:$0xf]
      %v816 = vld [vmem:[%s268 + $0x354] sm:$0xf]
      %v817 = vld [vmem:[%s268 + $0x358] sm:$0xf]
      %v818 = vld [vmem:[%s268 + $0x35c] sm:$0xf]
      %v819 = vld [vmem:[%s268 + $0x360] sm:$0xf]
      %v820 = vld [vmem:[%s268 + $0x364] sm:$0xf]
      %v821 = vld [vmem:[%s268 + $0x368] sm:$0xf]
      %v822 = vld [vmem:[%s268 + $0x36c] sm:$0xf]
      %v823 = vld [vmem:[%s268 + $0x370] sm:$0xf]
      %v824 = vld [vmem:[%s268 + $0x374] sm:$0xf]
      %v825 = vld [vmem:[%s268 + $0x378] sm:$0xf]
      %v826 = vld [vmem:[%s268 + $0x37c] sm:$0xf]
      %v827 = vld [vmem:[%s268 + $0x380] sm:$0xf]
      %v828 = vld [vmem:[%s268 + $0x384] sm:$0xf]
      %v829 = vld [vmem:[%s268 + $0x388] sm:$0xf]
      %v830 = vld [vmem:[%s268 + $0x38c] sm:$0xf]
      %v831 = vld [vmem:[%s268 + $0x390] sm:$0xf]
      %v832 = vld [vmem:[%s268 + $0x394] sm:$0xf]
      %v833 = vld [vmem:[%s268 + $0x398] sm:$0xf]
      %v834 = vld [vmem:[%s268 + $0x39c] sm:$0xf]
      %v835 = vld [vmem:[%s268 + $0x3a0] sm:$0xf]
      %v836 = vld [vmem:[%s268 + $0x3a4] sm:$0xf]
      %v837 = vld [vmem:[%s268 + $0x3a8] sm:$0xf]
      %v838 = vld [vmem:[%s268 + $0x3ac] sm:$0xf]
      %v839 = vld [vmem:[%s268 + $0x3b0] sm:$0xf]
      %v840 = vld [vmem:[%s268 + $0x3b4] sm:$0xf]
      %v841 = vld [vmem:[%s268 + $0x3b8] sm:$0xf]
      %v842 = vld [vmem:[%s268 + $0x3bc] sm:$0xf]
      %v843 = vld [vmem:[%s268 + $0x3c0] sm:$0xf]
      %v844 = vld [vmem:[%s268 + $0x3c4] sm:$0xf]
      %v845 = vld [vmem:[%s268 + $0x3c8] sm:$0xf]
      %v846 = vld [vmem:[%s268 + $0x3cc] sm:$0xf]
      %v847 = vld [vmem:[%s268 + $0x3d0] sm:$0xf]
      %v848 = vld [vmem:[%s268 + $0x3d4] sm:$0xf]
      %v849 = vld [vmem:[%s268 + $0x3d8] sm:$0xf]
      %v850 = vld [vmem:[%s268 + $0x3dc] sm:$0xf]
      %v851 = vld [vmem:[%s268 + $0x3e0] sm:$0xf]
      %v852 = vld [vmem:[%s268 + $0x3e4] sm:$0xf]
      %v853 = vld [vmem:[%s268 + $0x3e8] sm:$0xf]
      %v854 = vld [vmem:[%s268 + $0x3ec] sm:$0xf]
      %v855 = vld [vmem:[%s268 + $0x3f0] sm:$0xf]
      %v856 = vld [vmem:[%s268 + $0x3f4] sm:$0xf]
      %v857 = vld [vmem:[%s268 + $0x3f8] sm:$0xf]
      %v858 = vld [vmem:[%s268 + $0x3fc] sm:$0xf]
      %v859 = vld [vmem:[%s268 + $0x400] sm:$0xf]
      %v860 = vld [vmem:[%s268 + $0x404] sm:$0xf]
      %v861 = vld [vmem:[%s268 + $0x408] sm:$0xf]
      %v862 = vld [vmem:[%s268 + $0x40c] sm:$0xf]
      %v863 = vld [vmem:[%s268 + $0x410] sm:$0xf]
      %v864 = vld [vmem:[%s268 + $0x414] sm:$0xf]
      %v865 = vld [vmem:[%s268 + $0x418] sm:$0xf]
      %v866 = vld [vmem:[%s268 + $0x41c] sm:$0xf]
      %v867 = vld [vmem:[%s268 + $0x420] sm:$0xf]
      %v868 = vld [vmem:[%s268 + $0x424] sm:$0xf]
      %v869 = vld [vmem:[%s268 + $0x428] sm:$0xf]
      %v870 = vld [vmem:[%s268 + $0x42c] sm:$0xf]
      %v871 = vld [vmem:[%s268 + $0x430] sm:$0xf]
      %v872 = vld [vmem:[%s268 + $0x434] sm:$0xf]
      %v873 = vld [vmem:[%s268 + $0x438] sm:$0xf]
      %v874 = vld [vmem:[%s268 + $0x43c] sm:$0xf]
      %v875 = vld [vmem:[%s268 + $0x440] sm:$0xf]
      %v876 = vld [vmem:[%s268 + $0x444] sm:$0xf]
      %v877 = vld [vmem:[%s268 + $0x448] sm:$0xf]
      %v878 = vld [vmem:[%s268 + $0x44c] sm:$0xf]
      %v879 = vld [vmem:[%s268 + $0x450] sm:$0xf]
      %v880 = vld [vmem:[%s268 + $0x454] sm:$0xf]
      %v881 = vld [vmem:[%s268 + $0x458] sm:$0xf]
      %v882 = vld [vmem:[%s268 + $0x45c] sm:$0xf]
      %v883 = vld [vmem:[%s268 + $0x460] sm:$0xf]
      %v884 = vld [vmem:[%s268 + $0x464] sm:$0xf]
      %v885 = vld [vmem:[%s268 + $0x468] sm:$0xf]
      %v886 = vld [vmem:[%s268 + $0x46c] sm:$0xf]
      %v887 = vld [vmem:[%s268 + $0x470] sm:$0xf]
      %v888 = vld [vmem:[%s268 + $0x474] sm:$0xf]
      %v889 = vld [vmem:[%s268 + $0x478] sm:$0xf]
      %v890 = vld [vmem:[%s268 + $0x47c] sm:$0xf]
      %v1179 = vunpack.c.l.b16 %v603
      %v1180 = vunpack.c.l.b16 %v604
      %v1181 = vunpack.c.l.b16 %v605
      %v1182 = vunpack.c.l.b16 %v606
      %v1183 = vunpack.c.l.b16 %v607
      %v1184 = vunpack.c.l.b16 %v608
      %v1185 = vunpack.c.l.b16 %v609
      %v1186 = vunpack.c.l.b16 %v610
      %v1187 = vunpack.c.l.b16 %v611
      %v1188 = vunpack.c.l.b16 %v612
      %v1189 = vunpack.c.l.b16 %v613
      %v1190 = vunpack.c.l.b16 %v614
      %v1191 = vunpack.c.l.b16 %v615
      %v1192 = vunpack.c.l.b16 %v616
      %v1193 = vunpack.c.l.b16 %v617
      %v1194 = vunpack.c.l.b16 %v618
      %v1195 = vunpack.c.l.b16 %v619
      %v1196 = vunpack.c.l.b16 %v620
      %v1197 = vunpack.c.l.b16 %v621
      %v1198 = vunpack.c.l.b16 %v622
      %v1199 = vunpack.c.l.b16 %v623
      %v1200 = vunpack.c.l.b16 %v624
      %v1201 = vunpack.c.l.b16 %v625
      %v1202 = vunpack.c.l.b16 %v626
      %v1203 = vunpack.c.l.b16 %v627
      %v1204 = vunpack.c.l.b16 %v628
      %v1205 = vunpack.c.l.b16 %v629
      %v1206 = vunpack.c.l.b16 %v630
      %v1207 = vunpack.c.l.b16 %v631
      %v1208 = vunpack.c.l.b16 %v632
      %v1209 = vunpack.c.l.b16 %v633
      %v1210 = vunpack.c.l.b16 %v634
      %v1211 = vunpack.c.l.b16 %v635
      %v1212 = vunpack.c.l.b16 %v636
      %v1213 = vunpack.c.l.b16 %v637
      %v1214 = vunpack.c.l.b16 %v638
      %v1215 = vunpack.c.l.b16 %v639
      %v1216 = vunpack.c.l.b16 %v640
      %v1217 = vunpack.c.l.b16 %v641
      %v1218 = vunpack.c.l.b16 %v642
      %v1219 = vunpack.c.l.b16 %v643
      %v1220 = vunpack.c.l.b16 %v644
      %v1221 = vunpack.c.l.b16 %v645
      %v1222 = vunpack.c.l.b16 %v646
      %v1223 = vunpack.c.l.b16 %v647
      %v1224 = vunpack.c.l.b16 %v648
      %v1225 = vunpack.c.l.b16 %v649
      %v1226 = vunpack.c.l.b16 %v650
      %v1227 = vunpack.c.l.b16 %v651
      %v1228 = vunpack.c.l.b16 %v652
      %v1229 = vunpack.c.l.b16 %v653
      %v1230 = vunpack.c.l.b16 %v654
      %v1231 = vunpack.c.l.b16 %v655
      %v1232 = vunpack.c.l.b16 %v656
      %v1233 = vunpack.c.l.b16 %v657
      %v1234 = vunpack.c.l.b16 %v658
      %v1235 = vunpack.c.l.b16 %v659
      %v1236 = vunpack.c.l.b16 %v660
      %v1237 = vunpack.c.l.b16 %v661
      %v1238 = vunpack.c.l.b16 %v662
      %v1239 = vunpack.c.l.b16 %v663
      %v1240 = vunpack.c.l.b16 %v664
      %v1241 = vunpack.c.l.b16 %v665
      %v1242 = vunpack.c.l.b16 %v666
      %v1243 = vunpack.c.l.b16 %v667
      %v1244 = vunpack.c.l.b16 %v668
      %v1245 = vunpack.c.l.b16 %v669
      %v1246 = vunpack.c.l.b16 %v670
      %v1247 = vunpack.c.l.b16 %v671
      %v1248 = vunpack.c.l.b16 %v672
      %v1249 = vunpack.c.l.b16 %v673
      %v1250 = vunpack.c.l.b16 %v674
      %v1251 = vunpack.c.l.b16 %v675
      %v1252 = vunpack.c.l.b16 %v676
      %v1253 = vunpack.c.l.b16 %v677
      %v1254 = vunpack.c.l.b16 %v678
      %v1255 = vunpack.c.l.b16 %v679
      %v1256 = vunpack.c.l.b16 %v680
      %v1257 = vunpack.c.l.b16 %v681
      %v1258 = vunpack.c.l.b16 %v682
      %v1259 = vunpack.c.l.b16 %v683
      %v1260 = vunpack.c.l.b16 %v684
      %v1261 = vunpack.c.l.b16 %v685
      %v1262 = vunpack.c.l.b16 %v686
      %v1263 = vunpack.c.l.b16 %v687
      %v1264 = vunpack.c.l.b16 %v688
      %v1265 = vunpack.c.l.b16 %v689
      %v1266 = vunpack.c.l.b16 %v690
      %v1267 = vunpack.c.l.b16 %v691
      %v1268 = vunpack.c.l.b16 %v692
      %v1269 = vunpack.c.l.b16 %v693
      %v1270 = vunpack.c.l.b16 %v694
      %v1271 = vunpack.c.l.b16 %v695
      %v1272 = vunpack.c.l.b16 %v696
      %v1273 = vunpack.c.l.b16 %v697
      %v1274 = vunpack.c.l.b16 %v698
      %v1275 = vunpack.c.l.b16 %v699
      %v1276 = vunpack.c.l.b16 %v700
      %v1277 = vunpack.c.l.b16 %v701
      %v1278 = vunpack.c.l.b16 %v702
      %v1279 = vunpack.c.l.b16 %v703
      %v1280 = vunpack.c.l.b16 %v704
      %v1281 = vunpack.c.l.b16 %v705
      %v1282 = vunpack.c.l.b16 %v706
      %v1283 = vunpack.c.l.b16 %v707
      %v1284 = vunpack.c.l.b16 %v708
      %v1285 = vunpack.c.l.b16 %v709
      %v1286 = vunpack.c.l.b16 %v710
      %v1287 = vunpack.c.l.b16 %v711
      %v1288 = vunpack.c.l.b16 %v712
      %v1289 = vunpack.c.l.b16 %v713
      %v1290 = vunpack.c.l.b16 %v714
      %v1291 = vunpack.c.l.b16 %v715
      %v1292 = vunpack.c.l.b16 %v716
      %v1293 = vunpack.c.l.b16 %v717
      %v1294 = vunpack.c.l.b16 %v718
      %v1295 = vunpack.c.l.b16 %v719
      %v1296 = vunpack.c.l.b16 %v720
      %v1297 = vunpack.c.l.b16 %v721
      %v1298 = vunpack.c.l.b16 %v722
      %v1299 = vunpack.c.l.b16 %v723
      %v1300 = vunpack.c.l.b16 %v724
      %v1301 = vunpack.c.l.b16 %v725
      %v1302 = vunpack.c.l.b16 %v726
      %v1303 = vunpack.c.l.b16 %v727
      %v1304 = vunpack.c.l.b16 %v728
      %v1305 = vunpack.c.l.b16 %v729
      %v1306 = vunpack.c.l.b16 %v730
      %v1307 = vunpack.c.l.b16 %v731
      %v1308 = vunpack.c.l.b16 %v732
      %v1309 = vunpack.c.l.b16 %v733
      %v1310 = vunpack.c.l.b16 %v734
      %v1311 = vunpack.c.l.b16 %v735
      %v1312 = vunpack.c.l.b16 %v736
      %v1313 = vunpack.c.l.b16 %v737
      %v1314 = vunpack.c.l.b16 %v738
      %v1315 = vunpack.c.l.b16 %v739
      %v1316 = vunpack.c.l.b16 %v740
      %v1317 = vunpack.c.l.b16 %v741
      %v1318 = vunpack.c.l.b16 %v742
      %v1319 = vunpack.c.l.b16 %v743
      %v1320 = vunpack.c.l.b16 %v744
      %v1321 = vunpack.c.l.b16 %v745
      %v1322 = vunpack.c.l.b16 %v746
      %v1323 = vunpack.c.l.b16 %v747
      %v1324 = vunpack.c.l.b16 %v748
      %v1325 = vunpack.c.l.b16 %v749
      %v1326 = vunpack.c.l.b16 %v750
      %v1327 = vunpack.c.l.b16 %v751
      %v1328 = vunpack.c.l.b16 %v752
      %v1329 = vunpack.c.l.b16 %v753
      %v1330 = vunpack.c.l.b16 %v754
      %v1331 = vunpack.c.l.b16 %v755
      %v1332 = vunpack.c.l.b16 %v756
      %v1333 = vunpack.c.l.b16 %v757
      %v1334 = vunpack.c.l.b16 %v758
      %v1335 = vunpack.c.l.b16 %v759
      %v1336 = vunpack.c.l.b16 %v760
      %v1337 = vunpack.c.l.b16 %v761
      %v1338 = vunpack.c.l.b16 %v762
      %v1339 = vunpack.c.l.b16 %v763
      %v1340 = vunpack.c.l.b16 %v764
      %v1341 = vunpack.c.l.b16 %v765
      %v1342 = vunpack.c.l.b16 %v766
      %v1343 = vunpack.c.l.b16 %v767
      %v1344 = vunpack.c.l.b16 %v768
      %v1345 = vunpack.c.l.b16 %v769
      %v1346 = vunpack.c.l.b16 %v770
      %v1347 = vunpack.c.l.b16 %v771
      %v1348 = vunpack.c.l.b16 %v772
      %v1349 = vunpack.c.l.b16 %v773
      %v1350 = vunpack.c.l.b16 %v774
      %v1351 = vunpack.c.l.b16 %v775
      %v1352 = vunpack.c.l.b16 %v776
      %v1353 = vunpack.c.l.b16 %v777
      %v1354 = vunpack.c.l.b16 %v778
      %v1355 = vunpack.c.l.b16 %v779
      %v1356 = vunpack.c.l.b16 %v780
      %v1357 = vunpack.c.l.b16 %v781
      %v1358 = vunpack.c.l.b16 %v782
      %v1359 = vunpack.c.l.b16 %v783
      %v1360 = vunpack.c.l.b16 %v784
      %v1361 = vunpack.c.l.b16 %v785
      %v1362 = vunpack.c.l.b16 %v786
      %v1363 = vunpack.c.l.b16 %v787
      %v1364 = vunpack.c.l.b16 %v788
      %v1365 = vunpack.c.l.b16 %v789
      %v1366 = vunpack.c.l.b16 %v790
      %v1367 = vunpack.c.l.b16 %v791
      %v1368 = vunpack.c.l.b16 %v792
      %v1369 = vunpack.c.l.b16 %v793
      %v1370 = vunpack.c.l.b16 %v794
      %v1371 = vunpack.c.l.b16 %v795
      %v1372 = vunpack.c.l.b16 %v796
      %v1373 = vunpack.c.l.b16 %v797
      %v1374 = vunpack.c.l.b16 %v798
      %v1375 = vunpack.c.l.b16 %v799
      %v1376 = vunpack.c.l.b16 %v800
      %v1377 = vunpack.c.l.b16 %v801
      %v1378 = vunpack.c.l.b16 %v802
      %v1379 = vunpack.c.l.b16 %v803
      %v1380 = vunpack.c.l.b16 %v804
      %v1381 = vunpack.c.l.b16 %v805
      %v1382 = vunpack.c.l.b16 %v806
      %v1383 = vunpack.c.l.b16 %v807
      %v1384 = vunpack.c.l.b16 %v808
      %v1385 = vunpack.c.l.b16 %v809
      %v1386 = vunpack.c.l.b16 %v810
      %v1387 = vunpack.c.l.b16 %v811
      %v1388 = vunpack.c.l.b16 %v812
      %v1389 = vunpack.c.l.b16 %v813
      %v1390 = vunpack.c.l.b16 %v814
      %v1391 = vunpack.c.l.b16 %v815
      %v1392 = vunpack.c.l.b16 %v816
      %v1393 = vunpack.c.l.b16 %v817
      %v1394 = vunpack.c.l.b16 %v818
      %v1395 = vunpack.c.l.b16 %v819
      %v1396 = vunpack.c.l.b16 %v820
      %v1397 = vunpack.c.l.b16 %v821
      %v1398 = vunpack.c.l.b16 %v822
      %v1399 = vunpack.c.l.b16 %v823
      %v1400 = vunpack.c.l.b16 %v824
      %v1401 = vunpack.c.l.b16 %v825
      %v1402 = vunpack.c.l.b16 %v826
      %v1403 = vunpack.c.l.b16 %v827
      %v1404 = vunpack.c.l.b16 %v828
      %v1405 = vunpack.c.l.b16 %v829
      %v1406 = vunpack.c.l.b16 %v830
      %v1407 = vunpack.c.l.b16 %v831
      %v1408 = vunpack.c.l.b16 %v832
      %v1409 = vunpack.c.l.b16 %v833
      %v1410 = vunpack.c.l.b16 %v834
      %v1411 = vunpack.c.l.b16 %v835
      %v1412 = vunpack.c.l.b16 %v836
      %v1413 = vunpack.c.l.b16 %v837
      %v1414 = vunpack.c.l.b16 %v838
      %v1415 = vunpack.c.l.b16 %v839
      %v1416 = vunpack.c.l.b16 %v840
      %v1417 = vunpack.c.l.b16 %v841
      %v1418 = vunpack.c.l.b16 %v842
      %v1419 = vunpack.c.l.b16 %v843
      %v1420 = vunpack.c.l.b16 %v844
      %v1421 = vunpack.c.l.b16 %v845
      %v1422 = vunpack.c.l.b16 %v846
      %v1423 = vunpack.c.l.b16 %v847
      %v1424 = vunpack.c.l.b16 %v848
      %v1425 = vunpack.c.l.b16 %v849
      %v1426 = vunpack.c.l.b16 %v850
      %v1427 = vunpack.c.l.b16 %v851
      %v1428 = vunpack.c.l.b16 %v852
      %v1429 = vunpack.c.l.b16 %v853
      %v1430 = vunpack.c.l.b16 %v854
      %v1431 = vunpack.c.l.b16 %v855
      %v1432 = vunpack.c.l.b16 %v856
      %v1433 = vunpack.c.l.b16 %v857
      %v1434 = vunpack.c.l.b16 %v858
      %v1435 = vunpack.c.l.b16 %v859
      %v1436 = vunpack.c.l.b16 %v860
      %v1437 = vunpack.c.l.b16 %v861
      %v1438 = vunpack.c.l.b16 %v862
      %v1439 = vunpack.c.l.b16 %v863
      %v1440 = vunpack.c.l.b16 %v864
      %v1441 = vunpack.c.l.b16 %v865
      %v1442 = vunpack.c.l.b16 %v866
      %v1443 = vunpack.c.l.b16 %v867
      %v1444 = vunpack.c.l.b16 %v868
      %v1445 = vunpack.c.l.b16 %v869
      %v1446 = vunpack.c.l.b16 %v870
      %v1447 = vunpack.c.l.b16 %v871
      %v1448 = vunpack.c.l.b16 %v872
      %v1449 = vunpack.c.l.b16 %v873
      %v1450 = vunpack.c.l.b16 %v874
      %v1451 = vunpack.c.l.b16 %v875
      %v1452 = vunpack.c.l.b16 %v876
      %v1453 = vunpack.c.l.b16 %v877
      %v1454 = vunpack.c.l.b16 %v878
      %v1455 = vunpack.c.l.b16 %v879
      %v1456 = vunpack.c.l.b16 %v880
      %v1457 = vunpack.c.l.b16 %v881
      %v1458 = vunpack.c.l.b16 %v882
      %v1459 = vunpack.c.l.b16 %v883
      %v1460 = vunpack.c.l.b16 %v884
      %v1461 = vunpack.c.l.b16 %v885
      %v1462 = vunpack.c.l.b16 %v886
      %v1463 = vunpack.c.l.b16 %v887
      %v1464 = vunpack.c.l.b16 %v888
      %v1465 = vunpack.c.l.b16 %v889
      %v1466 = vunpack.c.l.b16 %v890
      %v1467 = vpack.c.b16 %v1180, %v1179
      %v1468 = vpack.c.b16 %v1182, %v1181
      %v1469 = vpack.c.b16 %v1184, %v1183
      %v1470 = vpack.c.b16 %v1186, %v1185
      %v1471 = vpack.c.b16 %v1188, %v1187
      %v1472 = vpack.c.b16 %v1190, %v1189
      %v1473 = vpack.c.b16 %v1192, %v1191
      %v1474 = vpack.c.b16 %v1194, %v1193
      %v1475 = vpack.c.b16 %v1196, %v1195
      %v1476 = vpack.c.b16 %v1198, %v1197
      %v1477 = vpack.c.b16 %v1200, %v1199
      %v1478 = vpack.c.b16 %v1202, %v1201
      %v1479 = vpack.c.b16 %v1204, %v1203
      %v1480 = vpack.c.b16 %v1206, %v1205
      %v1481 = vpack.c.b16 %v1208, %v1207
      %v1482 = vpack.c.b16 %v1210, %v1209
      %v1483 = vpack.c.b16 %v1212, %v1211
      %v1484 = vpack.c.b16 %v1214, %v1213
      %v1485 = vpack.c.b16 %v1216, %v1215
      %v1486 = vpack.c.b16 %v1218, %v1217
      %v1487 = vpack.c.b16 %v1220, %v1219
      %v1488 = vpack.c.b16 %v1222, %v1221
      %v1489 = vpack.c.b16 %v1224, %v1223
      %v1490 = vpack.c.b16 %v1226, %v1225
      %v1491 = vpack.c.b16 %v1228, %v1227
      %v1492 = vpack.c.b16 %v1230, %v1229
      %v1493 = vpack.c.b16 %v1232, %v1231
      %v1494 = vpack.c.b16 %v1234, %v1233
      %v1495 = vpack.c.b16 %v1236, %v1235
      %v1496 = vpack.c.b16 %v1238, %v1237
      %v1497 = vpack.c.b16 %v1240, %v1239
      %v1498 = vpack.c.b16 %v1242, %v1241
      %v1499 = vpack.c.b16 %v1244, %v1243
      %v1500 = vpack.c.b16 %v1246, %v1245
      %v1501 = vpack.c.b16 %v1248, %v1247
      %v1502 = vpack.c.b16 %v1250, %v1249
      %v1503 = vpack.c.b16 %v1252, %v1251
      %v1504 = vpack.c.b16 %v1254, %v1253
      %v1505 = vpack.c.b16 %v1256, %v1255
      %v1506 = vpack.c.b16 %v1258, %v1257
      %v1507 = vpack.c.b16 %v1260, %v1259
      %v1508 = vpack.c.b16 %v1262, %v1261
      %v1509 = vpack.c.b16 %v1264, %v1263
      %v1510 = vpack.c.b16 %v1266, %v1265
      %v1511 = vpack.c.b16 %v1268, %v1267
      %v1512 = vpack.c.b16 %v1270, %v1269
      %v1513 = vpack.c.b16 %v1272, %v1271
      %v1514 = vpack.c.b16 %v1274, %v1273
      %v1515 = vpack.c.b16 %v1276, %v1275
      %v1516 = vpack.c.b16 %v1278, %v1277
      %v1517 = vpack.c.b16 %v1280, %v1279
      %v1518 = vpack.c.b16 %v1282, %v1281
      %v1519 = vpack.c.b16 %v1284, %v1283
      %v1520 = vpack.c.b16 %v1286, %v1285
      %v1521 = vpack.c.b16 %v1288, %v1287
      %v1522 = vpack.c.b16 %v1290, %v1289
      %v1523 = vpack.c.b16 %v1292, %v1291
      %v1524 = vpack.c.b16 %v1294, %v1293
      %v1525 = vpack.c.b16 %v1296, %v1295
      %v1526 = vpack.c.b16 %v1298, %v1297
      %v1527 = vpack.c.b16 %v1300, %v1299
      %v1528 = vpack.c.b16 %v1302, %v1301
      %v1529 = vpack.c.b16 %v1304, %v1303
      %v1530 = vpack.c.b16 %v1306, %v1305
      %v1531 = vpack.c.b16 %v1308, %v1307
      %v1532 = vpack.c.b16 %v1310, %v1309
      %v1533 = vpack.c.b16 %v1312, %v1311
      %v1534 = vpack.c.b16 %v1314, %v1313
      %v1535 = vpack.c.b16 %v1316, %v1315
      %v1536 = vpack.c.b16 %v1318, %v1317
      %v1537 = vpack.c.b16 %v1320, %v1319
      %v1538 = vpack.c.b16 %v1322, %v1321
      %v1539 = vpack.c.b16 %v1324, %v1323
      %v1540 = vpack.c.b16 %v1326, %v1325
      %v1541 = vpack.c.b16 %v1328, %v1327
      %v1542 = vpack.c.b16 %v1330, %v1329
      %v1543 = vpack.c.b16 %v1332, %v1331
      %v1544 = vpack.c.b16 %v1334, %v1333
      %v1545 = vpack.c.b16 %v1336, %v1335
      %v1546 = vpack.c.b16 %v1338, %v1337
      %v1547 = vpack.c.b16 %v1340, %v1339
      %v1548 = vpack.c.b16 %v1342, %v1341
      %v1549 = vpack.c.b16 %v1344, %v1343
      %v1550 = vpack.c.b16 %v1346, %v1345
      %v1551 = vpack.c.b16 %v1348, %v1347
      %v1552 = vpack.c.b16 %v1350, %v1349
      %v1553 = vpack.c.b16 %v1352, %v1351
      %v1554 = vpack.c.b16 %v1354, %v1353
      %v1555 = vpack.c.b16 %v1356, %v1355
      %v1556 = vpack.c.b16 %v1358, %v1357
      %v1557 = vpack.c.b16 %v1360, %v1359
      %v1558 = vpack.c.b16 %v1362, %v1361
      %v1559 = vpack.c.b16 %v1364, %v1363
      %v1560 = vpack.c.b16 %v1366, %v1365
      %v1561 = vpack.c.b16 %v1368, %v1367
      %v1562 = vpack.c.b16 %v1370, %v1369
      %v1563 = vpack.c.b16 %v1372, %v1371
      %v1564 = vpack.c.b16 %v1374, %v1373
      %v1565 = vpack.c.b16 %v1376, %v1375
      %v1566 = vpack.c.b16 %v1378, %v1377
      %v1567 = vpack.c.b16 %v1380, %v1379
      %v1568 = vpack.c.b16 %v1382, %v1381
      %v1569 = vpack.c.b16 %v1384, %v1383
      %v1570 = vpack.c.b16 %v1386, %v1385
      %v1571 = vpack.c.b16 %v1388, %v1387
      %v1572 = vpack.c.b16 %v1390, %v1389
      %v1573 = vpack.c.b16 %v1392, %v1391
      %v1574 = vpack.c.b16 %v1394, %v1393
      %v1575 = vpack.c.b16 %v1396, %v1395
      %v1576 = vpack.c.b16 %v1398, %v1397
      %v1577 = vpack.c.b16 %v1400, %v1399
      %v1578 = vpack.c.b16 %v1402, %v1401
      %v1579 = vpack.c.b16 %v1404, %v1403
      %v1580 = vpack.c.b16 %v1406, %v1405
      %v1581 = vpack.c.b16 %v1408, %v1407
      %v1582 = vpack.c.b16 %v1410, %v1409
      %v1583 = vpack.c.b16 %v1412, %v1411
      %v1584 = vpack.c.b16 %v1414, %v1413
      %v1585 = vpack.c.b16 %v1416, %v1415
      %v1586 = vpack.c.b16 %v1418, %v1417
      %v1587 = vpack.c.b16 %v1420, %v1419
      %v1588 = vpack.c.b16 %v1422, %v1421
      %v1589 = vpack.c.b16 %v1424, %v1423
      %v1590 = vpack.c.b16 %v1426, %v1425
      %v1591 = vpack.c.b16 %v1428, %v1427
      %v1592 = vpack.c.b16 %v1430, %v1429
      %v1593 = vpack.c.b16 %v1432, %v1431
      %v1594 = vpack.c.b16 %v1434, %v1433
      %v1595 = vpack.c.b16 %v1436, %v1435
      %v1596 = vpack.c.b16 %v1438, %v1437
      %v1597 = vpack.c.b16 %v1440, %v1439
      %v1598 = vpack.c.b16 %v1442, %v1441
      %v1599 = vpack.c.b16 %v1444, %v1443
      %v1600 = vpack.c.b16 %v1446, %v1445
      %v1601 = vpack.c.b16 %v1448, %v1447
      %v1602 = vpack.c.b16 %v1450, %v1449
      %v1603 = vpack.c.b16 %v1452, %v1451
      %v1604 = vpack.c.b16 %v1454, %v1453
      %v1605 = vpack.c.b16 %v1456, %v1455
      %v1606 = vpack.c.b16 %v1458, %v1457
      %v1607 = vpack.c.b16 %v1460, %v1459
      %v1608 = vpack.c.b16 %v1462, %v1461
      %v1609 = vpack.c.b16 %v1464, %v1463
      %v1610 = vpack.c.b16 %v1466, %v1465
      %1755 = vmatprep.subr.bf16.mxu0 0
      %1756 = vmatpush1.bf16.msra.mxu0 %v1474
      %1757 = vmatprep.subr.bf16.mxu0 0
      %1758 = vmatpush1.bf16.msra.mxu0 %v1473
      %1759 = vmatprep.subr.bf16.mxu0 0
      %1760 = vmatpush1.bf16.msra.mxu0 %v1472
      %1761 = vmatprep.subr.bf16.mxu0 0
      %1762 = vmatpush1.bf16.msra.mxu0 %v1471
      %1763 = vmatprep.subr.bf16.mxu0 0
      %1764 = vmatpush1.bf16.msra.mxu0 %v1470
      %1765 = vmatprep.subr.bf16.mxu0 0
      %1766 = vmatpush1.bf16.msra.mxu0 %v1469
      %1767 = vmatprep.subr.bf16.mxu0 0
      %1768 = vmatpush1.bf16.msra.mxu0 %v1468
      %1769 = vmatprep.subr.bf16.mxu0 0
      %1770 = vmatpush1.bf16.msra.mxu0 %v1467
      %1771 = vmatprep.subr.bf16.mxu0 0
      %1772 = vmatpush2.bf16.msra.mxu0 %v1482
      %1773 = vmatprep.subr.bf16.mxu0 0
      %1774 = vmatpush2.bf16.msra.mxu0 %v1481
      %1775 = vmatprep.subr.bf16.mxu0 0
      %1776 = vmatpush2.bf16.msra.mxu0 %v1480
      %1777 = vmatprep.subr.bf16.mxu0 0
      %1778 = vmatpush2.bf16.msra.mxu0 %v1479
      %1779 = vmatprep.subr.bf16.mxu0 0
      %1780 = vmatpush2.bf16.msra.mxu0 %v1478
      %1781 = vmatprep.subr.bf16.mxu0 0
      %1782 = vmatpush2.bf16.msra.mxu0 %v1477
      %1783 = vmatprep.subr.bf16.mxu0 0
      %1784 = vmatpush2.bf16.msra.mxu0 %v1476
      %1785 = vmatprep.subr.bf16.mxu0 0
      %1786 = vmatpush2.bf16.msra.mxu0 %v1475
      %1787 = vmatprep.mubr.bf16.mxu0 %v586
      %1788 = vmatmul.mubr.bf16.gmra.mxu0 %v585
      %v1789 = vpop.f32.mrf.mxu0
      %v1790 = vadd.f32 0.0, %v1789
      %v1791 = vpop.f32.mrf.mxu0
      %v1792 = vpop.f32.mrf.mxu0
      %v1793 = vpop.f32.mrf.mxu0
      %1794 = vdwg.mxu0
      %1795 = vmatprep.subr.bf16.mxu0 0
      %1796 = vmatpush1.bf16.msra.mxu0 %v1490
      %1797 = vmatprep.subr.bf16.mxu0 0
      %1798 = vmatpush1.bf16.msra.mxu0 %v1489
      %1799 = vmatprep.subr.bf16.mxu0 0
      %1800 = vmatpush1.bf16.msra.mxu0 %v1488
      %1801 = vmatprep.subr.bf16.mxu0 0
      %1802 = vmatpush1.bf16.msra.mxu0 %v1487
      %1803 = vmatprep.subr.bf16.mxu0 0
      %1804 = vmatpush1.bf16.msra.mxu0 %v1486
      %1805 = vmatprep.subr.bf16.mxu0 0
      %1806 = vmatpush1.bf16.msra.mxu0 %v1485
      %1807 = vmatprep.subr.bf16.mxu0 0
      %1808 = vmatpush1.bf16.msra.mxu0 %v1484
      %1809 = vmatprep.subr.bf16.mxu0 0
      %1810 = vmatpush1.bf16.msra.mxu0 %v1483
      %1811 = vmatprep.subr.bf16.mxu0 0
      %1812 = vmatpush2.bf16.msra.mxu0 %v1498
      %1813 = vmatprep.subr.bf16.mxu0 0
      %1814 = vmatpush2.bf16.msra.mxu0 %v1497
      %1815 = vmatprep.subr.bf16.mxu0 0
      %1816 = vmatpush2.bf16.msra.mxu0 %v1496
      %1817 = vmatprep.subr.bf16.mxu0 0
      %1818 = vmatpush2.bf16.msra.mxu0 %v1495
      %1819 = vmatprep.subr.bf16.mxu0 0
      %1820 = vmatpush2.bf16.msra.mxu0 %v1494
      %1821 = vmatprep.subr.bf16.mxu0 0
      %1822 = vmatpush2.bf16.msra.mxu0 %v1493
      %1823 = vmatprep.subr.bf16.mxu0 0
      %1824 = vmatpush2.bf16.msra.mxu0 %v1492
      %1825 = vmatprep.subr.bf16.mxu0 0
      %1826 = vmatpush2.bf16.msra.mxu0 %v1491
      %1827 = vmatprep.mubr.bf16.mxu0 %v588
      %1828 = vmatmul.mubr.bf16.gmra.mxu0 %v587
      %v1829 = vpop.f32.mrf.mxu0
      %v1830 = vadd.f32 %v1790, %v1829
      %v1831 = vpop.f32.mrf.mxu0
      %v1832 = vpop.f32.mrf.mxu0
      %v1833 = vpop.f32.mrf.mxu0
      %1834 = vdwg.mxu0
      %1835 = vmatprep.subr.bf16.mxu0 0
      %1836 = vmatpush1.bf16.msra.mxu0 %v1506
      %1837 = vmatprep.subr.bf16.mxu0 0
      %1838 = vmatpush1.bf16.msra.mxu0 %v1505
      %1839 = vmatprep.subr.bf16.mxu0 0
      %1840 = vmatpush1.bf16.msra.mxu0 %v1504
      %1841 = vmatprep.subr.bf16.mxu0 0
      %1842 = vmatpush1.bf16.msra.mxu0 %v1503
      %1843 = vmatprep.subr.bf16.mxu0 0
      %1844 = vmatpush1.bf16.msra.mxu0 %v1502
      %1845 = vmatprep.subr.bf16.mxu0 0
      %1846 = vmatpush1.bf16.msra.mxu0 %v1501
      %1847 = vmatprep.subr.bf16.mxu0 0
      %1848 = vmatpush1.bf16.msra.mxu0 %v1500
      %1849 = vmatprep.subr.bf16.mxu0 0
      %1850 = vmatpush1.bf16.msra.mxu0 %v1499
      %1851 = vmatprep.subr.bf16.mxu0 0
      %1852 = vmatpush2.bf16.msra.mxu0 %v1514
      %1853 = vmatprep.subr.bf16.mxu0 0
      %1854 = vmatpush2.bf16.msra.mxu0 %v1513
      %1855 = vmatprep.subr.bf16.mxu0 0
      %1856 = vmatpush2.bf16.msra.mxu0 %v1512
      %1857 = vmatprep.subr.bf16.mxu0 0
      %1858 = vmatpush2.bf16.msra.mxu0 %v1511
      %1859 = vmatprep.subr.bf16.mxu0 0
      %1860 = vmatpush2.bf16.msra.mxu0 %v1510
      %1861 = vmatprep.subr.bf16.mxu0 0
      %1862 = vmatpush2.bf16.msra.mxu0 %v1509
      %1863 = vmatprep.subr.bf16.mxu0 0
      %1864 = vmatpush2.bf16.msra.mxu0 %v1508
      %1865 = vmatprep.subr.bf16.mxu0 0
      %1866 = vmatpush2.bf16.msra.mxu0 %v1507
      %1867 = vmatprep.mubr.bf16.mxu0 %v590
      %1868 = vmatmul.mubr.bf16.gmra.mxu0 %v589
      %v1869 = vpop.f32.mrf.mxu0
      %v1870 = vadd.f32 %v1830, %v1869
      %v1871 = vpop.f32.mrf.mxu0
      %v1872 = vpop.f32.mrf.mxu0
      %v1873 = vpop.f32.mrf.mxu0
      %1874 = vdwg.mxu0
      %1875 = vmatprep.subr.bf16.mxu0 0
      %1876 = vmatpush1.bf16.msra.mxu0 %v1522
      %1877 = vmatprep.subr.bf16.mxu0 0
      %1878 = vmatpush1.bf16.msra.mxu0 %v1521
      %1879 = vmatprep.subr.bf16.mxu0 0
      %1880 = vmatpush1.bf16.msra.mxu0 %v1520
      %1881 = vmatprep.subr.bf16.mxu0 0
      %1882 = vmatpush1.bf16.msra.mxu0 %v1519
      %1883 = vmatprep.subr.bf16.mxu0 0
      %1884 = vmatpush1.bf16.msra.mxu0 %v1518
      %1885 = vmatprep.subr.bf16.mxu0 0
      %1886 = vmatpush1.bf16.msra.mxu0 %v1517
      %1887 = vmatprep.subr.bf16.mxu0 0
      %1888 = vmatpush1.bf16.msra.mxu0 %v1516
      %1889 = vmatprep.subr.bf16.mxu0 0
      %1890 = vmatpush1.bf16.msra.mxu0 %v1515
      %1891 = vmatprep.subr.bf16.mxu0 0
      %1892 = vmatpush2.bf16.msra.mxu0 %v1530
      %1893 = vmatprep.subr.bf16.mxu0 0
      %1894 = vmatpush2.bf16.msra.mxu0 %v1529
      %1895 = vmatprep.subr.bf16.mxu0 0
      %1896 = vmatpush2.bf16.msra.mxu0 %v1528
      %1897 = vmatprep.subr.bf16.mxu0 0
      %1898 = vmatpush2.bf16.msra.mxu0 %v1527
      %1899 = vmatprep.subr.bf16.mxu0 0
      %1900 = vmatpush2.bf16.msra.mxu0 %v1526
      %1901 = vmatprep.subr.bf16.mxu0 0
      %1902 = vmatpush2.bf16.msra.mxu0 %v1525
      %1903 = vmatprep.subr.bf16.mxu0 0
      %1904 = vmatpush2.bf16.msra.mxu0 %v1524
      %1905 = vmatprep.subr.bf16.mxu0 0
      %1906 = vmatpush2.bf16.msra.mxu0 %v1523
      %1907 = vmatprep.mubr.bf16.mxu0 %v592
      %1908 = vmatmul.mubr.bf16.gmra.mxu0 %v591
      %v1909 = vpop.f32.mrf.mxu0
      %v1910 = vadd.f32 %v1870, %v1909
      %v1911 = vpop.f32.mrf.mxu0
      %v1912 = vpop.f32.mrf.mxu0
      %v1913 = vpop.f32.mrf.mxu0
      %1914 = vdwg.mxu0
      %1915 = vmatprep.subr.bf16.mxu0 0
      %1916 = vmatpush1.bf16.msra.mxu0 %v1538
      %1917 = vmatprep.subr.bf16.mxu0 0
      %1918 = vmatpush1.bf16.msra.mxu0 %v1537
      %1919 = vmatprep.subr.bf16.mxu0 0
      %1920 = vmatpush1.bf16.msra.mxu0 %v1536
      %1921 = vmatprep.subr.bf16.mxu0 0
      %1922 = vmatpush1.bf16.msra.mxu0 %v1535
      %1923 = vmatprep.subr.bf16.mxu0 0
      %1924 = vmatpush1.bf16.msra.mxu0 %v1534
      %1925 = vmatprep.subr.bf16.mxu0 0
      %1926 = vmatpush1.bf16.msra.mxu0 %v1533
      %1927 = vmatprep.subr.bf16.mxu0 0
      %1928 = vmatpush1.bf16.msra.mxu0 %v1532
      %1929 = vmatprep.subr.bf16.mxu0 0
      %1930 = vmatpush1.bf16.msra.mxu0 %v1531
      %1931 = vmatprep.subr.bf16.mxu0 0
      %1932 = vmatpush2.bf16.msra.mxu0 %v1546
      %1933 = vmatprep.subr.bf16.mxu0 0
      %1934 = vmatpush2.bf16.msra.mxu0 %v1545
      %1935 = vmatprep.subr.bf16.mxu0 0
      %1936 = vmatpush2.bf16.msra.mxu0 %v1544
      %1937 = vmatprep.subr.bf16.mxu0 0
      %1938 = vmatpush2.bf16.msra.mxu0 %v1543
      %1939 = vmatprep.subr.bf16.mxu0 0
      %1940 = vmatpush2.bf16.msra.mxu0 %v1542
      %1941 = vmatprep.subr.bf16.mxu0 0
      %1942 = vmatpush2.bf16.msra.mxu0 %v1541
      %1943 = vmatprep.subr.bf16.mxu0 0
      %1944 = vmatpush2.bf16.msra.mxu0 %v1540
      %1945 = vmatprep.subr.bf16.mxu0 0
      %1946 = vmatpush2.bf16.msra.mxu0 %v1539
      %1947 = vmatprep.mubr.bf16.mxu0 %v594
      %1948 = vmatmul.mubr.bf16.gmra.mxu0 %v593
      %v1949 = vpop.f32.mrf.mxu0
      %v1950 = vadd.f32 %v1910, %v1949
      %v1951 = vpop.f32.mrf.mxu0
      %v1952 = vpop.f32.mrf.mxu0
      %v1953 = vpop.f32.mrf.mxu0
      %1954 = vdwg.mxu0
      %1955 = vmatprep.subr.bf16.mxu0 0
      %1956 = vmatpush1.bf16.msra.mxu0 %v1554
      %1957 = vmatprep.subr.bf16.mxu0 0
      %1958 = vmatpush1.bf16.msra.mxu0 %v1553
      %1959 = vmatprep.subr.bf16.mxu0 0
      %1960 = vmatpush1.bf16.msra.mxu0 %v1552
      %1961 = vmatprep.subr.bf16.mxu0 0
      %1962 = vmatpush1.bf16.msra.mxu0 %v1551
      %1963 = vmatprep.subr.bf16.mxu0 0
      %1964 = vmatpush1.bf16.msra.mxu0 %v1550
      %1965 = vmatprep.subr.bf16.mxu0 0
      %1966 = vmatpush1.bf16.msra.mxu0 %v1549
      %1967 = vmatprep.subr.bf16.mxu0 0
      %1968 = vmatpush1.bf16.msra.mxu0 %v1548
      %1969 = vmatprep.subr.bf16.mxu0 0
      %1970 = vmatpush1.bf16.msra.mxu0 %v1547
      %1971 = vmatprep.subr.bf16.mxu0 0
      %1972 = vmatpush2.bf16.msra.mxu0 %v1562
      %1973 = vmatprep.subr.bf16.mxu0 0
      %1974 = vmatpush2.bf16.msra.mxu0 %v1561
      %1975 = vmatprep.subr.bf16.mxu0 0
      %1976 = vmatpush2.bf16.msra.mxu0 %v1560
      %1977 = vmatprep.subr.bf16.mxu0 0
      %1978 = vmatpush2.bf16.msra.mxu0 %v1559
      %1979 = vmatprep.subr.bf16.mxu0 0
      %1980 = vmatpush2.bf16.msra.mxu0 %v1558
      %1981 = vmatprep.subr.bf16.mxu0 0
      %1982 = vmatpush2.bf16.msra.mxu0 %v1557
      %1983 = vmatprep.subr.bf16.mxu0 0
      %1984 = vmatpush2.bf16.msra.mxu0 %v1556
      %1985 = vmatprep.subr.bf16.mxu0 0
      %1986 = vmatpush2.bf16.msra.mxu0 %v1555
      %1987 = vmatprep.mubr.bf16.mxu0 %v596
      %1988 = vmatmul.mubr.bf16.gmra.mxu0 %v595
      %v1989 = vpop.f32.mrf.mxu0
      %v1990 = vadd.f32 %v1950, %v1989
      %v1991 = vpop.f32.mrf.mxu0
      %v1992 = vpop.f32.mrf.mxu0
      %v1993 = vpop.f32.mrf.mxu0
      %1994 = vdwg.mxu0
      %1995 = vmatprep.subr.bf16.mxu0 0
      %1996 = vmatpush1.bf16.msra.mxu0 %v1570
      %1997 = vmatprep.subr.bf16.mxu0 0
      %1998 = vmatpush1.bf16.msra.mxu0 %v1569
      %1999 = vmatprep.subr.bf16.mxu0 0
      %2000 = vmatpush1.bf16.msra.mxu0 %v1568
      %2001 = vmatprep.subr.bf16.mxu0 0
      %2002 = vmatpush1.bf16.msra.mxu0 %v1567
      %2003 = vmatprep.subr.bf16.mxu0 0
      %2004 = vmatpush1.bf16.msra.mxu0 %v1566
      %2005 = vmatprep.subr.bf16.mxu0 0
      %2006 = vmatpush1.bf16.msra.mxu0 %v1565
      %2007 = vmatprep.subr.bf16.mxu0 0
      %2008 = vmatpush1.bf16.msra.mxu0 %v1564
      %2009 = vmatprep.subr.bf16.mxu0 0
      %2010 = vmatpush1.bf16.msra.mxu0 %v1563
      %2011 = vmatprep.subr.bf16.mxu0 0
      %2012 = vmatpush2.bf16.msra.mxu0 %v1578
      %2013 = vmatprep.subr.bf16.mxu0 0
      %2014 = vmatpush2.bf16.msra.mxu0 %v1577
      %2015 = vmatprep.subr.bf16.mxu0 0
      %2016 = vmatpush2.bf16.msra.mxu0 %v1576
      %2017 = vmatprep.subr.bf16.mxu0 0
      %2018 = vmatpush2.bf16.msra.mxu0 %v1575
      %2019 = vmatprep.subr.bf16.mxu0 0
      %2020 = vmatpush2.bf16.msra.mxu0 %v1574
      %2021 = vmatprep.subr.bf16.mxu0 0
      %2022 = vmatpush2.bf16.msra.mxu0 %v1573
      %2023 = vmatprep.subr.bf16.mxu0 0
      %2024 = vmatpush2.bf16.msra.mxu0 %v1572
      %2025 = vmatprep.subr.bf16.mxu0 0
      %2026 = vmatpush2.bf16.msra.mxu0 %v1571
      %2027 = vmatprep.mubr.bf16.mxu0 %v598
      %2028 = vmatmul.mubr.bf16.gmra.mxu0 %v597
      %v2029 = vpop.f32.mrf.mxu0
      %v2030 = vadd.f32 %v1990, %v2029
      %v2031 = vpop.f32.mrf.mxu0
      %v2032 = vpop.f32.mrf.mxu0
      %v2033 = vpop.f32.mrf.mxu0
      %2034 = vdwg.mxu0
      %2035 = vmatprep.subr.bf16.mxu0 0
      %2036 = vmatpush1.bf16.msra.mxu0 %v1586
      %2037 = vmatprep.subr.bf16.mxu0 0
      %2038 = vmatpush1.bf16.msra.mxu0 %v1585
      %2039 = vmatprep.subr.bf16.mxu0 0
      %2040 = vmatpush1.bf16.msra.mxu0 %v1584
      %2041 = vmatprep.subr.bf16.mxu0 0
      %2042 = vmatpush1.bf16.msra.mxu0 %v1583
      %2043 = vmatprep.subr.bf16.mxu0 0
      %2044 = vmatpush1.bf16.msra.mxu0 %v1582
      %2045 = vmatprep.subr.bf16.mxu0 0
      %2046 = vmatpush1.bf16.msra.mxu0 %v1581
      %2047 = vmatprep.subr.bf16.mxu0 0
      %2048 = vmatpush1.bf16.msra.mxu0 %v1580
      %2049 = vmatprep.subr.bf16.mxu0 0
      %2050 = vmatpush1.bf16.msra.mxu0 %v1579
      %2051 = vmatprep.subr.bf16.mxu0 0
      %2052 = vmatpush2.bf16.msra.mxu0 %v1594
      %2053 = vmatprep.subr.bf16.mxu0 0
      %2054 = vmatpush2.bf16.msra.mxu0 %v1593
      %2055 = vmatprep.subr.bf16.mxu0 0
      %2056 = vmatpush2.bf16.msra.mxu0 %v1592
      %2057 = vmatprep.subr.bf16.mxu0 0
      %2058 = vmatpush2.bf16.msra.mxu0 %v1591
      %2059 = vmatprep.subr.bf16.mxu0 0
      %2060 = vmatpush2.bf16.msra.mxu0 %v1590
      %2061 = vmatprep.subr.bf16.mxu0 0
      %2062 = vmatpush2.bf16.msra.mxu0 %v1589
      %2063 = vmatprep.subr.bf16.mxu0 0
      %2064 = vmatpush2.bf16.msra.mxu0 %v1588
      %2065 = vmatprep.subr.bf16.mxu0 0
      %2066 = vmatpush2.bf16.msra.mxu0 %v1587
      %2067 = vmatprep.mubr.bf16.mxu0 %v600
      %2068 = vmatmul.mubr.bf16.gmra.mxu0 %v599
      %v2069 = vpop.f32.mrf.mxu0
      %v2070 = vadd.f32 %v2030, %v2069
      %v2071 = vpop.f32.mrf.mxu0
      %v2072 = vpop.f32.mrf.mxu0
      %v2073 = vpop.f32.mrf.mxu0
      %2074 = vdwg.mxu0
      %2075 = vmatprep.subr.bf16.mxu0 0
      %2076 = vmatpush1.bf16.msra.mxu0 %v1602
      %2077 = vmatprep.subr.bf16.mxu0 0
      %2078 = vmatpush1.bf16.msra.mxu0 %v1601
      %2079 = vmatprep.subr.bf16.mxu0 0
      %2080 = vmatpush1.bf16.msra.mxu0 %v1600
      %2081 = vmatprep.subr.bf16.mxu0 0
      %2082 = vmatpush1.bf16.msra.mxu0 %v1599
      %2083 = vmatprep.subr.bf16.mxu0 0
      %2084 = vmatpush1.bf16.msra.mxu0 %v1598
      %2085 = vmatprep.subr.bf16.mxu0 0
      %2086 = vmatpush1.bf16.msra.mxu0 %v1597
      %2087 = vmatprep.subr.bf16.mxu0 0
      %2088 = vmatpush1.bf16.msra.mxu0 %v1596
      %2089 = vmatprep.subr.bf16.mxu0 0
      %2090 = vmatpush1.bf16.msra.mxu0 %v1595
      %2091 = vmatprep.subr.bf16.mxu0 0
      %2092 = vmatpush2.bf16.msra.mxu0 %v1610
      %2093 = vmatprep.subr.bf16.mxu0 0
      %2094 = vmatpush2.bf16.msra.mxu0 %v1609
      %2095 = vmatprep.subr.bf16.mxu0 0
      %2096 = vmatpush2.bf16.msra.mxu0 %v1608
      %2097 = vmatprep.subr.bf16.mxu0 0
      %2098 = vmatpush2.bf16.msra.mxu0 %v1607
      %2099 = vmatprep.subr.bf16.mxu0 0
      %2100 = vmatpush2.bf16.msra.mxu0 %v1606
      %2101 = vmatprep.subr.bf16.mxu0 0
      %2102 = vmatpush2.bf16.msra.mxu0 %v1605
      %2103 = vmatprep.subr.bf16.mxu0 0
      %2104 = vmatpush2.bf16.msra.mxu0 %v1604
      %2105 = vmatprep.subr.bf16.mxu0 0
      %2106 = vmatpush2.bf16.msra.mxu0 %v1603
      %2107 = vmatprep.mubr.bf16.mxu0 %v602
      %2108 = vmatmul.mubr.bf16.gmra.mxu0 %v601
      %v2109 = vpop.f32.mrf.mxu0
      %v2110 = vadd.f32 %v2070, %v2109
      %v2111 = vpop.f32.mrf.mxu0
      %v2112 = vpop.f32.mrf.mxu0
      %v2113 = vpop.f32.mrf.mxu0
      %2114 = vdwg.mxu0
      %p2115 = scmp.eq.s32.totalorder %s20, 0
      // Predicated region
      $region37: #{encoder_forward_pallas.9} parent=35 // pred_check
        %p2116 = pneg %p2115
      $region38: #{encoder_forward_pallas.9} parent=35 // pred_check_branch
        %2118 = sbr.rel (%p2116) target = $region40
      $region39: #{encoder_forward_pallas.9} parent=35 // pred_region
        %2119 = vst [vmem:[#allocation2] sm:$0xff] 0.0
      $region40: #{encoder_forward_pallas.9} parent=35 // pred_fallthru
        _
      %v2120 = vld [vmem:[#allocation2] sm:$0xff]
      %v2121 = vadd.f32 %v2120, %v2110
      %2122 = vst [vmem:[#allocation2] sm:$0xff] %v2121
      %p2123 = scmp.eq.s32.totalorder %s20, 1
      // Predicated region
      $region41: #{encoder_forward_pallas.9} parent=35 // pred_check
        %p2124 = pneg %p2123
      $region42: #{encoder_forward_pallas.9} parent=35 // pred_check_branch
        %2126 = sbr.rel (%p2124) target = $region44
      $region43: #{encoder_forward_pallas.9} parent=35 // pred_region
        %v2127 = vld [vmem:[#allocation2] sm:$0xff]
        %2128 = vst [vmem:[%s283] sm:$0xff] %v2127
      $region44: #{encoder_forward_pallas.9} parent=35 // pred_fallthru
        _
      %p2129 = scmp.lt.s32.totalorder %s19, 0
      %s2130 = scalar_select %p2129, %s19, 0
      %s2131 = smul.addr %s2130, 8
      %s2132 = scalar_lea.vmem %s4, %s2131
      // Predicated region
      $region45: #{encoder_forward_pallas.9} parent=35 // pred_check
        %p2133 = pneg %p151
      $region46: #{encoder_forward_pallas.9} parent=35 // pred_check_branch
        %2135 = sbr.rel (%p2133) target = $region48
      $region47: #{encoder_forward_pallas.9} parent=35 // pred_region
        _
      $region48: #{encoder_forward_pallas.9} parent=35 // pred_fallthru
        _
      // Predicated region
      $region49: #{encoder_forward_pallas.9} parent=35 // pred_check
        %p2136 = pneg %p151
      $region50: #{encoder_forward_pallas.9} parent=35 // pred_check_branch
        %2138 = sbr.rel (%p2136) target = $region52
      $region51: #{encoder_forward_pallas.9} parent=35 // pred_region
        %p2139 = scmp.lt.s32.totalorder %s19, 0
        %s2140 = scalar_select %p2139, %s19, 0
        %s2141 = smul.addr %s2140, 8
        %s2142 = scalar_lea.vmem %s4, %s2141
      $region52: #{encoder_forward_pallas.9} parent=35 // pred_fallthru
        _
    $region36: #{encoder_forward_pallas.9} parent=5 // pred_fallthru
      _
    %p2143 = scmp.le.s32.totalorder 2, %s10
    // Predicated region
    $region53: #{encoder_forward_pallas.9} parent=5 // pred_check
      %p2144 = pneg %p2143
    $region54: #{encoder_forward_pallas.9} parent=5 // pred_check_branch
      %2146 = sbr.rel (%p2144) target = $region56
    $region55: #{encoder_forward_pallas.9} parent=5 // pred_region
      %s2147 = ssub.s32 %s10, 2
    $region56: #{encoder_forward_pallas.9} parent=5 // pred_fallthru
      _
  $region6: #{encoder_forward_pallas.9} parent=0 // loop_footer
    %s14 = sadd.s32 1, %s10
  $region7: #{encoder_forward_pallas.9} parent=0 // loop_footer_branch
    %9 = sbr.rel target = $region3
  $region8: #{encoder_forward_pallas.9} parent=0 // loop_exit
    _

</llo_original>
